<compile_context>
chip_gen: v7x
topology: tpu7x:2x2x1
jax: 0.10.0
libtpu: 0.0.40
codegen_flags: <defaults>
</compile_context>

<pallas_src>
import functools

import jax
import jax.numpy as jnp
from jax.experimental import pallas as pl
from jax.experimental.pallas import tpu as pltpu


_VMEM_LIMIT = 32 * 1024 * 1024  # safe on v5e (16 MiB default) .. v7x (64 MiB phys)


def _round_up(x, m):
    return (x + m - 1) // m * m


def _compiler_params():
    return pltpu.CompilerParams(
        dimension_semantics=("parallel",),
        vmem_limit_bytes=_VMEM_LIMIT,
    )


def _m_tiling(M, tm):
    """Pick an effective M tile and padded M (multiple of 16 for bf16 sublanes)."""
    if M <= tm:
        Mp = _round_up(M, 16)
        return Mp, Mp
    return _round_up(M, tm), tm


# ----------------------------------------------------------------------------
# Pallas kernels
# ----------------------------------------------------------------------------
def _linear_kernel(x_ref, w_ref, b_ref, o_ref, *, relu):
    y = jnp.dot(x_ref[...], w_ref[...], preferred_element_type=jnp.float32)
    y = y + b_ref[...]
    if relu:
        y = jnp.maximum(y, 0.0)
    o_ref[...] = y.astype(o_ref.dtype)


def pallas_linear(x, w, b, *, relu, out_dtype=jnp.float32, tm=256):
    """y = act(x @ w + b); x:[M,K], w:[K,N], b:[N]. Tiled over M, bf16 operands."""
    M, K = x.shape
    K2, N = w.shape
    assert K == K2
    Mp, tm_eff = _m_tiling(M, tm)
    if Mp != M:
        x = jnp.pad(x, ((0, Mp - M), (0, 0)))
    x = x.astype(jnp.bfloat16)
    w = w.astype(jnp.bfloat16)
    b = b.astype(jnp.float32).reshape(1, N)
    cost = pl.CostEstimate(
        flops=2 * Mp * K * N,
        transcendentals=0,
        bytes_accessed=Mp * K * 2 + K * N * 2 + N * 4
        + Mp * N * jnp.dtype(out_dtype).itemsize,
    )
    out = pl.pallas_call(
        functools.partial(_linear_kernel, relu=relu),
        out_shape=jax.ShapeDtypeStruct((Mp, N), out_dtype),
        grid=(Mp // tm_eff,),
        in_specs=[
            pl.BlockSpec((tm_eff, K), lambda i: (i, 0)),
            pl.BlockSpec((K, N), lambda i: (0, 0)),
            pl.BlockSpec((1, N), lambda i: (0, 0)),
        ],
        out_specs=pl.BlockSpec((tm_eff, N), lambda i: (i, 0)),
        compiler_params=_compiler_params(),
        cost_estimate=cost,
    )(x, w, b)
    return out[:M]


def _fused_head_kernel(x_ref, w1_ref, b1_ref, w2_ref, b2_ref, w3_ref, b3_ref, o_ref):
    # branch proj 64->768 (ReLU), last_layer 768->768 (ReLU), seg 768->128.
    # Intermediates stay on-chip; bias add + ReLU in f32, matmul operands bf16.
    h = jnp.dot(x_ref[...], w1_ref[...], preferred_element_type=jnp.float32)
    h = jnp.maximum(h + b1_ref[...], 0.0).astype(jnp.bfloat16)
    h = jnp.dot(h, w2_ref[...], preferred_element_type=jnp.float32)
    h = jnp.maximum(h + b2_ref[...], 0.0).astype(jnp.bfloat16)
    y = jnp.dot(h, w3_ref[...], preferred_element_type=jnp.float32) + b3_ref[...]
    o_ref[...] = y.astype(o_ref.dtype)


def pallas_fused_head(feat, w1, b1, w2, b2, w3, b3, *, tm=256):
    """seg = (relu(relu(feat@w1+b1)@w2+b2))@w3+b3, fused in one pallas_call."""
    M, K = feat.shape
    H = w1.shape[1]
    NO = w3.shape[1]
    Mp, tm_eff = _m_tiling(M, tm)
    if Mp != M:
        feat = jnp.pad(feat, ((0, Mp - M), (0, 0)))
    feat = feat.astype(jnp.bfloat16)
    flops = 2 * Mp * (K * H + H * H + H * NO)
    bytes_acc = (Mp * K * 2 + (K * H + H * H + H * NO) * 2
                 + (2 * H + NO) * 4 + Mp * NO * 4)
    out = pl.pallas_call(
        _fused_head_kernel,
        out_shape=jax.ShapeDtypeStruct((Mp, NO), jnp.float32),
        grid=(Mp // tm_eff,),
        in_specs=[
            pl.BlockSpec((tm_eff, K), lambda i: (i, 0)),
            pl.BlockSpec((K, H), lambda i: (0, 0)),
            pl.BlockSpec((1, H), lambda i: (0, 0)),
            pl.BlockSpec((H, H), lambda i: (0, 0)),
            pl.BlockSpec((1, H), lambda i: (0, 0)),
            pl.BlockSpec((H, NO), lambda i: (0, 0)),
            pl.BlockSpec((1, NO), lambda i: (0, 0)),
        ],
        out_specs=pl.BlockSpec((tm_eff, NO), lambda i: (i, 0)),
        compiler_params=_compiler_params(),
        cost_estimate=pl.CostEstimate(
            flops=flops, transcendentals=0, bytes_accessed=bytes_acc),
    )(feat,
      w1.astype(jnp.bfloat16), b1.astype(jnp.float32).reshape(1, H),
      w2.astype(jnp.bfloat16), b2.astype(jnp.float32).reshape(1, H),
      w3.astype(jnp.bfloat16), b3.astype(jnp.float32).reshape(1, NO))
    return out[:M]


def _bilinear_kernel(x_ref, wh_ref, wwt_ref, o_ref):
    cb, hin, win = x_ref.shape
    hout = wh_ref.shape[0]
    wout = wwt_ref.shape[1]
    x = x_ref[...].astype(jnp.float32)
    whb = jnp.broadcast_to(wh_ref[...], (cb, hout, hin))
    wwtb = jnp.broadcast_to(wwt_ref[...], (cb, win, wout))
    # batched height pass then width pass on the MXU
    t = jnp.einsum("coh,chw->cow", whb, x, preferred_element_type=jnp.float32)
    o = jnp.einsum("cow,cwq->coq", t, wwtb, preferred_element_type=jnp.float32)
    o_ref[...] = o.astype(o_ref.dtype)


def pallas_bilinear_upsample(x_nchw, scale=4, cb=8):
    """Bilinear upsample, align_corners=True (nn.UpsamplingBilinear2d)."""
    N, C, Hin, Win = x_nchw.shape
    Hout, Wout = Hin * scale, Win * scale
    wh = _bilinear_matrix(Hin, Hout)          # (Hout, Hin)
    wwt = _bilinear_matrix(Win, Wout).T       # (Win, Wout)
    NC = N * C
    NCp = _round_up(NC, cb)
    x = x_nchw.reshape(NC, Hin, Win).astype(jnp.float32)
    if NCp != NC:
        x = jnp.pad(x, ((0, NCp - NC), (0, 0), (0, 0)))
    out = pl.pallas_call(
        _bilinear_kernel,
        out_shape=jax.ShapeDtypeStruct((NCp, Hout, Wout), jnp.float32),
        grid=(NCp // cb,),
        in_specs=[
            pl.BlockSpec((cb, Hin, Win), lambda i: (i, 0, 0)),
            pl.BlockSpec((Hout, Hin), lambda i: (0, 0)),
            pl.BlockSpec((Win, Wout), lambda i: (0, 0)),
        ],
        out_specs=pl.BlockSpec((cb, Hout, Wout), lambda i: (i, 0, 0)),
        compiler_params=_compiler_params(),
        cost_estimate=pl.CostEstimate(
            flops=2 * NCp * (Hout * Hin * Win + Hout * Win * Wout),
            transcendentals=0,
            bytes_accessed=NCp * Hin * Win * 4 + NCp * Hout * Wout * 4
            + (Hout * Hin + Win * Wout) * 4,
        ),
    )(x, wh, wwt)
    return out[:NC].reshape(N, C, Hout, Wout)


# ----------------------------------------------------------------------------
# Plain-JAX glue: im2col, BN folding, interpolation matrices, param init
# ----------------------------------------------------------------------------
def _bilinear_matrix(n_in, n_out):
    # align_corners=True: src = dst * (n_in-1)/(n_out-1)
    pos = jnp.arange(n_out, dtype=jnp.float32) * (n_in - 1) / (n_out - 1)
    lo = jnp.floor(pos).astype(jnp.int32)
    hi = jnp.minimum(lo + 1, n_in - 1)
    frac = pos - lo.astype(jnp.float32)
    W = jnp.zeros((n_out, n_in), jnp.float32)
    W = W.at[jnp.arange(n_out), lo].add(1.0 - frac)
    W = W.at[jnp.arange(n_out), hi].add(frac)
    return W


def im2col_3x3_s2(x_nchw):
    """3x3 conv, stride 2, padding 1 -> patches [N*Ho*Wo, Cin*9] (cin,kh,kw order)."""
    # TODO(synk): replace the 9x patch materialization with a halo-aware Pallas
    # conv kernel; for now it stays in XLA but in bf16 to halve HBM traffic.
    N, C, H, W = x_nchw.shape
    Ho, Wo = H // 2, W // 2
    xp = jnp.pad(x_nchw, ((0, 0), (0, 0), (1, 1), (1, 1)))
    patches = []
    for kh in range(3):
        for kw in range(3):
            patches.append(xp[:, :, kh:kh + 2 * Ho:2, kw:kw + 2 * Wo:2])
    p = jnp.stack(patches, axis=2)                       # (N, C, 9, Ho, Wo)
    p = p.transpose(0, 3, 4, 1, 2).reshape(N * Ho * Wo, C * 9)
    return p, (N, Ho, Wo)


def fold_bn(w_kcout, bias, gamma, beta, mean, var, eps=1e-5):
    """Fold BatchNorm into a [K, Cout] matmul weight + bias (in f32)."""
    s = gamma / jnp.sqrt(var + eps)
    w_f = w_kcout.astype(jnp.float32) * s[None, :]
    b0 = bias if bias is not None else jnp.zeros_like(mean)
    b_f = (b0 - mean) * s + beta
    return w_f, b_f


def make_params(classes=12):
    key = jax.random.PRNGKey(0)
    ks = iter(jax.random.split(key, 64))

    def nrm(shape, scale=0.05):
        return scale * jax.random.normal(next(ks), shape, jnp.float32)

    def bn(c):
        return dict(gamma=1.0 + 0.01 * nrm((c,)), beta=0.01 * nrm((c,)),
                    mean=0.01 * nrm((c,)), var=1.0 + 0.1 * jnp.abs(nrm((c,))))

    p = {}
    # stem: Conv2d(3,64,3,s2,p1,bias=False)+BN, Conv2d(64,64,3,s2,p1,bias=False)+BN
    p["conv1_w"] = nrm((64, 3, 3, 3));   p["bn1"] = bn(64)
    p["conv2_w"] = nrm((64, 64, 3, 3));  p["bn2"] = bn(64)
    # branch projections -> 48/96/192/384 channels (stand-in for HRNet stages)
    for c in (48, 96, 192, 384):
        p[f"br{c}_w"] = nrm((c, 64)); p[f"br{c}_bn"] = bn(c)
    # last_layer (index 3 deleted): Conv2d(720,720,1)+BN+ReLU
    p["last_w"] = nrm((720, 720)); p["last_b"] = 0.01 * nrm((720,)); p["last_bn"] = bn(720)
    # seg_head: Conv2d(720,classes,1) with bias
    p["seg_w"] = nrm((classes, 720)); p["seg_b"] = 0.01 * nrm((classes,))
    return p


# ----------------------------------------------------------------------------
# Forward pass
# ----------------------------------------------------------------------------
def hrnet_forward(x_nchw, p, classes=12):
    HID = 720
    HID_PAD = 768    # pad 720 -> 768 (multiple of 256) for full MXU tiles
    CLS_PAD = 128    # lane-dense seg output; sliced back below

    x = x_nchw.astype(jnp.bfloat16)

    # ---- stem conv1 (3x3 s2) + BN + ReLU
    cols, (n, ho, wo) = im2col_3x3_s2(x)
    w = p["conv1_w"].reshape(64, -1).T                         # [27, 64]
    w, b = fold_bn(w, None, **p["bn1"])
    y = pallas_linear(cols, w, b, relu=True, out_dtype=jnp.bfloat16)
    y = y.reshape(n, ho, wo, 64).transpose(0, 3, 1, 2)         # NCHW, bf16

    # ---- stem conv2 (3x3 s2) + BN + ReLU
    cols, (n, ho, wo) = im2col_3x3_s2(y)
    w = p["conv2_w"].reshape(64, -1).T                         # [576, 64]
    w, b = fold_bn(w, None, **p["bn2"])
    feat = pallas_linear(cols, w, b, relu=True, out_dtype=jnp.bfloat16)  # [M, 64]

    # ---- fused 1x1 head: branch proj (64->720) + last_layer (720->720) + seg
    ws, bs = [], []
    for c in (48, 96, 192, 384):
        wb, bb = fold_bn(p[f"br{c}_w"].T, None, **p[f"br{c}_bn"])
        ws.append(wb); bs.append(bb)
    w1 = jnp.concatenate(ws, axis=1)                           # [64, 720]
    b1 = jnp.concatenate(bs, axis=0)                           # [720]
    w2, b2 = fold_bn(p["last_w"].T, p["last_b"], **p["last_bn"])   # [720,720]
    w3 = p["seg_w"].T                                          # [720, classes]
    b3 = p["seg_b"]

    # zero padding is exact: ReLU(0)=0 and zero rows/cols contribute nothing
    w1 = jnp.pad(w1, ((0, 0), (0, HID_PAD - HID)))
    b1 = jnp.pad(b1, ((0, HID_PAD - HID),))
    w2 = jnp.pad(w2, ((0, HID_PAD - HID), (0, HID_PAD - HID)))
    b2 = jnp.pad(b2, ((0, HID_PAD - HID),))
    w3 = jnp.pad(w3, ((0, HID_PAD - HID), (0, CLS_PAD - classes)))
    b3 = jnp.pad(b3, ((0, CLS_PAD - classes),))

    seg = pallas_fused_head(feat, w1, b1, w2, b2, w3, b3)      # [M, 128] f32
    seg = seg[:, :classes].reshape(n, ho, wo, classes).transpose(0, 3, 1, 2)

    # ---- seg_head upsample: bilinear x4, align_corners=True
    return pallas_bilinear_upsample(seg, scale=4)              # [N, classes, H, W]


if __name__ == "__main__":
    classes = 12
    x = jax.random.normal(jax.random.PRNGKey(0), (2, 3, 32, 32), jnp.float32)
    params = make_params(classes)
    fwd = jax.jit(functools.partial(hrnet_forward, classes=classes))
    out = fwd(x, params)
    out = jax.block_until_ready(out)
    assert out.shape == (2, classes, 32, 32), out.shape
    assert bool(jnp.all(jnp.isfinite(out)))
    print("KERNEL_OK")
</pallas_src>

<mosaic_0001>
module attributes {stable_mosaic.version = 11 : i64} {
  func.func private @main(%arg0: i32) attributes {dimension_semantics = [#tpu.dimension_semantics<core_parallel>], iteration_bounds = array<i64: 2>, tpu.core_type = #tpu.core_type<sc_scalar_subcore>, window_params = []} {
    return
  }
}

module attributes {stable_mosaic.version = 11 : i64} {
  func.func private @main(%arg0: i32) attributes {dimension_semantics = [#tpu.dimension_semantics<core_parallel>], iteration_bounds = array<i64: 2>, tpu.core_type = #tpu.core_type<sc_scalar_subcore>, window_params = []} {
    return
  }
}

module attributes {stable_mosaic.version = 11 : i64} {
  func.func @_linear_kernel(%arg0: i32, %arg1: memref<256x27xbf16, #tpu.memory_space<vmem>>, %arg2: memref<27x64xbf16, #tpu.memory_space<vmem>>, %arg3: memref<1x64xf32, #tpu.memory_space<vmem>>, %arg4: memref<256x64xbf16, #tpu.memory_space<vmem>>) attributes {dimension_semantics = [#tpu.dimension_semantics<parallel>], iteration_bounds = array<i64: 2>, scalar_prefetch = 0 : i64, scratch_operands = 0 : i64, tpu.core_type = #tpu.core_type<tc>, window_params = [{transform_indices = @transform_0, window_bounds = array<i64: 256, 27>}, {pipeline_mode = #tpu.pipeline_mode<synchronous>, transform_indices = @transform_1, window_bounds = array<i64: 27, 64>}, {pipeline_mode = #tpu.pipeline_mode<synchronous>, transform_indices = @transform_2, window_bounds = array<i64: 1, 64>}, {transform_indices = @transform_3, window_bounds = array<i64: 256, 64>}]} {
    %c0 = arith.constant 0 : index
    %c0_0 = arith.constant 0 : index
    %0 = vector.load %arg1[%c0, %c0_0] : memref<256x27xbf16, #tpu.memory_space<vmem>>, vector<256x27xbf16>
    %c0_1 = arith.constant 0 : index
    %c0_2 = arith.constant 0 : index
    %1 = vector.load %arg2[%c0_1, %c0_2] : memref<27x64xbf16, #tpu.memory_space<vmem>>, vector<27x64xbf16>
    %cst = arith.constant dense<0.000000e+00> : vector<256x64xf32>
    %2 = tpu.matmul %0, %1, %cst {dimension_numbers = #tpu.dot_dimension_numbers<[1], [0], [0], [1], [0, 0, 1, 1], [], []>} : vector<256x27xbf16>, vector<27x64xbf16>, vector<256x64xf32> -> vector<256x64xf32>
    %c0_3 = arith.constant 0 : index
    %c0_4 = arith.constant 0 : index
    %3 = vector.load %arg3[%c0_3, %c0_4] : memref<1x64xf32, #tpu.memory_space<vmem>>, vector<1x64xf32>
    %4 = vector.broadcast %3 : vector<1x64xf32> to vector<256x64xf32>
    %5 = arith.addf %2, %4 : vector<256x64xf32>
    %cst_5 = arith.constant 0.000000e+00 : f32
    %6 = vector.broadcast %cst_5 : f32 to vector<256x64xf32>
    %7 = arith.maximumf %5, %6 : vector<256x64xf32>
    %8 = arith.truncf %7 : vector<256x64xf32> to vector<256x64xbf16>
    %c0_6 = arith.constant 0 : index
    %c0_7 = arith.constant 0 : index
    %9 = vector.load %arg4[%c0_6, %c0_7] : memref<256x64xbf16, #tpu.memory_space<vmem>>, vector<256x64xbf16>
    tpu.vector_store %arg4[%c0_6, %c0_7], %8 {strides = array<i32>} : memref<256x64xbf16, #tpu.memory_space<vmem>>, vector<256x64xbf16>,
    return
  }
  func.func @transform_0(%arg0: i32) -> (i32, i32) {
    %c0_i32 = arith.constant 0 : i32
    %c0_i32_0 = arith.constant 0 : i32
    return %arg0, %c0_i32 : i32, i32
  }
  func.func @transform_1(%arg0: i32) -> (i32, i32) {
    %c0_i32 = arith.constant 0 : i32
    %c0_i32_0 = arith.constant 0 : i32
    %c0_i32_1 = arith.constant 0 : i32
    return %c0_i32, %c0_i32_0 : i32, i32
  }
  func.func @transform_2(%arg0: i32) -> (i32, i32) {
    %c0_i32 = arith.constant 0 : i32
    %c0_i32_0 = arith.constant 0 : i32
    %c0_i32_1 = arith.constant 0 : i32
    return %c0_i32, %c0_i32_0 : i32, i32
  }
  func.func @transform_3(%arg0: i32) -> (i32, i32) {
    %c0_i32 = arith.constant 0 : i32
    %c0_i32_0 = arith.constant 0 : i32
    return %arg0, %c0_i32 : i32, i32
  }
}

module attributes {stable_mosaic.version = 11 : i64} {
  func.func @_linear_kernel(%arg0: i32, %arg1: memref<128x576xbf16, #tpu.memory_space<vmem>>, %arg2: memref<576x64xbf16, #tpu.memory_space<vmem>>, %arg3: memref<1x64xf32, #tpu.memory_space<vmem>>, %arg4: memref<128x64xbf16, #tpu.memory_space<vmem>>) attributes {dimension_semantics = [#tpu.dimension_semantics<parallel>], iteration_bounds = array<i64: 1>, scalar_prefetch = 0 : i64, scratch_operands = 0 : i64, tpu.core_type = #tpu.core_type<tc>, window_params = [{transform_indices = @transform_0, window_bounds = array<i64: 128, 576>}, {pipeline_mode = #tpu.pipeline_mode<synchronous>, transform_indices = @transform_1, window_bounds = array<i64: 576, 64>}, {pipeline_mode = #tpu.pipeline_mode<synchronous>, transform_indices = @transform_2, window_bounds = array<i64: 1, 64>}, {transform_indices = @transform_3, window_bounds = array<i64: 128, 64>}]} {
    %c0 = arith.constant 0 : index
    %c0_0 = arith.constant 0 : index
    %0 = vector.load %arg1[%c0, %c0_0] : memref<128x576xbf16, #tpu.memory_space<vmem>>, vector<128x576xbf16>
    %c0_1 = arith.constant 0 : index
    %c0_2 = arith.constant 0 : index
    %1 = vector.load %arg2[%c0_1, %c0_2] : memref<576x64xbf16, #tpu.memory_space<vmem>>, vector<576x64xbf16>
    %cst = arith.constant dense<0.000000e+00> : vector<128x64xf32>
    %2 = tpu.matmul %0, %1, %cst {dimension_numbers = #tpu.dot_dimension_numbers<[1], [0], [0], [1], [0, 0, 1, 1], [], []>} : vector<128x576xbf16>, vector<576x64xbf16>, vector<128x64xf32> -> vector<128x64xf32>
    %c0_3 = arith.constant 0 : index
    %c0_4 = arith.constant 0 : index
    %3 = vector.load %arg3[%c0_3, %c0_4] : memref<1x64xf32, #tpu.memory_space<vmem>>, vector<1x64xf32>
    %4 = vector.broadcast %3 : vector<1x64xf32> to vector<128x64xf32>
    %5 = arith.addf %2, %4 : vector<128x64xf32>
    %cst_5 = arith.constant 0.000000e+00 : f32
    %6 = vector.broadcast %cst_5 : f32 to vector<128x64xf32>
    %7 = arith.maximumf %5, %6 : vector<128x64xf32>
    %8 = arith.truncf %7 : vector<128x64xf32> to vector<128x64xbf16>
    %c0_6 = arith.constant 0 : index
    %c0_7 = arith.constant 0 : index
    %9 = vector.load %arg4[%c0_6, %c0_7] : memref<128x64xbf16, #tpu.memory_space<vmem>>, vector<128x64xbf16>
    tpu.vector_store %arg4[%c0_6, %c0_7], %8 {strides = array<i32>} : memref<128x64xbf16, #tpu.memory_space<vmem>>, vector<128x64xbf16>,
    return
  }
  func.func @transform_0(%arg0: i32) -> (i32, i32) {
    %c0_i32 = arith.constant 0 : i32
    %c0_i32_0 = arith.constant 0 : i32
    return %arg0, %c0_i32 : i32, i32
  }
  func.func @transform_1(%arg0: i32) -> (i32, i32) {
    %c0_i32 = arith.constant 0 : i32
    %c0_i32_0 = arith.constant 0 : i32
    %c0_i32_1 = arith.constant 0 : i32
    return %c0_i32, %c0_i32_0 : i32, i32
  }
  func.func @transform_2(%arg0: i32) -> (i32, i32) {
    %c0_i32 = arith.constant 0 : i32
    %c0_i32_0 = arith.constant 0 : i32
    %c0_i32_1 = arith.constant 0 : i32
    return %c0_i32, %c0_i32_0 : i32, i32
  }
  func.func @transform_3(%arg0: i32) -> (i32, i32) {
    %c0_i32 = arith.constant 0 : i32
    %c0_i32_0 = arith.constant 0 : i32
    return %arg0, %c0_i32 : i32, i32
  }
}

module attributes {stable_mosaic.version = 11 : i64} {
  func.func @_fused_head_kernel(%arg0: i32, %arg1: memref<128x64xbf16, #tpu.memory_space<vmem>>, %arg2: memref<64x768xbf16, #tpu.memory_space<vmem>>, %arg3: memref<1x768xf32, #tpu.memory_space<vmem>>, %arg4: memref<768x768xbf16, #tpu.memory_space<vmem>>, %arg5: memref<1x768xf32, #tpu.memory_space<vmem>>, %arg6: memref<768x128xbf16, #tpu.memory_space<vmem>>, %arg7: memref<1x128xf32, #tpu.memory_space<vmem>>, %arg8: memref<128x128xf32, #tpu.memory_space<vmem>>) attributes {dimension_semantics = [#tpu.dimension_semantics<parallel>], iteration_bounds = array<i64: 1>, scalar_prefetch = 0 : i64, scratch_operands = 0 : i64, tpu.core_type = #tpu.core_type<tc>, window_params = [{transform_indices = @transform_0, window_bounds = array<i64: 128, 64>}, {pipeline_mode = #tpu.pipeline_mode<synchronous>, transform_indices = @transform_1, window_bounds = array<i64: 64, 768>}, {pipeline_mode = #tpu.pipeline_mode<synchronous>, transform_indices = @transform_2, window_bounds = array<i64: 1, 768>}, {pipeline_mode = #tpu.pipeline_mode<synchronous>, transform_indices = @transform_3, window_bounds = array<i64: 768, 768>}, {pipeline_mode = #tpu.pipeline_mode<synchronous>, transform_indices = @transform_4, window_bounds = array<i64: 1, 768>}, {pipeline_mode = #tpu.pipeline_mode<synchronous>, transform_indices = @transform_5, window_bounds = array<i64: 768, 128>}, {pipeline_mode = #tpu.pipeline_mode<synchronous>, transform_indices = @transform_6, window_bounds = array<i64: 1, 128>}, {transform_indices = @transform_7, window_bounds = array<i64: 128, 128>}]} {
    %c0 = arith.constant 0 : index
    %c0_0 = arith.constant 0 : index
    %0 = vector.load %arg1[%c0, %c0_0] : memref<128x64xbf16, #tpu.memory_space<vmem>>, vector<128x64xbf16>
    %c0_1 = arith.constant 0 : index
    %c0_2 = arith.constant 0 : index
    %1 = vector.load %arg2[%c0_1, %c0_2] : memref<64x768xbf16, #tpu.memory_space<vmem>>, vector<64x768xbf16>
    %cst = arith.constant dense<0.000000e+00> : vector<128x768xf32>
    %2 = tpu.matmul %0, %1, %cst {dimension_numbers = #tpu.dot_dimension_numbers<[1], [0], [0], [1], [0, 0, 1, 1], [], []>} : vector<128x64xbf16>, vector<64x768xbf16>, vector<128x768xf32> -> vector<128x768xf32>
    %c0_3 = arith.constant 0 : index
    %c0_4 = arith.constant 0 : index
    %3 = vector.load %arg3[%c0_3, %c0_4] : memref<1x768xf32, #tpu.memory_space<vmem>>, vector<1x768xf32>
    %4 = vector.broadcast %3 : vector<1x768xf32> to vector<128x768xf32>
    %5 = arith.addf %2, %4 : vector<128x768xf32>
    %cst_5 = arith.constant 0.000000e+00 : f32
    %6 = vector.broadcast %cst_5 : f32 to vector<128x768xf32>
    %7 = arith.maximumf %5, %6 : vector<128x768xf32>
    %8 = arith.truncf %7 : vector<128x768xf32> to vector<128x768xbf16>
    %c0_6 = arith.constant 0 : index
    %c0_7 = arith.constant 0 : index
    %9 = vector.load %arg4[%c0_6, %c0_7] : memref<768x768xbf16, #tpu.memory_space<vmem>>, vector<768x768xbf16>
    %cst_8 = arith.constant dense<0.000000e+00> : vector<128x768xf32>
    %10 = tpu.matmul %8, %9, %cst_8 {dimension_numbers = #tpu.dot_dimension_numbers<[1], [0], [0], [1], [0, 0, 1, 1], [], []>} : vector<128x768xbf16>, vector<768x768xbf16>, vector<128x768xf32> -> vector<128x768xf32>
    %c0_9 = arith.constant 0 : index
    %c0_10 = arith.constant 0 : index
    %11 = vector.load %arg5[%c0_9, %c0_10] : memref<1x768xf32, #tpu.memory_space<vmem>>, vector<1x768xf32>
    %12 = vector.broadcast %11 : vector<1x768xf32> to vector<128x768xf32>
    %13 = arith.addf %10, %12 : vector<128x768xf32>
    %cst_11 = arith.constant 0.000000e+00 : f32
    %14 = vector.broadcast %cst_11 : f32 to vector<128x768xf32>
    %15 = arith.maximumf %13, %14 : vector<128x768xf32>
    %16 = arith.truncf %15 : vector<128x768xf32> to vector<128x768xbf16>
    %c0_12 = arith.constant 0 : index
    %c0_13 = arith.constant 0 : index
    %17 = vector.load %arg6[%c0_12, %c0_13] : memref<768x128xbf16, #tpu.memory_space<vmem>>, vector<768x128xbf16>
    %cst_14 = arith.constant dense<0.000000e+00> : vector<128x128xf32>
    %18 = tpu.matmul %16, %17, %cst_14 {dimension_numbers = #tpu.dot_dimension_numbers<[1], [0], [0], [1], [0, 0, 1, 1], [], []>} : vector<128x768xbf16>, vector<768x128xbf16>, vector<128x128xf32> -> vector<128x128xf32>
    %c0_15 = arith.constant 0 : index
    %c0_16 = arith.constant 0 : index
    %19 = vector.load %arg7[%c0_15, %c0_16] : memref<1x128xf32, #tpu.memory_space<vmem>>, vector<1x128xf32>
    %20 = vector.broadcast %19 : vector<1x128xf32> to vector<128x128xf32>
    %21 = arith.addf %18, %20 : vector<128x128xf32>
    %c0_17 = arith.constant 0 : index
    %c0_18 = arith.constant 0 : index
    %22 = vector.load %arg8[%c0_17, %c0_18] : memref<128x128xf32, #tpu.memory_space<vmem>>, vector<128x128xf32>
    tpu.vector_store %arg8[%c0_17, %c0_18], %21 {strides = array<i32>} : memref<128x128xf32, #tpu.memory_space<vmem>>, vector<128x128xf32>,
    return
  }
  func.func @transform_0(%arg0: i32) -> (i32, i32) {
    %c0_i32 = arith.constant 0 : i32
    %c0_i32_0 = arith.constant 0 : i32
    return %arg0, %c0_i32 : i32, i32
  }
  func.func @transform_1(%arg0: i32) -> (i32, i32) {
    %c0_i32 = arith.constant 0 : i32
    %c0_i32_0 = arith.constant 0 : i32
    %c0_i32_1 = arith.constant 0 : i32
    return %c0_i32, %c0_i32_0 : i32, i32
  }
  func.func @transform_2(%arg0: i32) -> (i32, i32) {
    %c0_i32 = arith.constant 0 : i32
    %c0_i32_0 = arith.constant 0 : i32
    %c0_i32_1 = arith.constant 0 : i32
    return %c0_i32, %c0_i32_0 : i32, i32
  }
  func.func @transform_3(%arg0: i32) -> (i32, i32) {
    %c0_i32 = arith.constant 0 : i32
    %c0_i32_0 = arith.constant 0 : i32
    %c0_i32_1 = arith.constant 0 : i32
    return %c0_i32, %c0_i32_0 : i32, i32
  }
  func.func @transform_4(%arg0: i32) -> (i32, i32) {
    %c0_i32 = arith.constant 0 : i32
    %c0_i32_0 = arith.constant 0 : i32
    %c0_i32_1 = arith.constant 0 : i32
    return %c0_i32, %c0_i32_0 : i32, i32
  }
  func.func @transform_5(%arg0: i32) -> (i32, i32) {
    %c0_i32 = arith.constant 0 : i32
    %c0_i32_0 = arith.constant 0 : i32
    %c0_i32_1 = arith.constant 0 : i32
    return %c0_i32, %c0_i32_0 : i32, i32
  }
  func.func @transform_6(%arg0: i32) -> (i32, i32) {
    %c0_i32 = arith.constant 0 : i32
    %c0_i32_0 = arith.constant 0 : i32
    %c0_i32_1 = arith.constant 0 : i32
    return %c0_i32, %c0_i32_0 : i32, i32
  }
  func.func @transform_7(%arg0: i32) -> (i32, i32) {
    %c0_i32 = arith.constant 0 : i32
    %c0_i32_0 = arith.constant 0 : i32
    return %arg0, %c0_i32 : i32, i32
  }
}

module attributes {stable_mosaic.version = 11 : i64} {
  func.func @_bilinear_kernel(%arg0: i32, %arg1: memref<8x8x8xf32, #tpu.memory_space<vmem>>, %arg2: memref<32x8xf32, #tpu.memory_space<vmem>>, %arg3: memref<8x32xf32, #tpu.memory_space<vmem>>, %arg4: memref<8x32x32xf32, #tpu.memory_space<vmem>>) attributes {dimension_semantics = [#tpu.dimension_semantics<parallel>], iteration_bounds = array<i64: 3>, scalar_prefetch = 0 : i64, scratch_operands = 0 : i64, tpu.core_type = #tpu.core_type<tc>, window_params = [{transform_indices = @transform_0, window_bounds = array<i64: 8, 8, 8>}, {pipeline_mode = #tpu.pipeline_mode<synchronous>, transform_indices = @transform_1, window_bounds = array<i64: 32, 8>}, {pipeline_mode = #tpu.pipeline_mode<synchronous>, transform_indices = @transform_2, window_bounds = array<i64: 8, 32>}, {transform_indices = @transform_3, window_bounds = array<i64: 8, 32, 32>}]} {
    %c0 = arith.constant 0 : index
    %c0_0 = arith.constant 0 : index
    %c0_1 = arith.constant 0 : index
    %0 = vector.load %arg1[%c0, %c0_0, %c0_1] : memref<8x8x8xf32, #tpu.memory_space<vmem>>, vector<8x8x8xf32>
    %c0_2 = arith.constant 0 : index
    %c0_3 = arith.constant 0 : index
    %1 = vector.load %arg2[%c0_2, %c0_3] : memref<32x8xf32, #tpu.memory_space<vmem>>, vector<32x8xf32>
    %2 = vector.shape_cast %1 : vector<32x8xf32> to vector<1x32x8xf32>
    %3 = vector.broadcast %2 : vector<1x32x8xf32> to vector<8x32x8xf32>
    %c0_4 = arith.constant 0 : index
    %c0_5 = arith.constant 0 : index
    %4 = vector.load %arg3[%c0_4, %c0_5] : memref<8x32xf32, #tpu.memory_space<vmem>>, vector<8x32xf32>
    %5 = vector.shape_cast %4 : vector<8x32xf32> to vector<1x8x32xf32>
    %6 = vector.broadcast %5 : vector<1x8x32xf32> to vector<8x8x32xf32>
    "tpu.trace_start"() <{level = 10 : i32, message = "coh,chw->cow"}> : () -> ()
    %cst = arith.constant dense<0.000000e+00> : vector<8x32x8xf32>
    %7 = tpu.matmul %3, %0, %cst {dimension_numbers = #tpu.dot_dimension_numbers<[2], [1], [1], [2], [0, 0, 0, 1, 1, 2], [0], [0]>} : vector<8x32x8xf32>, vector<8x8x8xf32>, vector<8x32x8xf32> -> vector<8x32x8xf32>
    "tpu.trace_stop"() : () -> ()
    "tpu.trace_start"() <{level = 10 : i32, message = "cow,cwq->coq"}> : () -> ()
    %cst_6 = arith.constant dense<0.000000e+00> : vector<8x32x32xf32>
    %8 = tpu.matmul %7, %6, %cst_6 {dimension_numbers = #tpu.dot_dimension_numbers<[2], [1], [1], [2], [0, 0, 0, 1, 1, 2], [0], [0]>} : vector<8x32x8xf32>, vector<8x8x32xf32>, vector<8x32x32xf32> -> vector<8x32x32xf32>
    "tpu.trace_stop"() : () -> ()
    %c0_7 = arith.constant 0 : index
    %c0_8 = arith.constant 0 : index
    %c0_9 = arith.constant 0 : index
    %9 = vector.load %arg4[%c0_7, %c0_8, %c0_9] : memref<8x32x32xf32, #tpu.memory_space<vmem>>, vector<8x32x32xf32>
    tpu.vector_store %arg4[%c0_7, %c0_8, %c0_9], %8 {strides = array<i32>} : memref<8x32x32xf32, #tpu.memory_space<vmem>>, vector<8x32x32xf32>,
    return
  }
  func.func @transform_0(%arg0: i32) -> (i32, i32, i32) {
    %c0_i32 = arith.constant 0 : i32
    %c0_i32_0 = arith.constant 0 : i32
    %c0_i32_1 = arith.constant 0 : i32
    return %arg0, %c0_i32, %c0_i32_0 : i32, i32, i32
  }
  func.func @transform_1(%arg0: i32) -> (i32, i32) {
    %c0_i32 = arith.constant 0 : i32
    %c0_i32_0 = arith.constant 0 : i32
    %c0_i32_1 = arith.constant 0 : i32
    return %c0_i32, %c0_i32_0 : i32, i32
  }
  func.func @transform_2(%arg0: i32) -> (i32, i32) {
    %c0_i32 = arith.constant 0 : i32
    %c0_i32_0 = arith.constant 0 : i32
    %c0_i32_1 = arith.constant 0 : i32
    return %c0_i32, %c0_i32_0 : i32, i32
  }
  func.func @transform_3(%arg0: i32) -> (i32, i32, i32) {
    %c0_i32 = arith.constant 0 : i32
    %c0_i32_0 = arith.constant 0 : i32
    %c0_i32_1 = arith.constant 0 : i32
    return %arg0, %c0_i32, %c0_i32_0 : i32, i32, i32
  }
}

</mosaic_0001>

<llo_original>
// kernel: hrnet_forward.4
$region0: #{hrnet_forward.4}
  #allocation0 [shape = 'u32[]', space=smem, size = 0x4, offset = 0x4, fixed_abs, tag = 'smem constant byte address 0x4 - core index']
  #allocation1 [shape = 'u32[144,128]{1,0:T(1,128)}', space=vmem, size = 0x12000, scoped, tag = 'internal scratch']
  %s0 = inlined_call_operand.vmem [shape: bf16[512,27], index: 0, kind: input, shape index: {}]
  %s1 = inlined_call_operand.vmem [shape: bf16[27,64], index: 1, kind: input, shape index: {}]
  %s2 = inlined_call_operand.vmem [shape: f32[1,64], index: 2, kind: input, shape index: {}]
  %s3 = inlined_call_operand.vmem [shape: bf16[512,64], index: 3, kind: output, shape index: {}]
  %s4 = sld [smem:[#allocation0]]
  $region45: #{hrnet_forward.4} parent=0
    _
  %s6 = ssub.s32 1, %s4
  %s7 = scalar_select 0, %s6, %s4
  loop: start=0, step=1, limit=4
  $region2: #{hrnet_forward.4} parent=0 // loop_pre_header
    _
  $region3: #{hrnet_forward.4} parent=0 // loop_header
    %s9 = sphi 0, %s13
    %p10 = scmp.ge.s32.totalorder %s9, 4
    %s19 = sphi 0, %s21
    %s22 = sphi 0, %s19
    %s23 = sphi 0, %s22
    %s39 = sphi 0, %s23
    %s43 = sphi 0, %s43
    %s45 = sphi 0, %s43
    %s46 = sphi 0, %s45
    %s60 = sphi 0, %s46
    %s64 = sphi 0, %s64
    %s66 = sphi 0, %s64
    %s67 = sphi 0, %s66
    %s81 = sphi 0, %s67
    %s87 = sphi 0, %s89
    %s90 = sphi 0, %s87
    %s91 = sphi 0, %s90
    %s107 = sphi 0, %s91
  $region4: #{hrnet_forward.4} parent=0 // loop_header_branch
    %12 = sbr.rel (%p10) target = $region8
  $region5: #{hrnet_forward.4} parent=0 // loop_body
    %s14 = ssub.s32 %s9, 1
    %s15 = ssub.s32 %s9, 2
    %s16 = sadd.s32 %s9, 1
    %s17 = ssub.s32 %s9, %s16
    %p18 = scmp.eq.s32.totalorder %s17, 0
    %s20 = sadd.s32 %s19, 1
    %s21 = scalar_select %p18, %s19, %s20
    %p24 = pneg %p18
    %p25 = scmp.eq.s32.totalorder %s9, 1
    %p26 = por %p24, %p25
    %p27 = scmp.ne.s32.totalorder %s19, %s22
    %p28 = scmp.eq.s32.totalorder %s9, 0
    %p29 = por %p27, %p28
    %p30 = scmp.ne.s32.totalorder %s19, %s22
    %p31 = scmp.eq.s32.totalorder %s14, 1
    %p32 = por %p30, %p31
    %p33 = scmp.ne.s32.totalorder %s22, %s23
    %p34 = scmp.eq.s32.totalorder %s14, 0
    %p35 = por %p33, %p34
    %p36 = scmp.ne.s32.totalorder %s22, %s23
    %p37 = scmp.eq.s32.totalorder %s15, 1
    %p38 = por %p36, %p37
    %p40 = scmp.ne.s32.totalorder %s23, %s39
    %p41 = scmp.eq.s32.totalorder %s15, 0
    %p42 = por %p40, %p41
    %s44 = sadd.s32 %s43, 1
    %p47 = scmp.eq.s32.totalorder %s9, 1
    %p48 = scmp.ne.s32.totalorder %s43, %s45
    %p49 = scmp.eq.s32.totalorder %s9, 0
    %p50 = por %p48, %p49
    %p51 = scmp.ne.s32.totalorder %s43, %s45
    %p52 = scmp.eq.s32.totalorder %s14, 1
    %p53 = por %p51, %p52
    %p54 = scmp.ne.s32.totalorder %s45, %s46
    %p55 = scmp.eq.s32.totalorder %s14, 0
    %p56 = por %p54, %p55
    %p57 = scmp.ne.s32.totalorder %s45, %s46
    %p58 = scmp.eq.s32.totalorder %s15, 1
    %p59 = por %p57, %p58
    %p61 = scmp.ne.s32.totalorder %s46, %s60
    %p62 = scmp.eq.s32.totalorder %s15, 0
    %p63 = por %p61, %p62
    %s65 = sadd.s32 %s64, 1
    %p68 = scmp.eq.s32.totalorder %s9, 1
    %p69 = scmp.ne.s32.totalorder %s64, %s66
    %p70 = scmp.eq.s32.totalorder %s9, 0
    %p71 = por %p69, %p70
    %p72 = scmp.ne.s32.totalorder %s64, %s66
    %p73 = scmp.eq.s32.totalorder %s14, 1
    %p74 = por %p72, %p73
    %p75 = scmp.ne.s32.totalorder %s66, %s67
    %p76 = scmp.eq.s32.totalorder %s14, 0
    %p77 = por %p75, %p76
    %p78 = scmp.ne.s32.totalorder %s66, %s67
    %p79 = scmp.eq.s32.totalorder %s15, 1
    %p80 = por %p78, %p79
    %p82 = scmp.ne.s32.totalorder %s67, %s81
    %p83 = scmp.eq.s32.totalorder %s15, 0
    %p84 = por %p82, %p83
    %s85 = ssub.s32 %s9, %s16
    %p86 = scmp.eq.s32.totalorder %s85, 0
    %s88 = sadd.s32 %s87, 1
    %s89 = scalar_select %p86, %s87, %s88
    %p92 = pneg %p86
    %p93 = scmp.eq.s32.totalorder %s9, 1
    %p94 = por %p92, %p93
    %p95 = scmp.ne.s32.totalorder %s87, %s90
    %p96 = scmp.eq.s32.totalorder %s9, 0
    %p97 = por %p95, %p96
    %p98 = scmp.ne.s32.totalorder %s87, %s90
    %p99 = scmp.eq.s32.totalorder %s14, 1
    %p100 = por %p98, %p99
    %p101 = scmp.ne.s32.totalorder %s90, %s91
    %p102 = scmp.eq.s32.totalorder %s14, 0
    %p103 = por %p101, %p102
    %p104 = scmp.ne.s32.totalorder %s90, %s91
    %p105 = scmp.eq.s32.totalorder %s15, 1
    %p106 = por %p104, %p105
    %p108 = scmp.ne.s32.totalorder %s91, %s107
    %p109 = scmp.eq.s32.totalorder %s15, 0
    %p110 = por %p108, %p109
    %p111 = scmp.le.s32.totalorder 1, %s9
    %p112 = scmp.lt.s32.totalorder %s9, 3
    %p113 = pnand %p111, %p112
    %p114 = pneg %p113
    // Predicated region
    $region9: #{hrnet_forward.4} parent=5 // pred_check
      _
    $region10: #{hrnet_forward.4} parent=5 // pred_check_branch
      %116 = sbr.rel (%p113) target = $region12
    $region11: #{hrnet_forward.4} parent=5 // pred_region
      %s117 = ssub.s32 %s9, 1
      // Predicated region
      $region13: #{hrnet_forward.4} parent=11 // pred_check
        %p118 = pneg %p56
      $region14: #{hrnet_forward.4} parent=11 // pred_check_branch
        %120 = sbr.rel (%p118) target = $region16
      $region15: #{hrnet_forward.4} parent=11 // pred_region
        _
      $region16: #{hrnet_forward.4} parent=11 // pred_fallthru
        _
      // Predicated region
      $region17: #{hrnet_forward.4} parent=11 // pred_check
        %p121 = pneg %p77
      $region18: #{hrnet_forward.4} parent=11 // pred_check_branch
        %123 = sbr.rel (%p121) target = $region20
      $region19: #{hrnet_forward.4} parent=11 // pred_region
        _
      $region20: #{hrnet_forward.4} parent=11 // pred_fallthru
        _
    $region12: #{hrnet_forward.4} parent=5 // pred_fallthru
      _
    %p124 = scmp.lt.s32.totalorder %s9, 2
    // Predicated region
    $region21: #{hrnet_forward.4} parent=5 // pred_check
      %p125 = pneg %p124
    $region22: #{hrnet_forward.4} parent=5 // pred_check_branch
      %127 = sbr.rel (%p125) target = $region24
    $region23: #{hrnet_forward.4} parent=5 // pred_region
      // Predicated region
      $region25: #{hrnet_forward.4} parent=23 // pred_check
        %p128 = pneg %p29
      $region26: #{hrnet_forward.4} parent=23 // pred_check_branch
        %130 = sbr.rel (%p128) target = $region28
      $region27: #{hrnet_forward.4} parent=23 // pred_region
        %s131 = smul.u32 32, %s9
        %p132 = scmp.lt.s32.totalorder %s131, 63
        %s133 = scalar_select %p132, %s131, 63
        %s134 = smul.addr %s133, 4
        %s135 = scalar_lea.vmem %s0, %s134
        %s136 = smul.u32 32, %s9
      $region28: #{hrnet_forward.4} parent=23 // pred_fallthru
        _
    $region24: #{hrnet_forward.4} parent=5 // pred_fallthru
      _
    %p137 = scmp.le.s32.totalorder 1, %s9
    %p138 = scmp.lt.s32.totalorder %s9, 3
    %p139 = pnand %p137, %p138
    %p140 = pneg %p139
    // Predicated region
    $region29: #{hrnet_forward.4} parent=5 // pred_check
      _
    $region30: #{hrnet_forward.4} parent=5 // pred_check_branch
      %142 = sbr.rel (%p139) target = $region32
    $region31: #{hrnet_forward.4} parent=5 // pred_region
      %s143 = ssub.s32 %s9, 1
      %s144 = smul.u32 32, %s14
      %p145 = scmp.lt.s32.totalorder %s144, 63
      %s146 = scalar_select %p145, %s144, 63
      %s147 = smul.addr %s146, 4
      %s148 = scalar_lea.vmem %s0, %s147
      %p149 = pneg %p35
      %p150 = pneg %p32
      %p151 = pneg %p56
      %p152 = pneg %p53
      %p153 = pneg %p77
      %p154 = pneg %p74
      %p155 = pneg %p103
      %p156 = pneg %p100
      %s157 = smul.u32 32, %s14
      %p158 = scmp.lt.s32.totalorder %s157, 63
      %s159 = scalar_select %p158, %s157, 63
      %s160 = smul.addr %s159, 4
      %s161 = scalar_lea.vmem %s3, %s160
      %s162 = smul.u32 32, %s14
      %p163 = scmp.lt.s32.totalorder %s162, 63
      %s164 = scalar_select %p163, %s162, 63
      %s165 = smul.addr %s164, 4
      %s166 = scalar_lea.vmem %s0, %s165
      %s167 = smul.u32 32, %s14
      %s168 = smul.u32 32, %s14
      %p169 = scmp.lt.s32.totalorder %s168, 63
      %s170 = scalar_select %p169, %s168, 63
      %s171 = smul.addr %s170, 4
      %s172 = scalar_lea.vmem %s3, %s171
      %s173 = smul.u32 32, %s14
      %v175 = vld [vmem:[%s166] sm:$0xf]
      %v176 = vld [vmem:[%s166 + $0x4] sm:$0xf]
      %v177 = vld [vmem:[%s166 + $0x8] sm:$0xf]
      %v178 = vld [vmem:[%s166 + $0xc] sm:$0xf]
      %v179 = vld [vmem:[%s166 + $0x10] sm:$0xf]
      %v180 = vld [vmem:[%s166 + $0x14] sm:$0xf]
      %v181 = vld [vmem:[%s166 + $0x18] sm:$0xf]
      %v182 = vld [vmem:[%s166 + $0x1c] sm:$0xf]
      %v183 = vld [vmem:[%s166 + $0x20] sm:$0xf]
      %v184 = vld [vmem:[%s166 + $0x24] sm:$0xf]
      %v185 = vld [vmem:[%s166 + $0x28] sm:$0xf]
      %v186 = vld [vmem:[%s166 + $0x2c] sm:$0xf]
      %v187 = vld [vmem:[%s166 + $0x30] sm:$0xf]
      %v188 = vld [vmem:[%s166 + $0x34] sm:$0xf]
      %v189 = vld [vmem:[%s166 + $0x38] sm:$0xf]
      %v190 = vld [vmem:[%s166 + $0x3c] sm:$0xf]
      %v191 = vld [vmem:[%s166 + $0x40] sm:$0xf]
      %v192 = vld [vmem:[%s166 + $0x44] sm:$0xf]
      %v193 = vld [vmem:[%s166 + $0x48] sm:$0xf]
      %v194 = vld [vmem:[%s166 + $0x4c] sm:$0xf]
      %v195 = vld [vmem:[%s166 + $0x50] sm:$0xf]
      %v196 = vld [vmem:[%s166 + $0x54] sm:$0xf]
      %v197 = vld [vmem:[%s166 + $0x58] sm:$0xf]
      %v198 = vld [vmem:[%s166 + $0x5c] sm:$0xf]
      %v199 = vld [vmem:[%s166 + $0x60] sm:$0xf]
      %v200 = vld [vmem:[%s166 + $0x64] sm:$0xf]
      %v201 = vld [vmem:[%s166 + $0x68] sm:$0xf]
      %v202 = vld [vmem:[%s166 + $0x6c] sm:$0xf]
      %v203 = vld [vmem:[%s166 + $0x70] sm:$0xf]
      %v204 = vld [vmem:[%s166 + $0x74] sm:$0xf]
      %v205 = vld [vmem:[%s166 + $0x78] sm:$0xf]
      %v206 = vld [vmem:[%s166 + $0x7c] sm:$0xf]
      %v207 = vld [vmem:[%s1] sm:$0xf]
      %v208 = vld [vmem:[%s1 + $0x4] sm:$0xf]
      %v209 = vld [vmem:[%s1 + $0x8] sm:$0xf]
      %v210 = vld [vmem:[%s1 + $0xc] sm:$0x3]
      %v211 = vld [vmem:[%s2] sm:$0x1]
      %v213 = vlaneseq
      %v214 = vshrl.u32 %v213, 7
      %v215 = vsub.s32 0, %v214
      %v216 = vrot.slane %v211, %v215
      %v250 = vunpack.c.l.b16 %v175
      %v251 = vunpack.c.l.b16 %v176
      %v252 = vunpack.c.l.b16 %v177
      %v253 = vunpack.c.l.b16 %v178
      %v254 = vunpack.c.l.b16 %v179
      %v255 = vunpack.c.l.b16 %v180
      %v256 = vunpack.c.l.b16 %v181
      %v257 = vunpack.c.l.b16 %v182
      %v258 = vunpack.c.l.b16 %v183
      %v259 = vunpack.c.l.b16 %v184
      %v260 = vunpack.c.l.b16 %v185
      %v261 = vunpack.c.l.b16 %v186
      %v262 = vunpack.c.l.b16 %v187
      %v263 = vunpack.c.l.b16 %v188
      %v264 = vunpack.c.l.b16 %v189
      %v265 = vunpack.c.l.b16 %v190
      %v266 = vunpack.c.l.b16 %v191
      %v267 = vunpack.c.l.b16 %v192
      %v268 = vunpack.c.l.b16 %v193
      %v269 = vunpack.c.l.b16 %v194
      %v270 = vunpack.c.l.b16 %v195
      %v271 = vunpack.c.l.b16 %v196
      %v272 = vunpack.c.l.b16 %v197
      %v273 = vunpack.c.l.b16 %v198
      %v274 = vunpack.c.l.b16 %v199
      %v275 = vunpack.c.l.b16 %v200
      %v276 = vunpack.c.l.b16 %v201
      %v277 = vunpack.c.l.b16 %v202
      %v278 = vunpack.c.l.b16 %v203
      %v279 = vunpack.c.l.b16 %v204
      %v280 = vunpack.c.l.b16 %v205
      %v281 = vunpack.c.l.b16 %v206
      %v282 = vpack.c.b16 %v251, %v250
      %v283 = vpack.c.b16 %v253, %v252
      %v284 = vpack.c.b16 %v255, %v254
      %v285 = vpack.c.b16 %v257, %v256
      %v286 = vpack.c.b16 %v259, %v258
      %v287 = vpack.c.b16 %v261, %v260
      %v288 = vpack.c.b16 %v263, %v262
      %v289 = vpack.c.b16 %v265, %v264
      %v290 = vpack.c.b16 %v267, %v266
      %v291 = vpack.c.b16 %v269, %v268
      %v292 = vpack.c.b16 %v271, %v270
      %v293 = vpack.c.b16 %v273, %v272
      %v294 = vpack.c.b16 %v275, %v274
      %v295 = vpack.c.b16 %v277, %v276
      %v296 = vpack.c.b16 %v279, %v278
      %v297 = vpack.c.b16 %v281, %v280
      %v302 = vunpack.c.l.b16 %v207
      %v303 = vunpack.c.l.b16 %v208
      %v304 = vunpack.c.l.b16 %v209
      %v305 = vunpack.c.l.b16 %v210
      %v306 = vpack.c.b16 %v303, %v302
      %v307 = vpack.c.b16 %v305, %v304
      %vm309 = vcmask 220160
      %v311 = vsel %vm309, %v282, 0
      %v314 = vsel %vm309, %v283, 0
      %v317 = vsel %vm309, %v284, 0
      %v320 = vsel %vm309, %v285, 0
      %v323 = vsel %vm309, %v286, 0
      %v326 = vsel %vm309, %v287, 0
      %v329 = vsel %vm309, %v288, 0
      %v332 = vsel %vm309, %v289, 0
      %v335 = vsel %vm309, %v290, 0
      %v338 = vsel %vm309, %v291, 0
      %v341 = vsel %vm309, %v292, 0
      %v344 = vsel %vm309, %v293, 0
      %v347 = vsel %vm309, %v294, 0
      %v350 = vsel %vm309, %v295, 0
      %v353 = vsel %vm309, %v296, 0
      %v356 = vsel %vm309, %v297, 0
      %vm358 = vcmask 1044480
      %vm359 = vcmask 1045504
      %v360 = vsel %vm358, 4294967295, 65535
      %v361 = vsel %vm359, %v360, 0
      %v363 = vand.u32 %v307, %v361
      %365 = vmatprep.subr.bf16.mxu0 0
      %366 = vmatpush1.bf16.msra.mxu0 %v306
      %367 = vmatprep.subr.bf16.mxu0 0
      %368 = vmatpush1.bf16.msra.mxu0 %v363
      %369 = vmatprep.subr.bf16.mxu0 0
      %370 = vmatpush1.bf16.msra.mxu0 0
      %371 = vmatprep.subr.bf16.mxu0 0
      %372 = vmatpush1.bf16.msra.mxu0 0
      %373 = vmatprep.subr.bf16.mxu0 0
      %374 = vmatpush1.bf16.msra.mxu0 0
      %375 = vmatprep.subr.bf16.mxu0 0
      %376 = vmatpush1.bf16.msra.mxu0 0
      %377 = vmatprep.subr.bf16.mxu0 0
      %378 = vmatpush1.bf16.msra.mxu0 0
      %379 = vmatprep.subr.bf16.mxu0 0
      %380 = vmatpush1.bf16.msra.mxu0 0
      %381 = vmatprep.subr.bf16.mxu0 0
      %382 = vmatpush1.bf16.msra.mxu0 0
      %383 = vmatprep.subr.bf16.mxu0 0
      %384 = vmatpush1.bf16.msra.mxu0 0
      %385 = vmatprep.subr.bf16.mxu0 0
      %386 = vmatpush1.bf16.msra.mxu0 0
      %387 = vmatprep.subr.bf16.mxu0 0
      %388 = vmatpush1.bf16.msra.mxu0 0
      %389 = vmatprep.subr.bf16.mxu0 0
      %390 = vmatpush1.bf16.msra.mxu0 0
      %391 = vmatprep.subr.bf16.mxu0 0
      %392 = vmatpush1.bf16.msra.mxu0 0
      %393 = vmatprep.subr.bf16.mxu0 0
      %394 = vmatpush1.bf16.msra.mxu0 0
      %395 = vmatprep.subr.bf16.mxu0 0
      %396 = vmatpush1.bf16.msra.mxu0 0
      %397 = vmatprep.mubr.bf16.mxu0 0
      %398 = vmatmul.mubr.bf16.gmra.mrb[0].mxu0 %v311
      %v399 = vpop.f32.mrb[0].mxu0
      %v400 = vadd.f32 %v216, %v399
      %v401 = vpop.f32.mrb[0].mxu0
      %v402 = vpop.f32.mrb[0].mxu0
      %v403 = vadd.f32 %v216, %v402
      %v404 = vpop.f32.mrb[0].mxu0
      %405 = vmatprep.mubr.bf16.mxu0 0
      %406 = vmatmul.mubr.bf16.gmra.mrb[0].mxu0 %v314
      %v407 = vpop.f32.mrb[0].mxu0
      %v408 = vadd.f32 %v216, %v407
      %v409 = vpop.f32.mrb[0].mxu0
      %v410 = vpop.f32.mrb[0].mxu0
      %v411 = vadd.f32 %v216, %v410
      %v412 = vpop.f32.mrb[0].mxu0
      %413 = vmatprep.mubr.bf16.mxu0 0
      %414 = vmatmul.mubr.bf16.gmra.mrb[0].mxu0 %v317
      %v415 = vpop.f32.mrb[0].mxu0
      %v416 = vadd.f32 %v216, %v415
      %v417 = vpop.f32.mrb[0].mxu0
      %v418 = vpop.f32.mrb[0].mxu0
      %v419 = vadd.f32 %v216, %v418
      %v420 = vpop.f32.mrb[0].mxu0
      %421 = vmatprep.mubr.bf16.mxu0 0
      %422 = vmatmul.mubr.bf16.gmra.mrb[0].mxu0 %v320
      %v423 = vpop.f32.mrb[0].mxu0
      %v424 = vadd.f32 %v216, %v423
      %v425 = vpop.f32.mrb[0].mxu0
      %v426 = vpop.f32.mrb[0].mxu0
      %v427 = vadd.f32 %v216, %v426
      %v428 = vpop.f32.mrb[0].mxu0
      %429 = vmatprep.mubr.bf16.mxu0 0
      %430 = vmatmul.mubr.bf16.gmra.mrb[0].mxu0 %v323
      %v431 = vpop.f32.mrb[0].mxu0
      %v432 = vadd.f32 %v216, %v431
      %v433 = vpop.f32.mrb[0].mxu0
      %v434 = vpop.f32.mrb[0].mxu0
      %v435 = vadd.f32 %v216, %v434
      %v436 = vpop.f32.mrb[0].mxu0
      %437 = vmatprep.mubr.bf16.mxu0 0
      %438 = vmatmul.mubr.bf16.gmra.mrb[0].mxu0 %v326
      %v439 = vpop.f32.mrb[0].mxu0
      %v440 = vadd.f32 %v216, %v439
      %v441 = vpop.f32.mrb[0].mxu0
      %v442 = vpop.f32.mrb[0].mxu0
      %v443 = vadd.f32 %v216, %v442
      %v444 = vpop.f32.mrb[0].mxu0
      %445 = vmatprep.mubr.bf16.mxu0 0
      %446 = vmatmul.mubr.bf16.gmra.mrb[0].mxu0 %v329
      %v447 = vpop.f32.mrb[0].mxu0
      %v448 = vadd.f32 %v216, %v447
      %v449 = vpop.f32.mrb[0].mxu0
      %v450 = vpop.f32.mrb[0].mxu0
      %v451 = vadd.f32 %v216, %v450
      %v452 = vpop.f32.mrb[0].mxu0
      %453 = vmatprep.mubr.bf16.mxu0 0
      %454 = vmatmul.mubr.bf16.gmra.mrb[0].mxu0 %v332
      %v455 = vpop.f32.mrb[0].mxu0
      %v456 = vadd.f32 %v216, %v455
      %v457 = vpop.f32.mrb[0].mxu0
      %v458 = vpop.f32.mrb[0].mxu0
      %v459 = vadd.f32 %v216, %v458
      %v460 = vpop.f32.mrb[0].mxu0
      %461 = vmatprep.mubr.bf16.mxu0 0
      %462 = vmatmul.mubr.bf16.gmra.mrb[0].mxu0 %v335
      %v463 = vpop.f32.mrb[0].mxu0
      %v464 = vadd.f32 %v216, %v463
      %v465 = vpop.f32.mrb[0].mxu0
      %v466 = vpop.f32.mrb[0].mxu0
      %v467 = vadd.f32 %v216, %v466
      %v468 = vpop.f32.mrb[0].mxu0
      %469 = vmatprep.mubr.bf16.mxu0 0
      %470 = vmatmul.mubr.bf16.gmra.mrb[0].mxu0 %v338
      %v471 = vpop.f32.mrb[0].mxu0
      %v472 = vadd.f32 %v216, %v471
      %v473 = vpop.f32.mrb[0].mxu0
      %v474 = vpop.f32.mrb[0].mxu0
      %v475 = vadd.f32 %v216, %v474
      %v476 = vpop.f32.mrb[0].mxu0
      %477 = vmatprep.mubr.bf16.mxu0 0
      %478 = vmatmul.mubr.bf16.gmra.mrb[0].mxu0 %v341
      %v479 = vpop.f32.mrb[0].mxu0
      %v480 = vadd.f32 %v216, %v479
      %v481 = vpop.f32.mrb[0].mxu0
      %v482 = vpop.f32.mrb[0].mxu0
      %v483 = vadd.f32 %v216, %v482
      %v484 = vpop.f32.mrb[0].mxu0
      %485 = vmatprep.mubr.bf16.mxu0 0
      %486 = vmatmul.mubr.bf16.gmra.mrb[0].mxu0 %v344
      %v487 = vpop.f32.mrb[0].mxu0
      %v488 = vadd.f32 %v216, %v487
      %v489 = vpop.f32.mrb[0].mxu0
      %v490 = vpop.f32.mrb[0].mxu0
      %v491 = vadd.f32 %v216, %v490
      %v492 = vpop.f32.mrb[0].mxu0
      %493 = vmatprep.mubr.bf16.mxu0 0
      %494 = vmatmul.mubr.bf16.gmra.mrb[0].mxu0 %v347
      %v495 = vpop.f32.mrb[0].mxu0
      %v496 = vadd.f32 %v216, %v495
      %v497 = vpop.f32.mrb[0].mxu0
      %v498 = vpop.f32.mrb[0].mxu0
      %v499 = vadd.f32 %v216, %v498
      %v500 = vpop.f32.mrb[0].mxu0
      %501 = vmatprep.mubr.bf16.mxu0 0
      %502 = vmatmul.mubr.bf16.gmra.mrb[0].mxu0 %v350
      %v503 = vpop.f32.mrb[0].mxu0
      %v504 = vadd.f32 %v216, %v503
      %v505 = vpop.f32.mrb[0].mxu0
      %v506 = vpop.f32.mrb[0].mxu0
      %v507 = vadd.f32 %v216, %v506
      %v508 = vpop.f32.mrb[0].mxu0
      %509 = vmatprep.mubr.bf16.mxu0 0
      %510 = vmatmul.mubr.bf16.gmra.mrb[0].mxu0 %v353
      %v511 = vpop.f32.mrb[0].mxu0
      %v512 = vadd.f32 %v216, %v511
      %v513 = vpop.f32.mrb[0].mxu0
      %v514 = vpop.f32.mrb[0].mxu0
      %v515 = vadd.f32 %v216, %v514
      %v516 = vpop.f32.mrb[0].mxu0
      %517 = vmatprep.mubr.bf16.mxu0 0
      %518 = vmatmul.mubr.bf16.gmra.mrb[0].mxu0 %v356
      %v519 = vpop.f32.mrb[0].mxu0
      %v520 = vadd.f32 %v216, %v519
      %v521 = vpop.f32.mrb[0].mxu0
      %v522 = vpop.f32.mrb[0].mxu0
      %v523 = vadd.f32 %v216, %v522
      %v524 = vpop.f32.mrb[0].mxu0
      %525 = vdwg.mxu0
      %v526 = vmax.f32 %v400, 0.0
      %v527 = vmax.f32 %v403, 0.0
      %v528 = vmax.f32 %v408, 0.0
      %v529 = vmax.f32 %v411, 0.0
      %v530 = vmax.f32 %v416, 0.0
      %v531 = vmax.f32 %v419, 0.0
      %v532 = vmax.f32 %v424, 0.0
      %v533 = vmax.f32 %v427, 0.0
      %v534 = vmax.f32 %v432, 0.0
      %v535 = vmax.f32 %v435, 0.0
      %v536 = vmax.f32 %v440, 0.0
      %v537 = vmax.f32 %v443, 0.0
      %v538 = vmax.f32 %v448, 0.0
      %v539 = vmax.f32 %v451, 0.0
      %v540 = vmax.f32 %v456, 0.0
      %v541 = vmax.f32 %v459, 0.0
      %v542 = vmax.f32 %v464, 0.0
      %v543 = vmax.f32 %v467, 0.0
      %v544 = vmax.f32 %v472, 0.0
      %v545 = vmax.f32 %v475, 0.0
      %v546 = vmax.f32 %v480, 0.0
      %v547 = vmax.f32 %v483, 0.0
      %v548 = vmax.f32 %v488, 0.0
      %v549 = vmax.f32 %v491, 0.0
      %v550 = vmax.f32 %v496, 0.0
      %v551 = vmax.f32 %v499, 0.0
      %v552 = vmax.f32 %v504, 0.0
      %v553 = vmax.f32 %v507, 0.0
      %v554 = vmax.f32 %v512, 0.0
      %v555 = vmax.f32 %v515, 0.0
      %v556 = vmax.f32 %v520, 0.0
      %v557 = vmax.f32 %v523, 0.0
      %v558 = vpack.c.bf16 %v527, %v526
      %v559 = vpack.c.bf16 %v529, %v528
      %v560 = vpack.c.bf16 %v531, %v530
      %v561 = vpack.c.bf16 %v533, %v532
      %v562 = vpack.c.bf16 %v535, %v534
      %v563 = vpack.c.bf16 %v537, %v536
      %v564 = vpack.c.bf16 %v539, %v538
      %v565 = vpack.c.bf16 %v541, %v540
      %v566 = vpack.c.bf16 %v543, %v542
      %v567 = vpack.c.bf16 %v545, %v544
      %v568 = vpack.c.bf16 %v547, %v546
      %v569 = vpack.c.bf16 %v549, %v548
      %v570 = vpack.c.bf16 %v551, %v550
      %v571 = vpack.c.bf16 %v553, %v552
      %v572 = vpack.c.bf16 %v555, %v554
      %v573 = vpack.c.bf16 %v557, %v556
      %v590 = vunpack.c.l.b16 %v558
      %v591 = vunpack.c.h.b16 %v558
      %v592 = vunpack.c.l.b16 %v559
      %v593 = vunpack.c.h.b16 %v559
      %v594 = vunpack.c.l.b16 %v560
      %v595 = vunpack.c.h.b16 %v560
      %v596 = vunpack.c.l.b16 %v561
      %v597 = vunpack.c.h.b16 %v561
      %v598 = vunpack.c.l.b16 %v562
      %v599 = vunpack.c.h.b16 %v562
      %v600 = vunpack.c.l.b16 %v563
      %v601 = vunpack.c.h.b16 %v563
      %v602 = vunpack.c.l.b16 %v564
      %v603 = vunpack.c.h.b16 %v564
      %v604 = vunpack.c.l.b16 %v565
      %v605 = vunpack.c.h.b16 %v565
      %v606 = vunpack.c.l.b16 %v566
      %v607 = vunpack.c.h.b16 %v566
      %v608 = vunpack.c.l.b16 %v567
      %v609 = vunpack.c.h.b16 %v567
      %v610 = vunpack.c.l.b16 %v568
      %v611 = vunpack.c.h.b16 %v568
      %v612 = vunpack.c.l.b16 %v569
      %v613 = vunpack.c.h.b16 %v569
      %v614 = vunpack.c.l.b16 %v570
      %v615 = vunpack.c.h.b16 %v570
      %v616 = vunpack.c.l.b16 %v571
      %v617 = vunpack.c.h.b16 %v571
      %v618 = vunpack.c.l.b16 %v572
      %v619 = vunpack.c.h.b16 %v572
      %v620 = vunpack.c.l.b16 %v573
      %v621 = vunpack.c.h.b16 %v573
      %v622 = vpack.c.b16 %v590, %v590
      %v623 = vpack.c.b16 %v591, %v591
      %v624 = vpack.c.b16 %v592, %v592
      %v625 = vpack.c.b16 %v593, %v593
      %v626 = vpack.c.b16 %v594, %v594
      %v627 = vpack.c.b16 %v595, %v595
      %v628 = vpack.c.b16 %v596, %v596
      %v629 = vpack.c.b16 %v597, %v597
      %v630 = vpack.c.b16 %v598, %v598
      %v631 = vpack.c.b16 %v599, %v599
      %v632 = vpack.c.b16 %v600, %v600
      %v633 = vpack.c.b16 %v601, %v601
      %v634 = vpack.c.b16 %v602, %v602
      %v635 = vpack.c.b16 %v603, %v603
      %v636 = vpack.c.b16 %v604, %v604
      %v637 = vpack.c.b16 %v605, %v605
      %v638 = vpack.c.b16 %v606, %v606
      %v639 = vpack.c.b16 %v607, %v607
      %v640 = vpack.c.b16 %v608, %v608
      %v641 = vpack.c.b16 %v609, %v609
      %v642 = vpack.c.b16 %v610, %v610
      %v643 = vpack.c.b16 %v611, %v611
      %v644 = vpack.c.b16 %v612, %v612
      %v645 = vpack.c.b16 %v613, %v613
      %v646 = vpack.c.b16 %v614, %v614
      %v647 = vpack.c.b16 %v615, %v615
      %v648 = vpack.c.b16 %v616, %v616
      %v649 = vpack.c.b16 %v617, %v617
      %v650 = vpack.c.b16 %v618, %v618
      %v651 = vpack.c.b16 %v619, %v619
      %v652 = vpack.c.b16 %v620, %v620
      %v653 = vpack.c.b16 %v621, %v621
      %vm686 = vcmask 519168
      %687 = vst.msk [vmem:[%s172] sm:$0xf] %vm686, %v622
      %688 = vst.msk [vmem:[%s172 + $0x4] sm:$0xf] %vm686, %v623
      %689 = vst.msk [vmem:[%s172 + $0x8] sm:$0xf] %vm686, %v624
      %690 = vst.msk [vmem:[%s172 + $0xc] sm:$0xf] %vm686, %v625
      %691 = vst.msk [vmem:[%s172 + $0x10] sm:$0xf] %vm686, %v626
      %692 = vst.msk [vmem:[%s172 + $0x14] sm:$0xf] %vm686, %v627
      %693 = vst.msk [vmem:[%s172 + $0x18] sm:$0xf] %vm686, %v628
      %694 = vst.msk [vmem:[%s172 + $0x1c] sm:$0xf] %vm686, %v629
      %695 = vst.msk [vmem:[%s172 + $0x20] sm:$0xf] %vm686, %v630
      %696 = vst.msk [vmem:[%s172 + $0x24] sm:$0xf] %vm686, %v631
      %697 = vst.msk [vmem:[%s172 + $0x28] sm:$0xf] %vm686, %v632
      %698 = vst.msk [vmem:[%s172 + $0x2c] sm:$0xf] %vm686, %v633
      %699 = vst.msk [vmem:[%s172 + $0x30] sm:$0xf] %vm686, %v634
      %700 = vst.msk [vmem:[%s172 + $0x34] sm:$0xf] %vm686, %v635
      %701 = vst.msk [vmem:[%s172 + $0x38] sm:$0xf] %vm686, %v636
      %702 = vst.msk [vmem:[%s172 + $0x3c] sm:$0xf] %vm686, %v637
      %703 = vst.msk [vmem:[%s172 + $0x40] sm:$0xf] %vm686, %v638
      %704 = vst.msk [vmem:[%s172 + $0x44] sm:$0xf] %vm686, %v639
      %705 = vst.msk [vmem:[%s172 + $0x48] sm:$0xf] %vm686, %v640
      %706 = vst.msk [vmem:[%s172 + $0x4c] sm:$0xf] %vm686, %v641
      %707 = vst.msk [vmem:[%s172 + $0x50] sm:$0xf] %vm686, %v642
      %708 = vst.msk [vmem:[%s172 + $0x54] sm:$0xf] %vm686, %v643
      %709 = vst.msk [vmem:[%s172 + $0x58] sm:$0xf] %vm686, %v644
      %710 = vst.msk [vmem:[%s172 + $0x5c] sm:$0xf] %vm686, %v645
      %711 = vst.msk [vmem:[%s172 + $0x60] sm:$0xf] %vm686, %v646
      %712 = vst.msk [vmem:[%s172 + $0x64] sm:$0xf] %vm686, %v647
      %713 = vst.msk [vmem:[%s172 + $0x68] sm:$0xf] %vm686, %v648
      %714 = vst.msk [vmem:[%s172 + $0x6c] sm:$0xf] %vm686, %v649
      %715 = vst.msk [vmem:[%s172 + $0x70] sm:$0xf] %vm686, %v650
      %716 = vst.msk [vmem:[%s172 + $0x74] sm:$0xf] %vm686, %v651
      %717 = vst.msk [vmem:[%s172 + $0x78] sm:$0xf] %vm686, %v652
      %718 = vst.msk [vmem:[%s172 + $0x7c] sm:$0xf] %vm686, %v653
      %s719 = smul.u32 32, %s14
      %p720 = scmp.lt.s32.totalorder %s719, 63
      %s721 = scalar_select %p720, %s719, 63
      %s722 = smul.addr %s721, 4
      %s723 = scalar_lea.vmem %s3, %s722
      // Predicated region
      $region33: #{hrnet_forward.4} parent=31 // pred_check
        %p724 = pneg %p100
      $region34: #{hrnet_forward.4} parent=31 // pred_check_branch
        %726 = sbr.rel (%p724) target = $region36
      $region35: #{hrnet_forward.4} parent=31 // pred_region
        %s727 = smul.u32 32, %s14
      $region36: #{hrnet_forward.4} parent=31 // pred_fallthru
        _
    $region32: #{hrnet_forward.4} parent=5 // pred_fallthru
      _
    %p728 = scmp.le.s32.totalorder 2, %s9
    // Predicated region
    $region37: #{hrnet_forward.4} parent=5 // pred_check
      %p729 = pneg %p728
    $region38: #{hrnet_forward.4} parent=5 // pred_check_branch
      %731 = sbr.rel (%p729) target = $region40
    $region39: #{hrnet_forward.4} parent=5 // pred_region
      %s732 = ssub.s32 %s9, 2
      // Predicated region
      $region41: #{hrnet_forward.4} parent=39 // pred_check
        %p733 = pneg %p106
      $region42: #{hrnet_forward.4} parent=39 // pred_check_branch
        %735 = sbr.rel (%p733) target = $region44
      $region43: #{hrnet_forward.4} parent=39 // pred_region
        %s736 = smul.u32 32, %s15
        %p737 = scmp.lt.s32.totalorder %s736, 63
        %s738 = scalar_select %p737, %s736, 63
        %s739 = smul.addr %s738, 4
        %s740 = scalar_lea.vmem %s3, %s739
      $region44: #{hrnet_forward.4} parent=39 // pred_fallthru
        _
    $region40: #{hrnet_forward.4} parent=5 // pred_fallthru
      _
  $region6: #{hrnet_forward.4} parent=0 // loop_footer
    %s13 = sadd.s32 1, %s9
  $region7: #{hrnet_forward.4} parent=0 // loop_footer_branch
    %8 = sbr.rel target = $region3
  $region8: #{hrnet_forward.4} parent=0 // loop_exit
    _

// kernel: hrnet_forward.5
$region0: #{hrnet_forward.5}
  #allocation0 [shape = 'u32[]', space=smem, size = 0x4, offset = 0x4, fixed_abs, tag = 'smem constant byte address 0x4 - core index']
  #allocation1 [shape = 'u32[144,128]{1,0:T(1,128)}', space=vmem, size = 0x12000, scoped, tag = 'internal scratch']
  %s0 = inlined_call_operand.vmem [shape: bf16[128,576], index: 0, kind: input, shape index: {}]
  %s1 = inlined_call_operand.vmem [shape: bf16[576,64], index: 1, kind: input, shape index: {}]
  %s2 = inlined_call_operand.vmem [shape: f32[1,64], index: 2, kind: input, shape index: {}]
  %s3 = inlined_call_operand.vmem [shape: bf16[128,64], index: 3, kind: output, shape index: {}]
  %s4 = sld [smem:[#allocation0]]
  $region22: #{hrnet_forward.5} parent=0
    _
  %s6 = ssub.s32 1, %s4
  %s7 = scalar_select 0, %s6, %s4
  // Predicated region
  $region2: #{hrnet_forward.5} parent=0 // pred_check
    _
  $region3: #{hrnet_forward.5} parent=0 // pred_check_branch
    %9 = sbr.rel (0) target = $region5
  $region4: #{hrnet_forward.5} parent=0 // pred_region
    _
  $region5: #{hrnet_forward.5} parent=0 // pred_fallthru
    _
  // Predicated region
  $region6: #{hrnet_forward.5} parent=0 // pred_check
    _
  $region7: #{hrnet_forward.5} parent=0 // pred_check_branch
    %11 = sbr.rel (0) target = $region9
  $region8: #{hrnet_forward.5} parent=0 // pred_region
    _
  $region9: #{hrnet_forward.5} parent=0 // pred_fallthru
    _
  // Predicated region
  $region10: #{hrnet_forward.5} parent=0 // pred_check
    _
  $region11: #{hrnet_forward.5} parent=0 // pred_check_branch
    %13 = sbr.rel (0) target = $region13
  $region12: #{hrnet_forward.5} parent=0 // pred_region
    _
  $region13: #{hrnet_forward.5} parent=0 // pred_fallthru
    _
  %v15 = vld [vmem:[%s0] sm:$0xff]
  %v16 = vld [vmem:[%s0 + $0x8] sm:$0xff]
  %v17 = vld [vmem:[%s0 + $0x10] sm:$0xf]
  %v18 = vld [vmem:[%s0 + $0x14] sm:$0xff]
  %v19 = vld [vmem:[%s0 + $0x1c] sm:$0xff]
  %v20 = vld [vmem:[%s0 + $0x24] sm:$0xf]
  %v21 = vld [vmem:[%s0 + $0x28] sm:$0xff]
  %v22 = vld [vmem:[%s0 + $0x30] sm:$0xff]
  %v23 = vld [vmem:[%s0 + $0x38] sm:$0xf]
  %v24 = vld [vmem:[%s0 + $0x3c] sm:$0xff]
  %v25 = vld [vmem:[%s0 + $0x44] sm:$0xff]
  %v26 = vld [vmem:[%s0 + $0x4c] sm:$0xf]
  %v27 = vld [vmem:[%s0 + $0x50] sm:$0xff]
  %v28 = vld [vmem:[%s0 + $0x58] sm:$0xff]
  %v29 = vld [vmem:[%s0 + $0x60] sm:$0xf]
  %v30 = vld [vmem:[%s0 + $0x64] sm:$0xff]
  %v31 = vld [vmem:[%s0 + $0x6c] sm:$0xff]
  %v32 = vld [vmem:[%s0 + $0x74] sm:$0xf]
  %v33 = vld [vmem:[%s0 + $0x78] sm:$0xff]
  %v34 = vld [vmem:[%s0 + $0x80] sm:$0xff]
  %v35 = vld [vmem:[%s0 + $0x88] sm:$0xf]
  %v36 = vld [vmem:[%s0 + $0x8c] sm:$0xff]
  %v37 = vld [vmem:[%s0 + $0x94] sm:$0xff]
  %v38 = vld [vmem:[%s0 + $0x9c] sm:$0xf]
  %v39 = vld [vmem:[%s0 + $0xa0] sm:$0xff]
  %v40 = vld [vmem:[%s0 + $0xa8] sm:$0xff]
  %v41 = vld [vmem:[%s0 + $0xb0] sm:$0xf]
  %v42 = vld [vmem:[%s0 + $0xb4] sm:$0xff]
  %v43 = vld [vmem:[%s0 + $0xbc] sm:$0xff]
  %v44 = vld [vmem:[%s0 + $0xc4] sm:$0xf]
  %v45 = vld [vmem:[%s0 + $0xc8] sm:$0xff]
  %v46 = vld [vmem:[%s0 + $0xd0] sm:$0xff]
  %v47 = vld [vmem:[%s0 + $0xd8] sm:$0xf]
  %v48 = vld [vmem:[%s0 + $0xdc] sm:$0xff]
  %v49 = vld [vmem:[%s0 + $0xe4] sm:$0xff]
  %v50 = vld [vmem:[%s0 + $0xec] sm:$0xf]
  %v51 = vld [vmem:[%s0 + $0xf0] sm:$0xff]
  %v52 = vld [vmem:[%s0 + $0xf8] sm:$0xff]
  %v53 = vld [vmem:[%s0 + $0x100] sm:$0xf]
  %v54 = vld [vmem:[%s0 + $0x104] sm:$0xff]
  %v55 = vld [vmem:[%s0 + $0x10c] sm:$0xff]
  %v56 = vld [vmem:[%s0 + $0x114] sm:$0xf]
  %v57 = vld [vmem:[%s0 + $0x118] sm:$0xff]
  %v58 = vld [vmem:[%s0 + $0x120] sm:$0xff]
  %v59 = vld [vmem:[%s0 + $0x128] sm:$0xf]
  %v60 = vld [vmem:[%s0 + $0x12c] sm:$0xff]
  %v61 = vld [vmem:[%s0 + $0x134] sm:$0xff]
  %v62 = vld [vmem:[%s0 + $0x13c] sm:$0xf]
  %v63 = vld [vmem:[%s1] sm:$0xf]
  %v64 = vld [vmem:[%s1 + $0x4] sm:$0xf]
  %v65 = vld [vmem:[%s1 + $0x8] sm:$0xf]
  %v66 = vld [vmem:[%s1 + $0xc] sm:$0xf]
  %v67 = vld [vmem:[%s1 + $0x10] sm:$0xf]
  %v68 = vld [vmem:[%s1 + $0x14] sm:$0xf]
  %v69 = vld [vmem:[%s1 + $0x18] sm:$0xf]
  %v70 = vld [vmem:[%s1 + $0x1c] sm:$0xf]
  %v71 = vld [vmem:[%s1 + $0x20] sm:$0xf]
  %v72 = vld [vmem:[%s1 + $0x24] sm:$0xf]
  %v73 = vld [vmem:[%s1 + $0x28] sm:$0xf]
  %v74 = vld [vmem:[%s1 + $0x2c] sm:$0xf]
  %v75 = vld [vmem:[%s1 + $0x30] sm:$0xf]
  %v76 = vld [vmem:[%s1 + $0x34] sm:$0xf]
  %v77 = vld [vmem:[%s1 + $0x38] sm:$0xf]
  %v78 = vld [vmem:[%s1 + $0x3c] sm:$0xf]
  %v79 = vld [vmem:[%s1 + $0x40] sm:$0xf]
  %v80 = vld [vmem:[%s1 + $0x44] sm:$0xf]
  %v81 = vld [vmem:[%s1 + $0x48] sm:$0xf]
  %v82 = vld [vmem:[%s1 + $0x4c] sm:$0xf]
  %v83 = vld [vmem:[%s1 + $0x50] sm:$0xf]
  %v84 = vld [vmem:[%s1 + $0x54] sm:$0xf]
  %v85 = vld [vmem:[%s1 + $0x58] sm:$0xf]
  %v86 = vld [vmem:[%s1 + $0x5c] sm:$0xf]
  %v87 = vld [vmem:[%s1 + $0x60] sm:$0xf]
  %v88 = vld [vmem:[%s1 + $0x64] sm:$0xf]
  %v89 = vld [vmem:[%s1 + $0x68] sm:$0xf]
  %v90 = vld [vmem:[%s1 + $0x6c] sm:$0xf]
  %v91 = vld [vmem:[%s1 + $0x70] sm:$0xf]
  %v92 = vld [vmem:[%s1 + $0x74] sm:$0xf]
  %v93 = vld [vmem:[%s1 + $0x78] sm:$0xf]
  %v94 = vld [vmem:[%s1 + $0x7c] sm:$0xf]
  %v95 = vld [vmem:[%s1 + $0x80] sm:$0xf]
  %v96 = vld [vmem:[%s1 + $0x84] sm:$0xf]
  %v97 = vld [vmem:[%s1 + $0x88] sm:$0xf]
  %v98 = vld [vmem:[%s1 + $0x8c] sm:$0xf]
  %v99 = vld [vmem:[%s1 + $0x90] sm:$0xf]
  %v100 = vld [vmem:[%s1 + $0x94] sm:$0xf]
  %v101 = vld [vmem:[%s1 + $0x98] sm:$0xf]
  %v102 = vld [vmem:[%s1 + $0x9c] sm:$0xf]
  %v103 = vld [vmem:[%s1 + $0xa0] sm:$0xf]
  %v104 = vld [vmem:[%s1 + $0xa4] sm:$0xf]
  %v105 = vld [vmem:[%s1 + $0xa8] sm:$0xf]
  %v106 = vld [vmem:[%s1 + $0xac] sm:$0xf]
  %v107 = vld [vmem:[%s1 + $0xb0] sm:$0xf]
  %v108 = vld [vmem:[%s1 + $0xb4] sm:$0xf]
  %v109 = vld [vmem:[%s1 + $0xb8] sm:$0xf]
  %v110 = vld [vmem:[%s1 + $0xbc] sm:$0xf]
  %v111 = vld [vmem:[%s1 + $0xc0] sm:$0xf]
  %v112 = vld [vmem:[%s1 + $0xc4] sm:$0xf]
  %v113 = vld [vmem:[%s1 + $0xc8] sm:$0xf]
  %v114 = vld [vmem:[%s1 + $0xcc] sm:$0xf]
  %v115 = vld [vmem:[%s1 + $0xd0] sm:$0xf]
  %v116 = vld [vmem:[%s1 + $0xd4] sm:$0xf]
  %v117 = vld [vmem:[%s1 + $0xd8] sm:$0xf]
  %v118 = vld [vmem:[%s1 + $0xdc] sm:$0xf]
  %v119 = vld [vmem:[%s1 + $0xe0] sm:$0xf]
  %v120 = vld [vmem:[%s1 + $0xe4] sm:$0xf]
  %v121 = vld [vmem:[%s1 + $0xe8] sm:$0xf]
  %v122 = vld [vmem:[%s1 + $0xec] sm:$0xf]
  %v123 = vld [vmem:[%s1 + $0xf0] sm:$0xf]
  %v124 = vld [vmem:[%s1 + $0xf4] sm:$0xf]
  %v125 = vld [vmem:[%s1 + $0xf8] sm:$0xf]
  %v126 = vld [vmem:[%s1 + $0xfc] sm:$0xf]
  %v127 = vld [vmem:[%s1 + $0x100] sm:$0xf]
  %v128 = vld [vmem:[%s1 + $0x104] sm:$0xf]
  %v129 = vld [vmem:[%s1 + $0x108] sm:$0xf]
  %v130 = vld [vmem:[%s1 + $0x10c] sm:$0xf]
  %v131 = vld [vmem:[%s1 + $0x110] sm:$0xf]
  %v132 = vld [vmem:[%s1 + $0x114] sm:$0xf]
  %v133 = vld [vmem:[%s1 + $0x118] sm:$0xf]
  %v134 = vld [vmem:[%s1 + $0x11c] sm:$0xf]
  %v135 = vld [vmem:[%s2] sm:$0x1]
  %v137 = vlaneseq
  %v138 = vshrl.u32 %v137, 7
  %v139 = vsub.s32 0, %v138
  %v140 = vrot.slane %v135, %v139
  %v190 = vunpack.c.l.b16 %v15
  %v191 = vunpack.c.h.b16 %v15
  %v192 = vunpack.c.l.b16 %v16
  %v193 = vunpack.c.h.b16 %v16
  %v194 = vunpack.c.l.b16 %v17
  %v195 = vunpack.c.l.b16 %v18
  %v196 = vunpack.c.h.b16 %v18
  %v197 = vunpack.c.l.b16 %v19
  %v198 = vunpack.c.h.b16 %v19
  %v199 = vunpack.c.l.b16 %v20
  %v200 = vunpack.c.l.b16 %v21
  %v201 = vunpack.c.h.b16 %v21
  %v202 = vunpack.c.l.b16 %v22
  %v203 = vunpack.c.h.b16 %v22
  %v204 = vunpack.c.l.b16 %v23
  %v205 = vunpack.c.l.b16 %v24
  %v206 = vunpack.c.h.b16 %v24
  %v207 = vunpack.c.l.b16 %v25
  %v208 = vunpack.c.h.b16 %v25
  %v209 = vunpack.c.l.b16 %v26
  %v210 = vunpack.c.l.b16 %v27
  %v211 = vunpack.c.h.b16 %v27
  %v212 = vunpack.c.l.b16 %v28
  %v213 = vunpack.c.h.b16 %v28
  %v214 = vunpack.c.l.b16 %v29
  %v215 = vunpack.c.l.b16 %v30
  %v216 = vunpack.c.h.b16 %v30
  %v217 = vunpack.c.l.b16 %v31
  %v218 = vunpack.c.h.b16 %v31
  %v219 = vunpack.c.l.b16 %v32
  %v220 = vunpack.c.l.b16 %v33
  %v221 = vunpack.c.h.b16 %v33
  %v222 = vunpack.c.l.b16 %v34
  %v223 = vunpack.c.h.b16 %v34
  %v224 = vunpack.c.l.b16 %v35
  %v225 = vunpack.c.l.b16 %v36
  %v226 = vunpack.c.h.b16 %v36
  %v227 = vunpack.c.l.b16 %v37
  %v228 = vunpack.c.h.b16 %v37
  %v229 = vunpack.c.l.b16 %v38
  %v230 = vunpack.c.l.b16 %v39
  %v231 = vunpack.c.h.b16 %v39
  %v232 = vunpack.c.l.b16 %v40
  %v233 = vunpack.c.h.b16 %v40
  %v234 = vunpack.c.l.b16 %v41
  %v235 = vunpack.c.l.b16 %v42
  %v236 = vunpack.c.h.b16 %v42
  %v237 = vunpack.c.l.b16 %v43
  %v238 = vunpack.c.h.b16 %v43
  %v239 = vunpack.c.l.b16 %v44
  %v240 = vunpack.c.l.b16 %v45
  %v241 = vunpack.c.h.b16 %v45
  %v242 = vunpack.c.l.b16 %v46
  %v243 = vunpack.c.h.b16 %v46
  %v244 = vunpack.c.l.b16 %v47
  %v245 = vunpack.c.l.b16 %v48
  %v246 = vunpack.c.h.b16 %v48
  %v247 = vunpack.c.l.b16 %v49
  %v248 = vunpack.c.h.b16 %v49
  %v249 = vunpack.c.l.b16 %v50
  %v250 = vunpack.c.l.b16 %v51
  %v251 = vunpack.c.h.b16 %v51
  %v252 = vunpack.c.l.b16 %v52
  %v253 = vunpack.c.h.b16 %v52
  %v254 = vunpack.c.l.b16 %v53
  %v255 = vunpack.c.l.b16 %v54
  %v256 = vunpack.c.h.b16 %v54
  %v257 = vunpack.c.l.b16 %v55
  %v258 = vunpack.c.h.b16 %v55
  %v259 = vunpack.c.l.b16 %v56
  %v260 = vunpack.c.l.b16 %v57
  %v261 = vunpack.c.h.b16 %v57
  %v262 = vunpack.c.l.b16 %v58
  %v263 = vunpack.c.h.b16 %v58
  %v264 = vunpack.c.l.b16 %v59
  %v265 = vunpack.c.l.b16 %v60
  %v266 = vunpack.c.h.b16 %v60
  %v267 = vunpack.c.l.b16 %v61
  %v268 = vunpack.c.h.b16 %v61
  %v269 = vunpack.c.l.b16 %v62
  %v270 = vpack.c.b16 %v195, %v190
  %v271 = vpack.c.b16 %v196, %v191
  %v272 = vpack.c.b16 %v197, %v192
  %v273 = vpack.c.b16 %v198, %v193
  %v274 = vpack.c.b16 %v199, %v194
  %v275 = vpack.c.b16 %v205, %v200
  %v276 = vpack.c.b16 %v206, %v201
  %v277 = vpack.c.b16 %v207, %v202
  %v278 = vpack.c.b16 %v208, %v203
  %v279 = vpack.c.b16 %v209, %v204
  %v280 = vpack.c.b16 %v215, %v210
  %v281 = vpack.c.b16 %v216, %v211
  %v282 = vpack.c.b16 %v217, %v212
  %v283 = vpack.c.b16 %v218, %v213
  %v284 = vpack.c.b16 %v219, %v214
  %v285 = vpack.c.b16 %v225, %v220
  %v286 = vpack.c.b16 %v226, %v221
  %v287 = vpack.c.b16 %v227, %v222
  %v288 = vpack.c.b16 %v228, %v223
  %v289 = vpack.c.b16 %v229, %v224
  %v290 = vpack.c.b16 %v235, %v230
  %v291 = vpack.c.b16 %v236, %v231
  %v292 = vpack.c.b16 %v237, %v232
  %v293 = vpack.c.b16 %v238, %v233
  %v294 = vpack.c.b16 %v239, %v234
  %v295 = vpack.c.b16 %v245, %v240
  %v296 = vpack.c.b16 %v246, %v241
  %v297 = vpack.c.b16 %v247, %v242
  %v298 = vpack.c.b16 %v248, %v243
  %v299 = vpack.c.b16 %v249, %v244
  %v300 = vpack.c.b16 %v255, %v250
  %v301 = vpack.c.b16 %v256, %v251
  %v302 = vpack.c.b16 %v257, %v252
  %v303 = vpack.c.b16 %v258, %v253
  %v304 = vpack.c.b16 %v259, %v254
  %v305 = vpack.c.b16 %v265, %v260
  %v306 = vpack.c.b16 %v266, %v261
  %v307 = vpack.c.b16 %v267, %v262
  %v308 = vpack.c.b16 %v268, %v263
  %v309 = vpack.c.b16 %v269, %v264
  %v414 = vunpack.c.l.b16 %v63
  %v415 = vunpack.c.l.b16 %v64
  %v416 = vunpack.c.l.b16 %v65
  %v417 = vunpack.c.l.b16 %v66
  %v418 = vunpack.c.l.b16 %v67
  %v419 = vunpack.c.l.b16 %v68
  %v420 = vunpack.c.l.b16 %v69
  %v421 = vunpack.c.l.b16 %v70
  %v422 = vunpack.c.l.b16 %v71
  %v423 = vunpack.c.l.b16 %v72
  %v424 = vunpack.c.l.b16 %v73
  %v425 = vunpack.c.l.b16 %v74
  %v426 = vunpack.c.l.b16 %v75
  %v427 = vunpack.c.l.b16 %v76
  %v428 = vunpack.c.l.b16 %v77
  %v429 = vunpack.c.l.b16 %v78
  %v430 = vunpack.c.l.b16 %v79
  %v431 = vunpack.c.l.b16 %v80
  %v432 = vunpack.c.l.b16 %v81
  %v433 = vunpack.c.l.b16 %v82
  %v434 = vunpack.c.l.b16 %v83
  %v435 = vunpack.c.l.b16 %v84
  %v436 = vunpack.c.l.b16 %v85
  %v437 = vunpack.c.l.b16 %v86
  %v438 = vunpack.c.l.b16 %v87
  %v439 = vunpack.c.l.b16 %v88
  %v440 = vunpack.c.l.b16 %v89
  %v441 = vunpack.c.l.b16 %v90
  %v442 = vunpack.c.l.b16 %v91
  %v443 = vunpack.c.l.b16 %v92
  %v444 = vunpack.c.l.b16 %v93
  %v445 = vunpack.c.l.b16 %v94
  %v446 = vunpack.c.l.b16 %v95
  %v447 = vunpack.c.l.b16 %v96
  %v448 = vunpack.c.l.b16 %v97
  %v449 = vunpack.c.l.b16 %v98
  %v450 = vunpack.c.l.b16 %v99
  %v451 = vunpack.c.l.b16 %v100
  %v452 = vunpack.c.l.b16 %v101
  %v453 = vunpack.c.l.b16 %v102
  %v454 = vunpack.c.l.b16 %v103
  %v455 = vunpack.c.l.b16 %v104
  %v456 = vunpack.c.l.b16 %v105
  %v457 = vunpack.c.l.b16 %v106
  %v458 = vunpack.c.l.b16 %v107
  %v459 = vunpack.c.l.b16 %v108
  %v460 = vunpack.c.l.b16 %v109
  %v461 = vunpack.c.l.b16 %v110
  %v462 = vunpack.c.l.b16 %v111
  %v463 = vunpack.c.l.b16 %v112
  %v464 = vunpack.c.l.b16 %v113
  %v465 = vunpack.c.l.b16 %v114
  %v466 = vunpack.c.l.b16 %v115
  %v467 = vunpack.c.l.b16 %v116
  %v468 = vunpack.c.l.b16 %v117
  %v469 = vunpack.c.l.b16 %v118
  %v470 = vunpack.c.l.b16 %v119
  %v471 = vunpack.c.l.b16 %v120
  %v472 = vunpack.c.l.b16 %v121
  %v473 = vunpack.c.l.b16 %v122
  %v474 = vunpack.c.l.b16 %v123
  %v475 = vunpack.c.l.b16 %v124
  %v476 = vunpack.c.l.b16 %v125
  %v477 = vunpack.c.l.b16 %v126
  %v478 = vunpack.c.l.b16 %v127
  %v479 = vunpack.c.l.b16 %v128
  %v480 = vunpack.c.l.b16 %v129
  %v481 = vunpack.c.l.b16 %v130
  %v482 = vunpack.c.l.b16 %v131
  %v483 = vunpack.c.l.b16 %v132
  %v484 = vunpack.c.l.b16 %v133
  %v485 = vunpack.c.l.b16 %v134
  %v486 = vpack.c.b16 %v415, %v414
  %v487 = vpack.c.b16 %v417, %v416
  %v488 = vpack.c.b16 %v419, %v418
  %v489 = vpack.c.b16 %v421, %v420
  %v490 = vpack.c.b16 %v423, %v422
  %v491 = vpack.c.b16 %v425, %v424
  %v492 = vpack.c.b16 %v427, %v426
  %v493 = vpack.c.b16 %v429, %v428
  %v494 = vpack.c.b16 %v431, %v430
  %v495 = vpack.c.b16 %v433, %v432
  %v496 = vpack.c.b16 %v435, %v434
  %v497 = vpack.c.b16 %v437, %v436
  %v498 = vpack.c.b16 %v439, %v438
  %v499 = vpack.c.b16 %v441, %v440
  %v500 = vpack.c.b16 %v443, %v442
  %v501 = vpack.c.b16 %v445, %v444
  %v502 = vpack.c.b16 %v447, %v446
  %v503 = vpack.c.b16 %v449, %v448
  %v504 = vpack.c.b16 %v451, %v450
  %v505 = vpack.c.b16 %v453, %v452
  %v506 = vpack.c.b16 %v455, %v454
  %v507 = vpack.c.b16 %v457, %v456
  %v508 = vpack.c.b16 %v459, %v458
  %v509 = vpack.c.b16 %v461, %v460
  %v510 = vpack.c.b16 %v463, %v462
  %v511 = vpack.c.b16 %v465, %v464
  %v512 = vpack.c.b16 %v467, %v466
  %v513 = vpack.c.b16 %v469, %v468
  %v514 = vpack.c.b16 %v471, %v470
  %v515 = vpack.c.b16 %v473, %v472
  %v516 = vpack.c.b16 %v475, %v474
  %v517 = vpack.c.b16 %v477, %v476
  %v518 = vpack.c.b16 %v479, %v478
  %v519 = vpack.c.b16 %v481, %v480
  %v520 = vpack.c.b16 %v483, %v482
  %v521 = vpack.c.b16 %v485, %v484
  %vm558 = vcmask 523264
  %v560 = vsel %vm558, %v274, 0
  %v563 = vsel %vm558, %v279, 0
  %v566 = vsel %vm558, %v284, 0
  %v569 = vsel %vm558, %v289, 0
  %v572 = vsel %vm558, %v294, 0
  %v575 = vsel %vm558, %v299, 0
  %v578 = vsel %vm558, %v304, 0
  %v581 = vsel %vm558, %v309, 0
  %583 = vmatprep.subr.bf16.mxu0 0
  %584 = vmatpush1.bf16.msra.mxu0 %v486
  %585 = vmatprep.subr.bf16.mxu0 0
  %586 = vmatpush1.bf16.msra.mxu0 %v487
  %587 = vmatprep.subr.bf16.mxu0 0
  %588 = vmatpush1.bf16.msra.mxu0 %v488
  %589 = vmatprep.subr.bf16.mxu0 0
  %590 = vmatpush1.bf16.msra.mxu0 %v489
  %591 = vmatprep.subr.bf16.mxu0 0
  %592 = vmatpush1.bf16.msra.mxu0 %v490
  %593 = vmatprep.subr.bf16.mxu0 0
  %594 = vmatpush1.bf16.msra.mxu0 %v491
  %595 = vmatprep.subr.bf16.mxu0 0
  %596 = vmatpush1.bf16.msra.mxu0 %v492
  %597 = vmatprep.subr.bf16.mxu0 0
  %598 = vmatpush1.bf16.msra.mxu0 %v493
  %599 = vmatprep.subr.bf16.mxu0 0
  %600 = vmatpush1.bf16.msra.mxu0 %v494
  %601 = vmatprep.subr.bf16.mxu0 0
  %602 = vmatpush1.bf16.msra.mxu0 %v495
  %603 = vmatprep.subr.bf16.mxu0 0
  %604 = vmatpush1.bf16.msra.mxu0 %v496
  %605 = vmatprep.subr.bf16.mxu0 0
  %606 = vmatpush1.bf16.msra.mxu0 %v497
  %607 = vmatprep.subr.bf16.mxu0 0
  %608 = vmatpush1.bf16.msra.mxu0 %v498
  %609 = vmatprep.subr.bf16.mxu0 0
  %610 = vmatpush1.bf16.msra.mxu0 %v499
  %611 = vmatprep.subr.bf16.mxu0 0
  %612 = vmatpush1.bf16.msra.mxu0 %v500
  %613 = vmatprep.subr.bf16.mxu0 0
  %614 = vmatpush1.bf16.msra.mxu0 %v501
  %615 = vmatprep.mubr.bf16.mxu0 %v271
  %616 = vmatmul.mubr.bf16.gmra.mrb[0].mxu0 %v270
  %v617 = vpop.f32.mrb[0].mxu0
  %v618 = vadd.f32 %v140, %v617
  %v619 = vpop.f32.mrb[0].mxu0
  %v620 = vpop.f32.mrb[0].mxu0
  %v621 = vadd.f32 %v140, %v620
  %v622 = vpop.f32.mrb[0].mxu0
  %623 = vmatprep.mubr.bf16.mxu0 %v276
  %624 = vmatmul.mubr.bf16.gmra.mrb[0].mxu0 %v275
  %v625 = vpop.f32.mrb[0].mxu0
  %v626 = vadd.f32 %v140, %v625
  %v627 = vpop.f32.mrb[0].mxu0
  %v628 = vpop.f32.mrb[0].mxu0
  %v629 = vadd.f32 %v140, %v628
  %v630 = vpop.f32.mrb[0].mxu0
  %631 = vmatprep.mubr.bf16.mxu0 %v281
  %632 = vmatmul.mubr.bf16.gmra.mrb[0].mxu0 %v280
  %v633 = vpop.f32.mrb[0].mxu0
  %v634 = vadd.f32 %v140, %v633
  %v635 = vpop.f32.mrb[0].mxu0
  %v636 = vpop.f32.mrb[0].mxu0
  %v637 = vadd.f32 %v140, %v636
  %v638 = vpop.f32.mrb[0].mxu0
  %639 = vmatprep.mubr.bf16.mxu0 %v286
  %640 = vmatmul.mubr.bf16.gmra.mrb[0].mxu0 %v285
  %v641 = vpop.f32.mrb[0].mxu0
  %v642 = vadd.f32 %v140, %v641
  %v643 = vpop.f32.mrb[0].mxu0
  %v644 = vpop.f32.mrb[0].mxu0
  %v645 = vadd.f32 %v140, %v644
  %v646 = vpop.f32.mrb[0].mxu0
  %647 = vmatprep.mubr.bf16.mxu0 %v291
  %648 = vmatmul.mubr.bf16.gmra.mrb[0].mxu0 %v290
  %v649 = vpop.f32.mrb[0].mxu0
  %v650 = vadd.f32 %v140, %v649
  %v651 = vpop.f32.mrb[0].mxu0
  %v652 = vpop.f32.mrb[0].mxu0
  %v653 = vadd.f32 %v140, %v652
  %v654 = vpop.f32.mrb[0].mxu0
  %655 = vmatprep.mubr.bf16.mxu0 %v296
  %656 = vmatmul.mubr.bf16.gmra.mrb[0].mxu0 %v295
  %v657 = vpop.f32.mrb[0].mxu0
  %v658 = vadd.f32 %v140, %v657
  %v659 = vpop.f32.mrb[0].mxu0
  %v660 = vpop.f32.mrb[0].mxu0
  %v661 = vadd.f32 %v140, %v660
  %v662 = vpop.f32.mrb[0].mxu0
  %663 = vmatprep.mubr.bf16.mxu0 %v301
  %664 = vmatmul.mubr.bf16.gmra.mrb[0].mxu0 %v300
  %v665 = vpop.f32.mrb[0].mxu0
  %v666 = vadd.f32 %v140, %v665
  %v667 = vpop.f32.mrb[0].mxu0
  %v668 = vpop.f32.mrb[0].mxu0
  %v669 = vadd.f32 %v140, %v668
  %v670 = vpop.f32.mrb[0].mxu0
  %671 = vmatprep.mubr.bf16.mxu0 %v306
  %672 = vmatmul.mubr.bf16.gmra.mrb[0].mxu0 %v305
  %v673 = vpop.f32.mrb[0].mxu0
  %v674 = vadd.f32 %v140, %v673
  %v675 = vpop.f32.mrb[0].mxu0
  %v676 = vpop.f32.mrb[0].mxu0
  %v677 = vadd.f32 %v140, %v676
  %v678 = vpop.f32.mrb[0].mxu0
  %679 = vdwg.mxu0
  %680 = vmatprep.subr.bf16.mxu0 0
  %681 = vmatpush1.bf16.msra.mxu0 %v502
  %682 = vmatprep.subr.bf16.mxu0 0
  %683 = vmatpush1.bf16.msra.mxu0 %v503
  %684 = vmatprep.subr.bf16.mxu0 0
  %685 = vmatpush1.bf16.msra.mxu0 %v504
  %686 = vmatprep.subr.bf16.mxu0 0
  %687 = vmatpush1.bf16.msra.mxu0 %v505
  %688 = vmatprep.subr.bf16.mxu0 0
  %689 = vmatpush1.bf16.msra.mxu0 %v506
  %690 = vmatprep.subr.bf16.mxu0 0
  %691 = vmatpush1.bf16.msra.mxu0 %v507
  %692 = vmatprep.subr.bf16.mxu0 0
  %693 = vmatpush1.bf16.msra.mxu0 %v508
  %694 = vmatprep.subr.bf16.mxu0 0
  %695 = vmatpush1.bf16.msra.mxu0 %v509
  %696 = vmatprep.subr.bf16.mxu0 0
  %697 = vmatpush1.bf16.msra.mxu0 %v510
  %698 = vmatprep.subr.bf16.mxu0 0
  %699 = vmatpush1.bf16.msra.mxu0 %v511
  %700 = vmatprep.subr.bf16.mxu0 0
  %701 = vmatpush1.bf16.msra.mxu0 %v512
  %702 = vmatprep.subr.bf16.mxu0 0
  %703 = vmatpush1.bf16.msra.mxu0 %v513
  %704 = vmatprep.subr.bf16.mxu0 0
  %705 = vmatpush1.bf16.msra.mxu0 %v514
  %706 = vmatprep.subr.bf16.mxu0 0
  %707 = vmatpush1.bf16.msra.mxu0 %v515
  %708 = vmatprep.subr.bf16.mxu0 0
  %709 = vmatpush1.bf16.msra.mxu0 %v516
  %710 = vmatprep.subr.bf16.mxu0 0
  %711 = vmatpush1.bf16.msra.mxu0 %v517
  %712 = vmatprep.mubr.bf16.mxu0 %v273
  %713 = vmatmul.mubr.bf16.gmra.mrb[0].mxu0 %v272
  %v714 = vpop.f32.mrb[0].mxu0
  %v715 = vadd.f32 %v618, %v714
  %v716 = vpop.f32.mrb[0].mxu0
  %v717 = vpop.f32.mrb[0].mxu0
  %v718 = vadd.f32 %v621, %v717
  %v719 = vpop.f32.mrb[0].mxu0
  %720 = vmatprep.mubr.bf16.mxu0 %v278
  %721 = vmatmul.mubr.bf16.gmra.mrb[0].mxu0 %v277
  %v722 = vpop.f32.mrb[0].mxu0
  %v723 = vadd.f32 %v626, %v722
  %v724 = vpop.f32.mrb[0].mxu0
  %v725 = vpop.f32.mrb[0].mxu0
  %v726 = vadd.f32 %v629, %v725
  %v727 = vpop.f32.mrb[0].mxu0
  %728 = vmatprep.mubr.bf16.mxu0 %v283
  %729 = vmatmul.mubr.bf16.gmra.mrb[0].mxu0 %v282
  %v730 = vpop.f32.mrb[0].mxu0
  %v731 = vadd.f32 %v634, %v730
  %v732 = vpop.f32.mrb[0].mxu0
  %v733 = vpop.f32.mrb[0].mxu0
  %v734 = vadd.f32 %v637, %v733
  %v735 = vpop.f32.mrb[0].mxu0
  %736 = vmatprep.mubr.bf16.mxu0 %v288
  %737 = vmatmul.mubr.bf16.gmra.mrb[0].mxu0 %v287
  %v738 = vpop.f32.mrb[0].mxu0
  %v739 = vadd.f32 %v642, %v738
  %v740 = vpop.f32.mrb[0].mxu0
  %v741 = vpop.f32.mrb[0].mxu0
  %v742 = vadd.f32 %v645, %v741
  %v743 = vpop.f32.mrb[0].mxu0
  %744 = vmatprep.mubr.bf16.mxu0 %v293
  %745 = vmatmul.mubr.bf16.gmra.mrb[0].mxu0 %v292
  %v746 = vpop.f32.mrb[0].mxu0
  %v747 = vadd.f32 %v650, %v746
  %v748 = vpop.f32.mrb[0].mxu0
  %v749 = vpop.f32.mrb[0].mxu0
  %v750 = vadd.f32 %v653, %v749
  %v751 = vpop.f32.mrb[0].mxu0
  %752 = vmatprep.mubr.bf16.mxu0 %v298
  %753 = vmatmul.mubr.bf16.gmra.mrb[0].mxu0 %v297
  %v754 = vpop.f32.mrb[0].mxu0
  %v755 = vadd.f32 %v658, %v754
  %v756 = vpop.f32.mrb[0].mxu0
  %v757 = vpop.f32.mrb[0].mxu0
  %v758 = vadd.f32 %v661, %v757
  %v759 = vpop.f32.mrb[0].mxu0
  %760 = vmatprep.mubr.bf16.mxu0 %v303
  %761 = vmatmul.mubr.bf16.gmra.mrb[0].mxu0 %v302
  %v762 = vpop.f32.mrb[0].mxu0
  %v763 = vadd.f32 %v666, %v762
  %v764 = vpop.f32.mrb[0].mxu0
  %v765 = vpop.f32.mrb[0].mxu0
  %v766 = vadd.f32 %v669, %v765
  %v767 = vpop.f32.mrb[0].mxu0
  %768 = vmatprep.mubr.bf16.mxu0 %v308
  %769 = vmatmul.mubr.bf16.gmra.mrb[0].mxu0 %v307
  %v770 = vpop.f32.mrb[0].mxu0
  %v771 = vadd.f32 %v674, %v770
  %v772 = vpop.f32.mrb[0].mxu0
  %v773 = vpop.f32.mrb[0].mxu0
  %v774 = vadd.f32 %v677, %v773
  %v775 = vpop.f32.mrb[0].mxu0
  %776 = vdwg.mxu0
  %777 = vmatprep.subr.bf16.mxu0 0
  %778 = vmatpush1.bf16.msra.mxu0 %v518
  %779 = vmatprep.subr.bf16.mxu0 0
  %780 = vmatpush1.bf16.msra.mxu0 %v519
  %781 = vmatprep.subr.bf16.mxu0 0
  %782 = vmatpush1.bf16.msra.mxu0 %v520
  %783 = vmatprep.subr.bf16.mxu0 0
  %784 = vmatpush1.bf16.msra.mxu0 %v521
  %785 = vmatprep.subr.bf16.mxu0 0
  %786 = vmatpush1.bf16.msra.mxu0 0
  %787 = vmatprep.subr.bf16.mxu0 0
  %788 = vmatpush1.bf16.msra.mxu0 0
  %789 = vmatprep.subr.bf16.mxu0 0
  %790 = vmatpush1.bf16.msra.mxu0 0
  %791 = vmatprep.subr.bf16.mxu0 0
  %792 = vmatpush1.bf16.msra.mxu0 0
  %793 = vmatprep.subr.bf16.mxu0 0
  %794 = vmatpush1.bf16.msra.mxu0 0
  %795 = vmatprep.subr.bf16.mxu0 0
  %796 = vmatpush1.bf16.msra.mxu0 0
  %797 = vmatprep.subr.bf16.mxu0 0
  %798 = vmatpush1.bf16.msra.mxu0 0
  %799 = vmatprep.subr.bf16.mxu0 0
  %800 = vmatpush1.bf16.msra.mxu0 0
  %801 = vmatprep.subr.bf16.mxu0 0
  %802 = vmatpush1.bf16.msra.mxu0 0
  %803 = vmatprep.subr.bf16.mxu0 0
  %804 = vmatpush1.bf16.msra.mxu0 0
  %805 = vmatprep.subr.bf16.mxu0 0
  %806 = vmatpush1.bf16.msra.mxu0 0
  %807 = vmatprep.subr.bf16.mxu0 0
  %808 = vmatpush1.bf16.msra.mxu0 0
  %809 = vmatprep.mubr.bf16.mxu0 0
  %810 = vmatmul.mubr.bf16.gmra.mrb[0].mxu0 %v560
  %v811 = vpop.f32.mrb[0].mxu0
  %v812 = vadd.f32 %v715, %v811
  %v813 = vpop.f32.mrb[0].mxu0
  %v814 = vpop.f32.mrb[0].mxu0
  %v815 = vadd.f32 %v718, %v814
  %v816 = vpop.f32.mrb[0].mxu0
  %817 = vmatprep.mubr.bf16.mxu0 0
  %818 = vmatmul.mubr.bf16.gmra.mrb[0].mxu0 %v563
  %v819 = vpop.f32.mrb[0].mxu0
  %v820 = vadd.f32 %v723, %v819
  %v821 = vpop.f32.mrb[0].mxu0
  %v822 = vpop.f32.mrb[0].mxu0
  %v823 = vadd.f32 %v726, %v822
  %v824 = vpop.f32.mrb[0].mxu0
  %825 = vmatprep.mubr.bf16.mxu0 0
  %826 = vmatmul.mubr.bf16.gmra.mrb[0].mxu0 %v566
  %v827 = vpop.f32.mrb[0].mxu0
  %v828 = vadd.f32 %v731, %v827
  %v829 = vpop.f32.mrb[0].mxu0
  %v830 = vpop.f32.mrb[0].mxu0
  %v831 = vadd.f32 %v734, %v830
  %v832 = vpop.f32.mrb[0].mxu0
  %833 = vmatprep.mubr.bf16.mxu0 0
  %834 = vmatmul.mubr.bf16.gmra.mrb[0].mxu0 %v569
  %v835 = vpop.f32.mrb[0].mxu0
  %v836 = vadd.f32 %v739, %v835
  %v837 = vpop.f32.mrb[0].mxu0
  %v838 = vpop.f32.mrb[0].mxu0
  %v839 = vadd.f32 %v742, %v838
  %v840 = vpop.f32.mrb[0].mxu0
  %841 = vmatprep.mubr.bf16.mxu0 0
  %842 = vmatmul.mubr.bf16.gmra.mrb[0].mxu0 %v572
  %v843 = vpop.f32.mrb[0].mxu0
  %v844 = vadd.f32 %v747, %v843
  %v845 = vpop.f32.mrb[0].mxu0
  %v846 = vpop.f32.mrb[0].mxu0
  %v847 = vadd.f32 %v750, %v846
  %v848 = vpop.f32.mrb[0].mxu0
  %849 = vmatprep.mubr.bf16.mxu0 0
  %850 = vmatmul.mubr.bf16.gmra.mrb[0].mxu0 %v575
  %v851 = vpop.f32.mrb[0].mxu0
  %v852 = vadd.f32 %v755, %v851
  %v853 = vpop.f32.mrb[0].mxu0
  %v854 = vpop.f32.mrb[0].mxu0
  %v855 = vadd.f32 %v758, %v854
  %v856 = vpop.f32.mrb[0].mxu0
  %857 = vmatprep.mubr.bf16.mxu0 0
  %858 = vmatmul.mubr.bf16.gmra.mrb[0].mxu0 %v578
  %v859 = vpop.f32.mrb[0].mxu0
  %v860 = vadd.f32 %v763, %v859
  %v861 = vpop.f32.mrb[0].mxu0
  %v862 = vpop.f32.mrb[0].mxu0
  %v863 = vadd.f32 %v766, %v862
  %v864 = vpop.f32.mrb[0].mxu0
  %865 = vmatprep.mubr.bf16.mxu0 0
  %866 = vmatmul.mubr.bf16.gmra.mrb[0].mxu0 %v581
  %v867 = vpop.f32.mrb[0].mxu0
  %v868 = vadd.f32 %v771, %v867
  %v869 = vpop.f32.mrb[0].mxu0
  %v870 = vpop.f32.mrb[0].mxu0
  %v871 = vadd.f32 %v774, %v870
  %v872 = vpop.f32.mrb[0].mxu0
  %873 = vdwg.mxu0
  %v874 = vmax.f32 %v812, 0.0
  %v875 = vmax.f32 %v815, 0.0
  %v876 = vmax.f32 %v820, 0.0
  %v877 = vmax.f32 %v823, 0.0
  %v878 = vmax.f32 %v828, 0.0
  %v879 = vmax.f32 %v831, 0.0
  %v880 = vmax.f32 %v836, 0.0
  %v881 = vmax.f32 %v839, 0.0
  %v882 = vmax.f32 %v844, 0.0
  %v883 = vmax.f32 %v847, 0.0
  %v884 = vmax.f32 %v852, 0.0
  %v885 = vmax.f32 %v855, 0.0
  %v886 = vmax.f32 %v860, 0.0
  %v887 = vmax.f32 %v863, 0.0
  %v888 = vmax.f32 %v868, 0.0
  %v889 = vmax.f32 %v871, 0.0
  %v890 = vpack.c.bf16 %v875, %v874
  %v891 = vpack.c.bf16 %v877, %v876
  %v892 = vpack.c.bf16 %v879, %v878
  %v893 = vpack.c.bf16 %v881, %v880
  %v894 = vpack.c.bf16 %v883, %v882
  %v895 = vpack.c.bf16 %v885, %v884
  %v896 = vpack.c.bf16 %v887, %v886
  %v897 = vpack.c.bf16 %v889, %v888
  %v906 = vunpack.c.l.b16 %v890
  %v907 = vunpack.c.h.b16 %v890
  %v908 = vunpack.c.l.b16 %v891
  %v909 = vunpack.c.h.b16 %v891
  %v910 = vunpack.c.l.b16 %v892
  %v911 = vunpack.c.h.b16 %v892
  %v912 = vunpack.c.l.b16 %v893
  %v913 = vunpack.c.h.b16 %v893
  %v914 = vunpack.c.l.b16 %v894
  %v915 = vunpack.c.h.b16 %v894
  %v916 = vunpack.c.l.b16 %v895
  %v917 = vunpack.c.h.b16 %v895
  %v918 = vunpack.c.l.b16 %v896
  %v919 = vunpack.c.h.b16 %v896
  %v920 = vunpack.c.l.b16 %v897
  %v921 = vunpack.c.h.b16 %v897
  %v922 = vpack.c.b16 %v906, %v906
  %v923 = vpack.c.b16 %v907, %v907
  %v924 = vpack.c.b16 %v908, %v908
  %v925 = vpack.c.b16 %v909, %v909
  %v926 = vpack.c.b16 %v910, %v910
  %v927 = vpack.c.b16 %v911, %v911
  %v928 = vpack.c.b16 %v912, %v912
  %v929 = vpack.c.b16 %v913, %v913
  %v930 = vpack.c.b16 %v914, %v914
  %v931 = vpack.c.b16 %v915, %v915
  %v932 = vpack.c.b16 %v916, %v916
  %v933 = vpack.c.b16 %v917, %v917
  %v934 = vpack.c.b16 %v918, %v918
  %v935 = vpack.c.b16 %v919, %v919
  %v936 = vpack.c.b16 %v920, %v920
  %v937 = vpack.c.b16 %v921, %v921
  %vm954 = vcmask 519168
  %955 = vst.msk [vmem:[%s3] sm:$0xf] %vm954, %v922
  %956 = vst.msk [vmem:[%s3 + $0x4] sm:$0xf] %vm954, %v923
  %957 = vst.msk [vmem:[%s3 + $0x8] sm:$0xf] %vm954, %v924
  %958 = vst.msk [vmem:[%s3 + $0xc] sm:$0xf] %vm954, %v925
  %959 = vst.msk [vmem:[%s3 + $0x10] sm:$0xf] %vm954, %v926
  %960 = vst.msk [vmem:[%s3 + $0x14] sm:$0xf] %vm954, %v927
  %961 = vst.msk [vmem:[%s3 + $0x18] sm:$0xf] %vm954, %v928
  %962 = vst.msk [vmem:[%s3 + $0x1c] sm:$0xf] %vm954, %v929
  %963 = vst.msk [vmem:[%s3 + $0x20] sm:$0xf] %vm954, %v930
  %964 = vst.msk [vmem:[%s3 + $0x24] sm:$0xf] %vm954, %v931
  %965 = vst.msk [vmem:[%s3 + $0x28] sm:$0xf] %vm954, %v932
  %966 = vst.msk [vmem:[%s3 + $0x2c] sm:$0xf] %vm954, %v933
  %967 = vst.msk [vmem:[%s3 + $0x30] sm:$0xf] %vm954, %v934
  %968 = vst.msk [vmem:[%s3 + $0x34] sm:$0xf] %vm954, %v935
  %969 = vst.msk [vmem:[%s3 + $0x38] sm:$0xf] %vm954, %v936
  %970 = vst.msk [vmem:[%s3 + $0x3c] sm:$0xf] %vm954, %v937
  // Predicated region
  $region14: #{hrnet_forward.5} parent=0 // pred_check
    _
  $region15: #{hrnet_forward.5} parent=0 // pred_check_branch
    %972 = sbr.rel (0) target = $region17
  $region16: #{hrnet_forward.5} parent=0 // pred_region
    _
  $region17: #{hrnet_forward.5} parent=0 // pred_fallthru
    _
  // Predicated region
  $region18: #{hrnet_forward.5} parent=0 // pred_check
    _
  $region19: #{hrnet_forward.5} parent=0 // pred_check_branch
    %974 = sbr.rel (0) target = $region21
  $region20: #{hrnet_forward.5} parent=0 // pred_region
    _
  $region21: #{hrnet_forward.5} parent=0 // pred_fallthru
    _

// kernel: hrnet_forward.7
$region0: #{hrnet_forward.7}
  #allocation0 [shape = 'u32[]', space=smem, size = 0x4, offset = 0x4, fixed_abs, tag = 'smem constant byte address 0x4 - core index']
  #allocation1 [shape = 'u32[144,128]{1,0:T(1,128)}', space=vmem, size = 0x12000, scoped, tag = 'internal scratch']
  %s0 = inlined_call_operand.vmem [shape: f32[24,8,8], index: 0, kind: input, shape index: {}]
  %s1 = inlined_call_operand.vmem [shape: f32[32,8], index: 1, kind: input, shape index: {}]
  %s2 = inlined_call_operand.hbm [shape: f32[8,32], index: 2, kind: input, shape index: {}]
  %s3 = inlined_call_operand.hbm [shape: f32[24,32,32], index: 3, kind: output, shape index: {}]
  %s4 = sld [smem:[#allocation0]]
  $region49: #{hrnet_forward.7} parent=0
    _
  %s6 = ssub.s32 1, %s4
  %s7 = scalar_select 0, %s6, %s4
  $region1: #{hrnet_forward.7} parent=0
    #allocation2 [shape = 'u8[4096]{0}', space=vmem, size = 0x1000, scoped, tag = 'input window, operand 2, single buffered']
    #allocation3 [shape = 's32[2]{0}', space=sflag, size = 0x8, scoped, tag = 'scoped memory for hrnet_forward.7']
    #allocation4 [shape = 's32[2]{0}', space=sflag, size = 0x8, scoped, tag = 'scoped memory for hrnet_forward.7']
    #allocation5 [shape = 'u8[262144]{0}', space=vmem, size = 0x40000, scoped, tag = 'output window, operand 0']
    %8 = vsyncpa [#allocation3], 0
    %9 = vsyncpa [#allocation4], 0
    %s10 = scalar_lea.sflag [#allocation4], 1
    %11 = vsyncpa %s10, 0
    loop: start=0, step=1, limit=5
    $region2: #{hrnet_forward.7} parent=1 // loop_pre_header
      _
    $region3: #{hrnet_forward.7} parent=1 // loop_header
      %s13 = sphi 0, %s17
      %p14 = scmp.ge.s32.totalorder %s13, 5
      %s23 = sphi 0, %s25
      %s26 = sphi 0, %s23
      %s27 = sphi 0, %s26
      %s43 = sphi 0, %s27
      %s47 = sphi 0, %s47
      %s49 = sphi 0, %s47
      %s50 = sphi 0, %s49
      %s64 = sphi 0, %s50
      %s68 = sphi 0, %s68
      %s70 = sphi 0, %s68
      %s71 = sphi 0, %s70
      %s85 = sphi 0, %s71
      %s91 = sphi 0, %s93
      %s94 = sphi 0, %s91
      %s95 = sphi 0, %s94
      %s111 = sphi 0, %s95
    $region4: #{hrnet_forward.7} parent=1 // loop_header_branch
      %16 = sbr.rel (%p14) target = $region8
    $region5: #{hrnet_forward.7} parent=1 // loop_body
      %s18 = ssub.s32 %s13, 1
      %s19 = ssub.s32 %s13, 2
      %s20 = sadd.s32 %s13, 1
      %s21 = ssub.s32 %s13, %s20
      %p22 = scmp.eq.s32.totalorder %s21, 0
      %s24 = sadd.s32 %s23, 1
      %s25 = scalar_select %p22, %s23, %s24
      %p28 = pneg %p22
      %p29 = scmp.eq.s32.totalorder %s13, 2
      %p30 = por %p28, %p29
      %p31 = scmp.ne.s32.totalorder %s23, %s26
      %p32 = scmp.eq.s32.totalorder %s13, 0
      %p33 = por %p31, %p32
      %p34 = scmp.ne.s32.totalorder %s23, %s26
      %p35 = scmp.eq.s32.totalorder %s18, 2
      %p36 = por %p34, %p35
      %p37 = scmp.ne.s32.totalorder %s26, %s27
      %p38 = scmp.eq.s32.totalorder %s18, 0
      %p39 = por %p37, %p38
      %p40 = scmp.ne.s32.totalorder %s26, %s27
      %p41 = scmp.eq.s32.totalorder %s19, 2
      %p42 = por %p40, %p41
      %p44 = scmp.ne.s32.totalorder %s27, %s43
      %p45 = scmp.eq.s32.totalorder %s19, 0
      %p46 = por %p44, %p45
      %s48 = sadd.s32 %s47, 1
      %p51 = scmp.eq.s32.totalorder %s13, 2
      %p52 = scmp.ne.s32.totalorder %s47, %s49
      %p53 = scmp.eq.s32.totalorder %s13, 0
      %p54 = por %p52, %p53
      %p55 = scmp.ne.s32.totalorder %s47, %s49
      %p56 = scmp.eq.s32.totalorder %s18, 2
      %p57 = por %p55, %p56
      %p58 = scmp.ne.s32.totalorder %s49, %s50
      %p59 = scmp.eq.s32.totalorder %s18, 0
      %p60 = por %p58, %p59
      %p61 = scmp.ne.s32.totalorder %s49, %s50
      %p62 = scmp.eq.s32.totalorder %s19, 2
      %p63 = por %p61, %p62
      %p65 = scmp.ne.s32.totalorder %s50, %s64
      %p66 = scmp.eq.s32.totalorder %s19, 0
      %p67 = por %p65, %p66
      %s69 = sadd.s32 %s68, 1
      %p72 = scmp.eq.s32.totalorder %s13, 2
      %p73 = scmp.ne.s32.totalorder %s68, %s70
      %p74 = scmp.eq.s32.totalorder %s13, 0
      %p75 = por %p73, %p74
      %p76 = scmp.ne.s32.totalorder %s68, %s70
      %p77 = scmp.eq.s32.totalorder %s18, 2
      %p78 = por %p76, %p77
      %p79 = scmp.ne.s32.totalorder %s70, %s71
      %p80 = scmp.eq.s32.totalorder %s18, 0
      %p81 = por %p79, %p80
      %p82 = scmp.ne.s32.totalorder %s70, %s71
      %p83 = scmp.eq.s32.totalorder %s19, 2
      %p84 = por %p82, %p83
      %p86 = scmp.ne.s32.totalorder %s71, %s85
      %p87 = scmp.eq.s32.totalorder %s19, 0
      %p88 = por %p86, %p87
      %s89 = ssub.s32 %s13, %s20
      %p90 = scmp.eq.s32.totalorder %s89, 0
      %s92 = sadd.s32 %s91, 1
      %s93 = scalar_select %p90, %s91, %s92
      %p96 = pneg %p90
      %p97 = scmp.eq.s32.totalorder %s13, 2
      %p98 = por %p96, %p97
      %p99 = scmp.ne.s32.totalorder %s91, %s94
      %p100 = scmp.eq.s32.totalorder %s13, 0
      %p101 = por %p99, %p100
      %p102 = scmp.ne.s32.totalorder %s91, %s94
      %p103 = scmp.eq.s32.totalorder %s18, 2
      %p104 = por %p102, %p103
      %p105 = scmp.ne.s32.totalorder %s94, %s95
      %p106 = scmp.eq.s32.totalorder %s18, 0
      %p107 = por %p105, %p106
      %p108 = scmp.ne.s32.totalorder %s94, %s95
      %p109 = scmp.eq.s32.totalorder %s19, 2
      %p110 = por %p108, %p109
      %p112 = scmp.ne.s32.totalorder %s95, %s111
      %p113 = scmp.eq.s32.totalorder %s19, 0
      %p114 = por %p112, %p113
      %p115 = scmp.le.s32.totalorder 1, %s13
      %p116 = scmp.lt.s32.totalorder %s13, 4
      %p117 = pnand %p115, %p116
      %p118 = pneg %p117
      // Predicated region
      $region9: #{hrnet_forward.7} parent=5 // pred_check
        _
      $region10: #{hrnet_forward.7} parent=5 // pred_check_branch
        %120 = sbr.rel (%p117) target = $region12
      $region11: #{hrnet_forward.7} parent=5 // pred_region
        %s121 = ssub.s32 %s13, 1
        // Predicated region
        $region13: #{hrnet_forward.7} parent=11 // pred_check
          %p122 = pneg %p60
        $region14: #{hrnet_forward.7} parent=11 // pred_check_branch
          %124 = sbr.rel (%p122) target = $region16
        $region15: #{hrnet_forward.7} parent=11 // pred_region
          _
        $region16: #{hrnet_forward.7} parent=11 // pred_fallthru
          _
        // Predicated region
        $region17: #{hrnet_forward.7} parent=11 // pred_check
          %p125 = pneg %p81
        $region18: #{hrnet_forward.7} parent=11 // pred_check_branch
          %127 = sbr.rel (%p125) target = $region20
        $region19: #{hrnet_forward.7} parent=11 // pred_region
          %s129 = ssub.s32 128, 128
          %130 = vsyncadd [#allocation3], %s129
          %s132 = sshll.u32 [#allocation2], 4
          %s133 = int_to_ptr.vmem [resolvable:$true] %s132
          %135 = dma.hbm_to_vmem [thread:$0]  %s2, 128, %s133, [#allocation3]
        $region20: #{hrnet_forward.7} parent=11 // pred_fallthru
          _
      $region12: #{hrnet_forward.7} parent=5 // pred_fallthru
        _
      %p136 = scmp.lt.s32.totalorder %s13, 3
      // Predicated region
      $region21: #{hrnet_forward.7} parent=5 // pred_check
        %p137 = pneg %p136
      $region22: #{hrnet_forward.7} parent=5 // pred_check_branch
        %139 = sbr.rel (%p137) target = $region24
      $region23: #{hrnet_forward.7} parent=5 // pred_region
        // Predicated region
        $region25: #{hrnet_forward.7} parent=23 // pred_check
          %p140 = pneg %p33
        $region26: #{hrnet_forward.7} parent=23 // pred_check_branch
          %142 = sbr.rel (%p140) target = $region28
        $region27: #{hrnet_forward.7} parent=23 // pred_region
          %s143 = smul.u32 8, %s13
          %p144 = scmp.lt.s32.totalorder %s143, 23
          %s145 = scalar_select %p144, %s143, 23
          %s146 = smul.addr %s145, 8
          %s147 = scalar_lea.vmem %s0, %s146
          %s148 = smul.u32 8, %s13
        $region28: #{hrnet_forward.7} parent=23 // pred_fallthru
          _
      $region24: #{hrnet_forward.7} parent=5 // pred_fallthru
        _
      %p149 = scmp.le.s32.totalorder 1, %s13
      %p150 = scmp.lt.s32.totalorder %s13, 4
      %p151 = pnand %p149, %p150
      %p152 = pneg %p151
      // Predicated region
      $region29: #{hrnet_forward.7} parent=5 // pred_check
        _
      $region30: #{hrnet_forward.7} parent=5 // pred_check_branch
        %154 = sbr.rel (%p151) target = $region32
      $region31: #{hrnet_forward.7} parent=5 // pred_region
        %s155 = ssub.s32 %s13, 1
        // Predicated region
        $region33: #{hrnet_forward.7} parent=31 // pred_check
          %p156 = pneg %p81
        $region34: #{hrnet_forward.7} parent=31 // pred_check_branch
          %158 = sbr.rel (%p156) target = $region36
        $region35: #{hrnet_forward.7} parent=31 // pred_region
          %159 = dma.done [#allocation3], 128
        $region36: #{hrnet_forward.7} parent=31 // pred_fallthru
          _
        %s160 = smul.u32 8, %s18
        %p161 = scmp.lt.s32.totalorder %s160, 23
        %s162 = scalar_select %p161, %s160, 23
        %s163 = smul.addr %s162, 8
        %s164 = scalar_lea.vmem %s0, %s163
        %p165 = pneg %p39
        %p166 = pneg %p36
        %p167 = pneg %p60
        %p168 = pneg %p57
        %p169 = pneg %p81
        %p170 = pneg %p78
        %p171 = pneg %p107
        %p172 = pneg %p104
        %s173 = sand.u32 %s94, 1
        %s174 = scalar_lea.sflag [#allocation4], %s173
        %s175 = sand.u32 %s94, 1
        %s176 = smul.addr %s175, 256
        %s177 = scalar_lea.vmem [#allocation5], %s176
        %s178 = smul.u32 8, %s18
        %p179 = scmp.lt.s32.totalorder %s178, 23
        %s180 = scalar_select %p179, %s178, 23
        %s181 = smul.addr %s180, 8
        %s182 = scalar_lea.vmem %s0, %s181
        %s183 = smul.u32 8, %s18
        %s184 = smul.u32 8, %s18
        %v185 = vld [vmem:[%s182] sm:$0xff]
        %v186 = vld [vmem:[%s182 + $0x8] sm:$0xff]
        %v187 = vld [vmem:[%s182 + $0x10] sm:$0xff]
        %v188 = vld [vmem:[%s182 + $0x18] sm:$0xff]
        %v189 = vld [vmem:[%s182 + $0x20] sm:$0xff]
        %v190 = vld [vmem:[%s182 + $0x28] sm:$0xff]
        %v191 = vld [vmem:[%s182 + $0x30] sm:$0xff]
        %v192 = vld [vmem:[%s182 + $0x38] sm:$0xff]
        %v193 = vld [vmem:[%s1] sm:$0xff]
        %v194 = vld [vmem:[%s1 + $0x8] sm:$0xff]
        %v195 = vld [vmem:[%s1 + $0x10] sm:$0xff]
        %v196 = vld [vmem:[%s1 + $0x18] sm:$0xff]
        %v197 = vld [vmem:[#allocation2] sm:$0xff]
        %vm198 = vcmask 64512
        %v200 = vsel %vm198, %v193, 0
        %v203 = vsel %vm198, %v194, 0
        %v206 = vsel %vm198, %v195, 0
        %v209 = vsel %vm198, %v196, 0
        %211 = vmatprep.subr.mxu0 0.0
        %212 = vmatpush1.msra.mxu0 %v185
        %213 = vmatprep.subr.mxu0 0.0
        %214 = vmatpush1.msra.mxu0 0.0
        %215 = vmatprep.subr.mxu0 0.0
        %216 = vmatpush1.msra.mxu0 0.0
        %217 = vmatprep.subr.mxu0 0.0
        %218 = vmatpush1.msra.mxu0 0.0
        %219 = vmatprep.subr.mxu0 0.0
        %220 = vmatpush1.msra.mxu0 0.0
        %221 = vmatprep.subr.mxu0 0.0
        %222 = vmatpush1.msra.mxu0 0.0
        %223 = vmatprep.subr.mxu0 0.0
        %224 = vmatpush1.msra.mxu0 0.0
        %225 = vmatprep.subr.mxu0 0.0
        %226 = vmatpush1.msra.mxu0 0.0
        %227 = vmatprep.subr.mxu0 0.0
        %228 = vmatpush1.msra.mxu0 0.0
        %229 = vmatprep.subr.mxu0 0.0
        %230 = vmatpush1.msra.mxu0 0.0
        %231 = vmatprep.subr.mxu0 0.0
        %232 = vmatpush1.msra.mxu0 0.0
        %233 = vmatprep.subr.mxu0 0.0
        %234 = vmatpush1.msra.mxu0 0.0
        %235 = vmatprep.subr.mxu0 0.0
        %236 = vmatpush1.msra.mxu0 0.0
        %237 = vmatprep.subr.mxu0 0.0
        %238 = vmatpush1.msra.mxu0 0.0
        %239 = vmatprep.subr.mxu0 0.0
        %240 = vmatpush1.msra.mxu0 0.0
        %241 = vmatprep.subr.mxu0 0.0
        %242 = vmatpush1.msra.mxu0 0.0
        %243 = vmatprep.subr.mxu0 0.0
        %244 = vmatpush1.msra.mxu0 0.0
        %245 = vmatprep.subr.mxu0 0.0
        %246 = vmatpush1.msra.mxu0 0.0
        %247 = vmatprep.subr.mxu0 0.0
        %248 = vmatpush1.msra.mxu0 0.0
        %249 = vmatprep.subr.mxu0 0.0
        %250 = vmatpush1.msra.mxu0 0.0
        %251 = vmatprep.subr.mxu0 0.0
        %252 = vmatpush1.msra.mxu0 0.0
        %253 = vmatprep.subr.mxu0 0.0
        %254 = vmatpush1.msra.mxu0 0.0
        %255 = vmatprep.subr.mxu0 0.0
        %256 = vmatpush1.msra.mxu0 0.0
        %257 = vmatprep.subr.mxu0 0.0
        %258 = vmatpush1.msra.mxu0 0.0
        %259 = vmatprep.subr.mxu0 0.0
        %260 = vmatpush1.msra.mxu0 0.0
        %261 = vmatprep.subr.mxu0 0.0
        %262 = vmatpush1.msra.mxu0 0.0
        %263 = vmatprep.subr.mxu0 0.0
        %264 = vmatpush1.msra.mxu0 0.0
        %265 = vmatprep.subr.mxu0 0.0
        %266 = vmatpush1.msra.mxu0 0.0
        %267 = vmatprep.subr.mxu0 0.0
        %268 = vmatpush1.msra.mxu0 0.0
        %269 = vmatprep.subr.mxu0 0.0
        %270 = vmatpush1.msra.mxu0 0.0
        %271 = vmatprep.subr.mxu0 0.0
        %272 = vmatpush1.msra.mxu0 0.0
        %273 = vmatprep.subr.mxu0 0.0
        %274 = vmatpush1.msra.mxu0 0.0
        %275 = vmatprep.mubr.f32.mxu0 0.0
        %276 = vmatmul.mubr.f32.gmra.mrb[0].mxu0 %v200
        %v277 = vpop.f32.mrb[0].mxu0
        %v278 = vadd.f32 0.0, %v277
        %v279 = vpop.f32.mrb[0].mxu0
        %280 = vmatprep.mubr.f32.mxu0 0.0
        %281 = vmatmul.mubr.f32.gmra.mrb[0].mxu0 %v203
        %v282 = vpop.f32.mrb[0].mxu0
        %v283 = vadd.f32 0.0, %v282
        %v284 = vpop.f32.mrb[0].mxu0
        %285 = vmatprep.mubr.f32.mxu0 0.0
        %286 = vmatmul.mubr.f32.gmra.mrb[0].mxu0 %v206
        %v287 = vpop.f32.mrb[0].mxu0
        %v288 = vadd.f32 0.0, %v287
        %v289 = vpop.f32.mrb[0].mxu0
        %290 = vmatprep.mubr.f32.mxu0 0.0
        %291 = vmatmul.mubr.f32.gmra.mrb[0].mxu0 %v209
        %v292 = vpop.f32.mrb[0].mxu0
        %v293 = vadd.f32 0.0, %v292
        %v294 = vpop.f32.mrb[0].mxu0
        %295 = vdwg.mxu0
        %296 = vmatprep.subr.mxu0 0.0
        %297 = vmatpush1.msra.mxu0 %v186
        %298 = vmatprep.subr.mxu0 0.0
        %299 = vmatpush1.msra.mxu0 0.0
        %300 = vmatprep.subr.mxu0 0.0
        %301 = vmatpush1.msra.mxu0 0.0
        %302 = vmatprep.subr.mxu0 0.0
        %303 = vmatpush1.msra.mxu0 0.0
        %304 = vmatprep.subr.mxu0 0.0
        %305 = vmatpush1.msra.mxu0 0.0
        %306 = vmatprep.subr.mxu0 0.0
        %307 = vmatpush1.msra.mxu0 0.0
        %308 = vmatprep.subr.mxu0 0.0
        %309 = vmatpush1.msra.mxu0 0.0
        %310 = vmatprep.subr.mxu0 0.0
        %311 = vmatpush1.msra.mxu0 0.0
        %312 = vmatprep.subr.mxu0 0.0
        %313 = vmatpush1.msra.mxu0 0.0
        %314 = vmatprep.subr.mxu0 0.0
        %315 = vmatpush1.msra.mxu0 0.0
        %316 = vmatprep.subr.mxu0 0.0
        %317 = vmatpush1.msra.mxu0 0.0
        %318 = vmatprep.subr.mxu0 0.0
        %319 = vmatpush1.msra.mxu0 0.0
        %320 = vmatprep.subr.mxu0 0.0
        %321 = vmatpush1.msra.mxu0 0.0
        %322 = vmatprep.subr.mxu0 0.0
        %323 = vmatpush1.msra.mxu0 0.0
        %324 = vmatprep.subr.mxu0 0.0
        %325 = vmatpush1.msra.mxu0 0.0
        %326 = vmatprep.subr.mxu0 0.0
        %327 = vmatpush1.msra.mxu0 0.0
        %328 = vmatprep.subr.mxu0 0.0
        %329 = vmatpush1.msra.mxu0 0.0
        %330 = vmatprep.subr.mxu0 0.0
        %331 = vmatpush1.msra.mxu0 0.0
        %332 = vmatprep.subr.mxu0 0.0
        %333 = vmatpush1.msra.mxu0 0.0
        %334 = vmatprep.subr.mxu0 0.0
        %335 = vmatpush1.msra.mxu0 0.0
        %336 = vmatprep.subr.mxu0 0.0
        %337 = vmatpush1.msra.mxu0 0.0
        %338 = vmatprep.subr.mxu0 0.0
        %339 = vmatpush1.msra.mxu0 0.0
        %340 = vmatprep.subr.mxu0 0.0
        %341 = vmatpush1.msra.mxu0 0.0
        %342 = vmatprep.subr.mxu0 0.0
        %343 = vmatpush1.msra.mxu0 0.0
        %344 = vmatprep.subr.mxu0 0.0
        %345 = vmatpush1.msra.mxu0 0.0
        %346 = vmatprep.subr.mxu0 0.0
        %347 = vmatpush1.msra.mxu0 0.0
        %348 = vmatprep.subr.mxu0 0.0
        %349 = vmatpush1.msra.mxu0 0.0
        %350 = vmatprep.subr.mxu0 0.0
        %351 = vmatpush1.msra.mxu0 0.0
        %352 = vmatprep.subr.mxu0 0.0
        %353 = vmatpush1.msra.mxu0 0.0
        %354 = vmatprep.subr.mxu0 0.0
        %355 = vmatpush1.msra.mxu0 0.0
        %356 = vmatprep.subr.mxu0 0.0
        %357 = vmatpush1.msra.mxu0 0.0
        %358 = vmatprep.subr.mxu0 0.0
        %359 = vmatpush1.msra.mxu0 0.0
        %360 = vmatprep.mubr.f32.mxu0 0.0
        %361 = vmatmul.mubr.f32.gmra.mrb[0].mxu0 %v200
        %v362 = vpop.f32.mrb[0].mxu0
        %v363 = vadd.f32 0.0, %v362
        %v364 = vpop.f32.mrb[0].mxu0
        %365 = vmatprep.mubr.f32.mxu0 0.0
        %366 = vmatmul.mubr.f32.gmra.mrb[0].mxu0 %v203
        %v367 = vpop.f32.mrb[0].mxu0
        %v368 = vadd.f32 0.0, %v367
        %v369 = vpop.f32.mrb[0].mxu0
        %370 = vmatprep.mubr.f32.mxu0 0.0
        %371 = vmatmul.mubr.f32.gmra.mrb[0].mxu0 %v206
        %v372 = vpop.f32.mrb[0].mxu0
        %v373 = vadd.f32 0.0, %v372
        %v374 = vpop.f32.mrb[0].mxu0
        %375 = vmatprep.mubr.f32.mxu0 0.0
        %376 = vmatmul.mubr.f32.gmra.mrb[0].mxu0 %v209
        %v377 = vpop.f32.mrb[0].mxu0
        %v378 = vadd.f32 0.0, %v377
        %v379 = vpop.f32.mrb[0].mxu0
        %380 = vdwg.mxu0
        %381 = vmatprep.subr.mxu0 0.0
        %382 = vmatpush1.msra.mxu0 %v187
        %383 = vmatprep.subr.mxu0 0.0
        %384 = vmatpush1.msra.mxu0 0.0
        %385 = vmatprep.subr.mxu0 0.0
        %386 = vmatpush1.msra.mxu0 0.0
        %387 = vmatprep.subr.mxu0 0.0
        %388 = vmatpush1.msra.mxu0 0.0
        %389 = vmatprep.subr.mxu0 0.0
        %390 = vmatpush1.msra.mxu0 0.0
        %391 = vmatprep.subr.mxu0 0.0
        %392 = vmatpush1.msra.mxu0 0.0
        %393 = vmatprep.subr.mxu0 0.0
        %394 = vmatpush1.msra.mxu0 0.0
        %395 = vmatprep.subr.mxu0 0.0
        %396 = vmatpush1.msra.mxu0 0.0
        %397 = vmatprep.subr.mxu0 0.0
        %398 = vmatpush1.msra.mxu0 0.0
        %399 = vmatprep.subr.mxu0 0.0
        %400 = vmatpush1.msra.mxu0 0.0
        %401 = vmatprep.subr.mxu0 0.0
        %402 = vmatpush1.msra.mxu0 0.0
        %403 = vmatprep.subr.mxu0 0.0
        %404 = vmatpush1.msra.mxu0 0.0
        %405 = vmatprep.subr.mxu0 0.0
        %406 = vmatpush1.msra.mxu0 0.0
        %407 = vmatprep.subr.mxu0 0.0
        %408 = vmatpush1.msra.mxu0 0.0
        %409 = vmatprep.subr.mxu0 0.0
        %410 = vmatpush1.msra.mxu0 0.0
        %411 = vmatprep.subr.mxu0 0.0
        %412 = vmatpush1.msra.mxu0 0.0
        %413 = vmatprep.subr.mxu0 0.0
        %414 = vmatpush1.msra.mxu0 0.0
        %415 = vmatprep.subr.mxu0 0.0
        %416 = vmatpush1.msra.mxu0 0.0
        %417 = vmatprep.subr.mxu0 0.0
        %418 = vmatpush1.msra.mxu0 0.0
        %419 = vmatprep.subr.mxu0 0.0
        %420 = vmatpush1.msra.mxu0 0.0
        %421 = vmatprep.subr.mxu0 0.0
        %422 = vmatpush1.msra.mxu0 0.0
        %423 = vmatprep.subr.mxu0 0.0
        %424 = vmatpush1.msra.mxu0 0.0
        %425 = vmatprep.subr.mxu0 0.0
        %426 = vmatpush1.msra.mxu0 0.0
        %427 = vmatprep.subr.mxu0 0.0
        %428 = vmatpush1.msra.mxu0 0.0
        %429 = vmatprep.subr.mxu0 0.0
        %430 = vmatpush1.msra.mxu0 0.0
        %431 = vmatprep.subr.mxu0 0.0
        %432 = vmatpush1.msra.mxu0 0.0
        %433 = vmatprep.subr.mxu0 0.0
        %434 = vmatpush1.msra.mxu0 0.0
        %435 = vmatprep.subr.mxu0 0.0
        %436 = vmatpush1.msra.mxu0 0.0
        %437 = vmatprep.subr.mxu0 0.0
        %438 = vmatpush1.msra.mxu0 0.0
        %439 = vmatprep.subr.mxu0 0.0
        %440 = vmatpush1.msra.mxu0 0.0
        %441 = vmatprep.subr.mxu0 0.0
        %442 = vmatpush1.msra.mxu0 0.0
        %443 = vmatprep.subr.mxu0 0.0
        %444 = vmatpush1.msra.mxu0 0.0
        %445 = vmatprep.mubr.f32.mxu0 0.0
        %446 = vmatmul.mubr.f32.gmra.mrb[0].mxu0 %v200
        %v447 = vpop.f32.mrb[0].mxu0
        %v448 = vadd.f32 0.0, %v447
        %v449 = vpop.f32.mrb[0].mxu0
        %450 = vmatprep.mubr.f32.mxu0 0.0
        %451 = vmatmul.mubr.f32.gmra.mrb[0].mxu0 %v203
        %v452 = vpop.f32.mrb[0].mxu0
        %v453 = vadd.f32 0.0, %v452
        %v454 = vpop.f32.mrb[0].mxu0
        %455 = vmatprep.mubr.f32.mxu0 0.0
        %456 = vmatmul.mubr.f32.gmra.mrb[0].mxu0 %v206
        %v457 = vpop.f32.mrb[0].mxu0
        %v458 = vadd.f32 0.0, %v457
        %v459 = vpop.f32.mrb[0].mxu0
        %460 = vmatprep.mubr.f32.mxu0 0.0
        %461 = vmatmul.mubr.f32.gmra.mrb[0].mxu0 %v209
        %v462 = vpop.f32.mrb[0].mxu0
        %v463 = vadd.f32 0.0, %v462
        %v464 = vpop.f32.mrb[0].mxu0
        %465 = vdwg.mxu0
        %466 = vmatprep.subr.mxu0 0.0
        %467 = vmatpush1.msra.mxu0 %v188
        %468 = vmatprep.subr.mxu0 0.0
        %469 = vmatpush1.msra.mxu0 0.0
        %470 = vmatprep.subr.mxu0 0.0
        %471 = vmatpush1.msra.mxu0 0.0
        %472 = vmatprep.subr.mxu0 0.0
        %473 = vmatpush1.msra.mxu0 0.0
        %474 = vmatprep.subr.mxu0 0.0
        %475 = vmatpush1.msra.mxu0 0.0
        %476 = vmatprep.subr.mxu0 0.0
        %477 = vmatpush1.msra.mxu0 0.0
        %478 = vmatprep.subr.mxu0 0.0
        %479 = vmatpush1.msra.mxu0 0.0
        %480 = vmatprep.subr.mxu0 0.0
        %481 = vmatpush1.msra.mxu0 0.0
        %482 = vmatprep.subr.mxu0 0.0
        %483 = vmatpush1.msra.mxu0 0.0
        %484 = vmatprep.subr.mxu0 0.0
        %485 = vmatpush1.msra.mxu0 0.0
        %486 = vmatprep.subr.mxu0 0.0
        %487 = vmatpush1.msra.mxu0 0.0
        %488 = vmatprep.subr.mxu0 0.0
        %489 = vmatpush1.msra.mxu0 0.0
        %490 = vmatprep.subr.mxu0 0.0
        %491 = vmatpush1.msra.mxu0 0.0
        %492 = vmatprep.subr.mxu0 0.0
        %493 = vmatpush1.msra.mxu0 0.0
        %494 = vmatprep.subr.mxu0 0.0
        %495 = vmatpush1.msra.mxu0 0.0
        %496 = vmatprep.subr.mxu0 0.0
        %497 = vmatpush1.msra.mxu0 0.0
        %498 = vmatprep.subr.mxu0 0.0
        %499 = vmatpush1.msra.mxu0 0.0
        %500 = vmatprep.subr.mxu0 0.0
        %501 = vmatpush1.msra.mxu0 0.0
        %502 = vmatprep.subr.mxu0 0.0
        %503 = vmatpush1.msra.mxu0 0.0
        %504 = vmatprep.subr.mxu0 0.0
        %505 = vmatpush1.msra.mxu0 0.0
        %506 = vmatprep.subr.mxu0 0.0
        %507 = vmatpush1.msra.mxu0 0.0
        %508 = vmatprep.subr.mxu0 0.0
        %509 = vmatpush1.msra.mxu0 0.0
        %510 = vmatprep.subr.mxu0 0.0
        %511 = vmatpush1.msra.mxu0 0.0
        %512 = vmatprep.subr.mxu0 0.0
        %513 = vmatpush1.msra.mxu0 0.0
        %514 = vmatprep.subr.mxu0 0.0
        %515 = vmatpush1.msra.mxu0 0.0
        %516 = vmatprep.subr.mxu0 0.0
        %517 = vmatpush1.msra.mxu0 0.0
        %518 = vmatprep.subr.mxu0 0.0
        %519 = vmatpush1.msra.mxu0 0.0
        %520 = vmatprep.subr.mxu0 0.0
        %521 = vmatpush1.msra.mxu0 0.0
        %522 = vmatprep.subr.mxu0 0.0
        %523 = vmatpush1.msra.mxu0 0.0
        %524 = vmatprep.subr.mxu0 0.0
        %525 = vmatpush1.msra.mxu0 0.0
        %526 = vmatprep.subr.mxu0 0.0
        %527 = vmatpush1.msra.mxu0 0.0
        %528 = vmatprep.subr.mxu0 0.0
        %529 = vmatpush1.msra.mxu0 0.0
        %530 = vmatprep.mubr.f32.mxu0 0.0
        %531 = vmatmul.mubr.f32.gmra.mrb[0].mxu0 %v200
        %v532 = vpop.f32.mrb[0].mxu0
        %v533 = vadd.f32 0.0, %v532
        %v534 = vpop.f32.mrb[0].mxu0
        %535 = vmatprep.mubr.f32.mxu0 0.0
        %536 = vmatmul.mubr.f32.gmra.mrb[0].mxu0 %v203
        %v537 = vpop.f32.mrb[0].mxu0
        %v538 = vadd.f32 0.0, %v537
        %v539 = vpop.f32.mrb[0].mxu0
        %540 = vmatprep.mubr.f32.mxu0 0.0
        %541 = vmatmul.mubr.f32.gmra.mrb[0].mxu0 %v206
        %v542 = vpop.f32.mrb[0].mxu0
        %v543 = vadd.f32 0.0, %v542
        %v544 = vpop.f32.mrb[0].mxu0
        %545 = vmatprep.mubr.f32.mxu0 0.0
        %546 = vmatmul.mubr.f32.gmra.mrb[0].mxu0 %v209
        %v547 = vpop.f32.mrb[0].mxu0
        %v548 = vadd.f32 0.0, %v547
        %v549 = vpop.f32.mrb[0].mxu0
        %550 = vdwg.mxu0
        %551 = vmatprep.subr.mxu0 0.0
        %552 = vmatpush1.msra.mxu0 %v189
        %553 = vmatprep.subr.mxu0 0.0
        %554 = vmatpush1.msra.mxu0 0.0
        %555 = vmatprep.subr.mxu0 0.0
        %556 = vmatpush1.msra.mxu0 0.0
        %557 = vmatprep.subr.mxu0 0.0
        %558 = vmatpush1.msra.mxu0 0.0
        %559 = vmatprep.subr.mxu0 0.0
        %560 = vmatpush1.msra.mxu0 0.0
        %561 = vmatprep.subr.mxu0 0.0
        %562 = vmatpush1.msra.mxu0 0.0
        %563 = vmatprep.subr.mxu0 0.0
        %564 = vmatpush1.msra.mxu0 0.0
        %565 = vmatprep.subr.mxu0 0.0
        %566 = vmatpush1.msra.mxu0 0.0
        %567 = vmatprep.subr.mxu0 0.0
        %568 = vmatpush1.msra.mxu0 0.0
        %569 = vmatprep.subr.mxu0 0.0
        %570 = vmatpush1.msra.mxu0 0.0
        %571 = vmatprep.subr.mxu0 0.0
        %572 = vmatpush1.msra.mxu0 0.0
        %573 = vmatprep.subr.mxu0 0.0
        %574 = vmatpush1.msra.mxu0 0.0
        %575 = vmatprep.subr.mxu0 0.0
        %576 = vmatpush1.msra.mxu0 0.0
        %577 = vmatprep.subr.mxu0 0.0
        %578 = vmatpush1.msra.mxu0 0.0
        %579 = vmatprep.subr.mxu0 0.0
        %580 = vmatpush1.msra.mxu0 0.0
        %581 = vmatprep.subr.mxu0 0.0
        %582 = vmatpush1.msra.mxu0 0.0
        %583 = vmatprep.subr.mxu0 0.0
        %584 = vmatpush1.msra.mxu0 0.0
        %585 = vmatprep.subr.mxu0 0.0
        %586 = vmatpush1.msra.mxu0 0.0
        %587 = vmatprep.subr.mxu0 0.0
        %588 = vmatpush1.msra.mxu0 0.0
        %589 = vmatprep.subr.mxu0 0.0
        %590 = vmatpush1.msra.mxu0 0.0
        %591 = vmatprep.subr.mxu0 0.0
        %592 = vmatpush1.msra.mxu0 0.0
        %593 = vmatprep.subr.mxu0 0.0
        %594 = vmatpush1.msra.mxu0 0.0
        %595 = vmatprep.subr.mxu0 0.0
        %596 = vmatpush1.msra.mxu0 0.0
        %597 = vmatprep.subr.mxu0 0.0
        %598 = vmatpush1.msra.mxu0 0.0
        %599 = vmatprep.subr.mxu0 0.0
        %600 = vmatpush1.msra.mxu0 0.0
        %601 = vmatprep.subr.mxu0 0.0
        %602 = vmatpush1.msra.mxu0 0.0
        %603 = vmatprep.subr.mxu0 0.0
        %604 = vmatpush1.msra.mxu0 0.0
        %605 = vmatprep.subr.mxu0 0.0
        %606 = vmatpush1.msra.mxu0 0.0
        %607 = vmatprep.subr.mxu0 0.0
        %608 = vmatpush1.msra.mxu0 0.0
        %609 = vmatprep.subr.mxu0 0.0
        %610 = vmatpush1.msra.mxu0 0.0
        %611 = vmatprep.subr.mxu0 0.0
        %612 = vmatpush1.msra.mxu0 0.0
        %613 = vmatprep.subr.mxu0 0.0
        %614 = vmatpush1.msra.mxu0 0.0
        %615 = vmatprep.mubr.f32.mxu0 0.0
        %616 = vmatmul.mubr.f32.gmra.mrb[0].mxu0 %v200
        %v617 = vpop.f32.mrb[0].mxu0
        %v618 = vadd.f32 0.0, %v617
        %v619 = vpop.f32.mrb[0].mxu0
        %620 = vmatprep.mubr.f32.mxu0 0.0
        %621 = vmatmul.mubr.f32.gmra.mrb[0].mxu0 %v203
        %v622 = vpop.f32.mrb[0].mxu0
        %v623 = vadd.f32 0.0, %v622
        %v624 = vpop.f32.mrb[0].mxu0
        %625 = vmatprep.mubr.f32.mxu0 0.0
        %626 = vmatmul.mubr.f32.gmra.mrb[0].mxu0 %v206
        %v627 = vpop.f32.mrb[0].mxu0
        %v628 = vadd.f32 0.0, %v627
        %v629 = vpop.f32.mrb[0].mxu0
        %630 = vmatprep.mubr.f32.mxu0 0.0
        %631 = vmatmul.mubr.f32.gmra.mrb[0].mxu0 %v209
        %v632 = vpop.f32.mrb[0].mxu0
        %v633 = vadd.f32 0.0, %v632
        %v634 = vpop.f32.mrb[0].mxu0
        %635 = vdwg.mxu0
        %636 = vmatprep.subr.mxu0 0.0
        %637 = vmatpush1.msra.mxu0 %v190
        %638 = vmatprep.subr.mxu0 0.0
        %639 = vmatpush1.msra.mxu0 0.0
        %640 = vmatprep.subr.mxu0 0.0
        %641 = vmatpush1.msra.mxu0 0.0
        %642 = vmatprep.subr.mxu0 0.0
        %643 = vmatpush1.msra.mxu0 0.0
        %644 = vmatprep.subr.mxu0 0.0
        %645 = vmatpush1.msra.mxu0 0.0
        %646 = vmatprep.subr.mxu0 0.0
        %647 = vmatpush1.msra.mxu0 0.0
        %648 = vmatprep.subr.mxu0 0.0
        %649 = vmatpush1.msra.mxu0 0.0
        %650 = vmatprep.subr.mxu0 0.0
        %651 = vmatpush1.msra.mxu0 0.0
        %652 = vmatprep.subr.mxu0 0.0
        %653 = vmatpush1.msra.mxu0 0.0
        %654 = vmatprep.subr.mxu0 0.0
        %655 = vmatpush1.msra.mxu0 0.0
        %656 = vmatprep.subr.mxu0 0.0
        %657 = vmatpush1.msra.mxu0 0.0
        %658 = vmatprep.subr.mxu0 0.0
        %659 = vmatpush1.msra.mxu0 0.0
        %660 = vmatprep.subr.mxu0 0.0
        %661 = vmatpush1.msra.mxu0 0.0
        %662 = vmatprep.subr.mxu0 0.0
        %663 = vmatpush1.msra.mxu0 0.0
        %664 = vmatprep.subr.mxu0 0.0
        %665 = vmatpush1.msra.mxu0 0.0
        %666 = vmatprep.subr.mxu0 0.0
        %667 = vmatpush1.msra.mxu0 0.0
        %668 = vmatprep.subr.mxu0 0.0
        %669 = vmatpush1.msra.mxu0 0.0
        %670 = vmatprep.subr.mxu0 0.0
        %671 = vmatpush1.msra.mxu0 0.0
        %672 = vmatprep.subr.mxu0 0.0
        %673 = vmatpush1.msra.mxu0 0.0
        %674 = vmatprep.subr.mxu0 0.0
        %675 = vmatpush1.msra.mxu0 0.0
        %676 = vmatprep.subr.mxu0 0.0
        %677 = vmatpush1.msra.mxu0 0.0
        %678 = vmatprep.subr.mxu0 0.0
        %679 = vmatpush1.msra.mxu0 0.0
        %680 = vmatprep.subr.mxu0 0.0
        %681 = vmatpush1.msra.mxu0 0.0
        %682 = vmatprep.subr.mxu0 0.0
        %683 = vmatpush1.msra.mxu0 0.0
        %684 = vmatprep.subr.mxu0 0.0
        %685 = vmatpush1.msra.mxu0 0.0
        %686 = vmatprep.subr.mxu0 0.0
        %687 = vmatpush1.msra.mxu0 0.0
        %688 = vmatprep.subr.mxu0 0.0
        %689 = vmatpush1.msra.mxu0 0.0
        %690 = vmatprep.subr.mxu0 0.0
        %691 = vmatpush1.msra.mxu0 0.0
        %692 = vmatprep.subr.mxu0 0.0
        %693 = vmatpush1.msra.mxu0 0.0
        %694 = vmatprep.subr.mxu0 0.0
        %695 = vmatpush1.msra.mxu0 0.0
        %696 = vmatprep.subr.mxu0 0.0
        %697 = vmatpush1.msra.mxu0 0.0
        %698 = vmatprep.subr.mxu0 0.0
        %699 = vmatpush1.msra.mxu0 0.0
        %700 = vmatprep.mubr.f32.mxu0 0.0
        %701 = vmatmul.mubr.f32.gmra.mrb[0].mxu0 %v200
        %v702 = vpop.f32.mrb[0].mxu0
        %v703 = vadd.f32 0.0, %v702
        %v704 = vpop.f32.mrb[0].mxu0
        %705 = vmatprep.mubr.f32.mxu0 0.0
        %706 = vmatmul.mubr.f32.gmra.mrb[0].mxu0 %v203
        %v707 = vpop.f32.mrb[0].mxu0
        %v708 = vadd.f32 0.0, %v707
        %v709 = vpop.f32.mrb[0].mxu0
        %710 = vmatprep.mubr.f32.mxu0 0.0
        %711 = vmatmul.mubr.f32.gmra.mrb[0].mxu0 %v206
        %v712 = vpop.f32.mrb[0].mxu0
        %v713 = vadd.f32 0.0, %v712
        %v714 = vpop.f32.mrb[0].mxu0
        %715 = vmatprep.mubr.f32.mxu0 0.0
        %716 = vmatmul.mubr.f32.gmra.mrb[0].mxu0 %v209
        %v717 = vpop.f32.mrb[0].mxu0
        %v718 = vadd.f32 0.0, %v717
        %v719 = vpop.f32.mrb[0].mxu0
        %720 = vdwg.mxu0
        %721 = vmatprep.subr.mxu0 0.0
        %722 = vmatpush1.msra.mxu0 %v191
        %723 = vmatprep.subr.mxu0 0.0
        %724 = vmatpush1.msra.mxu0 0.0
        %725 = vmatprep.subr.mxu0 0.0
        %726 = vmatpush1.msra.mxu0 0.0
        %727 = vmatprep.subr.mxu0 0.0
        %728 = vmatpush1.msra.mxu0 0.0
        %729 = vmatprep.subr.mxu0 0.0
        %730 = vmatpush1.msra.mxu0 0.0
        %731 = vmatprep.subr.mxu0 0.0
        %732 = vmatpush1.msra.mxu0 0.0
        %733 = vmatprep.subr.mxu0 0.0
        %734 = vmatpush1.msra.mxu0 0.0
        %735 = vmatprep.subr.mxu0 0.0
        %736 = vmatpush1.msra.mxu0 0.0
        %737 = vmatprep.subr.mxu0 0.0
        %738 = vmatpush1.msra.mxu0 0.0
        %739 = vmatprep.subr.mxu0 0.0
        %740 = vmatpush1.msra.mxu0 0.0
        %741 = vmatprep.subr.mxu0 0.0
        %742 = vmatpush1.msra.mxu0 0.0
        %743 = vmatprep.subr.mxu0 0.0
        %744 = vmatpush1.msra.mxu0 0.0
        %745 = vmatprep.subr.mxu0 0.0
        %746 = vmatpush1.msra.mxu0 0.0
        %747 = vmatprep.subr.mxu0 0.0
        %748 = vmatpush1.msra.mxu0 0.0
        %749 = vmatprep.subr.mxu0 0.0
        %750 = vmatpush1.msra.mxu0 0.0
        %751 = vmatprep.subr.mxu0 0.0
        %752 = vmatpush1.msra.mxu0 0.0
        %753 = vmatprep.subr.mxu0 0.0
        %754 = vmatpush1.msra.mxu0 0.0
        %755 = vmatprep.subr.mxu0 0.0
        %756 = vmatpush1.msra.mxu0 0.0
        %757 = vmatprep.subr.mxu0 0.0
        %758 = vmatpush1.msra.mxu0 0.0
        %759 = vmatprep.subr.mxu0 0.0
        %760 = vmatpush1.msra.mxu0 0.0
        %761 = vmatprep.subr.mxu0 0.0
        %762 = vmatpush1.msra.mxu0 0.0
        %763 = vmatprep.subr.mxu0 0.0
        %764 = vmatpush1.msra.mxu0 0.0
        %765 = vmatprep.subr.mxu0 0.0
        %766 = vmatpush1.msra.mxu0 0.0
        %767 = vmatprep.subr.mxu0 0.0
        %768 = vmatpush1.msra.mxu0 0.0
        %769 = vmatprep.subr.mxu0 0.0
        %770 = vmatpush1.msra.mxu0 0.0
        %771 = vmatprep.subr.mxu0 0.0
        %772 = vmatpush1.msra.mxu0 0.0
        %773 = vmatprep.subr.mxu0 0.0
        %774 = vmatpush1.msra.mxu0 0.0
        %775 = vmatprep.subr.mxu0 0.0
        %776 = vmatpush1.msra.mxu0 0.0
        %777 = vmatprep.subr.mxu0 0.0
        %778 = vmatpush1.msra.mxu0 0.0
        %779 = vmatprep.subr.mxu0 0.0
        %780 = vmatpush1.msra.mxu0 0.0
        %781 = vmatprep.subr.mxu0 0.0
        %782 = vmatpush1.msra.mxu0 0.0
        %783 = vmatprep.subr.mxu0 0.0
        %784 = vmatpush1.msra.mxu0 0.0
        %785 = vmatprep.mubr.f32.mxu0 0.0
        %786 = vmatmul.mubr.f32.gmra.mrb[0].mxu0 %v200
        %v787 = vpop.f32.mrb[0].mxu0
        %v788 = vadd.f32 0.0, %v787
        %v789 = vpop.f32.mrb[0].mxu0
        %790 = vmatprep.mubr.f32.mxu0 0.0
        %791 = vmatmul.mubr.f32.gmra.mrb[0].mxu0 %v203
        %v792 = vpop.f32.mrb[0].mxu0
        %v793 = vadd.f32 0.0, %v792
        %v794 = vpop.f32.mrb[0].mxu0
        %795 = vmatprep.mubr.f32.mxu0 0.0
        %796 = vmatmul.mubr.f32.gmra.mrb[0].mxu0 %v206
        %v797 = vpop.f32.mrb[0].mxu0
        %v798 = vadd.f32 0.0, %v797
        %v799 = vpop.f32.mrb[0].mxu0
        %800 = vmatprep.mubr.f32.mxu0 0.0
        %801 = vmatmul.mubr.f32.gmra.mrb[0].mxu0 %v209
        %v802 = vpop.f32.mrb[0].mxu0
        %v803 = vadd.f32 0.0, %v802
        %v804 = vpop.f32.mrb[0].mxu0
        %805 = vdwg.mxu0
        %806 = vmatprep.subr.mxu0 0.0
        %807 = vmatpush1.msra.mxu0 %v192
        %808 = vmatprep.subr.mxu0 0.0
        %809 = vmatpush1.msra.mxu0 0.0
        %810 = vmatprep.subr.mxu0 0.0
        %811 = vmatpush1.msra.mxu0 0.0
        %812 = vmatprep.subr.mxu0 0.0
        %813 = vmatpush1.msra.mxu0 0.0
        %814 = vmatprep.subr.mxu0 0.0
        %815 = vmatpush1.msra.mxu0 0.0
        %816 = vmatprep.subr.mxu0 0.0
        %817 = vmatpush1.msra.mxu0 0.0
        %818 = vmatprep.subr.mxu0 0.0
        %819 = vmatpush1.msra.mxu0 0.0
        %820 = vmatprep.subr.mxu0 0.0
        %821 = vmatpush1.msra.mxu0 0.0
        %822 = vmatprep.subr.mxu0 0.0
        %823 = vmatpush1.msra.mxu0 0.0
        %824 = vmatprep.subr.mxu0 0.0
        %825 = vmatpush1.msra.mxu0 0.0
        %826 = vmatprep.subr.mxu0 0.0
        %827 = vmatpush1.msra.mxu0 0.0
        %828 = vmatprep.subr.mxu0 0.0
        %829 = vmatpush1.msra.mxu0 0.0
        %830 = vmatprep.subr.mxu0 0.0
        %831 = vmatpush1.msra.mxu0 0.0
        %832 = vmatprep.subr.mxu0 0.0
        %833 = vmatpush1.msra.mxu0 0.0
        %834 = vmatprep.subr.mxu0 0.0
        %835 = vmatpush1.msra.mxu0 0.0
        %836 = vmatprep.subr.mxu0 0.0
        %837 = vmatpush1.msra.mxu0 0.0
        %838 = vmatprep.subr.mxu0 0.0
        %839 = vmatpush1.msra.mxu0 0.0
        %840 = vmatprep.subr.mxu0 0.0
        %841 = vmatpush1.msra.mxu0 0.0
        %842 = vmatprep.subr.mxu0 0.0
        %843 = vmatpush1.msra.mxu0 0.0
        %844 = vmatprep.subr.mxu0 0.0
        %845 = vmatpush1.msra.mxu0 0.0
        %846 = vmatprep.subr.mxu0 0.0
        %847 = vmatpush1.msra.mxu0 0.0
        %848 = vmatprep.subr.mxu0 0.0
        %849 = vmatpush1.msra.mxu0 0.0
        %850 = vmatprep.subr.mxu0 0.0
        %851 = vmatpush1.msra.mxu0 0.0
        %852 = vmatprep.subr.mxu0 0.0
        %853 = vmatpush1.msra.mxu0 0.0
        %854 = vmatprep.subr.mxu0 0.0
        %855 = vmatpush1.msra.mxu0 0.0
        %856 = vmatprep.subr.mxu0 0.0
        %857 = vmatpush1.msra.mxu0 0.0
        %858 = vmatprep.subr.mxu0 0.0
        %859 = vmatpush1.msra.mxu0 0.0
        %860 = vmatprep.subr.mxu0 0.0
        %861 = vmatpush1.msra.mxu0 0.0
        %862 = vmatprep.subr.mxu0 0.0
        %863 = vmatpush1.msra.mxu0 0.0
        %864 = vmatprep.subr.mxu0 0.0
        %865 = vmatpush1.msra.mxu0 0.0
        %866 = vmatprep.subr.mxu0 0.0
        %867 = vmatpush1.msra.mxu0 0.0
        %868 = vmatprep.subr.mxu0 0.0
        %869 = vmatpush1.msra.mxu0 0.0
        %870 = vmatprep.mubr.f32.mxu0 0.0
        %871 = vmatmul.mubr.f32.gmra.mrb[0].mxu0 %v200
        %v872 = vpop.f32.mrb[0].mxu0
        %v873 = vadd.f32 0.0, %v872
        %v874 = vpop.f32.mrb[0].mxu0
        %875 = vmatprep.mubr.f32.mxu0 0.0
        %876 = vmatmul.mubr.f32.gmra.mrb[0].mxu0 %v203
        %v877 = vpop.f32.mrb[0].mxu0
        %v878 = vadd.f32 0.0, %v877
        %v879 = vpop.f32.mrb[0].mxu0
        %880 = vmatprep.mubr.f32.mxu0 0.0
        %881 = vmatmul.mubr.f32.gmra.mrb[0].mxu0 %v206
        %v882 = vpop.f32.mrb[0].mxu0
        %v883 = vadd.f32 0.0, %v882
        %v884 = vpop.f32.mrb[0].mxu0
        %885 = vmatprep.mubr.f32.mxu0 0.0
        %886 = vmatmul.mubr.f32.gmra.mrb[0].mxu0 %v209
        %v887 = vpop.f32.mrb[0].mxu0
        %v888 = vadd.f32 0.0, %v887
        %v889 = vpop.f32.mrb[0].mxu0
        %890 = vdwg.mxu0
        %v892 = vsel %vm198, %v278, 0
        %v895 = vsel %vm198, %v283, 0
        %v898 = vsel %vm198, %v288, 0
        %v901 = vsel %vm198, %v293, 0
        %903 = vmatprep.subr.mxu0 0.0
        %904 = vmatpush1.msra.mxu0 %v197
        %905 = vmatprep.subr.mxu0 0.0
        %906 = vmatpush1.msra.mxu0 0.0
        %907 = vmatprep.subr.mxu0 0.0
        %908 = vmatpush1.msra.mxu0 0.0
        %909 = vmatprep.subr.mxu0 0.0
        %910 = vmatpush1.msra.mxu0 0.0
        %911 = vmatprep.subr.mxu0 0.0
        %912 = vmatpush1.msra.mxu0 0.0
        %913 = vmatprep.subr.mxu0 0.0
        %914 = vmatpush1.msra.mxu0 0.0
        %915 = vmatprep.subr.mxu0 0.0
        %916 = vmatpush1.msra.mxu0 0.0
        %917 = vmatprep.subr.mxu0 0.0
        %918 = vmatpush1.msra.mxu0 0.0
        %919 = vmatprep.subr.mxu0 0.0
        %920 = vmatpush1.msra.mxu0 0.0
        %921 = vmatprep.subr.mxu0 0.0
        %922 = vmatpush1.msra.mxu0 0.0
        %923 = vmatprep.subr.mxu0 0.0
        %924 = vmatpush1.msra.mxu0 0.0
        %925 = vmatprep.subr.mxu0 0.0
        %926 = vmatpush1.msra.mxu0 0.0
        %927 = vmatprep.subr.mxu0 0.0
        %928 = vmatpush1.msra.mxu0 0.0
        %929 = vmatprep.subr.mxu0 0.0
        %930 = vmatpush1.msra.mxu0 0.0
        %931 = vmatprep.subr.mxu0 0.0
        %932 = vmatpush1.msra.mxu0 0.0
        %933 = vmatprep.subr.mxu0 0.0
        %934 = vmatpush1.msra.mxu0 0.0
        %935 = vmatprep.subr.mxu0 0.0
        %936 = vmatpush1.msra.mxu0 0.0
        %937 = vmatprep.subr.mxu0 0.0
        %938 = vmatpush1.msra.mxu0 0.0
        %939 = vmatprep.subr.mxu0 0.0
        %940 = vmatpush1.msra.mxu0 0.0
        %941 = vmatprep.subr.mxu0 0.0
        %942 = vmatpush1.msra.mxu0 0.0
        %943 = vmatprep.subr.mxu0 0.0
        %944 = vmatpush1.msra.mxu0 0.0
        %945 = vmatprep.subr.mxu0 0.0
        %946 = vmatpush1.msra.mxu0 0.0
        %947 = vmatprep.subr.mxu0 0.0
        %948 = vmatpush1.msra.mxu0 0.0
        %949 = vmatprep.subr.mxu0 0.0
        %950 = vmatpush1.msra.mxu0 0.0
        %951 = vmatprep.subr.mxu0 0.0
        %952 = vmatpush1.msra.mxu0 0.0
        %953 = vmatprep.subr.mxu0 0.0
        %954 = vmatpush1.msra.mxu0 0.0
        %955 = vmatprep.subr.mxu0 0.0
        %956 = vmatpush1.msra.mxu0 0.0
        %957 = vmatprep.subr.mxu0 0.0
        %958 = vmatpush1.msra.mxu0 0.0
        %959 = vmatprep.subr.mxu0 0.0
        %960 = vmatpush1.msra.mxu0 0.0
        %961 = vmatprep.subr.mxu0 0.0
        %962 = vmatpush1.msra.mxu0 0.0
        %963 = vmatprep.subr.mxu0 0.0
        %964 = vmatpush1.msra.mxu0 0.0
        %965 = vmatprep.subr.mxu0 0.0
        %966 = vmatpush1.msra.mxu0 0.0
        %967 = vmatprep.mubr.f32.mxu0 0.0
        %968 = vmatmul.mubr.f32.gmra.mrb[0].mxu0 %v892
        %v969 = vpop.f32.mrb[0].mxu0
        %v970 = vadd.f32 0.0, %v969
        %v971 = vpop.f32.mrb[0].mxu0
        %972 = vmatprep.mubr.f32.mxu0 0.0
        %973 = vmatmul.mubr.f32.gmra.mrb[0].mxu0 %v895
        %v974 = vpop.f32.mrb[0].mxu0
        %v975 = vadd.f32 0.0, %v974
        %v976 = vpop.f32.mrb[0].mxu0
        %977 = vmatprep.mubr.f32.mxu0 0.0
        %978 = vmatmul.mubr.f32.gmra.mrb[0].mxu0 %v898
        %v979 = vpop.f32.mrb[0].mxu0
        %v980 = vadd.f32 0.0, %v979
        %v981 = vpop.f32.mrb[0].mxu0
        %982 = vmatprep.mubr.f32.mxu0 0.0
        %983 = vmatmul.mubr.f32.gmra.mrb[0].mxu0 %v901
        %v984 = vpop.f32.mrb[0].mxu0
        %v985 = vadd.f32 0.0, %v984
        %v986 = vpop.f32.mrb[0].mxu0
        %987 = vdwg.mxu0
        %v989 = vsel %vm198, %v363, 0
        %v992 = vsel %vm198, %v368, 0
        %v995 = vsel %vm198, %v373, 0
        %v998 = vsel %vm198, %v378, 0
        %1000 = vmatprep.subr.mxu0 0.0
        %1001 = vmatpush1.msra.mxu0 %v197
        %1002 = vmatprep.subr.mxu0 0.0
        %1003 = vmatpush1.msra.mxu0 0.0
        %1004 = vmatprep.subr.mxu0 0.0
        %1005 = vmatpush1.msra.mxu0 0.0
        %1006 = vmatprep.subr.mxu0 0.0
        %1007 = vmatpush1.msra.mxu0 0.0
        %1008 = vmatprep.subr.mxu0 0.0
        %1009 = vmatpush1.msra.mxu0 0.0
        %1010 = vmatprep.subr.mxu0 0.0
        %1011 = vmatpush1.msra.mxu0 0.0
        %1012 = vmatprep.subr.mxu0 0.0
        %1013 = vmatpush1.msra.mxu0 0.0
        %1014 = vmatprep.subr.mxu0 0.0
        %1015 = vmatpush1.msra.mxu0 0.0
        %1016 = vmatprep.subr.mxu0 0.0
        %1017 = vmatpush1.msra.mxu0 0.0
        %1018 = vmatprep.subr.mxu0 0.0
        %1019 = vmatpush1.msra.mxu0 0.0
        %1020 = vmatprep.subr.mxu0 0.0
        %1021 = vmatpush1.msra.mxu0 0.0
        %1022 = vmatprep.subr.mxu0 0.0
        %1023 = vmatpush1.msra.mxu0 0.0
        %1024 = vmatprep.subr.mxu0 0.0
        %1025 = vmatpush1.msra.mxu0 0.0
        %1026 = vmatprep.subr.mxu0 0.0
        %1027 = vmatpush1.msra.mxu0 0.0
        %1028 = vmatprep.subr.mxu0 0.0
        %1029 = vmatpush1.msra.mxu0 0.0
        %1030 = vmatprep.subr.mxu0 0.0
        %1031 = vmatpush1.msra.mxu0 0.0
        %1032 = vmatprep.subr.mxu0 0.0
        %1033 = vmatpush1.msra.mxu0 0.0
        %1034 = vmatprep.subr.mxu0 0.0
        %1035 = vmatpush1.msra.mxu0 0.0
        %1036 = vmatprep.subr.mxu0 0.0
        %1037 = vmatpush1.msra.mxu0 0.0
        %1038 = vmatprep.subr.mxu0 0.0
        %1039 = vmatpush1.msra.mxu0 0.0
        %1040 = vmatprep.subr.mxu0 0.0
        %1041 = vmatpush1.msra.mxu0 0.0
        %1042 = vmatprep.subr.mxu0 0.0
        %1043 = vmatpush1.msra.mxu0 0.0
        %1044 = vmatprep.subr.mxu0 0.0
        %1045 = vmatpush1.msra.mxu0 0.0
        %1046 = vmatprep.subr.mxu0 0.0
        %1047 = vmatpush1.msra.mxu0 0.0
        %1048 = vmatprep.subr.mxu0 0.0
        %1049 = vmatpush1.msra.mxu0 0.0
        %1050 = vmatprep.subr.mxu0 0.0
        %1051 = vmatpush1.msra.mxu0 0.0
        %1052 = vmatprep.subr.mxu0 0.0
        %1053 = vmatpush1.msra.mxu0 0.0
        %1054 = vmatprep.subr.mxu0 0.0
        %1055 = vmatpush1.msra.mxu0 0.0
        %1056 = vmatprep.subr.mxu0 0.0
        %1057 = vmatpush1.msra.mxu0 0.0
        %1058 = vmatprep.subr.mxu0 0.0
        %1059 = vmatpush1.msra.mxu0 0.0
        %1060 = vmatprep.subr.mxu0 0.0
        %1061 = vmatpush1.msra.mxu0 0.0
        %1062 = vmatprep.subr.mxu0 0.0
        %1063 = vmatpush1.msra.mxu0 0.0
        %1064 = vmatprep.mubr.f32.mxu0 0.0
        %1065 = vmatmul.mubr.f32.gmra.mrb[0].mxu0 %v989
        %v1066 = vpop.f32.mrb[0].mxu0
        %v1067 = vadd.f32 0.0, %v1066
        %v1068 = vpop.f32.mrb[0].mxu0
        %1069 = vmatprep.mubr.f32.mxu0 0.0
        %1070 = vmatmul.mubr.f32.gmra.mrb[0].mxu0 %v992
        %v1071 = vpop.f32.mrb[0].mxu0
        %v1072 = vadd.f32 0.0, %v1071
        %v1073 = vpop.f32.mrb[0].mxu0
        %1074 = vmatprep.mubr.f32.mxu0 0.0
        %1075 = vmatmul.mubr.f32.gmra.mrb[0].mxu0 %v995
        %v1076 = vpop.f32.mrb[0].mxu0
        %v1077 = vadd.f32 0.0, %v1076
        %v1078 = vpop.f32.mrb[0].mxu0
        %1079 = vmatprep.mubr.f32.mxu0 0.0
        %1080 = vmatmul.mubr.f32.gmra.mrb[0].mxu0 %v998
        %v1081 = vpop.f32.mrb[0].mxu0
        %v1082 = vadd.f32 0.0, %v1081
        %v1083 = vpop.f32.mrb[0].mxu0
        %1084 = vdwg.mxu0
        %v1086 = vsel %vm198, %v448, 0
        %v1089 = vsel %vm198, %v453, 0
        %v1092 = vsel %vm198, %v458, 0
        %v1095 = vsel %vm198, %v463, 0
        %1097 = vmatprep.subr.mxu0 0.0
        %1098 = vmatpush1.msra.mxu0 %v197
        %1099 = vmatprep.subr.mxu0 0.0
        %1100 = vmatpush1.msra.mxu0 0.0
        %1101 = vmatprep.subr.mxu0 0.0
        %1102 = vmatpush1.msra.mxu0 0.0
        %1103 = vmatprep.subr.mxu0 0.0
        %1104 = vmatpush1.msra.mxu0 0.0
        %1105 = vmatprep.subr.mxu0 0.0
        %1106 = vmatpush1.msra.mxu0 0.0
        %1107 = vmatprep.subr.mxu0 0.0
        %1108 = vmatpush1.msra.mxu0 0.0
        %1109 = vmatprep.subr.mxu0 0.0
        %1110 = vmatpush1.msra.mxu0 0.0
        %1111 = vmatprep.subr.mxu0 0.0
        %1112 = vmatpush1.msra.mxu0 0.0
        %1113 = vmatprep.subr.mxu0 0.0
        %1114 = vmatpush1.msra.mxu0 0.0
        %1115 = vmatprep.subr.mxu0 0.0
        %1116 = vmatpush1.msra.mxu0 0.0
        %1117 = vmatprep.subr.mxu0 0.0
        %1118 = vmatpush1.msra.mxu0 0.0
        %1119 = vmatprep.subr.mxu0 0.0
        %1120 = vmatpush1.msra.mxu0 0.0
        %1121 = vmatprep.subr.mxu0 0.0
        %1122 = vmatpush1.msra.mxu0 0.0
        %1123 = vmatprep.subr.mxu0 0.0
        %1124 = vmatpush1.msra.mxu0 0.0
        %1125 = vmatprep.subr.mxu0 0.0
        %1126 = vmatpush1.msra.mxu0 0.0
        %1127 = vmatprep.subr.mxu0 0.0
        %1128 = vmatpush1.msra.mxu0 0.0
        %1129 = vmatprep.subr.mxu0 0.0
        %1130 = vmatpush1.msra.mxu0 0.0
        %1131 = vmatprep.subr.mxu0 0.0
        %1132 = vmatpush1.msra.mxu0 0.0
        %1133 = vmatprep.subr.mxu0 0.0
        %1134 = vmatpush1.msra.mxu0 0.0
        %1135 = vmatprep.subr.mxu0 0.0
        %1136 = vmatpush1.msra.mxu0 0.0
        %1137 = vmatprep.subr.mxu0 0.0
        %1138 = vmatpush1.msra.mxu0 0.0
        %1139 = vmatprep.subr.mxu0 0.0
        %1140 = vmatpush1.msra.mxu0 0.0
        %1141 = vmatprep.subr.mxu0 0.0
        %1142 = vmatpush1.msra.mxu0 0.0
        %1143 = vmatprep.subr.mxu0 0.0
        %1144 = vmatpush1.msra.mxu0 0.0
        %1145 = vmatprep.subr.mxu0 0.0
        %1146 = vmatpush1.msra.mxu0 0.0
        %1147 = vmatprep.subr.mxu0 0.0
        %1148 = vmatpush1.msra.mxu0 0.0
        %1149 = vmatprep.subr.mxu0 0.0
        %1150 = vmatpush1.msra.mxu0 0.0
        %1151 = vmatprep.subr.mxu0 0.0
        %1152 = vmatpush1.msra.mxu0 0.0
        %1153 = vmatprep.subr.mxu0 0.0
        %1154 = vmatpush1.msra.mxu0 0.0
        %1155 = vmatprep.subr.mxu0 0.0
        %1156 = vmatpush1.msra.mxu0 0.0
        %1157 = vmatprep.subr.mxu0 0.0
        %1158 = vmatpush1.msra.mxu0 0.0
        %1159 = vmatprep.subr.mxu0 0.0
        %1160 = vmatpush1.msra.mxu0 0.0
        %1161 = vmatprep.mubr.f32.mxu0 0.0
        %1162 = vmatmul.mubr.f32.gmra.mrb[0].mxu0 %v1086
        %v1163 = vpop.f32.mrb[0].mxu0
        %v1164 = vadd.f32 0.0, %v1163
        %v1165 = vpop.f32.mrb[0].mxu0
        %1166 = vmatprep.mubr.f32.mxu0 0.0
        %1167 = vmatmul.mubr.f32.gmra.mrb[0].mxu0 %v1089
        %v1168 = vpop.f32.mrb[0].mxu0
        %v1169 = vadd.f32 0.0, %v1168
        %v1170 = vpop.f32.mrb[0].mxu0
        %1171 = vmatprep.mubr.f32.mxu0 0.0
        %1172 = vmatmul.mubr.f32.gmra.mrb[0].mxu0 %v1092
        %v1173 = vpop.f32.mrb[0].mxu0
        %v1174 = vadd.f32 0.0, %v1173
        %v1175 = vpop.f32.mrb[0].mxu0
        %1176 = vmatprep.mubr.f32.mxu0 0.0
        %1177 = vmatmul.mubr.f32.gmra.mrb[0].mxu0 %v1095
        %v1178 = vpop.f32.mrb[0].mxu0
        %v1179 = vadd.f32 0.0, %v1178
        %v1180 = vpop.f32.mrb[0].mxu0
        %1181 = vdwg.mxu0
        %v1183 = vsel %vm198, %v533, 0
        %v1186 = vsel %vm198, %v538, 0
        %v1189 = vsel %vm198, %v543, 0
        %v1192 = vsel %vm198, %v548, 0
        %1194 = vmatprep.subr.mxu0 0.0
        %1195 = vmatpush1.msra.mxu0 %v197
        %1196 = vmatprep.subr.mxu0 0.0
        %1197 = vmatpush1.msra.mxu0 0.0
        %1198 = vmatprep.subr.mxu0 0.0
        %1199 = vmatpush1.msra.mxu0 0.0
        %1200 = vmatprep.subr.mxu0 0.0
        %1201 = vmatpush1.msra.mxu0 0.0
        %1202 = vmatprep.subr.mxu0 0.0
        %1203 = vmatpush1.msra.mxu0 0.0
        %1204 = vmatprep.subr.mxu0 0.0
        %1205 = vmatpush1.msra.mxu0 0.0
        %1206 = vmatprep.subr.mxu0 0.0
        %1207 = vmatpush1.msra.mxu0 0.0
        %1208 = vmatprep.subr.mxu0 0.0
        %1209 = vmatpush1.msra.mxu0 0.0
        %1210 = vmatprep.subr.mxu0 0.0
        %1211 = vmatpush1.msra.mxu0 0.0
        %1212 = vmatprep.subr.mxu0 0.0
        %1213 = vmatpush1.msra.mxu0 0.0
        %1214 = vmatprep.subr.mxu0 0.0
        %1215 = vmatpush1.msra.mxu0 0.0
        %1216 = vmatprep.subr.mxu0 0.0
        %1217 = vmatpush1.msra.mxu0 0.0
        %1218 = vmatprep.subr.mxu0 0.0
        %1219 = vmatpush1.msra.mxu0 0.0
        %1220 = vmatprep.subr.mxu0 0.0
        %1221 = vmatpush1.msra.mxu0 0.0
        %1222 = vmatprep.subr.mxu0 0.0
        %1223 = vmatpush1.msra.mxu0 0.0
        %1224 = vmatprep.subr.mxu0 0.0
        %1225 = vmatpush1.msra.mxu0 0.0
        %1226 = vmatprep.subr.mxu0 0.0
        %1227 = vmatpush1.msra.mxu0 0.0
        %1228 = vmatprep.subr.mxu0 0.0
        %1229 = vmatpush1.msra.mxu0 0.0
        %1230 = vmatprep.subr.mxu0 0.0
        %1231 = vmatpush1.msra.mxu0 0.0
        %1232 = vmatprep.subr.mxu0 0.0
        %1233 = vmatpush1.msra.mxu0 0.0
        %1234 = vmatprep.subr.mxu0 0.0
        %1235 = vmatpush1.msra.mxu0 0.0
        %1236 = vmatprep.subr.mxu0 0.0
        %1237 = vmatpush1.msra.mxu0 0.0
        %1238 = vmatprep.subr.mxu0 0.0
        %1239 = vmatpush1.msra.mxu0 0.0
        %1240 = vmatprep.subr.mxu0 0.0
        %1241 = vmatpush1.msra.mxu0 0.0
        %1242 = vmatprep.subr.mxu0 0.0
        %1243 = vmatpush1.msra.mxu0 0.0
        %1244 = vmatprep.subr.mxu0 0.0
        %1245 = vmatpush1.msra.mxu0 0.0
        %1246 = vmatprep.subr.mxu0 0.0
        %1247 = vmatpush1.msra.mxu0 0.0
        %1248 = vmatprep.subr.mxu0 0.0
        %1249 = vmatpush1.msra.mxu0 0.0
        %1250 = vmatprep.subr.mxu0 0.0
        %1251 = vmatpush1.msra.mxu0 0.0
        %1252 = vmatprep.subr.mxu0 0.0
        %1253 = vmatpush1.msra.mxu0 0.0
        %1254 = vmatprep.subr.mxu0 0.0
        %1255 = vmatpush1.msra.mxu0 0.0
        %1256 = vmatprep.subr.mxu0 0.0
        %1257 = vmatpush1.msra.mxu0 0.0
        %1258 = vmatprep.mubr.f32.mxu0 0.0
        %1259 = vmatmul.mubr.f32.gmra.mrb[0].mxu0 %v1183
        %v1260 = vpop.f32.mrb[0].mxu0
        %v1261 = vadd.f32 0.0, %v1260
        %v1262 = vpop.f32.mrb[0].mxu0
        %1263 = vmatprep.mubr.f32.mxu0 0.0
        %1264 = vmatmul.mubr.f32.gmra.mrb[0].mxu0 %v1186
        %v1265 = vpop.f32.mrb[0].mxu0
        %v1266 = vadd.f32 0.0, %v1265
        %v1267 = vpop.f32.mrb[0].mxu0
        %1268 = vmatprep.mubr.f32.mxu0 0.0
        %1269 = vmatmul.mubr.f32.gmra.mrb[0].mxu0 %v1189
        %v1270 = vpop.f32.mrb[0].mxu0
        %v1271 = vadd.f32 0.0, %v1270
        %v1272 = vpop.f32.mrb[0].mxu0
        %1273 = vmatprep.mubr.f32.mxu0 0.0
        %1274 = vmatmul.mubr.f32.gmra.mrb[0].mxu0 %v1192
        %v1275 = vpop.f32.mrb[0].mxu0
        %v1276 = vadd.f32 0.0, %v1275
        %v1277 = vpop.f32.mrb[0].mxu0
        %1278 = vdwg.mxu0
        %v1280 = vsel %vm198, %v618, 0
        %v1283 = vsel %vm198, %v623, 0
        %v1286 = vsel %vm198, %v628, 0
        %v1289 = vsel %vm198, %v633, 0
        %1291 = vmatprep.subr.mxu0 0.0
        %1292 = vmatpush1.msra.mxu0 %v197
        %1293 = vmatprep.subr.mxu0 0.0
        %1294 = vmatpush1.msra.mxu0 0.0
        %1295 = vmatprep.subr.mxu0 0.0
        %1296 = vmatpush1.msra.mxu0 0.0
        %1297 = vmatprep.subr.mxu0 0.0
        %1298 = vmatpush1.msra.mxu0 0.0
        %1299 = vmatprep.subr.mxu0 0.0
        %1300 = vmatpush1.msra.mxu0 0.0
        %1301 = vmatprep.subr.mxu0 0.0
        %1302 = vmatpush1.msra.mxu0 0.0
        %1303 = vmatprep.subr.mxu0 0.0
        %1304 = vmatpush1.msra.mxu0 0.0
        %1305 = vmatprep.subr.mxu0 0.0
        %1306 = vmatpush1.msra.mxu0 0.0
        %1307 = vmatprep.subr.mxu0 0.0
        %1308 = vmatpush1.msra.mxu0 0.0
        %1309 = vmatprep.subr.mxu0 0.0
        %1310 = vmatpush1.msra.mxu0 0.0
        %1311 = vmatprep.subr.mxu0 0.0
        %1312 = vmatpush1.msra.mxu0 0.0
        %1313 = vmatprep.subr.mxu0 0.0
        %1314 = vmatpush1.msra.mxu0 0.0
        %1315 = vmatprep.subr.mxu0 0.0
        %1316 = vmatpush1.msra.mxu0 0.0
        %1317 = vmatprep.subr.mxu0 0.0
        %1318 = vmatpush1.msra.mxu0 0.0
        %1319 = vmatprep.subr.mxu0 0.0
        %1320 = vmatpush1.msra.mxu0 0.0
        %1321 = vmatprep.subr.mxu0 0.0
        %1322 = vmatpush1.msra.mxu0 0.0
        %1323 = vmatprep.subr.mxu0 0.0
        %1324 = vmatpush1.msra.mxu0 0.0
        %1325 = vmatprep.subr.mxu0 0.0
        %1326 = vmatpush1.msra.mxu0 0.0
        %1327 = vmatprep.subr.mxu0 0.0
        %1328 = vmatpush1.msra.mxu0 0.0
        %1329 = vmatprep.subr.mxu0 0.0
        %1330 = vmatpush1.msra.mxu0 0.0
        %1331 = vmatprep.subr.mxu0 0.0
        %1332 = vmatpush1.msra.mxu0 0.0
        %1333 = vmatprep.subr.mxu0 0.0
        %1334 = vmatpush1.msra.mxu0 0.0
        %1335 = vmatprep.subr.mxu0 0.0
        %1336 = vmatpush1.msra.mxu0 0.0
        %1337 = vmatprep.subr.mxu0 0.0
        %1338 = vmatpush1.msra.mxu0 0.0
        %1339 = vmatprep.subr.mxu0 0.0
        %1340 = vmatpush1.msra.mxu0 0.0
        %1341 = vmatprep.subr.mxu0 0.0
        %1342 = vmatpush1.msra.mxu0 0.0
        %1343 = vmatprep.subr.mxu0 0.0
        %1344 = vmatpush1.msra.mxu0 0.0
        %1345 = vmatprep.subr.mxu0 0.0
        %1346 = vmatpush1.msra.mxu0 0.0
        %1347 = vmatprep.subr.mxu0 0.0
        %1348 = vmatpush1.msra.mxu0 0.0
        %1349 = vmatprep.subr.mxu0 0.0
        %1350 = vmatpush1.msra.mxu0 0.0
        %1351 = vmatprep.subr.mxu0 0.0
        %1352 = vmatpush1.msra.mxu0 0.0
        %1353 = vmatprep.subr.mxu0 0.0
        %1354 = vmatpush1.msra.mxu0 0.0
        %1355 = vmatprep.mubr.f32.mxu0 0.0
        %1356 = vmatmul.mubr.f32.gmra.mrb[0].mxu0 %v1280
        %v1357 = vpop.f32.mrb[0].mxu0
        %v1358 = vadd.f32 0.0, %v1357
        %v1359 = vpop.f32.mrb[0].mxu0
        %1360 = vmatprep.mubr.f32.mxu0 0.0
        %1361 = vmatmul.mubr.f32.gmra.mrb[0].mxu0 %v1283
        %v1362 = vpop.f32.mrb[0].mxu0
        %v1363 = vadd.f32 0.0, %v1362
        %v1364 = vpop.f32.mrb[0].mxu0
        %1365 = vmatprep.mubr.f32.mxu0 0.0
        %1366 = vmatmul.mubr.f32.gmra.mrb[0].mxu0 %v1286
        %v1367 = vpop.f32.mrb[0].mxu0
        %v1368 = vadd.f32 0.0, %v1367
        %v1369 = vpop.f32.mrb[0].mxu0
        %1370 = vmatprep.mubr.f32.mxu0 0.0
        %1371 = vmatmul.mubr.f32.gmra.mrb[0].mxu0 %v1289
        %v1372 = vpop.f32.mrb[0].mxu0
        %v1373 = vadd.f32 0.0, %v1372
        %v1374 = vpop.f32.mrb[0].mxu0
        %1375 = vdwg.mxu0
        %v1377 = vsel %vm198, %v703, 0
        %v1380 = vsel %vm198, %v708, 0
        %v1383 = vsel %vm198, %v713, 0
        %v1386 = vsel %vm198, %v718, 0
        %1388 = vmatprep.subr.mxu0 0.0
        %1389 = vmatpush1.msra.mxu0 %v197
        %1390 = vmatprep.subr.mxu0 0.0
        %1391 = vmatpush1.msra.mxu0 0.0
        %1392 = vmatprep.subr.mxu0 0.0
        %1393 = vmatpush1.msra.mxu0 0.0
        %1394 = vmatprep.subr.mxu0 0.0
        %1395 = vmatpush1.msra.mxu0 0.0
        %1396 = vmatprep.subr.mxu0 0.0
        %1397 = vmatpush1.msra.mxu0 0.0
        %1398 = vmatprep.subr.mxu0 0.0
        %1399 = vmatpush1.msra.mxu0 0.0
        %1400 = vmatprep.subr.mxu0 0.0
        %1401 = vmatpush1.msra.mxu0 0.0
        %1402 = vmatprep.subr.mxu0 0.0
        %1403 = vmatpush1.msra.mxu0 0.0
        %1404 = vmatprep.subr.mxu0 0.0
        %1405 = vmatpush1.msra.mxu0 0.0
        %1406 = vmatprep.subr.mxu0 0.0
        %1407 = vmatpush1.msra.mxu0 0.0
        %1408 = vmatprep.subr.mxu0 0.0
        %1409 = vmatpush1.msra.mxu0 0.0
        %1410 = vmatprep.subr.mxu0 0.0
        %1411 = vmatpush1.msra.mxu0 0.0
        %1412 = vmatprep.subr.mxu0 0.0
        %1413 = vmatpush1.msra.mxu0 0.0
        %1414 = vmatprep.subr.mxu0 0.0
        %1415 = vmatpush1.msra.mxu0 0.0
        %1416 = vmatprep.subr.mxu0 0.0
        %1417 = vmatpush1.msra.mxu0 0.0
        %1418 = vmatprep.subr.mxu0 0.0
        %1419 = vmatpush1.msra.mxu0 0.0
        %1420 = vmatprep.subr.mxu0 0.0
        %1421 = vmatpush1.msra.mxu0 0.0
        %1422 = vmatprep.subr.mxu0 0.0
        %1423 = vmatpush1.msra.mxu0 0.0
        %1424 = vmatprep.subr.mxu0 0.0
        %1425 = vmatpush1.msra.mxu0 0.0
        %1426 = vmatprep.subr.mxu0 0.0
        %1427 = vmatpush1.msra.mxu0 0.0
        %1428 = vmatprep.subr.mxu0 0.0
        %1429 = vmatpush1.msra.mxu0 0.0
        %1430 = vmatprep.subr.mxu0 0.0
        %1431 = vmatpush1.msra.mxu0 0.0
        %1432 = vmatprep.subr.mxu0 0.0
        %1433 = vmatpush1.msra.mxu0 0.0
        %1434 = vmatprep.subr.mxu0 0.0
        %1435 = vmatpush1.msra.mxu0 0.0
        %1436 = vmatprep.subr.mxu0 0.0
        %1437 = vmatpush1.msra.mxu0 0.0
        %1438 = vmatprep.subr.mxu0 0.0
        %1439 = vmatpush1.msra.mxu0 0.0
        %1440 = vmatprep.subr.mxu0 0.0
        %1441 = vmatpush1.msra.mxu0 0.0
        %1442 = vmatprep.subr.mxu0 0.0
        %1443 = vmatpush1.msra.mxu0 0.0
        %1444 = vmatprep.subr.mxu0 0.0
        %1445 = vmatpush1.msra.mxu0 0.0
        %1446 = vmatprep.subr.mxu0 0.0
        %1447 = vmatpush1.msra.mxu0 0.0
        %1448 = vmatprep.subr.mxu0 0.0
        %1449 = vmatpush1.msra.mxu0 0.0
        %1450 = vmatprep.subr.mxu0 0.0
        %1451 = vmatpush1.msra.mxu0 0.0
        %1452 = vmatprep.mubr.f32.mxu0 0.0
        %1453 = vmatmul.mubr.f32.gmra.mrb[0].mxu0 %v1377
        %v1454 = vpop.f32.mrb[0].mxu0
        %v1455 = vadd.f32 0.0, %v1454
        %v1456 = vpop.f32.mrb[0].mxu0
        %1457 = vmatprep.mubr.f32.mxu0 0.0
        %1458 = vmatmul.mubr.f32.gmra.mrb[0].mxu0 %v1380
        %v1459 = vpop.f32.mrb[0].mxu0
        %v1460 = vadd.f32 0.0, %v1459
        %v1461 = vpop.f32.mrb[0].mxu0
        %1462 = vmatprep.mubr.f32.mxu0 0.0
        %1463 = vmatmul.mubr.f32.gmra.mrb[0].mxu0 %v1383
        %v1464 = vpop.f32.mrb[0].mxu0
        %v1465 = vadd.f32 0.0, %v1464
        %v1466 = vpop.f32.mrb[0].mxu0
        %1467 = vmatprep.mubr.f32.mxu0 0.0
        %1468 = vmatmul.mubr.f32.gmra.mrb[0].mxu0 %v1386
        %v1469 = vpop.f32.mrb[0].mxu0
        %v1470 = vadd.f32 0.0, %v1469
        %v1471 = vpop.f32.mrb[0].mxu0
        %1472 = vdwg.mxu0
        %v1474 = vsel %vm198, %v788, 0
        %v1477 = vsel %vm198, %v793, 0
        %v1480 = vsel %vm198, %v798, 0
        %v1483 = vsel %vm198, %v803, 0
        %1485 = vmatprep.subr.mxu0 0.0
        %1486 = vmatpush1.msra.mxu0 %v197
        %1487 = vmatprep.subr.mxu0 0.0
        %1488 = vmatpush1.msra.mxu0 0.0
        %1489 = vmatprep.subr.mxu0 0.0
        %1490 = vmatpush1.msra.mxu0 0.0
        %1491 = vmatprep.subr.mxu0 0.0
        %1492 = vmatpush1.msra.mxu0 0.0
        %1493 = vmatprep.subr.mxu0 0.0
        %1494 = vmatpush1.msra.mxu0 0.0
        %1495 = vmatprep.subr.mxu0 0.0
        %1496 = vmatpush1.msra.mxu0 0.0
        %1497 = vmatprep.subr.mxu0 0.0
        %1498 = vmatpush1.msra.mxu0 0.0
        %1499 = vmatprep.subr.mxu0 0.0
        %1500 = vmatpush1.msra.mxu0 0.0
        %1501 = vmatprep.subr.mxu0 0.0
        %1502 = vmatpush1.msra.mxu0 0.0
        %1503 = vmatprep.subr.mxu0 0.0
        %1504 = vmatpush1.msra.mxu0 0.0
        %1505 = vmatprep.subr.mxu0 0.0
        %1506 = vmatpush1.msra.mxu0 0.0
        %1507 = vmatprep.subr.mxu0 0.0
        %1508 = vmatpush1.msra.mxu0 0.0
        %1509 = vmatprep.subr.mxu0 0.0
        %1510 = vmatpush1.msra.mxu0 0.0
        %1511 = vmatprep.subr.mxu0 0.0
        %1512 = vmatpush1.msra.mxu0 0.0
        %1513 = vmatprep.subr.mxu0 0.0
        %1514 = vmatpush1.msra.mxu0 0.0
        %1515 = vmatprep.subr.mxu0 0.0
        %1516 = vmatpush1.msra.mxu0 0.0
        %1517 = vmatprep.subr.mxu0 0.0
        %1518 = vmatpush1.msra.mxu0 0.0
        %1519 = vmatprep.subr.mxu0 0.0
        %1520 = vmatpush1.msra.mxu0 0.0
        %1521 = vmatprep.subr.mxu0 0.0
        %1522 = vmatpush1.msra.mxu0 0.0
        %1523 = vmatprep.subr.mxu0 0.0
        %1524 = vmatpush1.msra.mxu0 0.0
        %1525 = vmatprep.subr.mxu0 0.0
        %1526 = vmatpush1.msra.mxu0 0.0
        %1527 = vmatprep.subr.mxu0 0.0
        %1528 = vmatpush1.msra.mxu0 0.0
        %1529 = vmatprep.subr.mxu0 0.0
        %1530 = vmatpush1.msra.mxu0 0.0
        %1531 = vmatprep.subr.mxu0 0.0
        %1532 = vmatpush1.msra.mxu0 0.0
        %1533 = vmatprep.subr.mxu0 0.0
        %1534 = vmatpush1.msra.mxu0 0.0
        %1535 = vmatprep.subr.mxu0 0.0
        %1536 = vmatpush1.msra.mxu0 0.0
        %1537 = vmatprep.subr.mxu0 0.0
        %1538 = vmatpush1.msra.mxu0 0.0
        %1539 = vmatprep.subr.mxu0 0.0
        %1540 = vmatpush1.msra.mxu0 0.0
        %1541 = vmatprep.subr.mxu0 0.0
        %1542 = vmatpush1.msra.mxu0 0.0
        %1543 = vmatprep.subr.mxu0 0.0
        %1544 = vmatpush1.msra.mxu0 0.0
        %1545 = vmatprep.subr.mxu0 0.0
        %1546 = vmatpush1.msra.mxu0 0.0
        %1547 = vmatprep.subr.mxu0 0.0
        %1548 = vmatpush1.msra.mxu0 0.0
        %1549 = vmatprep.mubr.f32.mxu0 0.0
        %1550 = vmatmul.mubr.f32.gmra.mrb[0].mxu0 %v1474
        %v1551 = vpop.f32.mrb[0].mxu0
        %v1552 = vadd.f32 0.0, %v1551
        %v1553 = vpop.f32.mrb[0].mxu0
        %1554 = vmatprep.mubr.f32.mxu0 0.0
        %1555 = vmatmul.mubr.f32.gmra.mrb[0].mxu0 %v1477
        %v1556 = vpop.f32.mrb[0].mxu0
        %v1557 = vadd.f32 0.0, %v1556
        %v1558 = vpop.f32.mrb[0].mxu0
        %1559 = vmatprep.mubr.f32.mxu0 0.0
        %1560 = vmatmul.mubr.f32.gmra.mrb[0].mxu0 %v1480
        %v1561 = vpop.f32.mrb[0].mxu0
        %v1562 = vadd.f32 0.0, %v1561
        %v1563 = vpop.f32.mrb[0].mxu0
        %1564 = vmatprep.mubr.f32.mxu0 0.0
        %1565 = vmatmul.mubr.f32.gmra.mrb[0].mxu0 %v1483
        %v1566 = vpop.f32.mrb[0].mxu0
        %v1567 = vadd.f32 0.0, %v1566
        %v1568 = vpop.f32.mrb[0].mxu0
        %1569 = vdwg.mxu0
        %v1571 = vsel %vm198, %v873, 0
        %v1574 = vsel %vm198, %v878, 0
        %v1577 = vsel %vm198, %v883, 0
        %v1580 = vsel %vm198, %v888, 0
        %1582 = vmatprep.subr.mxu0 0.0
        %1583 = vmatpush1.msra.mxu0 %v197
        %1584 = vmatprep.subr.mxu0 0.0
        %1585 = vmatpush1.msra.mxu0 0.0
        %1586 = vmatprep.subr.mxu0 0.0
        %1587 = vmatpush1.msra.mxu0 0.0
        %1588 = vmatprep.subr.mxu0 0.0
        %1589 = vmatpush1.msra.mxu0 0.0
        %1590 = vmatprep.subr.mxu0 0.0
        %1591 = vmatpush1.msra.mxu0 0.0
        %1592 = vmatprep.subr.mxu0 0.0
        %1593 = vmatpush1.msra.mxu0 0.0
        %1594 = vmatprep.subr.mxu0 0.0
        %1595 = vmatpush1.msra.mxu0 0.0
        %1596 = vmatprep.subr.mxu0 0.0
        %1597 = vmatpush1.msra.mxu0 0.0
        %1598 = vmatprep.subr.mxu0 0.0
        %1599 = vmatpush1.msra.mxu0 0.0
        %1600 = vmatprep.subr.mxu0 0.0
        %1601 = vmatpush1.msra.mxu0 0.0
        %1602 = vmatprep.subr.mxu0 0.0
        %1603 = vmatpush1.msra.mxu0 0.0
        %1604 = vmatprep.subr.mxu0 0.0
        %1605 = vmatpush1.msra.mxu0 0.0
        %1606 = vmatprep.subr.mxu0 0.0
        %1607 = vmatpush1.msra.mxu0 0.0
        %1608 = vmatprep.subr.mxu0 0.0
        %1609 = vmatpush1.msra.mxu0 0.0
        %1610 = vmatprep.subr.mxu0 0.0
        %1611 = vmatpush1.msra.mxu0 0.0
        %1612 = vmatprep.subr.mxu0 0.0
        %1613 = vmatpush1.msra.mxu0 0.0
        %1614 = vmatprep.subr.mxu0 0.0
        %1615 = vmatpush1.msra.mxu0 0.0
        %1616 = vmatprep.subr.mxu0 0.0
        %1617 = vmatpush1.msra.mxu0 0.0
        %1618 = vmatprep.subr.mxu0 0.0
        %1619 = vmatpush1.msra.mxu0 0.0
        %1620 = vmatprep.subr.mxu0 0.0
        %1621 = vmatpush1.msra.mxu0 0.0
        %1622 = vmatprep.subr.mxu0 0.0
        %1623 = vmatpush1.msra.mxu0 0.0
        %1624 = vmatprep.subr.mxu0 0.0
        %1625 = vmatpush1.msra.mxu0 0.0
        %1626 = vmatprep.subr.mxu0 0.0
        %1627 = vmatpush1.msra.mxu0 0.0
        %1628 = vmatprep.subr.mxu0 0.0
        %1629 = vmatpush1.msra.mxu0 0.0
        %1630 = vmatprep.subr.mxu0 0.0
        %1631 = vmatpush1.msra.mxu0 0.0
        %1632 = vmatprep.subr.mxu0 0.0
        %1633 = vmatpush1.msra.mxu0 0.0
        %1634 = vmatprep.subr.mxu0 0.0
        %1635 = vmatpush1.msra.mxu0 0.0
        %1636 = vmatprep.subr.mxu0 0.0
        %1637 = vmatpush1.msra.mxu0 0.0
        %1638 = vmatprep.subr.mxu0 0.0
        %1639 = vmatpush1.msra.mxu0 0.0
        %1640 = vmatprep.subr.mxu0 0.0
        %1641 = vmatpush1.msra.mxu0 0.0
        %1642 = vmatprep.subr.mxu0 0.0
        %1643 = vmatpush1.msra.mxu0 0.0
        %1644 = vmatprep.subr.mxu0 0.0
        %1645 = vmatpush1.msra.mxu0 0.0
        %1646 = vmatprep.mubr.f32.mxu0 0.0
        %1647 = vmatmul.mubr.f32.gmra.mrb[0].mxu0 %v1571
        %v1648 = vpop.f32.mrb[0].mxu0
        %v1649 = vadd.f32 0.0, %v1648
        %v1650 = vpop.f32.mrb[0].mxu0
        %1651 = vmatprep.mubr.f32.mxu0 0.0
        %1652 = vmatmul.mubr.f32.gmra.mrb[0].mxu0 %v1574
        %v1653 = vpop.f32.mrb[0].mxu0
        %v1654 = vadd.f32 0.0, %v1653
        %v1655 = vpop.f32.mrb[0].mxu0
        %1656 = vmatprep.mubr.f32.mxu0 0.0
        %1657 = vmatmul.mubr.f32.gmra.mrb[0].mxu0 %v1577
        %v1658 = vpop.f32.mrb[0].mxu0
        %v1659 = vadd.f32 0.0, %v1658
        %v1660 = vpop.f32.mrb[0].mxu0
        %1661 = vmatprep.mubr.f32.mxu0 0.0
        %1662 = vmatmul.mubr.f32.gmra.mrb[0].mxu0 %v1580
        %v1663 = vpop.f32.mrb[0].mxu0
        %v1664 = vadd.f32 0.0, %v1663
        %v1665 = vpop.f32.mrb[0].mxu0
        %1666 = vdwg.mxu0
        %vm1667 = vcmask 261120
        %1668 = vst.msk [vmem:[%s177] sm:$0xff] %vm1667, %v970
        %1669 = vst.msk [vmem:[%s177 + $0x8] sm:$0xff] %vm1667, %v975
        %1670 = vst.msk [vmem:[%s177 + $0x10] sm:$0xff] %vm1667, %v980
        %1671 = vst.msk [vmem:[%s177 + $0x18] sm:$0xff] %vm1667, %v985
        %1672 = vst.msk [vmem:[%s177 + $0x20] sm:$0xff] %vm1667, %v1067
        %1673 = vst.msk [vmem:[%s177 + $0x28] sm:$0xff] %vm1667, %v1072
        %1674 = vst.msk [vmem:[%s177 + $0x30] sm:$0xff] %vm1667, %v1077
        %1675 = vst.msk [vmem:[%s177 + $0x38] sm:$0xff] %vm1667, %v1082
        %1676 = vst.msk [vmem:[%s177 + $0x40] sm:$0xff] %vm1667, %v1164
        %1677 = vst.msk [vmem:[%s177 + $0x48] sm:$0xff] %vm1667, %v1169
        %1678 = vst.msk [vmem:[%s177 + $0x50] sm:$0xff] %vm1667, %v1174
        %1679 = vst.msk [vmem:[%s177 + $0x58] sm:$0xff] %vm1667, %v1179
        %1680 = vst.msk [vmem:[%s177 + $0x60] sm:$0xff] %vm1667, %v1261
        %1681 = vst.msk [vmem:[%s177 + $0x68] sm:$0xff] %vm1667, %v1266
        %1682 = vst.msk [vmem:[%s177 + $0x70] sm:$0xff] %vm1667, %v1271
        %1683 = vst.msk [vmem:[%s177 + $0x78] sm:$0xff] %vm1667, %v1276
        %1684 = vst.msk [vmem:[%s177 + $0x80] sm:$0xff] %vm1667, %v1358
        %1685 = vst.msk [vmem:[%s177 + $0x88] sm:$0xff] %vm1667, %v1363
        %1686 = vst.msk [vmem:[%s177 + $0x90] sm:$0xff] %vm1667, %v1368
        %1687 = vst.msk [vmem:[%s177 + $0x98] sm:$0xff] %vm1667, %v1373
        %1688 = vst.msk [vmem:[%s177 + $0xa0] sm:$0xff] %vm1667, %v1455
        %1689 = vst.msk [vmem:[%s177 + $0xa8] sm:$0xff] %vm1667, %v1460
        %1690 = vst.msk [vmem:[%s177 + $0xb0] sm:$0xff] %vm1667, %v1465
        %1691 = vst.msk [vmem:[%s177 + $0xb8] sm:$0xff] %vm1667, %v1470
        %1692 = vst.msk [vmem:[%s177 + $0xc0] sm:$0xff] %vm1667, %v1552
        %1693 = vst.msk [vmem:[%s177 + $0xc8] sm:$0xff] %vm1667, %v1557
        %1694 = vst.msk [vmem:[%s177 + $0xd0] sm:$0xff] %vm1667, %v1562
        %1695 = vst.msk [vmem:[%s177 + $0xd8] sm:$0xff] %vm1667, %v1567
        %1696 = vst.msk [vmem:[%s177 + $0xe0] sm:$0xff] %vm1667, %v1649
        %1697 = vst.msk [vmem:[%s177 + $0xe8] sm:$0xff] %vm1667, %v1654
        %1698 = vst.msk [vmem:[%s177 + $0xf0] sm:$0xff] %vm1667, %v1659
        %1699 = vst.msk [vmem:[%s177 + $0xf8] sm:$0xff] %vm1667, %v1664
        %s1700 = sand.u32 %s94, 1
        %s1701 = scalar_lea.sflag [#allocation4], %s1700
        %s1702 = sand.u32 %s94, 1
        %s1703 = smul.addr %s1702, 256
        %s1704 = scalar_lea.vmem [#allocation5], %s1703
        // Predicated region
        $region37: #{hrnet_forward.7} parent=31 // pred_check
          %p1705 = pneg %p104
        $region38: #{hrnet_forward.7} parent=31 // pred_check_branch
          %1707 = sbr.rel (%p1705) target = $region40
        $region39: #{hrnet_forward.7} parent=31 // pred_region
          %s1708 = smul.u32 8, %s18
          %s1710 = ssub.s32 4096, 4096
          %1711 = vsyncadd %s1701, %s1710
          %s1712 = smul.addr %s1708, 4
          %s1713 = smul.addr %s1712, 128
          %s1714 = scalar_lea.hbm %s3, %s1713
          %s1715 = sshll.u32 %s1704, 4
          %s1716 = int_to_ptr.vmem [resolvable:$true] %s1715
          %1721 = dma.vmem_to_hbm [thread:$0]  %s1716, 4096, %s1714, %s1701, 128, 128, 8
        $region40: #{hrnet_forward.7} parent=31 // pred_fallthru
          _
      $region32: #{hrnet_forward.7} parent=5 // pred_fallthru
        _
      %p1722 = scmp.le.s32.totalorder 2, %s13
      // Predicated region
      $region41: #{hrnet_forward.7} parent=5 // pred_check
        %p1723 = pneg %p1722
      $region42: #{hrnet_forward.7} parent=5 // pred_check_branch
        %1725 = sbr.rel (%p1723) target = $region44
      $region43: #{hrnet_forward.7} parent=5 // pred_region
        %s1726 = ssub.s32 %s13, 2
        // Predicated region
        $region45: #{hrnet_forward.7} parent=43 // pred_check
          %p1727 = pneg %p110
        $region46: #{hrnet_forward.7} parent=43 // pred_check_branch
          %1729 = sbr.rel (%p1727) target = $region48
        $region47: #{hrnet_forward.7} parent=43 // pred_region
          %s1730 = sand.u32 %s95, 1
          %s1731 = scalar_lea.sflag [#allocation4], %s1730
          %s1732 = sand.u32 %s95, 1
          %s1733 = smul.addr %s1732, 256
          %s1734 = scalar_lea.vmem [#allocation5], %s1733
          %1735 = dma.done %s1731, 4096
        $region48: #{hrnet_forward.7} parent=43 // pred_fallthru
          _
      $region44: #{hrnet_forward.7} parent=5 // pred_fallthru
        _
    $region6: #{hrnet_forward.7} parent=1 // loop_footer
      %s17 = sadd.s32 1, %s13
    $region7: #{hrnet_forward.7} parent=1 // loop_footer_branch
      %12 = sbr.rel target = $region3
    $region8: #{hrnet_forward.7} parent=1 // loop_exit
      _
    %1736 = vsyncpa [#allocation3], 1
    %s1737 = scalar_lea.sflag [#allocation3], 1
    %1738 = vsyncpa %s1737, 1
    %1739 = vsyncpa [#allocation4], 1
    %s1740 = scalar_lea.sflag [#allocation4], 1
    %1741 = vsyncpa %s1740, 1

// kernel: hrnet_forward.6
$region0: #{hrnet_forward.6}
  #allocation0 [shape = 'u32[]', space=smem, size = 0x4, offset = 0x4, fixed_abs, tag = 'smem constant byte address 0x4 - core index']
  #allocation1 [shape = 'u32[144,128]{1,0:T(1,128)}', space=vmem, size = 0x12000, scoped, tag = 'internal scratch']
  %s0 = inlined_call_operand.vmem [shape: bf16[128,64], index: 0, kind: input, shape index: {}]
  %s1 = inlined_call_operand.vmem [shape: bf16[64,768], index: 1, kind: input, shape index: {}]
  %s2 = inlined_call_operand.vmem [shape: f32[1,768], index: 2, kind: input, shape index: {}]
  %s3 = inlined_call_operand.vmem [shape: bf16[768,768], index: 3, kind: input, shape index: {}]
  %s4 = inlined_call_operand.vmem [shape: f32[1,768], index: 4, kind: input, shape index: {}]
  %s5 = inlined_call_operand.vmem [shape: bf16[768,128], index: 5, kind: input, shape index: {}]
  %s6 = inlined_call_operand.vmem [shape: f32[1,128], index: 6, kind: input, shape index: {}]
  %s7 = inlined_call_operand.vmem [shape: f32[128,128], index: 7, kind: output, shape index: {}]
  %s8 = sld [smem:[#allocation0]]
  $region38: #{hrnet_forward.6} parent=0
    _
  %s10 = ssub.s32 1, %s8
  %s11 = scalar_select 0, %s10, %s8
  // Predicated region
  $region2: #{hrnet_forward.6} parent=0 // pred_check
    _
  $region3: #{hrnet_forward.6} parent=0 // pred_check_branch
    %13 = sbr.rel (0) target = $region5
  $region4: #{hrnet_forward.6} parent=0 // pred_region
    _
  $region5: #{hrnet_forward.6} parent=0 // pred_fallthru
    _
  // Predicated region
  $region6: #{hrnet_forward.6} parent=0 // pred_check
    _
  $region7: #{hrnet_forward.6} parent=0 // pred_check_branch
    %15 = sbr.rel (0) target = $region9
  $region8: #{hrnet_forward.6} parent=0 // pred_region
    _
  $region9: #{hrnet_forward.6} parent=0 // pred_fallthru
    _
  // Predicated region
  $region10: #{hrnet_forward.6} parent=0 // pred_check
    _
  $region11: #{hrnet_forward.6} parent=0 // pred_check_branch
    %17 = sbr.rel (0) target = $region13
  $region12: #{hrnet_forward.6} parent=0 // pred_region
    _
  $region13: #{hrnet_forward.6} parent=0 // pred_fallthru
    _
  // Predicated region
  $region14: #{hrnet_forward.6} parent=0 // pred_check
    _
  $region15: #{hrnet_forward.6} parent=0 // pred_check_branch
    %19 = sbr.rel (0) target = $region17
  $region16: #{hrnet_forward.6} parent=0 // pred_region
    _
  $region17: #{hrnet_forward.6} parent=0 // pred_fallthru
    _
  // Predicated region
  $region18: #{hrnet_forward.6} parent=0 // pred_check
    _
  $region19: #{hrnet_forward.6} parent=0 // pred_check_branch
    %21 = sbr.rel (0) target = $region21
  $region20: #{hrnet_forward.6} parent=0 // pred_region
    _
  $region21: #{hrnet_forward.6} parent=0 // pred_fallthru
    _
  // Predicated region
  $region22: #{hrnet_forward.6} parent=0 // pred_check
    _
  $region23: #{hrnet_forward.6} parent=0 // pred_check_branch
    %23 = sbr.rel (0) target = $region25
  $region24: #{hrnet_forward.6} parent=0 // pred_region
    _
  $region25: #{hrnet_forward.6} parent=0 // pred_fallthru
    _
  // Predicated region
  $region26: #{hrnet_forward.6} parent=0 // pred_check
    _
  $region27: #{hrnet_forward.6} parent=0 // pred_check_branch
    %25 = sbr.rel (0) target = $region29
  $region28: #{hrnet_forward.6} parent=0 // pred_region
    _
  $region29: #{hrnet_forward.6} parent=0 // pred_fallthru
    _
  %v27 = vld [vmem:[%s0] sm:$0xf]
  %v28 = vld [vmem:[%s0 + $0x4] sm:$0xf]
  %v29 = vld [vmem:[%s0 + $0x8] sm:$0xf]
  %v30 = vld [vmem:[%s0 + $0xc] sm:$0xf]
  %v31 = vld [vmem:[%s0 + $0x10] sm:$0xf]
  %v32 = vld [vmem:[%s0 + $0x14] sm:$0xf]
  %v33 = vld [vmem:[%s0 + $0x18] sm:$0xf]
  %v34 = vld [vmem:[%s0 + $0x1c] sm:$0xf]
  %v35 = vld [vmem:[%s0 + $0x20] sm:$0xf]
  %v36 = vld [vmem:[%s0 + $0x24] sm:$0xf]
  %v37 = vld [vmem:[%s0 + $0x28] sm:$0xf]
  %v38 = vld [vmem:[%s0 + $0x2c] sm:$0xf]
  %v39 = vld [vmem:[%s0 + $0x30] sm:$0xf]
  %v40 = vld [vmem:[%s0 + $0x34] sm:$0xf]
  %v41 = vld [vmem:[%s0 + $0x38] sm:$0xf]
  %v42 = vld [vmem:[%s0 + $0x3c] sm:$0xf]
  %v43 = vld [vmem:[%s1] sm:$0xff]
  %v44 = vld [vmem:[%s1 + $0x8] sm:$0xff]
  %v45 = vld [vmem:[%s1 + $0x10] sm:$0xff]
  %v46 = vld [vmem:[%s1 + $0x18] sm:$0xff]
  %v47 = vld [vmem:[%s1 + $0x20] sm:$0xff]
  %v48 = vld [vmem:[%s1 + $0x28] sm:$0xff]
  %v49 = vld [vmem:[%s1 + $0x30] sm:$0xff]
  %v50 = vld [vmem:[%s1 + $0x38] sm:$0xff]
  %v51 = vld [vmem:[%s1 + $0x40] sm:$0xff]
  %v52 = vld [vmem:[%s1 + $0x48] sm:$0xff]
  %v53 = vld [vmem:[%s1 + $0x50] sm:$0xff]
  %v54 = vld [vmem:[%s1 + $0x58] sm:$0xff]
  %v55 = vld [vmem:[%s1 + $0x60] sm:$0xff]
  %v56 = vld [vmem:[%s1 + $0x68] sm:$0xff]
  %v57 = vld [vmem:[%s1 + $0x70] sm:$0xff]
  %v58 = vld [vmem:[%s1 + $0x78] sm:$0xff]
  %v59 = vld [vmem:[%s1 + $0x80] sm:$0xff]
  %v60 = vld [vmem:[%s1 + $0x88] sm:$0xff]
  %v61 = vld [vmem:[%s1 + $0x90] sm:$0xff]
  %v62 = vld [vmem:[%s1 + $0x98] sm:$0xff]
  %v63 = vld [vmem:[%s1 + $0xa0] sm:$0xff]
  %v64 = vld [vmem:[%s1 + $0xa8] sm:$0xff]
  %v65 = vld [vmem:[%s1 + $0xb0] sm:$0xff]
  %v66 = vld [vmem:[%s1 + $0xb8] sm:$0xff]
  %v67 = vld [vmem:[%s2] sm:$0x3f]
  %v69 = vlaneseq
  %v70 = vshrl.u32 %v69, 7
  %v71 = vsub.s32 0, %v70
  %v72 = vrot.slane %v67, %v71
  %v73 = vlaneseq
  %v74 = vshrl.u32 %v73, 7
  %v75 = vsub.s32 1, %v74
  %v76 = vrot.slane %v67, %v75
  %v77 = vlaneseq
  %v78 = vshrl.u32 %v77, 7
  %v79 = vsub.s32 2, %v78
  %v80 = vrot.slane %v67, %v79
  %v81 = vlaneseq
  %v82 = vshrl.u32 %v81, 7
  %v83 = vsub.s32 3, %v82
  %v84 = vrot.slane %v67, %v83
  %v85 = vlaneseq
  %v86 = vshrl.u32 %v85, 7
  %v87 = vsub.s32 4, %v86
  %v88 = vrot.slane %v67, %v87
  %v89 = vlaneseq
  %v90 = vshrl.u32 %v89, 7
  %v91 = vsub.s32 5, %v90
  %v92 = vrot.slane %v67, %v91
  %v115 = vunpack.c.l.b16 %v27
  %v116 = vunpack.c.l.b16 %v28
  %v117 = vunpack.c.l.b16 %v29
  %v118 = vunpack.c.l.b16 %v30
  %v119 = vunpack.c.l.b16 %v31
  %v120 = vunpack.c.l.b16 %v32
  %v121 = vunpack.c.l.b16 %v33
  %v122 = vunpack.c.l.b16 %v34
  %v123 = vunpack.c.l.b16 %v35
  %v124 = vunpack.c.l.b16 %v36
  %v125 = vunpack.c.l.b16 %v37
  %v126 = vunpack.c.l.b16 %v38
  %v127 = vunpack.c.l.b16 %v39
  %v128 = vunpack.c.l.b16 %v40
  %v129 = vunpack.c.l.b16 %v41
  %v130 = vunpack.c.l.b16 %v42
  %v131 = vpack.c.b16 %v116, %v115
  %v132 = vpack.c.b16 %v118, %v117
  %v133 = vpack.c.b16 %v120, %v119
  %v134 = vpack.c.b16 %v122, %v121
  %v135 = vpack.c.b16 %v124, %v123
  %v136 = vpack.c.b16 %v126, %v125
  %v137 = vpack.c.b16 %v128, %v127
  %v138 = vpack.c.b16 %v130, %v129
  %v163 = vunpack.c.l.b16 %v43
  %v164 = vunpack.c.h.b16 %v43
  %v165 = vunpack.c.l.b16 %v44
  %v166 = vunpack.c.h.b16 %v44
  %v167 = vunpack.c.l.b16 %v45
  %v168 = vunpack.c.h.b16 %v45
  %v169 = vunpack.c.l.b16 %v46
  %v170 = vunpack.c.h.b16 %v46
  %v171 = vunpack.c.l.b16 %v47
  %v172 = vunpack.c.h.b16 %v47
  %v173 = vunpack.c.l.b16 %v48
  %v174 = vunpack.c.h.b16 %v48
  %v175 = vunpack.c.l.b16 %v49
  %v176 = vunpack.c.h.b16 %v49
  %v177 = vunpack.c.l.b16 %v50
  %v178 = vunpack.c.h.b16 %v50
  %v179 = vunpack.c.l.b16 %v51
  %v180 = vunpack.c.h.b16 %v51
  %v181 = vunpack.c.l.b16 %v52
  %v182 = vunpack.c.h.b16 %v52
  %v183 = vunpack.c.l.b16 %v53
  %v184 = vunpack.c.h.b16 %v53
  %v185 = vunpack.c.l.b16 %v54
  %v186 = vunpack.c.h.b16 %v54
  %v187 = vunpack.c.l.b16 %v55
  %v188 = vunpack.c.h.b16 %v55
  %v189 = vunpack.c.l.b16 %v56
  %v190 = vunpack.c.h.b16 %v56
  %v191 = vunpack.c.l.b16 %v57
  %v192 = vunpack.c.h.b16 %v57
  %v193 = vunpack.c.l.b16 %v58
  %v194 = vunpack.c.h.b16 %v58
  %v195 = vunpack.c.l.b16 %v59
  %v196 = vunpack.c.h.b16 %v59
  %v197 = vunpack.c.l.b16 %v60
  %v198 = vunpack.c.h.b16 %v60
  %v199 = vunpack.c.l.b16 %v61
  %v200 = vunpack.c.h.b16 %v61
  %v201 = vunpack.c.l.b16 %v62
  %v202 = vunpack.c.h.b16 %v62
  %v203 = vunpack.c.l.b16 %v63
  %v204 = vunpack.c.h.b16 %v63
  %v205 = vunpack.c.l.b16 %v64
  %v206 = vunpack.c.h.b16 %v64
  %v207 = vunpack.c.l.b16 %v65
  %v208 = vunpack.c.h.b16 %v65
  %v209 = vunpack.c.l.b16 %v66
  %v210 = vunpack.c.h.b16 %v66
  %v211 = vpack.c.b16 %v169, %v163
  %v212 = vpack.c.b16 %v170, %v164
  %v213 = vpack.c.b16 %v171, %v165
  %v214 = vpack.c.b16 %v172, %v166
  %v215 = vpack.c.b16 %v173, %v167
  %v216 = vpack.c.b16 %v174, %v168
  %v217 = vpack.c.b16 %v181, %v175
  %v218 = vpack.c.b16 %v182, %v176
  %v219 = vpack.c.b16 %v183, %v177
  %v220 = vpack.c.b16 %v184, %v178
  %v221 = vpack.c.b16 %v185, %v179
  %v222 = vpack.c.b16 %v186, %v180
  %v223 = vpack.c.b16 %v193, %v187
  %v224 = vpack.c.b16 %v194, %v188
  %v225 = vpack.c.b16 %v195, %v189
  %v226 = vpack.c.b16 %v196, %v190
  %v227 = vpack.c.b16 %v197, %v191
  %v228 = vpack.c.b16 %v198, %v192
  %v229 = vpack.c.b16 %v205, %v199
  %v230 = vpack.c.b16 %v206, %v200
  %v231 = vpack.c.b16 %v207, %v201
  %v232 = vpack.c.b16 %v208, %v202
  %v233 = vpack.c.b16 %v209, %v203
  %v234 = vpack.c.b16 %v210, %v204
  %vm259 = vcmask 523264
  %v261 = vsel %vm259, %v131, 0
  %v264 = vsel %vm259, %v132, 0
  %v267 = vsel %vm259, %v133, 0
  %v270 = vsel %vm259, %v134, 0
  %v273 = vsel %vm259, %v135, 0
  %v276 = vsel %vm259, %v136, 0
  %v279 = vsel %vm259, %v137, 0
  %v282 = vsel %vm259, %v138, 0
  %284 = vmatprep.subr.bf16.mxu0 %v212
  %285 = vmatpush1.bf16.msra.mxu0 %v211
  %286 = vmatprep.subr.bf16.mxu0 %v218
  %287 = vmatpush1.bf16.msra.mxu0 %v217
  %288 = vmatprep.subr.bf16.mxu0 %v224
  %289 = vmatpush1.bf16.msra.mxu0 %v223
  %290 = vmatprep.subr.bf16.mxu0 %v230
  %291 = vmatpush1.bf16.msra.mxu0 %v229
  %292 = vmatprep.subr.bf16.mxu0 0
  %293 = vmatpush1.bf16.msra.mxu0 0
  %294 = vmatprep.subr.bf16.mxu0 0
  %295 = vmatpush1.bf16.msra.mxu0 0
  %296 = vmatprep.subr.bf16.mxu0 0
  %297 = vmatpush1.bf16.msra.mxu0 0
  %298 = vmatprep.subr.bf16.mxu0 0
  %299 = vmatpush1.bf16.msra.mxu0 0
  %300 = vmatprep.subr.bf16.mxu0 0
  %301 = vmatpush1.bf16.msra.mxu0 0
  %302 = vmatprep.subr.bf16.mxu0 0
  %303 = vmatpush1.bf16.msra.mxu0 0
  %304 = vmatprep.subr.bf16.mxu0 0
  %305 = vmatpush1.bf16.msra.mxu0 0
  %306 = vmatprep.subr.bf16.mxu0 0
  %307 = vmatpush1.bf16.msra.mxu0 0
  %308 = vmatprep.subr.bf16.mxu0 0
  %309 = vmatpush1.bf16.msra.mxu0 0
  %310 = vmatprep.subr.bf16.mxu0 0
  %311 = vmatpush1.bf16.msra.mxu0 0
  %312 = vmatprep.subr.bf16.mxu0 0
  %313 = vmatpush1.bf16.msra.mxu0 0
  %314 = vmatprep.subr.bf16.mxu0 0
  %315 = vmatpush1.bf16.msra.mxu0 0
  %316 = vmatprep.mubr.bf16.mxu0 0
  %317 = vmatmul.mubr.bf16.gmra.mrb[0].mxu0 %v261
  %v318 = vpop.f32.mrb[0].mxu0
  %v319 = vadd.f32 %v72, %v318
  %v320 = vpop.f32.mrb[0].mxu0
  %v321 = vadd.f32 %v76, %v320
  %v322 = vpop.f32.mrb[0].mxu0
  %v323 = vadd.f32 %v72, %v322
  %v324 = vpop.f32.mrb[0].mxu0
  %v325 = vadd.f32 %v76, %v324
  %326 = vmatprep.mubr.bf16.mxu0 0
  %327 = vmatmul.mubr.bf16.gmra.mrb[0].mxu0 %v264
  %v328 = vpop.f32.mrb[0].mxu0
  %v329 = vadd.f32 %v72, %v328
  %v330 = vpop.f32.mrb[0].mxu0
  %v331 = vadd.f32 %v76, %v330
  %v332 = vpop.f32.mrb[0].mxu0
  %v333 = vadd.f32 %v72, %v332
  %v334 = vpop.f32.mrb[0].mxu0
  %v335 = vadd.f32 %v76, %v334
  %336 = vmatprep.mubr.bf16.mxu0 0
  %337 = vmatmul.mubr.bf16.gmra.mrb[0].mxu0 %v267
  %v338 = vpop.f32.mrb[0].mxu0
  %v339 = vadd.f32 %v72, %v338
  %v340 = vpop.f32.mrb[0].mxu0
  %v341 = vadd.f32 %v76, %v340
  %v342 = vpop.f32.mrb[0].mxu0
  %v343 = vadd.f32 %v72, %v342
  %v344 = vpop.f32.mrb[0].mxu0
  %v345 = vadd.f32 %v76, %v344
  %346 = vmatprep.mubr.bf16.mxu0 0
  %347 = vmatmul.mubr.bf16.gmra.mrb[0].mxu0 %v270
  %v348 = vpop.f32.mrb[0].mxu0
  %v349 = vadd.f32 %v72, %v348
  %v350 = vpop.f32.mrb[0].mxu0
  %v351 = vadd.f32 %v76, %v350
  %v352 = vpop.f32.mrb[0].mxu0
  %v353 = vadd.f32 %v72, %v352
  %v354 = vpop.f32.mrb[0].mxu0
  %v355 = vadd.f32 %v76, %v354
  %356 = vmatprep.mubr.bf16.mxu0 0
  %357 = vmatmul.mubr.bf16.gmra.mrb[0].mxu0 %v273
  %v358 = vpop.f32.mrb[0].mxu0
  %v359 = vadd.f32 %v72, %v358
  %v360 = vpop.f32.mrb[0].mxu0
  %v361 = vadd.f32 %v76, %v360
  %v362 = vpop.f32.mrb[0].mxu0
  %v363 = vadd.f32 %v72, %v362
  %v364 = vpop.f32.mrb[0].mxu0
  %v365 = vadd.f32 %v76, %v364
  %366 = vmatprep.mubr.bf16.mxu0 0
  %367 = vmatmul.mubr.bf16.gmra.mrb[0].mxu0 %v276
  %v368 = vpop.f32.mrb[0].mxu0
  %v369 = vadd.f32 %v72, %v368
  %v370 = vpop.f32.mrb[0].mxu0
  %v371 = vadd.f32 %v76, %v370
  %v372 = vpop.f32.mrb[0].mxu0
  %v373 = vadd.f32 %v72, %v372
  %v374 = vpop.f32.mrb[0].mxu0
  %v375 = vadd.f32 %v76, %v374
  %376 = vmatprep.mubr.bf16.mxu0 0
  %377 = vmatmul.mubr.bf16.gmra.mrb[0].mxu0 %v279
  %v378 = vpop.f32.mrb[0].mxu0
  %v379 = vadd.f32 %v72, %v378
  %v380 = vpop.f32.mrb[0].mxu0
  %v381 = vadd.f32 %v76, %v380
  %v382 = vpop.f32.mrb[0].mxu0
  %v383 = vadd.f32 %v72, %v382
  %v384 = vpop.f32.mrb[0].mxu0
  %v385 = vadd.f32 %v76, %v384
  %386 = vmatprep.mubr.bf16.mxu0 0
  %387 = vmatmul.mubr.bf16.gmra.mrb[0].mxu0 %v282
  %v388 = vpop.f32.mrb[0].mxu0
  %v389 = vadd.f32 %v72, %v388
  %v390 = vpop.f32.mrb[0].mxu0
  %v391 = vadd.f32 %v76, %v390
  %v392 = vpop.f32.mrb[0].mxu0
  %v393 = vadd.f32 %v72, %v392
  %v394 = vpop.f32.mrb[0].mxu0
  %v395 = vadd.f32 %v76, %v394
  %396 = vdwg.mxu0
  %397 = vmatprep.subr.bf16.mxu0 %v214
  %398 = vmatpush1.bf16.msra.mxu0 %v213
  %399 = vmatprep.subr.bf16.mxu0 %v220
  %400 = vmatpush1.bf16.msra.mxu0 %v219
  %401 = vmatprep.subr.bf16.mxu0 %v226
  %402 = vmatpush1.bf16.msra.mxu0 %v225
  %403 = vmatprep.subr.bf16.mxu0 %v232
  %404 = vmatpush1.bf16.msra.mxu0 %v231
  %405 = vmatprep.subr.bf16.mxu0 0
  %406 = vmatpush1.bf16.msra.mxu0 0
  %407 = vmatprep.subr.bf16.mxu0 0
  %408 = vmatpush1.bf16.msra.mxu0 0
  %409 = vmatprep.subr.bf16.mxu0 0
  %410 = vmatpush1.bf16.msra.mxu0 0
  %411 = vmatprep.subr.bf16.mxu0 0
  %412 = vmatpush1.bf16.msra.mxu0 0
  %413 = vmatprep.subr.bf16.mxu0 0
  %414 = vmatpush1.bf16.msra.mxu0 0
  %415 = vmatprep.subr.bf16.mxu0 0
  %416 = vmatpush1.bf16.msra.mxu0 0
  %417 = vmatprep.subr.bf16.mxu0 0
  %418 = vmatpush1.bf16.msra.mxu0 0
  %419 = vmatprep.subr.bf16.mxu0 0
  %420 = vmatpush1.bf16.msra.mxu0 0
  %421 = vmatprep.subr.bf16.mxu0 0
  %422 = vmatpush1.bf16.msra.mxu0 0
  %423 = vmatprep.subr.bf16.mxu0 0
  %424 = vmatpush1.bf16.msra.mxu0 0
  %425 = vmatprep.subr.bf16.mxu0 0
  %426 = vmatpush1.bf16.msra.mxu0 0
  %427 = vmatprep.subr.bf16.mxu0 0
  %428 = vmatpush1.bf16.msra.mxu0 0
  %429 = vmatprep.mubr.bf16.mxu0 0
  %430 = vmatmul.mubr.bf16.gmra.mrb[0].mxu0 %v261
  %v431 = vpop.f32.mrb[0].mxu0
  %v432 = vadd.f32 %v80, %v431
  %v433 = vpop.f32.mrb[0].mxu0
  %v434 = vadd.f32 %v84, %v433
  %v435 = vpop.f32.mrb[0].mxu0
  %v436 = vadd.f32 %v80, %v435
  %v437 = vpop.f32.mrb[0].mxu0
  %v438 = vadd.f32 %v84, %v437
  %439 = vmatprep.mubr.bf16.mxu0 0
  %440 = vmatmul.mubr.bf16.gmra.mrb[0].mxu0 %v264
  %v441 = vpop.f32.mrb[0].mxu0
  %v442 = vadd.f32 %v80, %v441
  %v443 = vpop.f32.mrb[0].mxu0
  %v444 = vadd.f32 %v84, %v443
  %v445 = vpop.f32.mrb[0].mxu0
  %v446 = vadd.f32 %v80, %v445
  %v447 = vpop.f32.mrb[0].mxu0
  %v448 = vadd.f32 %v84, %v447
  %449 = vmatprep.mubr.bf16.mxu0 0
  %450 = vmatmul.mubr.bf16.gmra.mrb[0].mxu0 %v267
  %v451 = vpop.f32.mrb[0].mxu0
  %v452 = vadd.f32 %v80, %v451
  %v453 = vpop.f32.mrb[0].mxu0
  %v454 = vadd.f32 %v84, %v453
  %v455 = vpop.f32.mrb[0].mxu0
  %v456 = vadd.f32 %v80, %v455
  %v457 = vpop.f32.mrb[0].mxu0
  %v458 = vadd.f32 %v84, %v457
  %459 = vmatprep.mubr.bf16.mxu0 0
  %460 = vmatmul.mubr.bf16.gmra.mrb[0].mxu0 %v270
  %v461 = vpop.f32.mrb[0].mxu0
  %v462 = vadd.f32 %v80, %v461
  %v463 = vpop.f32.mrb[0].mxu0
  %v464 = vadd.f32 %v84, %v463
  %v465 = vpop.f32.mrb[0].mxu0
  %v466 = vadd.f32 %v80, %v465
  %v467 = vpop.f32.mrb[0].mxu0
  %v468 = vadd.f32 %v84, %v467
  %469 = vmatprep.mubr.bf16.mxu0 0
  %470 = vmatmul.mubr.bf16.gmra.mrb[0].mxu0 %v273
  %v471 = vpop.f32.mrb[0].mxu0
  %v472 = vadd.f32 %v80, %v471
  %v473 = vpop.f32.mrb[0].mxu0
  %v474 = vadd.f32 %v84, %v473
  %v475 = vpop.f32.mrb[0].mxu0
  %v476 = vadd.f32 %v80, %v475
  %v477 = vpop.f32.mrb[0].mxu0
  %v478 = vadd.f32 %v84, %v477
  %479 = vmatprep.mubr.bf16.mxu0 0
  %480 = vmatmul.mubr.bf16.gmra.mrb[0].mxu0 %v276
  %v481 = vpop.f32.mrb[0].mxu0
  %v482 = vadd.f32 %v80, %v481
  %v483 = vpop.f32.mrb[0].mxu0
  %v484 = vadd.f32 %v84, %v483
  %v485 = vpop.f32.mrb[0].mxu0
  %v486 = vadd.f32 %v80, %v485
  %v487 = vpop.f32.mrb[0].mxu0
  %v488 = vadd.f32 %v84, %v487
  %489 = vmatprep.mubr.bf16.mxu0 0
  %490 = vmatmul.mubr.bf16.gmra.mrb[0].mxu0 %v279
  %v491 = vpop.f32.mrb[0].mxu0
  %v492 = vadd.f32 %v80, %v491
  %v493 = vpop.f32.mrb[0].mxu0
  %v494 = vadd.f32 %v84, %v493
  %v495 = vpop.f32.mrb[0].mxu0
  %v496 = vadd.f32 %v80, %v495
  %v497 = vpop.f32.mrb[0].mxu0
  %v498 = vadd.f32 %v84, %v497
  %499 = vmatprep.mubr.bf16.mxu0 0
  %500 = vmatmul.mubr.bf16.gmra.mrb[0].mxu0 %v282
  %v501 = vpop.f32.mrb[0].mxu0
  %v502 = vadd.f32 %v80, %v501
  %v503 = vpop.f32.mrb[0].mxu0
  %v504 = vadd.f32 %v84, %v503
  %v505 = vpop.f32.mrb[0].mxu0
  %v506 = vadd.f32 %v80, %v505
  %v507 = vpop.f32.mrb[0].mxu0
  %v508 = vadd.f32 %v84, %v507
  %509 = vdwg.mxu0
  %510 = vmatprep.subr.bf16.mxu0 %v216
  %511 = vmatpush1.bf16.msra.mxu0 %v215
  %512 = vmatprep.subr.bf16.mxu0 %v222
  %513 = vmatpush1.bf16.msra.mxu0 %v221
  %514 = vmatprep.subr.bf16.mxu0 %v228
  %515 = vmatpush1.bf16.msra.mxu0 %v227
  %516 = vmatprep.subr.bf16.mxu0 %v234
  %517 = vmatpush1.bf16.msra.mxu0 %v233
  %518 = vmatprep.subr.bf16.mxu0 0
  %519 = vmatpush1.bf16.msra.mxu0 0
  %520 = vmatprep.subr.bf16.mxu0 0
  %521 = vmatpush1.bf16.msra.mxu0 0
  %522 = vmatprep.subr.bf16.mxu0 0
  %523 = vmatpush1.bf16.msra.mxu0 0
  %524 = vmatprep.subr.bf16.mxu0 0
  %525 = vmatpush1.bf16.msra.mxu0 0
  %526 = vmatprep.subr.bf16.mxu0 0
  %527 = vmatpush1.bf16.msra.mxu0 0
  %528 = vmatprep.subr.bf16.mxu0 0
  %529 = vmatpush1.bf16.msra.mxu0 0
  %530 = vmatprep.subr.bf16.mxu0 0
  %531 = vmatpush1.bf16.msra.mxu0 0
  %532 = vmatprep.subr.bf16.mxu0 0
  %533 = vmatpush1.bf16.msra.mxu0 0
  %534 = vmatprep.subr.bf16.mxu0 0
  %535 = vmatpush1.bf16.msra.mxu0 0
  %536 = vmatprep.subr.bf16.mxu0 0
  %537 = vmatpush1.bf16.msra.mxu0 0
  %538 = vmatprep.subr.bf16.mxu0 0
  %539 = vmatpush1.bf16.msra.mxu0 0
  %540 = vmatprep.subr.bf16.mxu0 0
  %541 = vmatpush1.bf16.msra.mxu0 0
  %542 = vmatprep.mubr.bf16.mxu0 0
  %543 = vmatmul.mubr.bf16.gmra.mrb[0].mxu0 %v261
  %v544 = vpop.f32.mrb[0].mxu0
  %v545 = vadd.f32 %v88, %v544
  %v546 = vpop.f32.mrb[0].mxu0
  %v547 = vadd.f32 %v92, %v546
  %v548 = vpop.f32.mrb[0].mxu0
  %v549 = vadd.f32 %v88, %v548
  %v550 = vpop.f32.mrb[0].mxu0
  %v551 = vadd.f32 %v92, %v550
  %552 = vmatprep.mubr.bf16.mxu0 0
  %553 = vmatmul.mubr.bf16.gmra.mrb[0].mxu0 %v264
  %v554 = vpop.f32.mrb[0].mxu0
  %v555 = vadd.f32 %v88, %v554
  %v556 = vpop.f32.mrb[0].mxu0
  %v557 = vadd.f32 %v92, %v556
  %v558 = vpop.f32.mrb[0].mxu0
  %v559 = vadd.f32 %v88, %v558
  %v560 = vpop.f32.mrb[0].mxu0
  %v561 = vadd.f32 %v92, %v560
  %562 = vmatprep.mubr.bf16.mxu0 0
  %563 = vmatmul.mubr.bf16.gmra.mrb[0].mxu0 %v267
  %v564 = vpop.f32.mrb[0].mxu0
  %v565 = vadd.f32 %v88, %v564
  %v566 = vpop.f32.mrb[0].mxu0
  %v567 = vadd.f32 %v92, %v566
  %v568 = vpop.f32.mrb[0].mxu0
  %v569 = vadd.f32 %v88, %v568
  %v570 = vpop.f32.mrb[0].mxu0
  %v571 = vadd.f32 %v92, %v570
  %572 = vmatprep.mubr.bf16.mxu0 0
  %573 = vmatmul.mubr.bf16.gmra.mrb[0].mxu0 %v270
  %v574 = vpop.f32.mrb[0].mxu0
  %v575 = vadd.f32 %v88, %v574
  %v576 = vpop.f32.mrb[0].mxu0
  %v577 = vadd.f32 %v92, %v576
  %v578 = vpop.f32.mrb[0].mxu0
  %v579 = vadd.f32 %v88, %v578
  %v580 = vpop.f32.mrb[0].mxu0
  %v581 = vadd.f32 %v92, %v580
  %582 = vmatprep.mubr.bf16.mxu0 0
  %583 = vmatmul.mubr.bf16.gmra.mrb[0].mxu0 %v273
  %v584 = vpop.f32.mrb[0].mxu0
  %v585 = vadd.f32 %v88, %v584
  %v586 = vpop.f32.mrb[0].mxu0
  %v587 = vadd.f32 %v92, %v586
  %v588 = vpop.f32.mrb[0].mxu0
  %v589 = vadd.f32 %v88, %v588
  %v590 = vpop.f32.mrb[0].mxu0
  %v591 = vadd.f32 %v92, %v590
  %592 = vmatprep.mubr.bf16.mxu0 0
  %593 = vmatmul.mubr.bf16.gmra.mrb[0].mxu0 %v276
  %v594 = vpop.f32.mrb[0].mxu0
  %v595 = vadd.f32 %v88, %v594
  %v596 = vpop.f32.mrb[0].mxu0
  %v597 = vadd.f32 %v92, %v596
  %v598 = vpop.f32.mrb[0].mxu0
  %v599 = vadd.f32 %v88, %v598
  %v600 = vpop.f32.mrb[0].mxu0
  %v601 = vadd.f32 %v92, %v600
  %602 = vmatprep.mubr.bf16.mxu0 0
  %603 = vmatmul.mubr.bf16.gmra.mrb[0].mxu0 %v279
  %v604 = vpop.f32.mrb[0].mxu0
  %v605 = vadd.f32 %v88, %v604
  %v606 = vpop.f32.mrb[0].mxu0
  %v607 = vadd.f32 %v92, %v606
  %v608 = vpop.f32.mrb[0].mxu0
  %v609 = vadd.f32 %v88, %v608
  %v610 = vpop.f32.mrb[0].mxu0
  %v611 = vadd.f32 %v92, %v610
  %612 = vmatprep.mubr.bf16.mxu0 0
  %613 = vmatmul.mubr.bf16.gmra.mrb[0].mxu0 %v282
  %v614 = vpop.f32.mrb[0].mxu0
  %v615 = vadd.f32 %v88, %v614
  %v616 = vpop.f32.mrb[0].mxu0
  %v617 = vadd.f32 %v92, %v616
  %v618 = vpop.f32.mrb[0].mxu0
  %v619 = vadd.f32 %v88, %v618
  %v620 = vpop.f32.mrb[0].mxu0
  %v621 = vadd.f32 %v92, %v620
  %622 = vdwg.mxu0
  %v623 = vmax.f32 %v319, 0.0
  %v624 = vmax.f32 %v321, 0.0
  %v625 = vmax.f32 %v432, 0.0
  %v626 = vmax.f32 %v434, 0.0
  %v627 = vmax.f32 %v545, 0.0
  %v628 = vmax.f32 %v547, 0.0
  %v629 = vmax.f32 %v323, 0.0
  %v630 = vmax.f32 %v325, 0.0
  %v631 = vmax.f32 %v436, 0.0
  %v632 = vmax.f32 %v438, 0.0
  %v633 = vmax.f32 %v549, 0.0
  %v634 = vmax.f32 %v551, 0.0
  %v635 = vmax.f32 %v329, 0.0
  %v636 = vmax.f32 %v331, 0.0
  %v637 = vmax.f32 %v442, 0.0
  %v638 = vmax.f32 %v444, 0.0
  %v639 = vmax.f32 %v555, 0.0
  %v640 = vmax.f32 %v557, 0.0
  %v641 = vmax.f32 %v333, 0.0
  %v642 = vmax.f32 %v335, 0.0
  %v643 = vmax.f32 %v446, 0.0
  %v644 = vmax.f32 %v448, 0.0
  %v645 = vmax.f32 %v559, 0.0
  %v646 = vmax.f32 %v561, 0.0
  %v647 = vmax.f32 %v339, 0.0
  %v648 = vmax.f32 %v341, 0.0
  %v649 = vmax.f32 %v452, 0.0
  %v650 = vmax.f32 %v454, 0.0
  %v651 = vmax.f32 %v565, 0.0
  %v652 = vmax.f32 %v567, 0.0
  %v653 = vmax.f32 %v343, 0.0
  %v654 = vmax.f32 %v345, 0.0
  %v655 = vmax.f32 %v456, 0.0
  %v656 = vmax.f32 %v458, 0.0
  %v657 = vmax.f32 %v569, 0.0
  %v658 = vmax.f32 %v571, 0.0
  %v659 = vmax.f32 %v349, 0.0
  %v660 = vmax.f32 %v351, 0.0
  %v661 = vmax.f32 %v462, 0.0
  %v662 = vmax.f32 %v464, 0.0
  %v663 = vmax.f32 %v575, 0.0
  %v664 = vmax.f32 %v577, 0.0
  %v665 = vmax.f32 %v353, 0.0
  %v666 = vmax.f32 %v355, 0.0
  %v667 = vmax.f32 %v466, 0.0
  %v668 = vmax.f32 %v468, 0.0
  %v669 = vmax.f32 %v579, 0.0
  %v670 = vmax.f32 %v581, 0.0
  %v671 = vmax.f32 %v359, 0.0
  %v672 = vmax.f32 %v361, 0.0
  %v673 = vmax.f32 %v472, 0.0
  %v674 = vmax.f32 %v474, 0.0
  %v675 = vmax.f32 %v585, 0.0
  %v676 = vmax.f32 %v587, 0.0
  %v677 = vmax.f32 %v363, 0.0
  %v678 = vmax.f32 %v365, 0.0
  %v679 = vmax.f32 %v476, 0.0
  %v680 = vmax.f32 %v478, 0.0
  %v681 = vmax.f32 %v589, 0.0
  %v682 = vmax.f32 %v591, 0.0
  %v683 = vmax.f32 %v369, 0.0
  %v684 = vmax.f32 %v371, 0.0
  %v685 = vmax.f32 %v482, 0.0
  %v686 = vmax.f32 %v484, 0.0
  %v687 = vmax.f32 %v595, 0.0
  %v688 = vmax.f32 %v597, 0.0
  %v689 = vmax.f32 %v373, 0.0
  %v690 = vmax.f32 %v375, 0.0
  %v691 = vmax.f32 %v486, 0.0
  %v692 = vmax.f32 %v488, 0.0
  %v693 = vmax.f32 %v599, 0.0
  %v694 = vmax.f32 %v601, 0.0
  %v695 = vmax.f32 %v379, 0.0
  %v696 = vmax.f32 %v381, 0.0
  %v697 = vmax.f32 %v492, 0.0
  %v698 = vmax.f32 %v494, 0.0
  %v699 = vmax.f32 %v605, 0.0
  %v700 = vmax.f32 %v607, 0.0
  %v701 = vmax.f32 %v383, 0.0
  %v702 = vmax.f32 %v385, 0.0
  %v703 = vmax.f32 %v496, 0.0
  %v704 = vmax.f32 %v498, 0.0
  %v705 = vmax.f32 %v609, 0.0
  %v706 = vmax.f32 %v611, 0.0
  %v707 = vmax.f32 %v389, 0.0
  %v708 = vmax.f32 %v391, 0.0
  %v709 = vmax.f32 %v502, 0.0
  %v710 = vmax.f32 %v504, 0.0
  %v711 = vmax.f32 %v615, 0.0
  %v712 = vmax.f32 %v617, 0.0
  %v713 = vmax.f32 %v393, 0.0
  %v714 = vmax.f32 %v395, 0.0
  %v715 = vmax.f32 %v506, 0.0
  %v716 = vmax.f32 %v508, 0.0
  %v717 = vmax.f32 %v619, 0.0
  %v718 = vmax.f32 %v621, 0.0
  %v719 = vpack.c.bf16 %v629, %v623
  %v720 = vpack.c.bf16 %v630, %v624
  %v721 = vpack.c.bf16 %v631, %v625
  %v722 = vpack.c.bf16 %v632, %v626
  %v723 = vpack.c.bf16 %v633, %v627
  %v724 = vpack.c.bf16 %v634, %v628
  %v725 = vpack.c.bf16 %v641, %v635
  %v726 = vpack.c.bf16 %v642, %v636
  %v727 = vpack.c.bf16 %v643, %v637
  %v728 = vpack.c.bf16 %v644, %v638
  %v729 = vpack.c.bf16 %v645, %v639
  %v730 = vpack.c.bf16 %v646, %v640
  %v731 = vpack.c.bf16 %v653, %v647
  %v732 = vpack.c.bf16 %v654, %v648
  %v733 = vpack.c.bf16 %v655, %v649
  %v734 = vpack.c.bf16 %v656, %v650
  %v735 = vpack.c.bf16 %v657, %v651
  %v736 = vpack.c.bf16 %v658, %v652
  %v737 = vpack.c.bf16 %v665, %v659
  %v738 = vpack.c.bf16 %v666, %v660
  %v739 = vpack.c.bf16 %v667, %v661
  %v740 = vpack.c.bf16 %v668, %v662
  %v741 = vpack.c.bf16 %v669, %v663
  %v742 = vpack.c.bf16 %v670, %v664
  %v743 = vpack.c.bf16 %v677, %v671
  %v744 = vpack.c.bf16 %v678, %v672
  %v745 = vpack.c.bf16 %v679, %v673
  %v746 = vpack.c.bf16 %v680, %v674
  %v747 = vpack.c.bf16 %v681, %v675
  %v748 = vpack.c.bf16 %v682, %v676
  %v749 = vpack.c.bf16 %v689, %v683
  %v750 = vpack.c.bf16 %v690, %v684
  %v751 = vpack.c.bf16 %v691, %v685
  %v752 = vpack.c.bf16 %v692, %v686
  %v753 = vpack.c.bf16 %v693, %v687
  %v754 = vpack.c.bf16 %v694, %v688
  %v755 = vpack.c.bf16 %v701, %v695
  %v756 = vpack.c.bf16 %v702, %v696
  %v757 = vpack.c.bf16 %v703, %v697
  %v758 = vpack.c.bf16 %v704, %v698
  %v759 = vpack.c.bf16 %v705, %v699
  %v760 = vpack.c.bf16 %v706, %v700
  %v761 = vpack.c.bf16 %v713, %v707
  %v762 = vpack.c.bf16 %v714, %v708
  %v763 = vpack.c.bf16 %v715, %v709
  %v764 = vpack.c.bf16 %v716, %v710
  %v765 = vpack.c.bf16 %v717, %v711
  %v766 = vpack.c.bf16 %v718, %v712
  %v767 = vld [vmem:[%s3] sm:$0xff]
  %v768 = vld [vmem:[%s3 + $0x8] sm:$0xff]
  %v769 = vld [vmem:[%s3 + $0x10] sm:$0xff]
  %v770 = vld [vmem:[%s3 + $0x18] sm:$0xff]
  %v771 = vld [vmem:[%s3 + $0x20] sm:$0xff]
  %v772 = vld [vmem:[%s3 + $0x28] sm:$0xff]
  %v773 = vld [vmem:[%s3 + $0x30] sm:$0xff]
  %v774 = vld [vmem:[%s3 + $0x38] sm:$0xff]
  %v775 = vld [vmem:[%s3 + $0x40] sm:$0xff]
  %v776 = vld [vmem:[%s3 + $0x48] sm:$0xff]
  %v777 = vld [vmem:[%s3 + $0x50] sm:$0xff]
  %v778 = vld [vmem:[%s3 + $0x58] sm:$0xff]
  %v779 = vld [vmem:[%s3 + $0x60] sm:$0xff]
  %v780 = vld [vmem:[%s3 + $0x68] sm:$0xff]
  %v781 = vld [vmem:[%s3 + $0x70] sm:$0xff]
  %v782 = vld [vmem:[%s3 + $0x78] sm:$0xff]
  %v783 = vld [vmem:[%s3 + $0x80] sm:$0xff]
  %v784 = vld [vmem:[%s3 + $0x88] sm:$0xff]
  %v785 = vld [vmem:[%s3 + $0x90] sm:$0xff]
  %v786 = vld [vmem:[%s3 + $0x98] sm:$0xff]
  %v787 = vld [vmem:[%s3 + $0xa0] sm:$0xff]
  %v788 = vld [vmem:[%s3 + $0xa8] sm:$0xff]
  %v789 = vld [vmem:[%s3 + $0xb0] sm:$0xff]
  %v790 = vld [vmem:[%s3 + $0xb8] sm:$0xff]
  %v791 = vld [vmem:[%s3 + $0xc0] sm:$0xff]
  %v792 = vld [vmem:[%s3 + $0xc8] sm:$0xff]
  %v793 = vld [vmem:[%s3 + $0xd0] sm:$0xff]
  %v794 = vld [vmem:[%s3 + $0xd8] sm:$0xff]
  %v795 = vld [vmem:[%s3 + $0xe0] sm:$0xff]
  %v796 = vld [vmem:[%s3 + $0xe8] sm:$0xff]
  %v797 = vld [vmem:[%s3 + $0xf0] sm:$0xff]
  %v798 = vld [vmem:[%s3 + $0xf8] sm:$0xff]
  %v799 = vld [vmem:[%s3 + $0x100] sm:$0xff]
  %v800 = vld [vmem:[%s3 + $0x108] sm:$0xff]
  %v801 = vld [vmem:[%s3 + $0x110] sm:$0xff]
  %v802 = vld [vmem:[%s3 + $0x118] sm:$0xff]
  %v803 = vld [vmem:[%s3 + $0x120] sm:$0xff]
  %v804 = vld [vmem:[%s3 + $0x128] sm:$0xff]
  %v805 = vld [vmem:[%s3 + $0x130] sm:$0xff]
  %v806 = vld [vmem:[%s3 + $0x138] sm:$0xff]
  %v807 = vld [vmem:[%s3 + $0x140] sm:$0xff]
  %v808 = vld [vmem:[%s3 + $0x148] sm:$0xff]
  %v809 = vld [vmem:[%s3 + $0x150] sm:$0xff]
  %v810 = vld [vmem:[%s3 + $0x158] sm:$0xff]
  %v811 = vld [vmem:[%s3 + $0x160] sm:$0xff]
  %v812 = vld [vmem:[%s3 + $0x168] sm:$0xff]
  %v813 = vld [vmem:[%s3 + $0x170] sm:$0xff]
  %v814 = vld [vmem:[%s3 + $0x178] sm:$0xff]
  %v815 = vld [vmem:[%s3 + $0x180] sm:$0xff]
  %v816 = vld [vmem:[%s3 + $0x188] sm:$0xff]
  %v817 = vld [vmem:[%s3 + $0x190] sm:$0xff]
  %v818 = vld [vmem:[%s3 + $0x198] sm:$0xff]
  %v819 = vld [vmem:[%s3 + $0x1a0] sm:$0xff]
  %v820 = vld [vmem:[%s3 + $0x1a8] sm:$0xff]
  %v821 = vld [vmem:[%s3 + $0x1b0] sm:$0xff]
  %v822 = vld [vmem:[%s3 + $0x1b8] sm:$0xff]
  %v823 = vld [vmem:[%s3 + $0x1c0] sm:$0xff]
  %v824 = vld [vmem:[%s3 + $0x1c8] sm:$0xff]
  %v825 = vld [vmem:[%s3 + $0x1d0] sm:$0xff]
  %v826 = vld [vmem:[%s3 + $0x1d8] sm:$0xff]
  %v827 = vld [vmem:[%s3 + $0x1e0] sm:$0xff]
  %v828 = vld [vmem:[%s3 + $0x1e8] sm:$0xff]
  %v829 = vld [vmem:[%s3 + $0x1f0] sm:$0xff]
  %v830 = vld [vmem:[%s3 + $0x1f8] sm:$0xff]
  %v831 = vld [vmem:[%s3 + $0x200] sm:$0xff]
  %v832 = vld [vmem:[%s3 + $0x208] sm:$0xff]
  %v833 = vld [vmem:[%s3 + $0x210] sm:$0xff]
  %v834 = vld [vmem:[%s3 + $0x218] sm:$0xff]
  %v835 = vld [vmem:[%s3 + $0x220] sm:$0xff]
  %v836 = vld [vmem:[%s3 + $0x228] sm:$0xff]
  %v837 = vld [vmem:[%s3 + $0x230] sm:$0xff]
  %v838 = vld [vmem:[%s3 + $0x238] sm:$0xff]
  %v839 = vld [vmem:[%s3 + $0x240] sm:$0xff]
  %v840 = vld [vmem:[%s3 + $0x248] sm:$0xff]
  %v841 = vld [vmem:[%s3 + $0x250] sm:$0xff]
  %v842 = vld [vmem:[%s3 + $0x258] sm:$0xff]
  %v843 = vld [vmem:[%s3 + $0x260] sm:$0xff]
  %v844 = vld [vmem:[%s3 + $0x268] sm:$0xff]
  %v845 = vld [vmem:[%s3 + $0x270] sm:$0xff]
  %v846 = vld [vmem:[%s3 + $0x278] sm:$0xff]
  %v847 = vld [vmem:[%s3 + $0x280] sm:$0xff]
  %v848 = vld [vmem:[%s3 + $0x288] sm:$0xff]
  %v849 = vld [vmem:[%s3 + $0x290] sm:$0xff]
  %v850 = vld [vmem:[%s3 + $0x298] sm:$0xff]
  %v851 = vld [vmem:[%s3 + $0x2a0] sm:$0xff]
  %v852 = vld [vmem:[%s3 + $0x2a8] sm:$0xff]
  %v853 = vld [vmem:[%s3 + $0x2b0] sm:$0xff]
  %v854 = vld [vmem:[%s3 + $0x2b8] sm:$0xff]
  %v855 = vld [vmem:[%s3 + $0x2c0] sm:$0xff]
  %v856 = vld [vmem:[%s3 + $0x2c8] sm:$0xff]
  %v857 = vld [vmem:[%s3 + $0x2d0] sm:$0xff]
  %v858 = vld [vmem:[%s3 + $0x2d8] sm:$0xff]
  %v859 = vld [vmem:[%s3 + $0x2e0] sm:$0xff]
  %v860 = vld [vmem:[%s3 + $0x2e8] sm:$0xff]
  %v861 = vld [vmem:[%s3 + $0x2f0] sm:$0xff]
  %v862 = vld [vmem:[%s3 + $0x2f8] sm:$0xff]
  %v863 = vld [vmem:[%s3 + $0x300] sm:$0xff]
  %v864 = vld [vmem:[%s3 + $0x308] sm:$0xff]
  %v865 = vld [vmem:[%s3 + $0x310] sm:$0xff]
  %v866 = vld [vmem:[%s3 + $0x318] sm:$0xff]
  %v867 = vld [vmem:[%s3 + $0x320] sm:$0xff]
  %v868 = vld [vmem:[%s3 + $0x328] sm:$0xff]
  %v869 = vld [vmem:[%s3 + $0x330] sm:$0xff]
  %v870 = vld [vmem:[%s3 + $0x338] sm:$0xff]
  %v871 = vld [vmem:[%s3 + $0x340] sm:$0xff]
  %v872 = vld [vmem:[%s3 + $0x348] sm:$0xff]
  %v873 = vld [vmem:[%s3 + $0x350] sm:$0xff]
  %v874 = vld [vmem:[%s3 + $0x358] sm:$0xff]
  %v875 = vld [vmem:[%s3 + $0x360] sm:$0xff]
  %v876 = vld [vmem:[%s3 + $0x368] sm:$0xff]
  %v877 = vld [vmem:[%s3 + $0x370] sm:$0xff]
  %v878 = vld [vmem:[%s3 + $0x378] sm:$0xff]
  %v879 = vld [vmem:[%s3 + $0x380] sm:$0xff]
  %v880 = vld [vmem:[%s3 + $0x388] sm:$0xff]
  %v881 = vld [vmem:[%s3 + $0x390] sm:$0xff]
  %v882 = vld [vmem:[%s3 + $0x398] sm:$0xff]
  %v883 = vld [vmem:[%s3 + $0x3a0] sm:$0xff]
  %v884 = vld [vmem:[%s3 + $0x3a8] sm:$0xff]
  %v885 = vld [vmem:[%s3 + $0x3b0] sm:$0xff]
  %v886 = vld [vmem:[%s3 + $0x3b8] sm:$0xff]
  %v887 = vld [vmem:[%s3 + $0x3c0] sm:$0xff]
  %v888 = vld [vmem:[%s3 + $0x3c8] sm:$0xff]
  %v889 = vld [vmem:[%s3 + $0x3d0] sm:$0xff]
  %v890 = vld [vmem:[%s3 + $0x3d8] sm:$0xff]
  %v891 = vld [vmem:[%s3 + $0x3e0] sm:$0xff]
  %v892 = vld [vmem:[%s3 + $0x3e8] sm:$0xff]
  %v893 = vld [vmem:[%s3 + $0x3f0] sm:$0xff]
  %v894 = vld [vmem:[%s3 + $0x3f8] sm:$0xff]
  %v895 = vld [vmem:[%s3 + $0x400] sm:$0xff]
  %v896 = vld [vmem:[%s3 + $0x408] sm:$0xff]
  %v897 = vld [vmem:[%s3 + $0x410] sm:$0xff]
  %v898 = vld [vmem:[%s3 + $0x418] sm:$0xff]
  %v899 = vld [vmem:[%s3 + $0x420] sm:$0xff]
  %v900 = vld [vmem:[%s3 + $0x428] sm:$0xff]
  %v901 = vld [vmem:[%s3 + $0x430] sm:$0xff]
  %v902 = vld [vmem:[%s3 + $0x438] sm:$0xff]
  %v903 = vld [vmem:[%s3 + $0x440] sm:$0xff]
  %v904 = vld [vmem:[%s3 + $0x448] sm:$0xff]
  %v905 = vld [vmem:[%s3 + $0x450] sm:$0xff]
  %v906 = vld [vmem:[%s3 + $0x458] sm:$0xff]
  %v907 = vld [vmem:[%s3 + $0x460] sm:$0xff]
  %v908 = vld [vmem:[%s3 + $0x468] sm:$0xff]
  %v909 = vld [vmem:[%s3 + $0x470] sm:$0xff]
  %v910 = vld [vmem:[%s3 + $0x478] sm:$0xff]
  %v911 = vld [vmem:[%s3 + $0x480] sm:$0xff]
  %v912 = vld [vmem:[%s3 + $0x488] sm:$0xff]
  %v913 = vld [vmem:[%s3 + $0x490] sm:$0xff]
  %v914 = vld [vmem:[%s3 + $0x498] sm:$0xff]
  %v915 = vld [vmem:[%s3 + $0x4a0] sm:$0xff]
  %v916 = vld [vmem:[%s3 + $0x4a8] sm:$0xff]
  %v917 = vld [vmem:[%s3 + $0x4b0] sm:$0xff]
  %v918 = vld [vmem:[%s3 + $0x4b8] sm:$0xff]
  %v919 = vld [vmem:[%s3 + $0x4c0] sm:$0xff]
  %v920 = vld [vmem:[%s3 + $0x4c8] sm:$0xff]
  %v921 = vld [vmem:[%s3 + $0x4d0] sm:$0xff]
  %v922 = vld [vmem:[%s3 + $0x4d8] sm:$0xff]
  %v923 = vld [vmem:[%s3 + $0x4e0] sm:$0xff]
  %v924 = vld [vmem:[%s3 + $0x4e8] sm:$0xff]
  %v925 = vld [vmem:[%s3 + $0x4f0] sm:$0xff]
  %v926 = vld [vmem:[%s3 + $0x4f8] sm:$0xff]
  %v927 = vld [vmem:[%s3 + $0x500] sm:$0xff]
  %v928 = vld [vmem:[%s3 + $0x508] sm:$0xff]
  %v929 = vld [vmem:[%s3 + $0x510] sm:$0xff]
  %v930 = vld [vmem:[%s3 + $0x518] sm:$0xff]
  %v931 = vld [vmem:[%s3 + $0x520] sm:$0xff]
  %v932 = vld [vmem:[%s3 + $0x528] sm:$0xff]
  %v933 = vld [vmem:[%s3 + $0x530] sm:$0xff]
  %v934 = vld [vmem:[%s3 + $0x538] sm:$0xff]
  %v935 = vld [vmem:[%s3 + $0x540] sm:$0xff]
  %v936 = vld [vmem:[%s3 + $0x548] sm:$0xff]
  %v937 = vld [vmem:[%s3 + $0x550] sm:$0xff]
  %v938 = vld [vmem:[%s3 + $0x558] sm:$0xff]
  %v939 = vld [vmem:[%s3 + $0x560] sm:$0xff]
  %v940 = vld [vmem:[%s3 + $0x568] sm:$0xff]
  %v941 = vld [vmem:[%s3 + $0x570] sm:$0xff]
  %v942 = vld [vmem:[%s3 + $0x578] sm:$0xff]
  %v943 = vld [vmem:[%s3 + $0x580] sm:$0xff]
  %v944 = vld [vmem:[%s3 + $0x588] sm:$0xff]
  %v945 = vld [vmem:[%s3 + $0x590] sm:$0xff]
  %v946 = vld [vmem:[%s3 + $0x598] sm:$0xff]
  %v947 = vld [vmem:[%s3 + $0x5a0] sm:$0xff]
  %v948 = vld [vmem:[%s3 + $0x5a8] sm:$0xff]
  %v949 = vld [vmem:[%s3 + $0x5b0] sm:$0xff]
  %v950 = vld [vmem:[%s3 + $0x5b8] sm:$0xff]
  %v951 = vld [vmem:[%s3 + $0x5c0] sm:$0xff]
  %v952 = vld [vmem:[%s3 + $0x5c8] sm:$0xff]
  %v953 = vld [vmem:[%s3 + $0x5d0] sm:$0xff]
  %v954 = vld [vmem:[%s3 + $0x5d8] sm:$0xff]
  %v955 = vld [vmem:[%s3 + $0x5e0] sm:$0xff]
  %v956 = vld [vmem:[%s3 + $0x5e8] sm:$0xff]
  %v957 = vld [vmem:[%s3 + $0x5f0] sm:$0xff]
  %v958 = vld [vmem:[%s3 + $0x5f8] sm:$0xff]
  %v959 = vld [vmem:[%s3 + $0x600] sm:$0xff]
  %v960 = vld [vmem:[%s3 + $0x608] sm:$0xff]
  %v961 = vld [vmem:[%s3 + $0x610] sm:$0xff]
  %v962 = vld [vmem:[%s3 + $0x618] sm:$0xff]
  %v963 = vld [vmem:[%s3 + $0x620] sm:$0xff]
  %v964 = vld [vmem:[%s3 + $0x628] sm:$0xff]
  %v965 = vld [vmem:[%s3 + $0x630] sm:$0xff]
  %v966 = vld [vmem:[%s3 + $0x638] sm:$0xff]
  %v967 = vld [vmem:[%s3 + $0x640] sm:$0xff]
  %v968 = vld [vmem:[%s3 + $0x648] sm:$0xff]
  %v969 = vld [vmem:[%s3 + $0x650] sm:$0xff]
  %v970 = vld [vmem:[%s3 + $0x658] sm:$0xff]
  %v971 = vld [vmem:[%s3 + $0x660] sm:$0xff]
  %v972 = vld [vmem:[%s3 + $0x668] sm:$0xff]
  %v973 = vld [vmem:[%s3 + $0x670] sm:$0xff]
  %v974 = vld [vmem:[%s3 + $0x678] sm:$0xff]
  %v975 = vld [vmem:[%s3 + $0x680] sm:$0xff]
  %v976 = vld [vmem:[%s3 + $0x688] sm:$0xff]
  %v977 = vld [vmem:[%s3 + $0x690] sm:$0xff]
  %v978 = vld [vmem:[%s3 + $0x698] sm:$0xff]
  %v979 = vld [vmem:[%s3 + $0x6a0] sm:$0xff]
  %v980 = vld [vmem:[%s3 + $0x6a8] sm:$0xff]
  %v981 = vld [vmem:[%s3 + $0x6b0] sm:$0xff]
  %v982 = vld [vmem:[%s3 + $0x6b8] sm:$0xff]
  %v983 = vld [vmem:[%s3 + $0x6c0] sm:$0xff]
  %v984 = vld [vmem:[%s3 + $0x6c8] sm:$0xff]
  %v985 = vld [vmem:[%s3 + $0x6d0] sm:$0xff]
  %v986 = vld [vmem:[%s3 + $0x6d8] sm:$0xff]
  %v987 = vld [vmem:[%s3 + $0x6e0] sm:$0xff]
  %v988 = vld [vmem:[%s3 + $0x6e8] sm:$0xff]
  %v989 = vld [vmem:[%s3 + $0x6f0] sm:$0xff]
  %v990 = vld [vmem:[%s3 + $0x6f8] sm:$0xff]
  %v991 = vld [vmem:[%s3 + $0x700] sm:$0xff]
  %v992 = vld [vmem:[%s3 + $0x708] sm:$0xff]
  %v993 = vld [vmem:[%s3 + $0x710] sm:$0xff]
  %v994 = vld [vmem:[%s3 + $0x718] sm:$0xff]
  %v995 = vld [vmem:[%s3 + $0x720] sm:$0xff]
  %v996 = vld [vmem:[%s3 + $0x728] sm:$0xff]
  %v997 = vld [vmem:[%s3 + $0x730] sm:$0xff]
  %v998 = vld [vmem:[%s3 + $0x738] sm:$0xff]
  %v999 = vld [vmem:[%s3 + $0x740] sm:$0xff]
  %v1000 = vld [vmem:[%s3 + $0x748] sm:$0xff]
  %v1001 = vld [vmem:[%s3 + $0x750] sm:$0xff]
  %v1002 = vld [vmem:[%s3 + $0x758] sm:$0xff]
  %v1003 = vld [vmem:[%s3 + $0x760] sm:$0xff]
  %v1004 = vld [vmem:[%s3 + $0x768] sm:$0xff]
  %v1005 = vld [vmem:[%s3 + $0x770] sm:$0xff]
  %v1006 = vld [vmem:[%s3 + $0x778] sm:$0xff]
  %v1007 = vld [vmem:[%s3 + $0x780] sm:$0xff]
  %v1008 = vld [vmem:[%s3 + $0x788] sm:$0xff]
  %v1009 = vld [vmem:[%s3 + $0x790] sm:$0xff]
  %v1010 = vld [vmem:[%s3 + $0x798] sm:$0xff]
  %v1011 = vld [vmem:[%s3 + $0x7a0] sm:$0xff]
  %v1012 = vld [vmem:[%s3 + $0x7a8] sm:$0xff]
  %v1013 = vld [vmem:[%s3 + $0x7b0] sm:$0xff]
  %v1014 = vld [vmem:[%s3 + $0x7b8] sm:$0xff]
  %v1015 = vld [vmem:[%s3 + $0x7c0] sm:$0xff]
  %v1016 = vld [vmem:[%s3 + $0x7c8] sm:$0xff]
  %v1017 = vld [vmem:[%s3 + $0x7d0] sm:$0xff]
  %v1018 = vld [vmem:[%s3 + $0x7d8] sm:$0xff]
  %v1019 = vld [vmem:[%s3 + $0x7e0] sm:$0xff]
  %v1020 = vld [vmem:[%s3 + $0x7e8] sm:$0xff]
  %v1021 = vld [vmem:[%s3 + $0x7f0] sm:$0xff]
  %v1022 = vld [vmem:[%s3 + $0x7f8] sm:$0xff]
  %v1023 = vld [vmem:[%s3 + $0x800] sm:$0xff]
  %v1024 = vld [vmem:[%s3 + $0x808] sm:$0xff]
  %v1025 = vld [vmem:[%s3 + $0x810] sm:$0xff]
  %v1026 = vld [vmem:[%s3 + $0x818] sm:$0xff]
  %v1027 = vld [vmem:[%s3 + $0x820] sm:$0xff]
  %v1028 = vld [vmem:[%s3 + $0x828] sm:$0xff]
  %v1029 = vld [vmem:[%s3 + $0x830] sm:$0xff]
  %v1030 = vld [vmem:[%s3 + $0x838] sm:$0xff]
  %v1031 = vld [vmem:[%s3 + $0x840] sm:$0xff]
  %v1032 = vld [vmem:[%s3 + $0x848] sm:$0xff]
  %v1033 = vld [vmem:[%s3 + $0x850] sm:$0xff]
  %v1034 = vld [vmem:[%s3 + $0x858] sm:$0xff]
  %v1035 = vld [vmem:[%s3 + $0x860] sm:$0xff]
  %v1036 = vld [vmem:[%s3 + $0x868] sm:$0xff]
  %v1037 = vld [vmem:[%s3 + $0x870] sm:$0xff]
  %v1038 = vld [vmem:[%s3 + $0x878] sm:$0xff]
  %v1039 = vld [vmem:[%s3 + $0x880] sm:$0xff]
  %v1040 = vld [vmem:[%s3 + $0x888] sm:$0xff]
  %v1041 = vld [vmem:[%s3 + $0x890] sm:$0xff]
  %v1042 = vld [vmem:[%s3 + $0x898] sm:$0xff]
  %v1043 = vld [vmem:[%s3 + $0x8a0] sm:$0xff]
  %v1044 = vld [vmem:[%s3 + $0x8a8] sm:$0xff]
  %v1045 = vld [vmem:[%s3 + $0x8b0] sm:$0xff]
  %v1046 = vld [vmem:[%s3 + $0x8b8] sm:$0xff]
  %v1047 = vld [vmem:[%s3 + $0x8c0] sm:$0xff]
  %v1048 = vld [vmem:[%s3 + $0x8c8] sm:$0xff]
  %v1049 = vld [vmem:[%s3 + $0x8d0] sm:$0xff]
  %v1050 = vld [vmem:[%s3 + $0x8d8] sm:$0xff]
  %v1051 = vld [vmem:[%s3 + $0x8e0] sm:$0xff]
  %v1052 = vld [vmem:[%s3 + $0x8e8] sm:$0xff]
  %v1053 = vld [vmem:[%s3 + $0x8f0] sm:$0xff]
  %v1054 = vld [vmem:[%s3 + $0x8f8] sm:$0xff]
  %v1055 = vld [vmem:[%s4] sm:$0x3f]
  %v1057 = vlaneseq
  %v1058 = vshrl.u32 %v1057, 7
  %v1059 = vsub.s32 0, %v1058
  %v1060 = vrot.slane %v1055, %v1059
  %v1061 = vlaneseq
  %v1062 = vshrl.u32 %v1061, 7
  %v1063 = vsub.s32 1, %v1062
  %v1064 = vrot.slane %v1055, %v1063
  %v1065 = vlaneseq
  %v1066 = vshrl.u32 %v1065, 7
  %v1067 = vsub.s32 2, %v1066
  %v1068 = vrot.slane %v1055, %v1067
  %v1069 = vlaneseq
  %v1070 = vshrl.u32 %v1069, 7
  %v1071 = vsub.s32 3, %v1070
  %v1072 = vrot.slane %v1055, %v1071
  %v1073 = vlaneseq
  %v1074 = vshrl.u32 %v1073, 7
  %v1075 = vsub.s32 4, %v1074
  %v1076 = vrot.slane %v1055, %v1075
  %v1077 = vlaneseq
  %v1078 = vshrl.u32 %v1077, 7
  %v1079 = vsub.s32 5, %v1078
  %v1080 = vrot.slane %v1055, %v1079
  %v1375 = vunpack.c.l.b16 %v767
  %v1376 = vunpack.c.h.b16 %v767
  %v1377 = vunpack.c.l.b16 %v768
  %v1378 = vunpack.c.h.b16 %v768
  %v1379 = vunpack.c.l.b16 %v769
  %v1380 = vunpack.c.h.b16 %v769
  %v1381 = vunpack.c.l.b16 %v770
  %v1382 = vunpack.c.h.b16 %v770
  %v1383 = vunpack.c.l.b16 %v771
  %v1384 = vunpack.c.h.b16 %v771
  %v1385 = vunpack.c.l.b16 %v772
  %v1386 = vunpack.c.h.b16 %v772
  %v1387 = vunpack.c.l.b16 %v773
  %v1388 = vunpack.c.h.b16 %v773
  %v1389 = vunpack.c.l.b16 %v774
  %v1390 = vunpack.c.h.b16 %v774
  %v1391 = vunpack.c.l.b16 %v775
  %v1392 = vunpack.c.h.b16 %v775
  %v1393 = vunpack.c.l.b16 %v776
  %v1394 = vunpack.c.h.b16 %v776
  %v1395 = vunpack.c.l.b16 %v777
  %v1396 = vunpack.c.h.b16 %v777
  %v1397 = vunpack.c.l.b16 %v778
  %v1398 = vunpack.c.h.b16 %v778
  %v1399 = vunpack.c.l.b16 %v779
  %v1400 = vunpack.c.h.b16 %v779
  %v1401 = vunpack.c.l.b16 %v780
  %v1402 = vunpack.c.h.b16 %v780
  %v1403 = vunpack.c.l.b16 %v781
  %v1404 = vunpack.c.h.b16 %v781
  %v1405 = vunpack.c.l.b16 %v782
  %v1406 = vunpack.c.h.b16 %v782
  %v1407 = vunpack.c.l.b16 %v783
  %v1408 = vunpack.c.h.b16 %v783
  %v1409 = vunpack.c.l.b16 %v784
  %v1410 = vunpack.c.h.b16 %v784
  %v1411 = vunpack.c.l.b16 %v785
  %v1412 = vunpack.c.h.b16 %v785
  %v1413 = vunpack.c.l.b16 %v786
  %v1414 = vunpack.c.h.b16 %v786
  %v1415 = vunpack.c.l.b16 %v787
  %v1416 = vunpack.c.h.b16 %v787
  %v1417 = vunpack.c.l.b16 %v788
  %v1418 = vunpack.c.h.b16 %v788
  %v1419 = vunpack.c.l.b16 %v789
  %v1420 = vunpack.c.h.b16 %v789
  %v1421 = vunpack.c.l.b16 %v790
  %v1422 = vunpack.c.h.b16 %v790
  %v1423 = vunpack.c.l.b16 %v791
  %v1424 = vunpack.c.h.b16 %v791
  %v1425 = vunpack.c.l.b16 %v792
  %v1426 = vunpack.c.h.b16 %v792
  %v1427 = vunpack.c.l.b16 %v793
  %v1428 = vunpack.c.h.b16 %v793
  %v1429 = vunpack.c.l.b16 %v794
  %v1430 = vunpack.c.h.b16 %v794
  %v1431 = vunpack.c.l.b16 %v795
  %v1432 = vunpack.c.h.b16 %v795
  %v1433 = vunpack.c.l.b16 %v796
  %v1434 = vunpack.c.h.b16 %v796
  %v1435 = vunpack.c.l.b16 %v797
  %v1436 = vunpack.c.h.b16 %v797
  %v1437 = vunpack.c.l.b16 %v798
  %v1438 = vunpack.c.h.b16 %v798
  %v1439 = vunpack.c.l.b16 %v799
  %v1440 = vunpack.c.h.b16 %v799
  %v1441 = vunpack.c.l.b16 %v800
  %v1442 = vunpack.c.h.b16 %v800
  %v1443 = vunpack.c.l.b16 %v801
  %v1444 = vunpack.c.h.b16 %v801
  %v1445 = vunpack.c.l.b16 %v802
  %v1446 = vunpack.c.h.b16 %v802
  %v1447 = vunpack.c.l.b16 %v803
  %v1448 = vunpack.c.h.b16 %v803
  %v1449 = vunpack.c.l.b16 %v804
  %v1450 = vunpack.c.h.b16 %v804
  %v1451 = vunpack.c.l.b16 %v805
  %v1452 = vunpack.c.h.b16 %v805
  %v1453 = vunpack.c.l.b16 %v806
  %v1454 = vunpack.c.h.b16 %v806
  %v1455 = vunpack.c.l.b16 %v807
  %v1456 = vunpack.c.h.b16 %v807
  %v1457 = vunpack.c.l.b16 %v808
  %v1458 = vunpack.c.h.b16 %v808
  %v1459 = vunpack.c.l.b16 %v809
  %v1460 = vunpack.c.h.b16 %v809
  %v1461 = vunpack.c.l.b16 %v810
  %v1462 = vunpack.c.h.b16 %v810
  %v1463 = vunpack.c.l.b16 %v811
  %v1464 = vunpack.c.h.b16 %v811
  %v1465 = vunpack.c.l.b16 %v812
  %v1466 = vunpack.c.h.b16 %v812
  %v1467 = vunpack.c.l.b16 %v813
  %v1468 = vunpack.c.h.b16 %v813
  %v1469 = vunpack.c.l.b16 %v814
  %v1470 = vunpack.c.h.b16 %v814
  %v1471 = vunpack.c.l.b16 %v815
  %v1472 = vunpack.c.h.b16 %v815
  %v1473 = vunpack.c.l.b16 %v816
  %v1474 = vunpack.c.h.b16 %v816
  %v1475 = vunpack.c.l.b16 %v817
  %v1476 = vunpack.c.h.b16 %v817
  %v1477 = vunpack.c.l.b16 %v818
  %v1478 = vunpack.c.h.b16 %v818
  %v1479 = vunpack.c.l.b16 %v819
  %v1480 = vunpack.c.h.b16 %v819
  %v1481 = vunpack.c.l.b16 %v820
  %v1482 = vunpack.c.h.b16 %v820
  %v1483 = vunpack.c.l.b16 %v821
  %v1484 = vunpack.c.h.b16 %v821
  %v1485 = vunpack.c.l.b16 %v822
  %v1486 = vunpack.c.h.b16 %v822
  %v1487 = vunpack.c.l.b16 %v823
  %v1488 = vunpack.c.h.b16 %v823
  %v1489 = vunpack.c.l.b16 %v824
  %v1490 = vunpack.c.h.b16 %v824
  %v1491 = vunpack.c.l.b16 %v825
  %v1492 = vunpack.c.h.b16 %v825
  %v1493 = vunpack.c.l.b16 %v826
  %v1494 = vunpack.c.h.b16 %v826
  %v1495 = vunpack.c.l.b16 %v827
  %v1496 = vunpack.c.h.b16 %v827
  %v1497 = vunpack.c.l.b16 %v828
  %v1498 = vunpack.c.h.b16 %v828
  %v1499 = vunpack.c.l.b16 %v829
  %v1500 = vunpack.c.h.b16 %v829
  %v1501 = vunpack.c.l.b16 %v830
  %v1502 = vunpack.c.h.b16 %v830
  %v1503 = vunpack.c.l.b16 %v831
  %v1504 = vunpack.c.h.b16 %v831
  %v1505 = vunpack.c.l.b16 %v832
  %v1506 = vunpack.c.h.b16 %v832
  %v1507 = vunpack.c.l.b16 %v833
  %v1508 = vunpack.c.h.b16 %v833
  %v1509 = vunpack.c.l.b16 %v834
  %v1510 = vunpack.c.h.b16 %v834
  %v1511 = vunpack.c.l.b16 %v835
  %v1512 = vunpack.c.h.b16 %v835
  %v1513 = vunpack.c.l.b16 %v836
  %v1514 = vunpack.c.h.b16 %v836
  %v1515 = vunpack.c.l.b16 %v837
  %v1516 = vunpack.c.h.b16 %v837
  %v1517 = vunpack.c.l.b16 %v838
  %v1518 = vunpack.c.h.b16 %v838
  %v1519 = vunpack.c.l.b16 %v839
  %v1520 = vunpack.c.h.b16 %v839
  %v1521 = vunpack.c.l.b16 %v840
  %v1522 = vunpack.c.h.b16 %v840
  %v1523 = vunpack.c.l.b16 %v841
  %v1524 = vunpack.c.h.b16 %v841
  %v1525 = vunpack.c.l.b16 %v842
  %v1526 = vunpack.c.h.b16 %v842
  %v1527 = vunpack.c.l.b16 %v843
  %v1528 = vunpack.c.h.b16 %v843
  %v1529 = vunpack.c.l.b16 %v844
  %v1530 = vunpack.c.h.b16 %v844
  %v1531 = vunpack.c.l.b16 %v845
  %v1532 = vunpack.c.h.b16 %v845
  %v1533 = vunpack.c.l.b16 %v846
  %v1534 = vunpack.c.h.b16 %v846
  %v1535 = vunpack.c.l.b16 %v847
  %v1536 = vunpack.c.h.b16 %v847
  %v1537 = vunpack.c.l.b16 %v848
  %v1538 = vunpack.c.h.b16 %v848
  %v1539 = vunpack.c.l.b16 %v849
  %v1540 = vunpack.c.h.b16 %v849
  %v1541 = vunpack.c.l.b16 %v850
  %v1542 = vunpack.c.h.b16 %v850
  %v1543 = vunpack.c.l.b16 %v851
  %v1544 = vunpack.c.h.b16 %v851
  %v1545 = vunpack.c.l.b16 %v852
  %v1546 = vunpack.c.h.b16 %v852
  %v1547 = vunpack.c.l.b16 %v853
  %v1548 = vunpack.c.h.b16 %v853
  %v1549 = vunpack.c.l.b16 %v854
  %v1550 = vunpack.c.h.b16 %v854
  %v1551 = vunpack.c.l.b16 %v855
  %v1552 = vunpack.c.h.b16 %v855
  %v1553 = vunpack.c.l.b16 %v856
  %v1554 = vunpack.c.h.b16 %v856
  %v1555 = vunpack.c.l.b16 %v857
  %v1556 = vunpack.c.h.b16 %v857
  %v1557 = vunpack.c.l.b16 %v858
  %v1558 = vunpack.c.h.b16 %v858
  %v1559 = vunpack.c.l.b16 %v859
  %v1560 = vunpack.c.h.b16 %v859
  %v1561 = vunpack.c.l.b16 %v860
  %v1562 = vunpack.c.h.b16 %v860
  %v1563 = vunpack.c.l.b16 %v861
  %v1564 = vunpack.c.h.b16 %v861
  %v1565 = vunpack.c.l.b16 %v862
  %v1566 = vunpack.c.h.b16 %v862
  %v1567 = vunpack.c.l.b16 %v863
  %v1568 = vunpack.c.h.b16 %v863
  %v1569 = vunpack.c.l.b16 %v864
  %v1570 = vunpack.c.h.b16 %v864
  %v1571 = vunpack.c.l.b16 %v865
  %v1572 = vunpack.c.h.b16 %v865
  %v1573 = vunpack.c.l.b16 %v866
  %v1574 = vunpack.c.h.b16 %v866
  %v1575 = vunpack.c.l.b16 %v867
  %v1576 = vunpack.c.h.b16 %v867
  %v1577 = vunpack.c.l.b16 %v868
  %v1578 = vunpack.c.h.b16 %v868
  %v1579 = vunpack.c.l.b16 %v869
  %v1580 = vunpack.c.h.b16 %v869
  %v1581 = vunpack.c.l.b16 %v870
  %v1582 = vunpack.c.h.b16 %v870
  %v1583 = vunpack.c.l.b16 %v871
  %v1584 = vunpack.c.h.b16 %v871
  %v1585 = vunpack.c.l.b16 %v872
  %v1586 = vunpack.c.h.b16 %v872
  %v1587 = vunpack.c.l.b16 %v873
  %v1588 = vunpack.c.h.b16 %v873
  %v1589 = vunpack.c.l.b16 %v874
  %v1590 = vunpack.c.h.b16 %v874
  %v1591 = vunpack.c.l.b16 %v875
  %v1592 = vunpack.c.h.b16 %v875
  %v1593 = vunpack.c.l.b16 %v876
  %v1594 = vunpack.c.h.b16 %v876
  %v1595 = vunpack.c.l.b16 %v877
  %v1596 = vunpack.c.h.b16 %v877
  %v1597 = vunpack.c.l.b16 %v878
  %v1598 = vunpack.c.h.b16 %v878
  %v1599 = vunpack.c.l.b16 %v879
  %v1600 = vunpack.c.h.b16 %v879
  %v1601 = vunpack.c.l.b16 %v880
  %v1602 = vunpack.c.h.b16 %v880
  %v1603 = vunpack.c.l.b16 %v881
  %v1604 = vunpack.c.h.b16 %v881
  %v1605 = vunpack.c.l.b16 %v882
  %v1606 = vunpack.c.h.b16 %v882
  %v1607 = vunpack.c.l.b16 %v883
  %v1608 = vunpack.c.h.b16 %v883
  %v1609 = vunpack.c.l.b16 %v884
  %v1610 = vunpack.c.h.b16 %v884
  %v1611 = vunpack.c.l.b16 %v885
  %v1612 = vunpack.c.h.b16 %v885
  %v1613 = vunpack.c.l.b16 %v886
  %v1614 = vunpack.c.h.b16 %v886
  %v1615 = vunpack.c.l.b16 %v887
  %v1616 = vunpack.c.h.b16 %v887
  %v1617 = vunpack.c.l.b16 %v888
  %v1618 = vunpack.c.h.b16 %v888
  %v1619 = vunpack.c.l.b16 %v889
  %v1620 = vunpack.c.h.b16 %v889
  %v1621 = vunpack.c.l.b16 %v890
  %v1622 = vunpack.c.h.b16 %v890
  %v1623 = vunpack.c.l.b16 %v891
  %v1624 = vunpack.c.h.b16 %v891
  %v1625 = vunpack.c.l.b16 %v892
  %v1626 = vunpack.c.h.b16 %v892
  %v1627 = vunpack.c.l.b16 %v893
  %v1628 = vunpack.c.h.b16 %v893
  %v1629 = vunpack.c.l.b16 %v894
  %v1630 = vunpack.c.h.b16 %v894
  %v1631 = vunpack.c.l.b16 %v895
  %v1632 = vunpack.c.h.b16 %v895
  %v1633 = vunpack.c.l.b16 %v896
  %v1634 = vunpack.c.h.b16 %v896
  %v1635 = vunpack.c.l.b16 %v897
  %v1636 = vunpack.c.h.b16 %v897
  %v1637 = vunpack.c.l.b16 %v898
  %v1638 = vunpack.c.h.b16 %v898
  %v1639 = vunpack.c.l.b16 %v899
  %v1640 = vunpack.c.h.b16 %v899
  %v1641 = vunpack.c.l.b16 %v900
  %v1642 = vunpack.c.h.b16 %v900
  %v1643 = vunpack.c.l.b16 %v901
  %v1644 = vunpack.c.h.b16 %v901
  %v1645 = vunpack.c.l.b16 %v902
  %v1646 = vunpack.c.h.b16 %v902
  %v1647 = vunpack.c.l.b16 %v903
  %v1648 = vunpack.c.h.b16 %v903
  %v1649 = vunpack.c.l.b16 %v904
  %v1650 = vunpack.c.h.b16 %v904
  %v1651 = vunpack.c.l.b16 %v905
  %v1652 = vunpack.c.h.b16 %v905
  %v1653 = vunpack.c.l.b16 %v906
  %v1654 = vunpack.c.h.b16 %v906
  %v1655 = vunpack.c.l.b16 %v907
  %v1656 = vunpack.c.h.b16 %v907
  %v1657 = vunpack.c.l.b16 %v908
  %v1658 = vunpack.c.h.b16 %v908
  %v1659 = vunpack.c.l.b16 %v909
  %v1660 = vunpack.c.h.b16 %v909
  %v1661 = vunpack.c.l.b16 %v910
  %v1662 = vunpack.c.h.b16 %v910
  %v1663 = vunpack.c.l.b16 %v911
  %v1664 = vunpack.c.h.b16 %v911
  %v1665 = vunpack.c.l.b16 %v912
  %v1666 = vunpack.c.h.b16 %v912
  %v1667 = vunpack.c.l.b16 %v913
  %v1668 = vunpack.c.h.b16 %v913
  %v1669 = vunpack.c.l.b16 %v914
  %v1670 = vunpack.c.h.b16 %v914
  %v1671 = vunpack.c.l.b16 %v915
  %v1672 = vunpack.c.h.b16 %v915
  %v1673 = vunpack.c.l.b16 %v916
  %v1674 = vunpack.c.h.b16 %v916
  %v1675 = vunpack.c.l.b16 %v917
  %v1676 = vunpack.c.h.b16 %v917
  %v1677 = vunpack.c.l.b16 %v918
  %v1678 = vunpack.c.h.b16 %v918
  %v1679 = vunpack.c.l.b16 %v919
  %v1680 = vunpack.c.h.b16 %v919
  %v1681 = vunpack.c.l.b16 %v920
  %v1682 = vunpack.c.h.b16 %v920
  %v1683 = vunpack.c.l.b16 %v921
  %v1684 = vunpack.c.h.b16 %v921
  %v1685 = vunpack.c.l.b16 %v922
  %v1686 = vunpack.c.h.b16 %v922
  %v1687 = vunpack.c.l.b16 %v923
  %v1688 = vunpack.c.h.b16 %v923
  %v1689 = vunpack.c.l.b16 %v924
  %v1690 = vunpack.c.h.b16 %v924
  %v1691 = vunpack.c.l.b16 %v925
  %v1692 = vunpack.c.h.b16 %v925
  %v1693 = vunpack.c.l.b16 %v926
  %v1694 = vunpack.c.h.b16 %v926
  %v1695 = vunpack.c.l.b16 %v927
  %v1696 = vunpack.c.h.b16 %v927
  %v1697 = vunpack.c.l.b16 %v928
  %v1698 = vunpack.c.h.b16 %v928
  %v1699 = vunpack.c.l.b16 %v929
  %v1700 = vunpack.c.h.b16 %v929
  %v1701 = vunpack.c.l.b16 %v930
  %v1702 = vunpack.c.h.b16 %v930
  %v1703 = vunpack.c.l.b16 %v931
  %v1704 = vunpack.c.h.b16 %v931
  %v1705 = vunpack.c.l.b16 %v932
  %v1706 = vunpack.c.h.b16 %v932
  %v1707 = vunpack.c.l.b16 %v933
  %v1708 = vunpack.c.h.b16 %v933
  %v1709 = vunpack.c.l.b16 %v934
  %v1710 = vunpack.c.h.b16 %v934
  %v1711 = vunpack.c.l.b16 %v935
  %v1712 = vunpack.c.h.b16 %v935
  %v1713 = vunpack.c.l.b16 %v936
  %v1714 = vunpack.c.h.b16 %v936
  %v1715 = vunpack.c.l.b16 %v937
  %v1716 = vunpack.c.h.b16 %v937
  %v1717 = vunpack.c.l.b16 %v938
  %v1718 = vunpack.c.h.b16 %v938
  %v1719 = vunpack.c.l.b16 %v939
  %v1720 = vunpack.c.h.b16 %v939
  %v1721 = vunpack.c.l.b16 %v940
  %v1722 = vunpack.c.h.b16 %v940
  %v1723 = vunpack.c.l.b16 %v941
  %v1724 = vunpack.c.h.b16 %v941
  %v1725 = vunpack.c.l.b16 %v942
  %v1726 = vunpack.c.h.b16 %v942
  %v1727 = vunpack.c.l.b16 %v943
  %v1728 = vunpack.c.h.b16 %v943
  %v1729 = vunpack.c.l.b16 %v944
  %v1730 = vunpack.c.h.b16 %v944
  %v1731 = vunpack.c.l.b16 %v945
  %v1732 = vunpack.c.h.b16 %v945
  %v1733 = vunpack.c.l.b16 %v946
  %v1734 = vunpack.c.h.b16 %v946
  %v1735 = vunpack.c.l.b16 %v947
  %v1736 = vunpack.c.h.b16 %v947
  %v1737 = vunpack.c.l.b16 %v948
  %v1738 = vunpack.c.h.b16 %v948
  %v1739 = vunpack.c.l.b16 %v949
  %v1740 = vunpack.c.h.b16 %v949
  %v1741 = vunpack.c.l.b16 %v950
  %v1742 = vunpack.c.h.b16 %v950
  %v1743 = vunpack.c.l.b16 %v951
  %v1744 = vunpack.c.h.b16 %v951
  %v1745 = vunpack.c.l.b16 %v952
  %v1746 = vunpack.c.h.b16 %v952
  %v1747 = vunpack.c.l.b16 %v953
  %v1748 = vunpack.c.h.b16 %v953
  %v1749 = vunpack.c.l.b16 %v954
  %v1750 = vunpack.c.h.b16 %v954
  %v1751 = vunpack.c.l.b16 %v955
  %v1752 = vunpack.c.h.b16 %v955
  %v1753 = vunpack.c.l.b16 %v956
  %v1754 = vunpack.c.h.b16 %v956
  %v1755 = vunpack.c.l.b16 %v957
  %v1756 = vunpack.c.h.b16 %v957
  %v1757 = vunpack.c.l.b16 %v958
  %v1758 = vunpack.c.h.b16 %v958
  %v1759 = vunpack.c.l.b16 %v959
  %v1760 = vunpack.c.h.b16 %v959
  %v1761 = vunpack.c.l.b16 %v960
  %v1762 = vunpack.c.h.b16 %v960
  %v1763 = vunpack.c.l.b16 %v961
  %v1764 = vunpack.c.h.b16 %v961
  %v1765 = vunpack.c.l.b16 %v962
  %v1766 = vunpack.c.h.b16 %v962
  %v1767 = vunpack.c.l.b16 %v963
  %v1768 = vunpack.c.h.b16 %v963
  %v1769 = vunpack.c.l.b16 %v964
  %v1770 = vunpack.c.h.b16 %v964
  %v1771 = vunpack.c.l.b16 %v965
  %v1772 = vunpack.c.h.b16 %v965
  %v1773 = vunpack.c.l.b16 %v966
  %v1774 = vunpack.c.h.b16 %v966
  %v1775 = vunpack.c.l.b16 %v967
  %v1776 = vunpack.c.h.b16 %v967
  %v1777 = vunpack.c.l.b16 %v968
  %v1778 = vunpack.c.h.b16 %v968
  %v1779 = vunpack.c.l.b16 %v969
  %v1780 = vunpack.c.h.b16 %v969
  %v1781 = vunpack.c.l.b16 %v970
  %v1782 = vunpack.c.h.b16 %v970
  %v1783 = vunpack.c.l.b16 %v971
  %v1784 = vunpack.c.h.b16 %v971
  %v1785 = vunpack.c.l.b16 %v972
  %v1786 = vunpack.c.h.b16 %v972
  %v1787 = vunpack.c.l.b16 %v973
  %v1788 = vunpack.c.h.b16 %v973
  %v1789 = vunpack.c.l.b16 %v974
  %v1790 = vunpack.c.h.b16 %v974
  %v1791 = vunpack.c.l.b16 %v975
  %v1792 = vunpack.c.h.b16 %v975
  %v1793 = vunpack.c.l.b16 %v976
  %v1794 = vunpack.c.h.b16 %v976
  %v1795 = vunpack.c.l.b16 %v977
  %v1796 = vunpack.c.h.b16 %v977
  %v1797 = vunpack.c.l.b16 %v978
  %v1798 = vunpack.c.h.b16 %v978
  %v1799 = vunpack.c.l.b16 %v979
  %v1800 = vunpack.c.h.b16 %v979
  %v1801 = vunpack.c.l.b16 %v980
  %v1802 = vunpack.c.h.b16 %v980
  %v1803 = vunpack.c.l.b16 %v981
  %v1804 = vunpack.c.h.b16 %v981
  %v1805 = vunpack.c.l.b16 %v982
  %v1806 = vunpack.c.h.b16 %v982
  %v1807 = vunpack.c.l.b16 %v983
  %v1808 = vunpack.c.h.b16 %v983
  %v1809 = vunpack.c.l.b16 %v984
  %v1810 = vunpack.c.h.b16 %v984
  %v1811 = vunpack.c.l.b16 %v985
  %v1812 = vunpack.c.h.b16 %v985
  %v1813 = vunpack.c.l.b16 %v986
  %v1814 = vunpack.c.h.b16 %v986
  %v1815 = vunpack.c.l.b16 %v987
  %v1816 = vunpack.c.h.b16 %v987
  %v1817 = vunpack.c.l.b16 %v988
  %v1818 = vunpack.c.h.b16 %v988
  %v1819 = vunpack.c.l.b16 %v989
  %v1820 = vunpack.c.h.b16 %v989
  %v1821 = vunpack.c.l.b16 %v990
  %v1822 = vunpack.c.h.b16 %v990
  %v1823 = vunpack.c.l.b16 %v991
  %v1824 = vunpack.c.h.b16 %v991
  %v1825 = vunpack.c.l.b16 %v992
  %v1826 = vunpack.c.h.b16 %v992
  %v1827 = vunpack.c.l.b16 %v993
  %v1828 = vunpack.c.h.b16 %v993
  %v1829 = vunpack.c.l.b16 %v994
  %v1830 = vunpack.c.h.b16 %v994
  %v1831 = vunpack.c.l.b16 %v995
  %v1832 = vunpack.c.h.b16 %v995
  %v1833 = vunpack.c.l.b16 %v996
  %v1834 = vunpack.c.h.b16 %v996
  %v1835 = vunpack.c.l.b16 %v997
  %v1836 = vunpack.c.h.b16 %v997
  %v1837 = vunpack.c.l.b16 %v998
  %v1838 = vunpack.c.h.b16 %v998
  %v1839 = vunpack.c.l.b16 %v999
  %v1840 = vunpack.c.h.b16 %v999
  %v1841 = vunpack.c.l.b16 %v1000
  %v1842 = vunpack.c.h.b16 %v1000
  %v1843 = vunpack.c.l.b16 %v1001
  %v1844 = vunpack.c.h.b16 %v1001
  %v1845 = vunpack.c.l.b16 %v1002
  %v1846 = vunpack.c.h.b16 %v1002
  %v1847 = vunpack.c.l.b16 %v1003
  %v1848 = vunpack.c.h.b16 %v1003
  %v1849 = vunpack.c.l.b16 %v1004
  %v1850 = vunpack.c.h.b16 %v1004
  %v1851 = vunpack.c.l.b16 %v1005
  %v1852 = vunpack.c.h.b16 %v1005
  %v1853 = vunpack.c.l.b16 %v1006
  %v1854 = vunpack.c.h.b16 %v1006
  %v1855 = vunpack.c.l.b16 %v1007
  %v1856 = vunpack.c.h.b16 %v1007
  %v1857 = vunpack.c.l.b16 %v1008
  %v1858 = vunpack.c.h.b16 %v1008
  %v1859 = vunpack.c.l.b16 %v1009
  %v1860 = vunpack.c.h.b16 %v1009
  %v1861 = vunpack.c.l.b16 %v1010
  %v1862 = vunpack.c.h.b16 %v1010
  %v1863 = vunpack.c.l.b16 %v1011
  %v1864 = vunpack.c.h.b16 %v1011
  %v1865 = vunpack.c.l.b16 %v1012
  %v1866 = vunpack.c.h.b16 %v1012
  %v1867 = vunpack.c.l.b16 %v1013
  %v1868 = vunpack.c.h.b16 %v1013
  %v1869 = vunpack.c.l.b16 %v1014
  %v1870 = vunpack.c.h.b16 %v1014
  %v1871 = vunpack.c.l.b16 %v1015
  %v1872 = vunpack.c.h.b16 %v1015
  %v1873 = vunpack.c.l.b16 %v1016
  %v1874 = vunpack.c.h.b16 %v1016
  %v1875 = vunpack.c.l.b16 %v1017
  %v1876 = vunpack.c.h.b16 %v1017
  %v1877 = vunpack.c.l.b16 %v1018
  %v1878 = vunpack.c.h.b16 %v1018
  %v1879 = vunpack.c.l.b16 %v1019
  %v1880 = vunpack.c.h.b16 %v1019
  %v1881 = vunpack.c.l.b16 %v1020
  %v1882 = vunpack.c.h.b16 %v1020
  %v1883 = vunpack.c.l.b16 %v1021
  %v1884 = vunpack.c.h.b16 %v1021
  %v1885 = vunpack.c.l.b16 %v1022
  %v1886 = vunpack.c.h.b16 %v1022
  %v1887 = vunpack.c.l.b16 %v1023
  %v1888 = vunpack.c.h.b16 %v1023
  %v1889 = vunpack.c.l.b16 %v1024
  %v1890 = vunpack.c.h.b16 %v1024
  %v1891 = vunpack.c.l.b16 %v1025
  %v1892 = vunpack.c.h.b16 %v1025
  %v1893 = vunpack.c.l.b16 %v1026
  %v1894 = vunpack.c.h.b16 %v1026
  %v1895 = vunpack.c.l.b16 %v1027
  %v1896 = vunpack.c.h.b16 %v1027
  %v1897 = vunpack.c.l.b16 %v1028
  %v1898 = vunpack.c.h.b16 %v1028
  %v1899 = vunpack.c.l.b16 %v1029
  %v1900 = vunpack.c.h.b16 %v1029
  %v1901 = vunpack.c.l.b16 %v1030
  %v1902 = vunpack.c.h.b16 %v1030
  %v1903 = vunpack.c.l.b16 %v1031
  %v1904 = vunpack.c.h.b16 %v1031
  %v1905 = vunpack.c.l.b16 %v1032
  %v1906 = vunpack.c.h.b16 %v1032
  %v1907 = vunpack.c.l.b16 %v1033
  %v1908 = vunpack.c.h.b16 %v1033
  %v1909 = vunpack.c.l.b16 %v1034
  %v1910 = vunpack.c.h.b16 %v1034
  %v1911 = vunpack.c.l.b16 %v1035
  %v1912 = vunpack.c.h.b16 %v1035
  %v1913 = vunpack.c.l.b16 %v1036
  %v1914 = vunpack.c.h.b16 %v1036
  %v1915 = vunpack.c.l.b16 %v1037
  %v1916 = vunpack.c.h.b16 %v1037
  %v1917 = vunpack.c.l.b16 %v1038
  %v1918 = vunpack.c.h.b16 %v1038
  %v1919 = vunpack.c.l.b16 %v1039
  %v1920 = vunpack.c.h.b16 %v1039
  %v1921 = vunpack.c.l.b16 %v1040
  %v1922 = vunpack.c.h.b16 %v1040
  %v1923 = vunpack.c.l.b16 %v1041
  %v1924 = vunpack.c.h.b16 %v1041
  %v1925 = vunpack.c.l.b16 %v1042
  %v1926 = vunpack.c.h.b16 %v1042
  %v1927 = vunpack.c.l.b16 %v1043
  %v1928 = vunpack.c.h.b16 %v1043
  %v1929 = vunpack.c.l.b16 %v1044
  %v1930 = vunpack.c.h.b16 %v1044
  %v1931 = vunpack.c.l.b16 %v1045
  %v1932 = vunpack.c.h.b16 %v1045
  %v1933 = vunpack.c.l.b16 %v1046
  %v1934 = vunpack.c.h.b16 %v1046
  %v1935 = vunpack.c.l.b16 %v1047
  %v1936 = vunpack.c.h.b16 %v1047
  %v1937 = vunpack.c.l.b16 %v1048
  %v1938 = vunpack.c.h.b16 %v1048
  %v1939 = vunpack.c.l.b16 %v1049
  %v1940 = vunpack.c.h.b16 %v1049
  %v1941 = vunpack.c.l.b16 %v1050
  %v1942 = vunpack.c.h.b16 %v1050
  %v1943 = vunpack.c.l.b16 %v1051
  %v1944 = vunpack.c.h.b16 %v1051
  %v1945 = vunpack.c.l.b16 %v1052
  %v1946 = vunpack.c.h.b16 %v1052
  %v1947 = vunpack.c.l.b16 %v1053
  %v1948 = vunpack.c.h.b16 %v1053
  %v1949 = vunpack.c.l.b16 %v1054
  %v1950 = vunpack.c.h.b16 %v1054
  %v1951 = vpack.c.b16 %v1381, %v1375
  %v1952 = vpack.c.b16 %v1382, %v1376
  %v1953 = vpack.c.b16 %v1383, %v1377
  %v1954 = vpack.c.b16 %v1384, %v1378
  %v1955 = vpack.c.b16 %v1385, %v1379
  %v1956 = vpack.c.b16 %v1386, %v1380
  %v1957 = vpack.c.b16 %v1393, %v1387
  %v1958 = vpack.c.b16 %v1394, %v1388
  %v1959 = vpack.c.b16 %v1395, %v1389
  %v1960 = vpack.c.b16 %v1396, %v1390
  %v1961 = vpack.c.b16 %v1397, %v1391
  %v1962 = vpack.c.b16 %v1398, %v1392
  %v1963 = vpack.c.b16 %v1405, %v1399
  %v1964 = vpack.c.b16 %v1406, %v1400
  %v1965 = vpack.c.b16 %v1407, %v1401
  %v1966 = vpack.c.b16 %v1408, %v1402
  %v1967 = vpack.c.b16 %v1409, %v1403
  %v1968 = vpack.c.b16 %v1410, %v1404
  %v1969 = vpack.c.b16 %v1417, %v1411
  %v1970 = vpack.c.b16 %v1418, %v1412
  %v1971 = vpack.c.b16 %v1419, %v1413
  %v1972 = vpack.c.b16 %v1420, %v1414
  %v1973 = vpack.c.b16 %v1421, %v1415
  %v1974 = vpack.c.b16 %v1422, %v1416
  %v1975 = vpack.c.b16 %v1429, %v1423
  %v1976 = vpack.c.b16 %v1430, %v1424
  %v1977 = vpack.c.b16 %v1431, %v1425
  %v1978 = vpack.c.b16 %v1432, %v1426
  %v1979 = vpack.c.b16 %v1433, %v1427
  %v1980 = vpack.c.b16 %v1434, %v1428
  %v1981 = vpack.c.b16 %v1441, %v1435
  %v1982 = vpack.c.b16 %v1442, %v1436
  %v1983 = vpack.c.b16 %v1443, %v1437
  %v1984 = vpack.c.b16 %v1444, %v1438
  %v1985 = vpack.c.b16 %v1445, %v1439
  %v1986 = vpack.c.b16 %v1446, %v1440
  %v1987 = vpack.c.b16 %v1453, %v1447
  %v1988 = vpack.c.b16 %v1454, %v1448
  %v1989 = vpack.c.b16 %v1455, %v1449
  %v1990 = vpack.c.b16 %v1456, %v1450
  %v1991 = vpack.c.b16 %v1457, %v1451
  %v1992 = vpack.c.b16 %v1458, %v1452
  %v1993 = vpack.c.b16 %v1465, %v1459
  %v1994 = vpack.c.b16 %v1466, %v1460
  %v1995 = vpack.c.b16 %v1467, %v1461
  %v1996 = vpack.c.b16 %v1468, %v1462
  %v1997 = vpack.c.b16 %v1469, %v1463
  %v1998 = vpack.c.b16 %v1470, %v1464
  %v1999 = vpack.c.b16 %v1477, %v1471
  %v2000 = vpack.c.b16 %v1478, %v1472
  %v2001 = vpack.c.b16 %v1479, %v1473
  %v2002 = vpack.c.b16 %v1480, %v1474
  %v2003 = vpack.c.b16 %v1481, %v1475
  %v2004 = vpack.c.b16 %v1482, %v1476
  %v2005 = vpack.c.b16 %v1489, %v1483
  %v2006 = vpack.c.b16 %v1490, %v1484
  %v2007 = vpack.c.b16 %v1491, %v1485
  %v2008 = vpack.c.b16 %v1492, %v1486
  %v2009 = vpack.c.b16 %v1493, %v1487
  %v2010 = vpack.c.b16 %v1494, %v1488
  %v2011 = vpack.c.b16 %v1501, %v1495
  %v2012 = vpack.c.b16 %v1502, %v1496
  %v2013 = vpack.c.b16 %v1503, %v1497
  %v2014 = vpack.c.b16 %v1504, %v1498
  %v2015 = vpack.c.b16 %v1505, %v1499
  %v2016 = vpack.c.b16 %v1506, %v1500
  %v2017 = vpack.c.b16 %v1513, %v1507
  %v2018 = vpack.c.b16 %v1514, %v1508
  %v2019 = vpack.c.b16 %v1515, %v1509
  %v2020 = vpack.c.b16 %v1516, %v1510
  %v2021 = vpack.c.b16 %v1517, %v1511
  %v2022 = vpack.c.b16 %v1518, %v1512
  %v2023 = vpack.c.b16 %v1525, %v1519
  %v2024 = vpack.c.b16 %v1526, %v1520
  %v2025 = vpack.c.b16 %v1527, %v1521
  %v2026 = vpack.c.b16 %v1528, %v1522
  %v2027 = vpack.c.b16 %v1529, %v1523
  %v2028 = vpack.c.b16 %v1530, %v1524
  %v2029 = vpack.c.b16 %v1537, %v1531
  %v2030 = vpack.c.b16 %v1538, %v1532
  %v2031 = vpack.c.b16 %v1539, %v1533
  %v2032 = vpack.c.b16 %v1540, %v1534
  %v2033 = vpack.c.b16 %v1541, %v1535
  %v2034 = vpack.c.b16 %v1542, %v1536
  %v2035 = vpack.c.b16 %v1549, %v1543
  %v2036 = vpack.c.b16 %v1550, %v1544
  %v2037 = vpack.c.b16 %v1551, %v1545
  %v2038 = vpack.c.b16 %v1552, %v1546
  %v2039 = vpack.c.b16 %v1553, %v1547
  %v2040 = vpack.c.b16 %v1554, %v1548
  %v2041 = vpack.c.b16 %v1561, %v1555
  %v2042 = vpack.c.b16 %v1562, %v1556
  %v2043 = vpack.c.b16 %v1563, %v1557
  %v2044 = vpack.c.b16 %v1564, %v1558
  %v2045 = vpack.c.b16 %v1565, %v1559
  %v2046 = vpack.c.b16 %v1566, %v1560
  %v2047 = vpack.c.b16 %v1573, %v1567
  %v2048 = vpack.c.b16 %v1574, %v1568
  %v2049 = vpack.c.b16 %v1575, %v1569
  %v2050 = vpack.c.b16 %v1576, %v1570
  %v2051 = vpack.c.b16 %v1577, %v1571
  %v2052 = vpack.c.b16 %v1578, %v1572
  %v2053 = vpack.c.b16 %v1585, %v1579
  %v2054 = vpack.c.b16 %v1586, %v1580
  %v2055 = vpack.c.b16 %v1587, %v1581
  %v2056 = vpack.c.b16 %v1588, %v1582
  %v2057 = vpack.c.b16 %v1589, %v1583
  %v2058 = vpack.c.b16 %v1590, %v1584
  %v2059 = vpack.c.b16 %v1597, %v1591
  %v2060 = vpack.c.b16 %v1598, %v1592
  %v2061 = vpack.c.b16 %v1599, %v1593
  %v2062 = vpack.c.b16 %v1600, %v1594
  %v2063 = vpack.c.b16 %v1601, %v1595
  %v2064 = vpack.c.b16 %v1602, %v1596
  %v2065 = vpack.c.b16 %v1609, %v1603
  %v2066 = vpack.c.b16 %v1610, %v1604
  %v2067 = vpack.c.b16 %v1611, %v1605
  %v2068 = vpack.c.b16 %v1612, %v1606
  %v2069 = vpack.c.b16 %v1613, %v1607
  %v2070 = vpack.c.b16 %v1614, %v1608
  %v2071 = vpack.c.b16 %v1621, %v1615
  %v2072 = vpack.c.b16 %v1622, %v1616
  %v2073 = vpack.c.b16 %v1623, %v1617
  %v2074 = vpack.c.b16 %v1624, %v1618
  %v2075 = vpack.c.b16 %v1625, %v1619
  %v2076 = vpack.c.b16 %v1626, %v1620
  %v2077 = vpack.c.b16 %v1633, %v1627
  %v2078 = vpack.c.b16 %v1634, %v1628
  %v2079 = vpack.c.b16 %v1635, %v1629
  %v2080 = vpack.c.b16 %v1636, %v1630
  %v2081 = vpack.c.b16 %v1637, %v1631
  %v2082 = vpack.c.b16 %v1638, %v1632
  %v2083 = vpack.c.b16 %v1645, %v1639
  %v2084 = vpack.c.b16 %v1646, %v1640
  %v2085 = vpack.c.b16 %v1647, %v1641
  %v2086 = vpack.c.b16 %v1648, %v1642
  %v2087 = vpack.c.b16 %v1649, %v1643
  %v2088 = vpack.c.b16 %v1650, %v1644
  %v2089 = vpack.c.b16 %v1657, %v1651
  %v2090 = vpack.c.b16 %v1658, %v1652
  %v2091 = vpack.c.b16 %v1659, %v1653
  %v2092 = vpack.c.b16 %v1660, %v1654
  %v2093 = vpack.c.b16 %v1661, %v1655
  %v2094 = vpack.c.b16 %v1662, %v1656
  %v2095 = vpack.c.b16 %v1669, %v1663
  %v2096 = vpack.c.b16 %v1670, %v1664
  %v2097 = vpack.c.b16 %v1671, %v1665
  %v2098 = vpack.c.b16 %v1672, %v1666
  %v2099 = vpack.c.b16 %v1673, %v1667
  %v2100 = vpack.c.b16 %v1674, %v1668
  %v2101 = vpack.c.b16 %v1681, %v1675
  %v2102 = vpack.c.b16 %v1682, %v1676
  %v2103 = vpack.c.b16 %v1683, %v1677
  %v2104 = vpack.c.b16 %v1684, %v1678
  %v2105 = vpack.c.b16 %v1685, %v1679
  %v2106 = vpack.c.b16 %v1686, %v1680
  %v2107 = vpack.c.b16 %v1693, %v1687
  %v2108 = vpack.c.b16 %v1694, %v1688
  %v2109 = vpack.c.b16 %v1695, %v1689
  %v2110 = vpack.c.b16 %v1696, %v1690
  %v2111 = vpack.c.b16 %v1697, %v1691
  %v2112 = vpack.c.b16 %v1698, %v1692
  %v2113 = vpack.c.b16 %v1705, %v1699
  %v2114 = vpack.c.b16 %v1706, %v1700
  %v2115 = vpack.c.b16 %v1707, %v1701
  %v2116 = vpack.c.b16 %v1708, %v1702
  %v2117 = vpack.c.b16 %v1709, %v1703
  %v2118 = vpack.c.b16 %v1710, %v1704
  %v2119 = vpack.c.b16 %v1717, %v1711
  %v2120 = vpack.c.b16 %v1718, %v1712
  %v2121 = vpack.c.b16 %v1719, %v1713
  %v2122 = vpack.c.b16 %v1720, %v1714
  %v2123 = vpack.c.b16 %v1721, %v1715
  %v2124 = vpack.c.b16 %v1722, %v1716
  %v2125 = vpack.c.b16 %v1729, %v1723
  %v2126 = vpack.c.b16 %v1730, %v1724
  %v2127 = vpack.c.b16 %v1731, %v1725
  %v2128 = vpack.c.b16 %v1732, %v1726
  %v2129 = vpack.c.b16 %v1733, %v1727
  %v2130 = vpack.c.b16 %v1734, %v1728
  %v2131 = vpack.c.b16 %v1741, %v1735
  %v2132 = vpack.c.b16 %v1742, %v1736
  %v2133 = vpack.c.b16 %v1743, %v1737
  %v2134 = vpack.c.b16 %v1744, %v1738
  %v2135 = vpack.c.b16 %v1745, %v1739
  %v2136 = vpack.c.b16 %v1746, %v1740
  %v2137 = vpack.c.b16 %v1753, %v1747
  %v2138 = vpack.c.b16 %v1754, %v1748
  %v2139 = vpack.c.b16 %v1755, %v1749
  %v2140 = vpack.c.b16 %v1756, %v1750
  %v2141 = vpack.c.b16 %v1757, %v1751
  %v2142 = vpack.c.b16 %v1758, %v1752
  %v2143 = vpack.c.b16 %v1765, %v1759
  %v2144 = vpack.c.b16 %v1766, %v1760
  %v2145 = vpack.c.b16 %v1767, %v1761
  %v2146 = vpack.c.b16 %v1768, %v1762
  %v2147 = vpack.c.b16 %v1769, %v1763
  %v2148 = vpack.c.b16 %v1770, %v1764
  %v2149 = vpack.c.b16 %v1777, %v1771
  %v2150 = vpack.c.b16 %v1778, %v1772
  %v2151 = vpack.c.b16 %v1779, %v1773
  %v2152 = vpack.c.b16 %v1780, %v1774
  %v2153 = vpack.c.b16 %v1781, %v1775
  %v2154 = vpack.c.b16 %v1782, %v1776
  %v2155 = vpack.c.b16 %v1789, %v1783
  %v2156 = vpack.c.b16 %v1790, %v1784
  %v2157 = vpack.c.b16 %v1791, %v1785
  %v2158 = vpack.c.b16 %v1792, %v1786
  %v2159 = vpack.c.b16 %v1793, %v1787
  %v2160 = vpack.c.b16 %v1794, %v1788
  %v2161 = vpack.c.b16 %v1801, %v1795
  %v2162 = vpack.c.b16 %v1802, %v1796
  %v2163 = vpack.c.b16 %v1803, %v1797
  %v2164 = vpack.c.b16 %v1804, %v1798
  %v2165 = vpack.c.b16 %v1805, %v1799
  %v2166 = vpack.c.b16 %v1806, %v1800
  %v2167 = vpack.c.b16 %v1813, %v1807
  %v2168 = vpack.c.b16 %v1814, %v1808
  %v2169 = vpack.c.b16 %v1815, %v1809
  %v2170 = vpack.c.b16 %v1816, %v1810
  %v2171 = vpack.c.b16 %v1817, %v1811
  %v2172 = vpack.c.b16 %v1818, %v1812
  %v2173 = vpack.c.b16 %v1825, %v1819
  %v2174 = vpack.c.b16 %v1826, %v1820
  %v2175 = vpack.c.b16 %v1827, %v1821
  %v2176 = vpack.c.b16 %v1828, %v1822
  %v2177 = vpack.c.b16 %v1829, %v1823
  %v2178 = vpack.c.b16 %v1830, %v1824
  %v2179 = vpack.c.b16 %v1837, %v1831
  %v2180 = vpack.c.b16 %v1838, %v1832
  %v2181 = vpack.c.b16 %v1839, %v1833
  %v2182 = vpack.c.b16 %v1840, %v1834
  %v2183 = vpack.c.b16 %v1841, %v1835
  %v2184 = vpack.c.b16 %v1842, %v1836
  %v2185 = vpack.c.b16 %v1849, %v1843
  %v2186 = vpack.c.b16 %v1850, %v1844
  %v2187 = vpack.c.b16 %v1851, %v1845
  %v2188 = vpack.c.b16 %v1852, %v1846
  %v2189 = vpack.c.b16 %v1853, %v1847
  %v2190 = vpack.c.b16 %v1854, %v1848
  %v2191 = vpack.c.b16 %v1861, %v1855
  %v2192 = vpack.c.b16 %v1862, %v1856
  %v2193 = vpack.c.b16 %v1863, %v1857
  %v2194 = vpack.c.b16 %v1864, %v1858
  %v2195 = vpack.c.b16 %v1865, %v1859
  %v2196 = vpack.c.b16 %v1866, %v1860
  %v2197 = vpack.c.b16 %v1873, %v1867
  %v2198 = vpack.c.b16 %v1874, %v1868
  %v2199 = vpack.c.b16 %v1875, %v1869
  %v2200 = vpack.c.b16 %v1876, %v1870
  %v2201 = vpack.c.b16 %v1877, %v1871
  %v2202 = vpack.c.b16 %v1878, %v1872
  %v2203 = vpack.c.b16 %v1885, %v1879
  %v2204 = vpack.c.b16 %v1886, %v1880
  %v2205 = vpack.c.b16 %v1887, %v1881
  %v2206 = vpack.c.b16 %v1888, %v1882
  %v2207 = vpack.c.b16 %v1889, %v1883
  %v2208 = vpack.c.b16 %v1890, %v1884
  %v2209 = vpack.c.b16 %v1897, %v1891
  %v2210 = vpack.c.b16 %v1898, %v1892
  %v2211 = vpack.c.b16 %v1899, %v1893
  %v2212 = vpack.c.b16 %v1900, %v1894
  %v2213 = vpack.c.b16 %v1901, %v1895
  %v2214 = vpack.c.b16 %v1902, %v1896
  %v2215 = vpack.c.b16 %v1909, %v1903
  %v2216 = vpack.c.b16 %v1910, %v1904
  %v2217 = vpack.c.b16 %v1911, %v1905
  %v2218 = vpack.c.b16 %v1912, %v1906
  %v2219 = vpack.c.b16 %v1913, %v1907
  %v2220 = vpack.c.b16 %v1914, %v1908
  %v2221 = vpack.c.b16 %v1921, %v1915
  %v2222 = vpack.c.b16 %v1922, %v1916
  %v2223 = vpack.c.b16 %v1923, %v1917
  %v2224 = vpack.c.b16 %v1924, %v1918
  %v2225 = vpack.c.b16 %v1925, %v1919
  %v2226 = vpack.c.b16 %v1926, %v1920
  %v2227 = vpack.c.b16 %v1933, %v1927
  %v2228 = vpack.c.b16 %v1934, %v1928
  %v2229 = vpack.c.b16 %v1935, %v1929
  %v2230 = vpack.c.b16 %v1936, %v1930
  %v2231 = vpack.c.b16 %v1937, %v1931
  %v2232 = vpack.c.b16 %v1938, %v1932
  %v2233 = vpack.c.b16 %v1945, %v1939
  %v2234 = vpack.c.b16 %v1946, %v1940
  %v2235 = vpack.c.b16 %v1947, %v1941
  %v2236 = vpack.c.b16 %v1948, %v1942
  %v2237 = vpack.c.b16 %v1949, %v1943
  %v2238 = vpack.c.b16 %v1950, %v1944
  %2527 = vmatprep.subr.bf16.mxu0 %v1952
  %2528 = vmatpush1.bf16.msra.mxu0 %v1951
  %2529 = vmatprep.subr.bf16.mxu0 %v1958
  %2530 = vmatpush1.bf16.msra.mxu0 %v1957
  %2531 = vmatprep.subr.bf16.mxu0 %v1964
  %2532 = vmatpush1.bf16.msra.mxu0 %v1963
  %2533 = vmatprep.subr.bf16.mxu0 %v1970
  %2534 = vmatpush1.bf16.msra.mxu0 %v1969
  %2535 = vmatprep.subr.bf16.mxu0 %v1976
  %2536 = vmatpush1.bf16.msra.mxu0 %v1975
  %2537 = vmatprep.subr.bf16.mxu0 %v1982
  %2538 = vmatpush1.bf16.msra.mxu0 %v1981
  %2539 = vmatprep.subr.bf16.mxu0 %v1988
  %2540 = vmatpush1.bf16.msra.mxu0 %v1987
  %2541 = vmatprep.subr.bf16.mxu0 %v1994
  %2542 = vmatpush1.bf16.msra.mxu0 %v1993
  %2543 = vmatprep.subr.bf16.mxu0 %v2000
  %2544 = vmatpush1.bf16.msra.mxu0 %v1999
  %2545 = vmatprep.subr.bf16.mxu0 %v2006
  %2546 = vmatpush1.bf16.msra.mxu0 %v2005
  %2547 = vmatprep.subr.bf16.mxu0 %v2012
  %2548 = vmatpush1.bf16.msra.mxu0 %v2011
  %2549 = vmatprep.subr.bf16.mxu0 %v2018
  %2550 = vmatpush1.bf16.msra.mxu0 %v2017
  %2551 = vmatprep.subr.bf16.mxu0 %v2024
  %2552 = vmatpush1.bf16.msra.mxu0 %v2023
  %2553 = vmatprep.subr.bf16.mxu0 %v2030
  %2554 = vmatpush1.bf16.msra.mxu0 %v2029
  %2555 = vmatprep.subr.bf16.mxu0 %v2036
  %2556 = vmatpush1.bf16.msra.mxu0 %v2035
  %2557 = vmatprep.subr.bf16.mxu0 %v2042
  %2558 = vmatpush1.bf16.msra.mxu0 %v2041
  %2559 = vmatprep.mubr.bf16.mxu0 %v720
  %2560 = vmatmul.mubr.bf16.gmra.mrb[0].mxu0 %v719
  %v2561 = vpop.f32.mrb[0].mxu0
  %v2562 = vadd.f32 %v1060, %v2561
  %v2563 = vpop.f32.mrb[0].mxu0
  %v2564 = vadd.f32 %v1064, %v2563
  %v2565 = vpop.f32.mrb[0].mxu0
  %v2566 = vadd.f32 %v1060, %v2565
  %v2567 = vpop.f32.mrb[0].mxu0
  %v2568 = vadd.f32 %v1064, %v2567
  %2569 = vmatprep.mubr.bf16.mxu0 %v726
  %2570 = vmatmul.mubr.bf16.gmra.mrb[0].mxu0 %v725
  %v2571 = vpop.f32.mrb[0].mxu0
  %v2572 = vadd.f32 %v1060, %v2571
  %v2573 = vpop.f32.mrb[0].mxu0
  %v2574 = vadd.f32 %v1064, %v2573
  %v2575 = vpop.f32.mrb[0].mxu0
  %v2576 = vadd.f32 %v1060, %v2575
  %v2577 = vpop.f32.mrb[0].mxu0
  %v2578 = vadd.f32 %v1064, %v2577
  %2579 = vmatprep.mubr.bf16.mxu0 %v732
  %2580 = vmatmul.mubr.bf16.gmra.mrb[0].mxu0 %v731
  %v2581 = vpop.f32.mrb[0].mxu0
  %v2582 = vadd.f32 %v1060, %v2581
  %v2583 = vpop.f32.mrb[0].mxu0
  %v2584 = vadd.f32 %v1064, %v2583
  %v2585 = vpop.f32.mrb[0].mxu0
  %v2586 = vadd.f32 %v1060, %v2585
  %v2587 = vpop.f32.mrb[0].mxu0
  %v2588 = vadd.f32 %v1064, %v2587
  %2589 = vmatprep.mubr.bf16.mxu0 %v738
  %2590 = vmatmul.mubr.bf16.gmra.mrb[0].mxu0 %v737
  %v2591 = vpop.f32.mrb[0].mxu0
  %v2592 = vadd.f32 %v1060, %v2591
  %v2593 = vpop.f32.mrb[0].mxu0
  %v2594 = vadd.f32 %v1064, %v2593
  %v2595 = vpop.f32.mrb[0].mxu0
  %v2596 = vadd.f32 %v1060, %v2595
  %v2597 = vpop.f32.mrb[0].mxu0
  %v2598 = vadd.f32 %v1064, %v2597
  %2599 = vmatprep.mubr.bf16.mxu0 %v744
  %2600 = vmatmul.mubr.bf16.gmra.mrb[0].mxu0 %v743
  %v2601 = vpop.f32.mrb[0].mxu0
  %v2602 = vadd.f32 %v1060, %v2601
  %v2603 = vpop.f32.mrb[0].mxu0
  %v2604 = vadd.f32 %v1064, %v2603
  %v2605 = vpop.f32.mrb[0].mxu0
  %v2606 = vadd.f32 %v1060, %v2605
  %v2607 = vpop.f32.mrb[0].mxu0
  %v2608 = vadd.f32 %v1064, %v2607
  %2609 = vmatprep.mubr.bf16.mxu0 %v750
  %2610 = vmatmul.mubr.bf16.gmra.mrb[0].mxu0 %v749
  %v2611 = vpop.f32.mrb[0].mxu0
  %v2612 = vadd.f32 %v1060, %v2611
  %v2613 = vpop.f32.mrb[0].mxu0
  %v2614 = vadd.f32 %v1064, %v2613
  %v2615 = vpop.f32.mrb[0].mxu0
  %v2616 = vadd.f32 %v1060, %v2615
  %v2617 = vpop.f32.mrb[0].mxu0
  %v2618 = vadd.f32 %v1064, %v2617
  %2619 = vmatprep.mubr.bf16.mxu0 %v756
  %2620 = vmatmul.mubr.bf16.gmra.mrb[0].mxu0 %v755
  %v2621 = vpop.f32.mrb[0].mxu0
  %v2622 = vadd.f32 %v1060, %v2621
  %v2623 = vpop.f32.mrb[0].mxu0
  %v2624 = vadd.f32 %v1064, %v2623
  %v2625 = vpop.f32.mrb[0].mxu0
  %v2626 = vadd.f32 %v1060, %v2625
  %v2627 = vpop.f32.mrb[0].mxu0
  %v2628 = vadd.f32 %v1064, %v2627
  %2629 = vmatprep.mubr.bf16.mxu0 %v762
  %2630 = vmatmul.mubr.bf16.gmra.mrb[0].mxu0 %v761
  %v2631 = vpop.f32.mrb[0].mxu0
  %v2632 = vadd.f32 %v1060, %v2631
  %v2633 = vpop.f32.mrb[0].mxu0
  %v2634 = vadd.f32 %v1064, %v2633
  %v2635 = vpop.f32.mrb[0].mxu0
  %v2636 = vadd.f32 %v1060, %v2635
  %v2637 = vpop.f32.mrb[0].mxu0
  %v2638 = vadd.f32 %v1064, %v2637
  %2639 = vdwg.mxu0
  %2640 = vmatprep.subr.bf16.mxu0 %v2048
  %2641 = vmatpush1.bf16.msra.mxu0 %v2047
  %2642 = vmatprep.subr.bf16.mxu0 %v2054
  %2643 = vmatpush1.bf16.msra.mxu0 %v2053
  %2644 = vmatprep.subr.bf16.mxu0 %v2060
  %2645 = vmatpush1.bf16.msra.mxu0 %v2059
  %2646 = vmatprep.subr.bf16.mxu0 %v2066
  %2647 = vmatpush1.bf16.msra.mxu0 %v2065
  %2648 = vmatprep.subr.bf16.mxu0 %v2072
  %2649 = vmatpush1.bf16.msra.mxu0 %v2071
  %2650 = vmatprep.subr.bf16.mxu0 %v2078
  %2651 = vmatpush1.bf16.msra.mxu0 %v2077
  %2652 = vmatprep.subr.bf16.mxu0 %v2084
  %2653 = vmatpush1.bf16.msra.mxu0 %v2083
  %2654 = vmatprep.subr.bf16.mxu0 %v2090
  %2655 = vmatpush1.bf16.msra.mxu0 %v2089
  %2656 = vmatprep.subr.bf16.mxu0 %v2096
  %2657 = vmatpush1.bf16.msra.mxu0 %v2095
  %2658 = vmatprep.subr.bf16.mxu0 %v2102
  %2659 = vmatpush1.bf16.msra.mxu0 %v2101
  %2660 = vmatprep.subr.bf16.mxu0 %v2108
  %2661 = vmatpush1.bf16.msra.mxu0 %v2107
  %2662 = vmatprep.subr.bf16.mxu0 %v2114
  %2663 = vmatpush1.bf16.msra.mxu0 %v2113
  %2664 = vmatprep.subr.bf16.mxu0 %v2120
  %2665 = vmatpush1.bf16.msra.mxu0 %v2119
  %2666 = vmatprep.subr.bf16.mxu0 %v2126
  %2667 = vmatpush1.bf16.msra.mxu0 %v2125
  %2668 = vmatprep.subr.bf16.mxu0 %v2132
  %2669 = vmatpush1.bf16.msra.mxu0 %v2131
  %2670 = vmatprep.subr.bf16.mxu0 %v2138
  %2671 = vmatpush1.bf16.msra.mxu0 %v2137
  %2672 = vmatprep.mubr.bf16.mxu0 %v722
  %2673 = vmatmul.mubr.bf16.gmra.mrb[0].mxu0 %v721
  %v2674 = vpop.f32.mrb[0].mxu0
  %v2675 = vadd.f32 %v2562, %v2674
  %v2676 = vpop.f32.mrb[0].mxu0
  %v2677 = vadd.f32 %v2564, %v2676
  %v2678 = vpop.f32.mrb[0].mxu0
  %v2679 = vadd.f32 %v2566, %v2678
  %v2680 = vpop.f32.mrb[0].mxu0
  %v2681 = vadd.f32 %v2568, %v2680
  %2682 = vmatprep.mubr.bf16.mxu0 %v728
  %2683 = vmatmul.mubr.bf16.gmra.mrb[0].mxu0 %v727
  %v2684 = vpop.f32.mrb[0].mxu0
  %v2685 = vadd.f32 %v2572, %v2684
  %v2686 = vpop.f32.mrb[0].mxu0
  %v2687 = vadd.f32 %v2574, %v2686
  %v2688 = vpop.f32.mrb[0].mxu0
  %v2689 = vadd.f32 %v2576, %v2688
  %v2690 = vpop.f32.mrb[0].mxu0
  %v2691 = vadd.f32 %v2578, %v2690
  %2692 = vmatprep.mubr.bf16.mxu0 %v734
  %2693 = vmatmul.mubr.bf16.gmra.mrb[0].mxu0 %v733
  %v2694 = vpop.f32.mrb[0].mxu0
  %v2695 = vadd.f32 %v2582, %v2694
  %v2696 = vpop.f32.mrb[0].mxu0
  %v2697 = vadd.f32 %v2584, %v2696
  %v2698 = vpop.f32.mrb[0].mxu0
  %v2699 = vadd.f32 %v2586, %v2698
  %v2700 = vpop.f32.mrb[0].mxu0
  %v2701 = vadd.f32 %v2588, %v2700
  %2702 = vmatprep.mubr.bf16.mxu0 %v740
  %2703 = vmatmul.mubr.bf16.gmra.mrb[0].mxu0 %v739
  %v2704 = vpop.f32.mrb[0].mxu0
  %v2705 = vadd.f32 %v2592, %v2704
  %v2706 = vpop.f32.mrb[0].mxu0
  %v2707 = vadd.f32 %v2594, %v2706
  %v2708 = vpop.f32.mrb[0].mxu0
  %v2709 = vadd.f32 %v2596, %v2708
  %v2710 = vpop.f32.mrb[0].mxu0
  %v2711 = vadd.f32 %v2598, %v2710
  %2712 = vmatprep.mubr.bf16.mxu0 %v746
  %2713 = vmatmul.mubr.bf16.gmra.mrb[0].mxu0 %v745
  %v2714 = vpop.f32.mrb[0].mxu0
  %v2715 = vadd.f32 %v2602, %v2714
  %v2716 = vpop.f32.mrb[0].mxu0
  %v2717 = vadd.f32 %v2604, %v2716
  %v2718 = vpop.f32.mrb[0].mxu0
  %v2719 = vadd.f32 %v2606, %v2718
  %v2720 = vpop.f32.mrb[0].mxu0
  %v2721 = vadd.f32 %v2608, %v2720
  %2722 = vmatprep.mubr.bf16.mxu0 %v752
  %2723 = vmatmul.mubr.bf16.gmra.mrb[0].mxu0 %v751
  %v2724 = vpop.f32.mrb[0].mxu0
  %v2725 = vadd.f32 %v2612, %v2724
  %v2726 = vpop.f32.mrb[0].mxu0
  %v2727 = vadd.f32 %v2614, %v2726
  %v2728 = vpop.f32.mrb[0].mxu0
  %v2729 = vadd.f32 %v2616, %v2728
  %v2730 = vpop.f32.mrb[0].mxu0
  %v2731 = vadd.f32 %v2618, %v2730
  %2732 = vmatprep.mubr.bf16.mxu0 %v758
  %2733 = vmatmul.mubr.bf16.gmra.mrb[0].mxu0 %v757
  %v2734 = vpop.f32.mrb[0].mxu0
  %v2735 = vadd.f32 %v2622, %v2734
  %v2736 = vpop.f32.mrb[0].mxu0
  %v2737 = vadd.f32 %v2624, %v2736
  %v2738 = vpop.f32.mrb[0].mxu0
  %v2739 = vadd.f32 %v2626, %v2738
  %v2740 = vpop.f32.mrb[0].mxu0
  %v2741 = vadd.f32 %v2628, %v2740
  %2742 = vmatprep.mubr.bf16.mxu0 %v764
  %2743 = vmatmul.mubr.bf16.gmra.mrb[0].mxu0 %v763
  %v2744 = vpop.f32.mrb[0].mxu0
  %v2745 = vadd.f32 %v2632, %v2744
  %v2746 = vpop.f32.mrb[0].mxu0
  %v2747 = vadd.f32 %v2634, %v2746
  %v2748 = vpop.f32.mrb[0].mxu0
  %v2749 = vadd.f32 %v2636, %v2748
  %v2750 = vpop.f32.mrb[0].mxu0
  %v2751 = vadd.f32 %v2638, %v2750
  %2752 = vdwg.mxu0
  %2753 = vmatprep.subr.bf16.mxu0 %v2144
  %2754 = vmatpush1.bf16.msra.mxu0 %v2143
  %2755 = vmatprep.subr.bf16.mxu0 %v2150
  %2756 = vmatpush1.bf16.msra.mxu0 %v2149
  %2757 = vmatprep.subr.bf16.mxu0 %v2156
  %2758 = vmatpush1.bf16.msra.mxu0 %v2155
  %2759 = vmatprep.subr.bf16.mxu0 %v2162
  %2760 = vmatpush1.bf16.msra.mxu0 %v2161
  %2761 = vmatprep.subr.bf16.mxu0 %v2168
  %2762 = vmatpush1.bf16.msra.mxu0 %v2167
  %2763 = vmatprep.subr.bf16.mxu0 %v2174
  %2764 = vmatpush1.bf16.msra.mxu0 %v2173
  %2765 = vmatprep.subr.bf16.mxu0 %v2180
  %2766 = vmatpush1.bf16.msra.mxu0 %v2179
  %2767 = vmatprep.subr.bf16.mxu0 %v2186
  %2768 = vmatpush1.bf16.msra.mxu0 %v2185
  %2769 = vmatprep.subr.bf16.mxu0 %v2192
  %2770 = vmatpush1.bf16.msra.mxu0 %v2191
  %2771 = vmatprep.subr.bf16.mxu0 %v2198
  %2772 = vmatpush1.bf16.msra.mxu0 %v2197
  %2773 = vmatprep.subr.bf16.mxu0 %v2204
  %2774 = vmatpush1.bf16.msra.mxu0 %v2203
  %2775 = vmatprep.subr.bf16.mxu0 %v2210
  %2776 = vmatpush1.bf16.msra.mxu0 %v2209
  %2777 = vmatprep.subr.bf16.mxu0 %v2216
  %2778 = vmatpush1.bf16.msra.mxu0 %v2215
  %2779 = vmatprep.subr.bf16.mxu0 %v2222
  %2780 = vmatpush1.bf16.msra.mxu0 %v2221
  %2781 = vmatprep.subr.bf16.mxu0 %v2228
  %2782 = vmatpush1.bf16.msra.mxu0 %v2227
  %2783 = vmatprep.subr.bf16.mxu0 %v2234
  %2784 = vmatpush1.bf16.msra.mxu0 %v2233
  %2785 = vmatprep.mubr.bf16.mxu0 %v724
  %2786 = vmatmul.mubr.bf16.gmra.mrb[0].mxu0 %v723
  %v2787 = vpop.f32.mrb[0].mxu0
  %v2788 = vadd.f32 %v2675, %v2787
  %v2789 = vpop.f32.mrb[0].mxu0
  %v2790 = vadd.f32 %v2677, %v2789
  %v2791 = vpop.f32.mrb[0].mxu0
  %v2792 = vadd.f32 %v2679, %v2791
  %v2793 = vpop.f32.mrb[0].mxu0
  %v2794 = vadd.f32 %v2681, %v2793
  %2795 = vmatprep.mubr.bf16.mxu0 %v730
  %2796 = vmatmul.mubr.bf16.gmra.mrb[0].mxu0 %v729
  %v2797 = vpop.f32.mrb[0].mxu0
  %v2798 = vadd.f32 %v2685, %v2797
  %v2799 = vpop.f32.mrb[0].mxu0
  %v2800 = vadd.f32 %v2687, %v2799
  %v2801 = vpop.f32.mrb[0].mxu0
  %v2802 = vadd.f32 %v2689, %v2801
  %v2803 = vpop.f32.mrb[0].mxu0
  %v2804 = vadd.f32 %v2691, %v2803
  %2805 = vmatprep.mubr.bf16.mxu0 %v736
  %2806 = vmatmul.mubr.bf16.gmra.mrb[0].mxu0 %v735
  %v2807 = vpop.f32.mrb[0].mxu0
  %v2808 = vadd.f32 %v2695, %v2807
  %v2809 = vpop.f32.mrb[0].mxu0
  %v2810 = vadd.f32 %v2697, %v2809
  %v2811 = vpop.f32.mrb[0].mxu0
  %v2812 = vadd.f32 %v2699, %v2811
  %v2813 = vpop.f32.mrb[0].mxu0
  %v2814 = vadd.f32 %v2701, %v2813
  %2815 = vmatprep.mubr.bf16.mxu0 %v742
  %2816 = vmatmul.mubr.bf16.gmra.mrb[0].mxu0 %v741
  %v2817 = vpop.f32.mrb[0].mxu0
  %v2818 = vadd.f32 %v2705, %v2817
  %v2819 = vpop.f32.mrb[0].mxu0
  %v2820 = vadd.f32 %v2707, %v2819
  %v2821 = vpop.f32.mrb[0].mxu0
  %v2822 = vadd.f32 %v2709, %v2821
  %v2823 = vpop.f32.mrb[0].mxu0
  %v2824 = vadd.f32 %v2711, %v2823
  %2825 = vmatprep.mubr.bf16.mxu0 %v748
  %2826 = vmatmul.mubr.bf16.gmra.mrb[0].mxu0 %v747
  %v2827 = vpop.f32.mrb[0].mxu0
  %v2828 = vadd.f32 %v2715, %v2827
  %v2829 = vpop.f32.mrb[0].mxu0
  %v2830 = vadd.f32 %v2717, %v2829
  %v2831 = vpop.f32.mrb[0].mxu0
  %v2832 = vadd.f32 %v2719, %v2831
  %v2833 = vpop.f32.mrb[0].mxu0
  %v2834 = vadd.f32 %v2721, %v2833
  %2835 = vmatprep.mubr.bf16.mxu0 %v754
  %2836 = vmatmul.mubr.bf16.gmra.mrb[0].mxu0 %v753
  %v2837 = vpop.f32.mrb[0].mxu0
  %v2838 = vadd.f32 %v2725, %v2837
  %v2839 = vpop.f32.mrb[0].mxu0
  %v2840 = vadd.f32 %v2727, %v2839
  %v2841 = vpop.f32.mrb[0].mxu0
  %v2842 = vadd.f32 %v2729, %v2841
  %v2843 = vpop.f32.mrb[0].mxu0
  %v2844 = vadd.f32 %v2731, %v2843
  %2845 = vmatprep.mubr.bf16.mxu0 %v760
  %2846 = vmatmul.mubr.bf16.gmra.mrb[0].mxu0 %v759
  %v2847 = vpop.f32.mrb[0].mxu0
  %v2848 = vadd.f32 %v2735, %v2847
  %v2849 = vpop.f32.mrb[0].mxu0
  %v2850 = vadd.f32 %v2737, %v2849
  %v2851 = vpop.f32.mrb[0].mxu0
  %v2852 = vadd.f32 %v2739, %v2851
  %v2853 = vpop.f32.mrb[0].mxu0
  %v2854 = vadd.f32 %v2741, %v2853
  %2855 = vmatprep.mubr.bf16.mxu0 %v766
  %2856 = vmatmul.mubr.bf16.gmra.mrb[0].mxu0 %v765
  %v2857 = vpop.f32.mrb[0].mxu0
  %v2858 = vadd.f32 %v2745, %v2857
  %v2859 = vpop.f32.mrb[0].mxu0
  %v2860 = vadd.f32 %v2747, %v2859
  %v2861 = vpop.f32.mrb[0].mxu0
  %v2862 = vadd.f32 %v2749, %v2861
  %v2863 = vpop.f32.mrb[0].mxu0
  %v2864 = vadd.f32 %v2751, %v2863
  %2865 = vdwg.mxu0
  %2866 = vmatprep.subr.bf16.mxu0 %v1954
  %2867 = vmatpush1.bf16.msra.mxu0 %v1953
  %2868 = vmatprep.subr.bf16.mxu0 %v1960
  %2869 = vmatpush1.bf16.msra.mxu0 %v1959
  %2870 = vmatprep.subr.bf16.mxu0 %v1966
  %2871 = vmatpush1.bf16.msra.mxu0 %v1965
  %2872 = vmatprep.subr.bf16.mxu0 %v1972
  %2873 = vmatpush1.bf16.msra.mxu0 %v1971
  %2874 = vmatprep.subr.bf16.mxu0 %v1978
  %2875 = vmatpush1.bf16.msra.mxu0 %v1977
  %2876 = vmatprep.subr.bf16.mxu0 %v1984
  %2877 = vmatpush1.bf16.msra.mxu0 %v1983
  %2878 = vmatprep.subr.bf16.mxu0 %v1990
  %2879 = vmatpush1.bf16.msra.mxu0 %v1989
  %2880 = vmatprep.subr.bf16.mxu0 %v1996
  %2881 = vmatpush1.bf16.msra.mxu0 %v1995
  %2882 = vmatprep.subr.bf16.mxu0 %v2002
  %2883 = vmatpush1.bf16.msra.mxu0 %v2001
  %2884 = vmatprep.subr.bf16.mxu0 %v2008
  %2885 = vmatpush1.bf16.msra.mxu0 %v2007
  %2886 = vmatprep.subr.bf16.mxu0 %v2014
  %2887 = vmatpush1.bf16.msra.mxu0 %v2013
  %2888 = vmatprep.subr.bf16.mxu0 %v2020
  %2889 = vmatpush1.bf16.msra.mxu0 %v2019
  %2890 = vmatprep.subr.bf16.mxu0 %v2026
  %2891 = vmatpush1.bf16.msra.mxu0 %v2025
  %2892 = vmatprep.subr.bf16.mxu0 %v2032
  %2893 = vmatpush1.bf16.msra.mxu0 %v2031
  %2894 = vmatprep.subr.bf16.mxu0 %v2038
  %2895 = vmatpush1.bf16.msra.mxu0 %v2037
  %2896 = vmatprep.subr.bf16.mxu0 %v2044
  %2897 = vmatpush1.bf16.msra.mxu0 %v2043
  %2898 = vmatprep.mubr.bf16.mxu0 %v720
  %2899 = vmatmul.mubr.bf16.gmra.mrb[0].mxu0 %v719
  %v2900 = vpop.f32.mrb[0].mxu0
  %v2901 = vadd.f32 %v1068, %v2900
  %v2902 = vpop.f32.mrb[0].mxu0
  %v2903 = vadd.f32 %v1072, %v2902
  %v2904 = vpop.f32.mrb[0].mxu0
  %v2905 = vadd.f32 %v1068, %v2904
  %v2906 = vpop.f32.mrb[0].mxu0
  %v2907 = vadd.f32 %v1072, %v2906
  %2908 = vmatprep.mubr.bf16.mxu0 %v726
  %2909 = vmatmul.mubr.bf16.gmra.mrb[0].mxu0 %v725
  %v2910 = vpop.f32.mrb[0].mxu0
  %v2911 = vadd.f32 %v1068, %v2910
  %v2912 = vpop.f32.mrb[0].mxu0
  %v2913 = vadd.f32 %v1072, %v2912
  %v2914 = vpop.f32.mrb[0].mxu0
  %v2915 = vadd.f32 %v1068, %v2914
  %v2916 = vpop.f32.mrb[0].mxu0
  %v2917 = vadd.f32 %v1072, %v2916
  %2918 = vmatprep.mubr.bf16.mxu0 %v732
  %2919 = vmatmul.mubr.bf16.gmra.mrb[0].mxu0 %v731
  %v2920 = vpop.f32.mrb[0].mxu0
  %v2921 = vadd.f32 %v1068, %v2920
  %v2922 = vpop.f32.mrb[0].mxu0
  %v2923 = vadd.f32 %v1072, %v2922
  %v2924 = vpop.f32.mrb[0].mxu0
  %v2925 = vadd.f32 %v1068, %v2924
  %v2926 = vpop.f32.mrb[0].mxu0
  %v2927 = vadd.f32 %v1072, %v2926
  %2928 = vmatprep.mubr.bf16.mxu0 %v738
  %2929 = vmatmul.mubr.bf16.gmra.mrb[0].mxu0 %v737
  %v2930 = vpop.f32.mrb[0].mxu0
  %v2931 = vadd.f32 %v1068, %v2930
  %v2932 = vpop.f32.mrb[0].mxu0
  %v2933 = vadd.f32 %v1072, %v2932
  %v2934 = vpop.f32.mrb[0].mxu0
  %v2935 = vadd.f32 %v1068, %v2934
  %v2936 = vpop.f32.mrb[0].mxu0
  %v2937 = vadd.f32 %v1072, %v2936
  %2938 = vmatprep.mubr.bf16.mxu0 %v744
  %2939 = vmatmul.mubr.bf16.gmra.mrb[0].mxu0 %v743
  %v2940 = vpop.f32.mrb[0].mxu0
  %v2941 = vadd.f32 %v1068, %v2940
  %v2942 = vpop.f32.mrb[0].mxu0
  %v2943 = vadd.f32 %v1072, %v2942
  %v2944 = vpop.f32.mrb[0].mxu0
  %v2945 = vadd.f32 %v1068, %v2944
  %v2946 = vpop.f32.mrb[0].mxu0
  %v2947 = vadd.f32 %v1072, %v2946
  %2948 = vmatprep.mubr.bf16.mxu0 %v750
  %2949 = vmatmul.mubr.bf16.gmra.mrb[0].mxu0 %v749
  %v2950 = vpop.f32.mrb[0].mxu0
  %v2951 = vadd.f32 %v1068, %v2950
  %v2952 = vpop.f32.mrb[0].mxu0
  %v2953 = vadd.f32 %v1072, %v2952
  %v2954 = vpop.f32.mrb[0].mxu0
  %v2955 = vadd.f32 %v1068, %v2954
  %v2956 = vpop.f32.mrb[0].mxu0
  %v2957 = vadd.f32 %v1072, %v2956
  %2958 = vmatprep.mubr.bf16.mxu0 %v756
  %2959 = vmatmul.mubr.bf16.gmra.mrb[0].mxu0 %v755
  %v2960 = vpop.f32.mrb[0].mxu0
  %v2961 = vadd.f32 %v1068, %v2960
  %v2962 = vpop.f32.mrb[0].mxu0
  %v2963 = vadd.f32 %v1072, %v2962
  %v2964 = vpop.f32.mrb[0].mxu0
  %v2965 = vadd.f32 %v1068, %v2964
  %v2966 = vpop.f32.mrb[0].mxu0
  %v2967 = vadd.f32 %v1072, %v2966
  %2968 = vmatprep.mubr.bf16.mxu0 %v762
  %2969 = vmatmul.mubr.bf16.gmra.mrb[0].mxu0 %v761
  %v2970 = vpop.f32.mrb[0].mxu0
  %v2971 = vadd.f32 %v1068, %v2970
  %v2972 = vpop.f32.mrb[0].mxu0
  %v2973 = vadd.f32 %v1072, %v2972
  %v2974 = vpop.f32.mrb[0].mxu0
  %v2975 = vadd.f32 %v1068, %v2974
  %v2976 = vpop.f32.mrb[0].mxu0
  %v2977 = vadd.f32 %v1072, %v2976
  %2978 = vdwg.mxu0
  %2979 = vmatprep.subr.bf16.mxu0 %v2050
  %2980 = vmatpush1.bf16.msra.mxu0 %v2049
  %2981 = vmatprep.subr.bf16.mxu0 %v2056
  %2982 = vmatpush1.bf16.msra.mxu0 %v2055
  %2983 = vmatprep.subr.bf16.mxu0 %v2062
  %2984 = vmatpush1.bf16.msra.mxu0 %v2061
  %2985 = vmatprep.subr.bf16.mxu0 %v2068
  %2986 = vmatpush1.bf16.msra.mxu0 %v2067
  %2987 = vmatprep.subr.bf16.mxu0 %v2074
  %2988 = vmatpush1.bf16.msra.mxu0 %v2073
  %2989 = vmatprep.subr.bf16.mxu0 %v2080
  %2990 = vmatpush1.bf16.msra.mxu0 %v2079
  %2991 = vmatprep.subr.bf16.mxu0 %v2086
  %2992 = vmatpush1.bf16.msra.mxu0 %v2085
  %2993 = vmatprep.subr.bf16.mxu0 %v2092
  %2994 = vmatpush1.bf16.msra.mxu0 %v2091
  %2995 = vmatprep.subr.bf16.mxu0 %v2098
  %2996 = vmatpush1.bf16.msra.mxu0 %v2097
  %2997 = vmatprep.subr.bf16.mxu0 %v2104
  %2998 = vmatpush1.bf16.msra.mxu0 %v2103
  %2999 = vmatprep.subr.bf16.mxu0 %v2110
  %3000 = vmatpush1.bf16.msra.mxu0 %v2109
  %3001 = vmatprep.subr.bf16.mxu0 %v2116
  %3002 = vmatpush1.bf16.msra.mxu0 %v2115
  %3003 = vmatprep.subr.bf16.mxu0 %v2122
  %3004 = vmatpush1.bf16.msra.mxu0 %v2121
  %3005 = vmatprep.subr.bf16.mxu0 %v2128
  %3006 = vmatpush1.bf16.msra.mxu0 %v2127
  %3007 = vmatprep.subr.bf16.mxu0 %v2134
  %3008 = vmatpush1.bf16.msra.mxu0 %v2133
  %3009 = vmatprep.subr.bf16.mxu0 %v2140
  %3010 = vmatpush1.bf16.msra.mxu0 %v2139
  %3011 = vmatprep.mubr.bf16.mxu0 %v722
  %3012 = vmatmul.mubr.bf16.gmra.mrb[0].mxu0 %v721
  %v3013 = vpop.f32.mrb[0].mxu0
  %v3014 = vadd.f32 %v2901, %v3013
  %v3015 = vpop.f32.mrb[0].mxu0
  %v3016 = vadd.f32 %v2903, %v3015
  %v3017 = vpop.f32.mrb[0].mxu0
  %v3018 = vadd.f32 %v2905, %v3017
  %v3019 = vpop.f32.mrb[0].mxu0
  %v3020 = vadd.f32 %v2907, %v3019
  %3021 = vmatprep.mubr.bf16.mxu0 %v728
  %3022 = vmatmul.mubr.bf16.gmra.mrb[0].mxu0 %v727
  %v3023 = vpop.f32.mrb[0].mxu0
  %v3024 = vadd.f32 %v2911, %v3023
  %v3025 = vpop.f32.mrb[0].mxu0
  %v3026 = vadd.f32 %v2913, %v3025
  %v3027 = vpop.f32.mrb[0].mxu0
  %v3028 = vadd.f32 %v2915, %v3027
  %v3029 = vpop.f32.mrb[0].mxu0
  %v3030 = vadd.f32 %v2917, %v3029
  %3031 = vmatprep.mubr.bf16.mxu0 %v734
  %3032 = vmatmul.mubr.bf16.gmra.mrb[0].mxu0 %v733
  %v3033 = vpop.f32.mrb[0].mxu0
  %v3034 = vadd.f32 %v2921, %v3033
  %v3035 = vpop.f32.mrb[0].mxu0
  %v3036 = vadd.f32 %v2923, %v3035
  %v3037 = vpop.f32.mrb[0].mxu0
  %v3038 = vadd.f32 %v2925, %v3037
  %v3039 = vpop.f32.mrb[0].mxu0
  %v3040 = vadd.f32 %v2927, %v3039
  %3041 = vmatprep.mubr.bf16.mxu0 %v740
  %3042 = vmatmul.mubr.bf16.gmra.mrb[0].mxu0 %v739
  %v3043 = vpop.f32.mrb[0].mxu0
  %v3044 = vadd.f32 %v2931, %v3043
  %v3045 = vpop.f32.mrb[0].mxu0
  %v3046 = vadd.f32 %v2933, %v3045
  %v3047 = vpop.f32.mrb[0].mxu0
  %v3048 = vadd.f32 %v2935, %v3047
  %v3049 = vpop.f32.mrb[0].mxu0
  %v3050 = vadd.f32 %v2937, %v3049
  %3051 = vmatprep.mubr.bf16.mxu0 %v746
  %3052 = vmatmul.mubr.bf16.gmra.mrb[0].mxu0 %v745
  %v3053 = vpop.f32.mrb[0].mxu0
  %v3054 = vadd.f32 %v2941, %v3053
  %v3055 = vpop.f32.mrb[0].mxu0
  %v3056 = vadd.f32 %v2943, %v3055
  %v3057 = vpop.f32.mrb[0].mxu0
  %v3058 = vadd.f32 %v2945, %v3057
  %v3059 = vpop.f32.mrb[0].mxu0
  %v3060 = vadd.f32 %v2947, %v3059
  %3061 = vmatprep.mubr.bf16.mxu0 %v752
  %3062 = vmatmul.mubr.bf16.gmra.mrb[0].mxu0 %v751
  %v3063 = vpop.f32.mrb[0].mxu0
  %v3064 = vadd.f32 %v2951, %v3063
  %v3065 = vpop.f32.mrb[0].mxu0
  %v3066 = vadd.f32 %v2953, %v3065
  %v3067 = vpop.f32.mrb[0].mxu0
  %v3068 = vadd.f32 %v2955, %v3067
  %v3069 = vpop.f32.mrb[0].mxu0
  %v3070 = vadd.f32 %v2957, %v3069
  %3071 = vmatprep.mubr.bf16.mxu0 %v758
  %3072 = vmatmul.mubr.bf16.gmra.mrb[0].mxu0 %v757
  %v3073 = vpop.f32.mrb[0].mxu0
  %v3074 = vadd.f32 %v2961, %v3073
  %v3075 = vpop.f32.mrb[0].mxu0
  %v3076 = vadd.f32 %v2963, %v3075
  %v3077 = vpop.f32.mrb[0].mxu0
  %v3078 = vadd.f32 %v2965, %v3077
  %v3079 = vpop.f32.mrb[0].mxu0
  %v3080 = vadd.f32 %v2967, %v3079
  %3081 = vmatprep.mubr.bf16.mxu0 %v764
  %3082 = vmatmul.mubr.bf16.gmra.mrb[0].mxu0 %v763
  %v3083 = vpop.f32.mrb[0].mxu0
  %v3084 = vadd.f32 %v2971, %v3083
  %v3085 = vpop.f32.mrb[0].mxu0
  %v3086 = vadd.f32 %v2973, %v3085
  %v3087 = vpop.f32.mrb[0].mxu0
  %v3088 = vadd.f32 %v2975, %v3087
  %v3089 = vpop.f32.mrb[0].mxu0
  %v3090 = vadd.f32 %v2977, %v3089
  %3091 = vdwg.mxu0
  %3092 = vmatprep.subr.bf16.mxu0 %v2146
  %3093 = vmatpush1.bf16.msra.mxu0 %v2145
  %3094 = vmatprep.subr.bf16.mxu0 %v2152
  %3095 = vmatpush1.bf16.msra.mxu0 %v2151
  %3096 = vmatprep.subr.bf16.mxu0 %v2158
  %3097 = vmatpush1.bf16.msra.mxu0 %v2157
  %3098 = vmatprep.subr.bf16.mxu0 %v2164
  %3099 = vmatpush1.bf16.msra.mxu0 %v2163
  %3100 = vmatprep.subr.bf16.mxu0 %v2170
  %3101 = vmatpush1.bf16.msra.mxu0 %v2169
  %3102 = vmatprep.subr.bf16.mxu0 %v2176
  %3103 = vmatpush1.bf16.msra.mxu0 %v2175
  %3104 = vmatprep.subr.bf16.mxu0 %v2182
  %3105 = vmatpush1.bf16.msra.mxu0 %v2181
  %3106 = vmatprep.subr.bf16.mxu0 %v2188
  %3107 = vmatpush1.bf16.msra.mxu0 %v2187
  %3108 = vmatprep.subr.bf16.mxu0 %v2194
  %3109 = vmatpush1.bf16.msra.mxu0 %v2193
  %3110 = vmatprep.subr.bf16.mxu0 %v2200
  %3111 = vmatpush1.bf16.msra.mxu0 %v2199
  %3112 = vmatprep.subr.bf16.mxu0 %v2206
  %3113 = vmatpush1.bf16.msra.mxu0 %v2205
  %3114 = vmatprep.subr.bf16.mxu0 %v2212
  %3115 = vmatpush1.bf16.msra.mxu0 %v2211
  %3116 = vmatprep.subr.bf16.mxu0 %v2218
  %3117 = vmatpush1.bf16.msra.mxu0 %v2217
  %3118 = vmatprep.subr.bf16.mxu0 %v2224
  %3119 = vmatpush1.bf16.msra.mxu0 %v2223
  %3120 = vmatprep.subr.bf16.mxu0 %v2230
  %3121 = vmatpush1.bf16.msra.mxu0 %v2229
  %3122 = vmatprep.subr.bf16.mxu0 %v2236
  %3123 = vmatpush1.bf16.msra.mxu0 %v2235
  %3124 = vmatprep.mubr.bf16.mxu0 %v724
  %3125 = vmatmul.mubr.bf16.gmra.mrb[0].mxu0 %v723
  %v3126 = vpop.f32.mrb[0].mxu0
  %v3127 = vadd.f32 %v3014, %v3126
  %v3128 = vpop.f32.mrb[0].mxu0
  %v3129 = vadd.f32 %v3016, %v3128
  %v3130 = vpop.f32.mrb[0].mxu0
  %v3131 = vadd.f32 %v3018, %v3130
  %v3132 = vpop.f32.mrb[0].mxu0
  %v3133 = vadd.f32 %v3020, %v3132
  %3134 = vmatprep.mubr.bf16.mxu0 %v730
  %3135 = vmatmul.mubr.bf16.gmra.mrb[0].mxu0 %v729
  %v3136 = vpop.f32.mrb[0].mxu0
  %v3137 = vadd.f32 %v3024, %v3136
  %v3138 = vpop.f32.mrb[0].mxu0
  %v3139 = vadd.f32 %v3026, %v3138
  %v3140 = vpop.f32.mrb[0].mxu0
  %v3141 = vadd.f32 %v3028, %v3140
  %v3142 = vpop.f32.mrb[0].mxu0
  %v3143 = vadd.f32 %v3030, %v3142
  %3144 = vmatprep.mubr.bf16.mxu0 %v736
  %3145 = vmatmul.mubr.bf16.gmra.mrb[0].mxu0 %v735
  %v3146 = vpop.f32.mrb[0].mxu0
  %v3147 = vadd.f32 %v3034, %v3146
  %v3148 = vpop.f32.mrb[0].mxu0
  %v3149 = vadd.f32 %v3036, %v3148
  %v3150 = vpop.f32.mrb[0].mxu0
  %v3151 = vadd.f32 %v3038, %v3150
  %v3152 = vpop.f32.mrb[0].mxu0
  %v3153 = vadd.f32 %v3040, %v3152
  %3154 = vmatprep.mubr.bf16.mxu0 %v742
  %3155 = vmatmul.mubr.bf16.gmra.mrb[0].mxu0 %v741
  %v3156 = vpop.f32.mrb[0].mxu0
  %v3157 = vadd.f32 %v3044, %v3156
  %v3158 = vpop.f32.mrb[0].mxu0
  %v3159 = vadd.f32 %v3046, %v3158
  %v3160 = vpop.f32.mrb[0].mxu0
  %v3161 = vadd.f32 %v3048, %v3160
  %v3162 = vpop.f32.mrb[0].mxu0
  %v3163 = vadd.f32 %v3050, %v3162
  %3164 = vmatprep.mubr.bf16.mxu0 %v748
  %3165 = vmatmul.mubr.bf16.gmra.mrb[0].mxu0 %v747
  %v3166 = vpop.f32.mrb[0].mxu0
  %v3167 = vadd.f32 %v3054, %v3166
  %v3168 = vpop.f32.mrb[0].mxu0
  %v3169 = vadd.f32 %v3056, %v3168
  %v3170 = vpop.f32.mrb[0].mxu0
  %v3171 = vadd.f32 %v3058, %v3170
  %v3172 = vpop.f32.mrb[0].mxu0
  %v3173 = vadd.f32 %v3060, %v3172
  %3174 = vmatprep.mubr.bf16.mxu0 %v754
  %3175 = vmatmul.mubr.bf16.gmra.mrb[0].mxu0 %v753
  %v3176 = vpop.f32.mrb[0].mxu0
  %v3177 = vadd.f32 %v3064, %v3176
  %v3178 = vpop.f32.mrb[0].mxu0
  %v3179 = vadd.f32 %v3066, %v3178
  %v3180 = vpop.f32.mrb[0].mxu0
  %v3181 = vadd.f32 %v3068, %v3180
  %v3182 = vpop.f32.mrb[0].mxu0
  %v3183 = vadd.f32 %v3070, %v3182
  %3184 = vmatprep.mubr.bf16.mxu0 %v760
  %3185 = vmatmul.mubr.bf16.gmra.mrb[0].mxu0 %v759
  %v3186 = vpop.f32.mrb[0].mxu0
  %v3187 = vadd.f32 %v3074, %v3186
  %v3188 = vpop.f32.mrb[0].mxu0
  %v3189 = vadd.f32 %v3076, %v3188
  %v3190 = vpop.f32.mrb[0].mxu0
  %v3191 = vadd.f32 %v3078, %v3190
  %v3192 = vpop.f32.mrb[0].mxu0
  %v3193 = vadd.f32 %v3080, %v3192
  %3194 = vmatprep.mubr.bf16.mxu0 %v766
  %3195 = vmatmul.mubr.bf16.gmra.mrb[0].mxu0 %v765
  %v3196 = vpop.f32.mrb[0].mxu0
  %v3197 = vadd.f32 %v3084, %v3196
  %v3198 = vpop.f32.mrb[0].mxu0
  %v3199 = vadd.f32 %v3086, %v3198
  %v3200 = vpop.f32.mrb[0].mxu0
  %v3201 = vadd.f32 %v3088, %v3200
  %v3202 = vpop.f32.mrb[0].mxu0
  %v3203 = vadd.f32 %v3090, %v3202
  %3204 = vdwg.mxu0
  %3205 = vmatprep.subr.bf16.mxu0 %v1956
  %3206 = vmatpush1.bf16.msra.mxu0 %v1955
  %3207 = vmatprep.subr.bf16.mxu0 %v1962
  %3208 = vmatpush1.bf16.msra.mxu0 %v1961
  %3209 = vmatprep.subr.bf16.mxu0 %v1968
  %3210 = vmatpush1.bf16.msra.mxu0 %v1967
  %3211 = vmatprep.subr.bf16.mxu0 %v1974
  %3212 = vmatpush1.bf16.msra.mxu0 %v1973
  %3213 = vmatprep.subr.bf16.mxu0 %v1980
  %3214 = vmatpush1.bf16.msra.mxu0 %v1979
  %3215 = vmatprep.subr.bf16.mxu0 %v1986
  %3216 = vmatpush1.bf16.msra.mxu0 %v1985
  %3217 = vmatprep.subr.bf16.mxu0 %v1992
  %3218 = vmatpush1.bf16.msra.mxu0 %v1991
  %3219 = vmatprep.subr.bf16.mxu0 %v1998
  %3220 = vmatpush1.bf16.msra.mxu0 %v1997
  %3221 = vmatprep.subr.bf16.mxu0 %v2004
  %3222 = vmatpush1.bf16.msra.mxu0 %v2003
  %3223 = vmatprep.subr.bf16.mxu0 %v2010
  %3224 = vmatpush1.bf16.msra.mxu0 %v2009
  %3225 = vmatprep.subr.bf16.mxu0 %v2016
  %3226 = vmatpush1.bf16.msra.mxu0 %v2015
  %3227 = vmatprep.subr.bf16.mxu0 %v2022
  %3228 = vmatpush1.bf16.msra.mxu0 %v2021
  %3229 = vmatprep.subr.bf16.mxu0 %v2028
  %3230 = vmatpush1.bf16.msra.mxu0 %v2027
  %3231 = vmatprep.subr.bf16.mxu0 %v2034
  %3232 = vmatpush1.bf16.msra.mxu0 %v2033
  %3233 = vmatprep.subr.bf16.mxu0 %v2040
  %3234 = vmatpush1.bf16.msra.mxu0 %v2039
  %3235 = vmatprep.subr.bf16.mxu0 %v2046
  %3236 = vmatpush1.bf16.msra.mxu0 %v2045
  %3237 = vmatprep.mubr.bf16.mxu0 %v720
  %3238 = vmatmul.mubr.bf16.gmra.mrb[0].mxu0 %v719
  %v3239 = vpop.f32.mrb[0].mxu0
  %v3240 = vadd.f32 %v1076, %v3239
  %v3241 = vpop.f32.mrb[0].mxu0
  %v3242 = vadd.f32 %v1080, %v3241
  %v3243 = vpop.f32.mrb[0].mxu0
  %v3244 = vadd.f32 %v1076, %v3243
  %v3245 = vpop.f32.mrb[0].mxu0
  %v3246 = vadd.f32 %v1080, %v3245
  %3247 = vmatprep.mubr.bf16.mxu0 %v726
  %3248 = vmatmul.mubr.bf16.gmra.mrb[0].mxu0 %v725
  %v3249 = vpop.f32.mrb[0].mxu0
  %v3250 = vadd.f32 %v1076, %v3249
  %v3251 = vpop.f32.mrb[0].mxu0
  %v3252 = vadd.f32 %v1080, %v3251
  %v3253 = vpop.f32.mrb[0].mxu0
  %v3254 = vadd.f32 %v1076, %v3253
  %v3255 = vpop.f32.mrb[0].mxu0
  %v3256 = vadd.f32 %v1080, %v3255
  %3257 = vmatprep.mubr.bf16.mxu0 %v732
  %3258 = vmatmul.mubr.bf16.gmra.mrb[0].mxu0 %v731
  %v3259 = vpop.f32.mrb[0].mxu0
  %v3260 = vadd.f32 %v1076, %v3259
  %v3261 = vpop.f32.mrb[0].mxu0
  %v3262 = vadd.f32 %v1080, %v3261
  %v3263 = vpop.f32.mrb[0].mxu0
  %v3264 = vadd.f32 %v1076, %v3263
  %v3265 = vpop.f32.mrb[0].mxu0
  %v3266 = vadd.f32 %v1080, %v3265
  %3267 = vmatprep.mubr.bf16.mxu0 %v738
  %3268 = vmatmul.mubr.bf16.gmra.mrb[0].mxu0 %v737
  %v3269 = vpop.f32.mrb[0].mxu0
  %v3270 = vadd.f32 %v1076, %v3269
  %v3271 = vpop.f32.mrb[0].mxu0
  %v3272 = vadd.f32 %v1080, %v3271
  %v3273 = vpop.f32.mrb[0].mxu0
  %v3274 = vadd.f32 %v1076, %v3273
  %v3275 = vpop.f32.mrb[0].mxu0
  %v3276 = vadd.f32 %v1080, %v3275
  %3277 = vmatprep.mubr.bf16.mxu0 %v744
  %3278 = vmatmul.mubr.bf16.gmra.mrb[0].mxu0 %v743
  %v3279 = vpop.f32.mrb[0].mxu0
  %v3280 = vadd.f32 %v1076, %v3279
  %v3281 = vpop.f32.mrb[0].mxu0
  %v3282 = vadd.f32 %v1080, %v3281
  %v3283 = vpop.f32.mrb[0].mxu0
  %v3284 = vadd.f32 %v1076, %v3283
  %v3285 = vpop.f32.mrb[0].mxu0
  %v3286 = vadd.f32 %v1080, %v3285
  %3287 = vmatprep.mubr.bf16.mxu0 %v750
  %3288 = vmatmul.mubr.bf16.gmra.mrb[0].mxu0 %v749
  %v3289 = vpop.f32.mrb[0].mxu0
  %v3290 = vadd.f32 %v1076, %v3289
  %v3291 = vpop.f32.mrb[0].mxu0
  %v3292 = vadd.f32 %v1080, %v3291
  %v3293 = vpop.f32.mrb[0].mxu0
  %v3294 = vadd.f32 %v1076, %v3293
  %v3295 = vpop.f32.mrb[0].mxu0
  %v3296 = vadd.f32 %v1080, %v3295
  %3297 = vmatprep.mubr.bf16.mxu0 %v756
  %3298 = vmatmul.mubr.bf16.gmra.mrb[0].mxu0 %v755
  %v3299 = vpop.f32.mrb[0].mxu0
  %v3300 = vadd.f32 %v1076, %v3299
  %v3301 = vpop.f32.mrb[0].mxu0
  %v3302 = vadd.f32 %v1080, %v3301
  %v3303 = vpop.f32.mrb[0].mxu0
  %v3304 = vadd.f32 %v1076, %v3303
  %v3305 = vpop.f32.mrb[0].mxu0
  %v3306 = vadd.f32 %v1080, %v3305
  %3307 = vmatprep.mubr.bf16.mxu0 %v762
  %3308 = vmatmul.mubr.bf16.gmra.mrb[0].mxu0 %v761
  %v3309 = vpop.f32.mrb[0].mxu0
  %v3310 = vadd.f32 %v1076, %v3309
  %v3311 = vpop.f32.mrb[0].mxu0
  %v3312 = vadd.f32 %v1080, %v3311
  %v3313 = vpop.f32.mrb[0].mxu0
  %v3314 = vadd.f32 %v1076, %v3313
  %v3315 = vpop.f32.mrb[0].mxu0
  %v3316 = vadd.f32 %v1080, %v3315
  %3317 = vdwg.mxu0
  %3318 = vmatprep.subr.bf16.mxu0 %v2052
  %3319 = vmatpush1.bf16.msra.mxu0 %v2051
  %3320 = vmatprep.subr.bf16.mxu0 %v2058
  %3321 = vmatpush1.bf16.msra.mxu0 %v2057
  %3322 = vmatprep.subr.bf16.mxu0 %v2064
  %3323 = vmatpush1.bf16.msra.mxu0 %v2063
  %3324 = vmatprep.subr.bf16.mxu0 %v2070
  %3325 = vmatpush1.bf16.msra.mxu0 %v2069
  %3326 = vmatprep.subr.bf16.mxu0 %v2076
  %3327 = vmatpush1.bf16.msra.mxu0 %v2075
  %3328 = vmatprep.subr.bf16.mxu0 %v2082
  %3329 = vmatpush1.bf16.msra.mxu0 %v2081
  %3330 = vmatprep.subr.bf16.mxu0 %v2088
  %3331 = vmatpush1.bf16.msra.mxu0 %v2087
  %3332 = vmatprep.subr.bf16.mxu0 %v2094
  %3333 = vmatpush1.bf16.msra.mxu0 %v2093
  %3334 = vmatprep.subr.bf16.mxu0 %v2100
  %3335 = vmatpush1.bf16.msra.mxu0 %v2099
  %3336 = vmatprep.subr.bf16.mxu0 %v2106
  %3337 = vmatpush1.bf16.msra.mxu0 %v2105
  %3338 = vmatprep.subr.bf16.mxu0 %v2112
  %3339 = vmatpush1.bf16.msra.mxu0 %v2111
  %3340 = vmatprep.subr.bf16.mxu0 %v2118
  %3341 = vmatpush1.bf16.msra.mxu0 %v2117
  %3342 = vmatprep.subr.bf16.mxu0 %v2124
  %3343 = vmatpush1.bf16.msra.mxu0 %v2123
  %3344 = vmatprep.subr.bf16.mxu0 %v2130
  %3345 = vmatpush1.bf16.msra.mxu0 %v2129
  %3346 = vmatprep.subr.bf16.mxu0 %v2136
  %3347 = vmatpush1.bf16.msra.mxu0 %v2135
  %3348 = vmatprep.subr.bf16.mxu0 %v2142
  %3349 = vmatpush1.bf16.msra.mxu0 %v2141
  %3350 = vmatprep.mubr.bf16.mxu0 %v722
  %3351 = vmatmul.mubr.bf16.gmra.mrb[0].mxu0 %v721
  %v3352 = vpop.f32.mrb[0].mxu0
  %v3353 = vadd.f32 %v3240, %v3352
  %v3354 = vpop.f32.mrb[0].mxu0
  %v3355 = vadd.f32 %v3242, %v3354
  %v3356 = vpop.f32.mrb[0].mxu0
  %v3357 = vadd.f32 %v3244, %v3356
  %v3358 = vpop.f32.mrb[0].mxu0
  %v3359 = vadd.f32 %v3246, %v3358
  %3360 = vmatprep.mubr.bf16.mxu0 %v728
  %3361 = vmatmul.mubr.bf16.gmra.mrb[0].mxu0 %v727
  %v3362 = vpop.f32.mrb[0].mxu0
  %v3363 = vadd.f32 %v3250, %v3362
  %v3364 = vpop.f32.mrb[0].mxu0
  %v3365 = vadd.f32 %v3252, %v3364
  %v3366 = vpop.f32.mrb[0].mxu0
  %v3367 = vadd.f32 %v3254, %v3366
  %v3368 = vpop.f32.mrb[0].mxu0
  %v3369 = vadd.f32 %v3256, %v3368
  %3370 = vmatprep.mubr.bf16.mxu0 %v734
  %3371 = vmatmul.mubr.bf16.gmra.mrb[0].mxu0 %v733
  %v3372 = vpop.f32.mrb[0].mxu0
  %v3373 = vadd.f32 %v3260, %v3372
  %v3374 = vpop.f32.mrb[0].mxu0
  %v3375 = vadd.f32 %v3262, %v3374
  %v3376 = vpop.f32.mrb[0].mxu0
  %v3377 = vadd.f32 %v3264, %v3376
  %v3378 = vpop.f32.mrb[0].mxu0
  %v3379 = vadd.f32 %v3266, %v3378
  %3380 = vmatprep.mubr.bf16.mxu0 %v740
  %3381 = vmatmul.mubr.bf16.gmra.mrb[0].mxu0 %v739
  %v3382 = vpop.f32.mrb[0].mxu0
  %v3383 = vadd.f32 %v3270, %v3382
  %v3384 = vpop.f32.mrb[0].mxu0
  %v3385 = vadd.f32 %v3272, %v3384
  %v3386 = vpop.f32.mrb[0].mxu0
  %v3387 = vadd.f32 %v3274, %v3386
  %v3388 = vpop.f32.mrb[0].mxu0
  %v3389 = vadd.f32 %v3276, %v3388
  %3390 = vmatprep.mubr.bf16.mxu0 %v746
  %3391 = vmatmul.mubr.bf16.gmra.mrb[0].mxu0 %v745
  %v3392 = vpop.f32.mrb[0].mxu0
  %v3393 = vadd.f32 %v3280, %v3392
  %v3394 = vpop.f32.mrb[0].mxu0
  %v3395 = vadd.f32 %v3282, %v3394
  %v3396 = vpop.f32.mrb[0].mxu0
  %v3397 = vadd.f32 %v3284, %v3396
  %v3398 = vpop.f32.mrb[0].mxu0
  %v3399 = vadd.f32 %v3286, %v3398
  %3400 = vmatprep.mubr.bf16.mxu0 %v752
  %3401 = vmatmul.mubr.bf16.gmra.mrb[0].mxu0 %v751
  %v3402 = vpop.f32.mrb[0].mxu0
  %v3403 = vadd.f32 %v3290, %v3402
  %v3404 = vpop.f32.mrb[0].mxu0
  %v3405 = vadd.f32 %v3292, %v3404
  %v3406 = vpop.f32.mrb[0].mxu0
  %v3407 = vadd.f32 %v3294, %v3406
  %v3408 = vpop.f32.mrb[0].mxu0
  %v3409 = vadd.f32 %v3296, %v3408
  %3410 = vmatprep.mubr.bf16.mxu0 %v758
  %3411 = vmatmul.mubr.bf16.gmra.mrb[0].mxu0 %v757
  %v3412 = vpop.f32.mrb[0].mxu0
  %v3413 = vadd.f32 %v3300, %v3412
  %v3414 = vpop.f32.mrb[0].mxu0
  %v3415 = vadd.f32 %v3302, %v3414
  %v3416 = vpop.f32.mrb[0].mxu0
  %v3417 = vadd.f32 %v3304, %v3416
  %v3418 = vpop.f32.mrb[0].mxu0
  %v3419 = vadd.f32 %v3306, %v3418
  %3420 = vmatprep.mubr.bf16.mxu0 %v764
  %3421 = vmatmul.mubr.bf16.gmra.mrb[0].mxu0 %v763
  %v3422 = vpop.f32.mrb[0].mxu0
  %v3423 = vadd.f32 %v3310, %v3422
  %v3424 = vpop.f32.mrb[0].mxu0
  %v3425 = vadd.f32 %v3312, %v3424
  %v3426 = vpop.f32.mrb[0].mxu0
  %v3427 = vadd.f32 %v3314, %v3426
  %v3428 = vpop.f32.mrb[0].mxu0
  %v3429 = vadd.f32 %v3316, %v3428
  %3430 = vdwg.mxu0
  %3431 = vmatprep.subr.bf16.mxu0 %v2148
  %3432 = vmatpush1.bf16.msra.mxu0 %v2147
  %3433 = vmatprep.subr.bf16.mxu0 %v2154
  %3434 = vmatpush1.bf16.msra.mxu0 %v2153
  %3435 = vmatprep.subr.bf16.mxu0 %v2160
  %3436 = vmatpush1.bf16.msra.mxu0 %v2159
  %3437 = vmatprep.subr.bf16.mxu0 %v2166
  %3438 = vmatpush1.bf16.msra.mxu0 %v2165
  %3439 = vmatprep.subr.bf16.mxu0 %v2172
  %3440 = vmatpush1.bf16.msra.mxu0 %v2171
  %3441 = vmatprep.subr.bf16.mxu0 %v2178
  %3442 = vmatpush1.bf16.msra.mxu0 %v2177
  %3443 = vmatprep.subr.bf16.mxu0 %v2184
  %3444 = vmatpush1.bf16.msra.mxu0 %v2183
  %3445 = vmatprep.subr.bf16.mxu0 %v2190
  %3446 = vmatpush1.bf16.msra.mxu0 %v2189
  %3447 = vmatprep.subr.bf16.mxu0 %v2196
  %3448 = vmatpush1.bf16.msra.mxu0 %v2195
  %3449 = vmatprep.subr.bf16.mxu0 %v2202
  %3450 = vmatpush1.bf16.msra.mxu0 %v2201
  %3451 = vmatprep.subr.bf16.mxu0 %v2208
  %3452 = vmatpush1.bf16.msra.mxu0 %v2207
  %3453 = vmatprep.subr.bf16.mxu0 %v2214
  %3454 = vmatpush1.bf16.msra.mxu0 %v2213
  %3455 = vmatprep.subr.bf16.mxu0 %v2220
  %3456 = vmatpush1.bf16.msra.mxu0 %v2219
  %3457 = vmatprep.subr.bf16.mxu0 %v2226
  %3458 = vmatpush1.bf16.msra.mxu0 %v2225
  %3459 = vmatprep.subr.bf16.mxu0 %v2232
  %3460 = vmatpush1.bf16.msra.mxu0 %v2231
  %3461 = vmatprep.subr.bf16.mxu0 %v2238
  %3462 = vmatpush1.bf16.msra.mxu0 %v2237
  %3463 = vmatprep.mubr.bf16.mxu0 %v724
  %3464 = vmatmul.mubr.bf16.gmra.mrb[0].mxu0 %v723
  %v3465 = vpop.f32.mrb[0].mxu0
  %v3466 = vadd.f32 %v3353, %v3465
  %v3467 = vpop.f32.mrb[0].mxu0
  %v3468 = vadd.f32 %v3355, %v3467
  %v3469 = vpop.f32.mrb[0].mxu0
  %v3470 = vadd.f32 %v3357, %v3469
  %v3471 = vpop.f32.mrb[0].mxu0
  %v3472 = vadd.f32 %v3359, %v3471
  %3473 = vmatprep.mubr.bf16.mxu0 %v730
  %3474 = vmatmul.mubr.bf16.gmra.mrb[0].mxu0 %v729
  %v3475 = vpop.f32.mrb[0].mxu0
  %v3476 = vadd.f32 %v3363, %v3475
  %v3477 = vpop.f32.mrb[0].mxu0
  %v3478 = vadd.f32 %v3365, %v3477
  %v3479 = vpop.f32.mrb[0].mxu0
  %v3480 = vadd.f32 %v3367, %v3479
  %v3481 = vpop.f32.mrb[0].mxu0
  %v3482 = vadd.f32 %v3369, %v3481
  %3483 = vmatprep.mubr.bf16.mxu0 %v736
  %3484 = vmatmul.mubr.bf16.gmra.mrb[0].mxu0 %v735
  %v3485 = vpop.f32.mrb[0].mxu0
  %v3486 = vadd.f32 %v3373, %v3485
  %v3487 = vpop.f32.mrb[0].mxu0
  %v3488 = vadd.f32 %v3375, %v3487
  %v3489 = vpop.f32.mrb[0].mxu0
  %v3490 = vadd.f32 %v3377, %v3489
  %v3491 = vpop.f32.mrb[0].mxu0
  %v3492 = vadd.f32 %v3379, %v3491
  %3493 = vmatprep.mubr.bf16.mxu0 %v742
  %3494 = vmatmul.mubr.bf16.gmra.mrb[0].mxu0 %v741
  %v3495 = vpop.f32.mrb[0].mxu0
  %v3496 = vadd.f32 %v3383, %v3495
  %v3497 = vpop.f32.mrb[0].mxu0
  %v3498 = vadd.f32 %v3385, %v3497
  %v3499 = vpop.f32.mrb[0].mxu0
  %v3500 = vadd.f32 %v3387, %v3499
  %v3501 = vpop.f32.mrb[0].mxu0
  %v3502 = vadd.f32 %v3389, %v3501
  %3503 = vmatprep.mubr.bf16.mxu0 %v748
  %3504 = vmatmul.mubr.bf16.gmra.mrb[0].mxu0 %v747
  %v3505 = vpop.f32.mrb[0].mxu0
  %v3506 = vadd.f32 %v3393, %v3505
  %v3507 = vpop.f32.mrb[0].mxu0
  %v3508 = vadd.f32 %v3395, %v3507
  %v3509 = vpop.f32.mrb[0].mxu0
  %v3510 = vadd.f32 %v3397, %v3509
  %v3511 = vpop.f32.mrb[0].mxu0
  %v3512 = vadd.f32 %v3399, %v3511
  %3513 = vmatprep.mubr.bf16.mxu0 %v754
  %3514 = vmatmul.mubr.bf16.gmra.mrb[0].mxu0 %v753
  %v3515 = vpop.f32.mrb[0].mxu0
  %v3516 = vadd.f32 %v3403, %v3515
  %v3517 = vpop.f32.mrb[0].mxu0
  %v3518 = vadd.f32 %v3405, %v3517
  %v3519 = vpop.f32.mrb[0].mxu0
  %v3520 = vadd.f32 %v3407, %v3519
  %v3521 = vpop.f32.mrb[0].mxu0
  %v3522 = vadd.f32 %v3409, %v3521
  %3523 = vmatprep.mubr.bf16.mxu0 %v760
  %3524 = vmatmul.mubr.bf16.gmra.mrb[0].mxu0 %v759
  %v3525 = vpop.f32.mrb[0].mxu0
  %v3526 = vadd.f32 %v3413, %v3525
  %v3527 = vpop.f32.mrb[0].mxu0
  %v3528 = vadd.f32 %v3415, %v3527
  %v3529 = vpop.f32.mrb[0].mxu0
  %v3530 = vadd.f32 %v3417, %v3529
  %v3531 = vpop.f32.mrb[0].mxu0
  %v3532 = vadd.f32 %v3419, %v3531
  %3533 = vmatprep.mubr.bf16.mxu0 %v766
  %3534 = vmatmul.mubr.bf16.gmra.mrb[0].mxu0 %v765
  %v3535 = vpop.f32.mrb[0].mxu0
  %v3536 = vadd.f32 %v3423, %v3535
  %v3537 = vpop.f32.mrb[0].mxu0
  %v3538 = vadd.f32 %v3425, %v3537
  %v3539 = vpop.f32.mrb[0].mxu0
  %v3540 = vadd.f32 %v3427, %v3539
  %v3541 = vpop.f32.mrb[0].mxu0
  %v3542 = vadd.f32 %v3429, %v3541
  %3543 = vdwg.mxu0
  %v3544 = vmax.f32 %v2788, 0.0
  %v3545 = vmax.f32 %v2790, 0.0
  %v3546 = vmax.f32 %v3127, 0.0
  %v3547 = vmax.f32 %v3129, 0.0
  %v3548 = vmax.f32 %v3466, 0.0
  %v3549 = vmax.f32 %v3468, 0.0
  %v3550 = vmax.f32 %v2792, 0.0
  %v3551 = vmax.f32 %v2794, 0.0
  %v3552 = vmax.f32 %v3131, 0.0
  %v3553 = vmax.f32 %v3133, 0.0
  %v3554 = vmax.f32 %v3470, 0.0
  %v3555 = vmax.f32 %v3472, 0.0
  %v3556 = vmax.f32 %v2798, 0.0
  %v3557 = vmax.f32 %v2800, 0.0
  %v3558 = vmax.f32 %v3137, 0.0
  %v3559 = vmax.f32 %v3139, 0.0
  %v3560 = vmax.f32 %v3476, 0.0
  %v3561 = vmax.f32 %v3478, 0.0
  %v3562 = vmax.f32 %v2802, 0.0
  %v3563 = vmax.f32 %v2804, 0.0
  %v3564 = vmax.f32 %v3141, 0.0
  %v3565 = vmax.f32 %v3143, 0.0
  %v3566 = vmax.f32 %v3480, 0.0
  %v3567 = vmax.f32 %v3482, 0.0
  %v3568 = vmax.f32 %v2808, 0.0
  %v3569 = vmax.f32 %v2810, 0.0
  %v3570 = vmax.f32 %v3147, 0.0
  %v3571 = vmax.f32 %v3149, 0.0
  %v3572 = vmax.f32 %v3486, 0.0
  %v3573 = vmax.f32 %v3488, 0.0
  %v3574 = vmax.f32 %v2812, 0.0
  %v3575 = vmax.f32 %v2814, 0.0
  %v3576 = vmax.f32 %v3151, 0.0
  %v3577 = vmax.f32 %v3153, 0.0
  %v3578 = vmax.f32 %v3490, 0.0
  %v3579 = vmax.f32 %v3492, 0.0
  %v3580 = vmax.f32 %v2818, 0.0
  %v3581 = vmax.f32 %v2820, 0.0
  %v3582 = vmax.f32 %v3157, 0.0
  %v3583 = vmax.f32 %v3159, 0.0
  %v3584 = vmax.f32 %v3496, 0.0
  %v3585 = vmax.f32 %v3498, 0.0
  %v3586 = vmax.f32 %v2822, 0.0
  %v3587 = vmax.f32 %v2824, 0.0
  %v3588 = vmax.f32 %v3161, 0.0
  %v3589 = vmax.f32 %v3163, 0.0
  %v3590 = vmax.f32 %v3500, 0.0
  %v3591 = vmax.f32 %v3502, 0.0
  %v3592 = vmax.f32 %v2828, 0.0
  %v3593 = vmax.f32 %v2830, 0.0
  %v3594 = vmax.f32 %v3167, 0.0
  %v3595 = vmax.f32 %v3169, 0.0
  %v3596 = vmax.f32 %v3506, 0.0
  %v3597 = vmax.f32 %v3508, 0.0
  %v3598 = vmax.f32 %v2832, 0.0
  %v3599 = vmax.f32 %v2834, 0.0
  %v3600 = vmax.f32 %v3171, 0.0
  %v3601 = vmax.f32 %v3173, 0.0
  %v3602 = vmax.f32 %v3510, 0.0
  %v3603 = vmax.f32 %v3512, 0.0
  %v3604 = vmax.f32 %v2838, 0.0
  %v3605 = vmax.f32 %v2840, 0.0
  %v3606 = vmax.f32 %v3177, 0.0
  %v3607 = vmax.f32 %v3179, 0.0
  %v3608 = vmax.f32 %v3516, 0.0
  %v3609 = vmax.f32 %v3518, 0.0
  %v3610 = vmax.f32 %v2842, 0.0
  %v3611 = vmax.f32 %v2844, 0.0
  %v3612 = vmax.f32 %v3181, 0.0
  %v3613 = vmax.f32 %v3183, 0.0
  %v3614 = vmax.f32 %v3520, 0.0
  %v3615 = vmax.f32 %v3522, 0.0
  %v3616 = vmax.f32 %v2848, 0.0
  %v3617 = vmax.f32 %v2850, 0.0
  %v3618 = vmax.f32 %v3187, 0.0
  %v3619 = vmax.f32 %v3189, 0.0
  %v3620 = vmax.f32 %v3526, 0.0
  %v3621 = vmax.f32 %v3528, 0.0
  %v3622 = vmax.f32 %v2852, 0.0
  %v3623 = vmax.f32 %v2854, 0.0
  %v3624 = vmax.f32 %v3191, 0.0
  %v3625 = vmax.f32 %v3193, 0.0
  %v3626 = vmax.f32 %v3530, 0.0
  %v3627 = vmax.f32 %v3532, 0.0
  %v3628 = vmax.f32 %v2858, 0.0
  %v3629 = vmax.f32 %v2860, 0.0
  %v3630 = vmax.f32 %v3197, 0.0
  %v3631 = vmax.f32 %v3199, 0.0
  %v3632 = vmax.f32 %v3536, 0.0
  %v3633 = vmax.f32 %v3538, 0.0
  %v3634 = vmax.f32 %v2862, 0.0
  %v3635 = vmax.f32 %v2864, 0.0
  %v3636 = vmax.f32 %v3201, 0.0
  %v3637 = vmax.f32 %v3203, 0.0
  %v3638 = vmax.f32 %v3540, 0.0
  %v3639 = vmax.f32 %v3542, 0.0
  %v3640 = vpack.c.bf16 %v3550, %v3544
  %v3641 = vpack.c.bf16 %v3551, %v3545
  %v3642 = vpack.c.bf16 %v3552, %v3546
  %v3643 = vpack.c.bf16 %v3553, %v3547
  %v3644 = vpack.c.bf16 %v3554, %v3548
  %v3645 = vpack.c.bf16 %v3555, %v3549
  %v3646 = vpack.c.bf16 %v3562, %v3556
  %v3647 = vpack.c.bf16 %v3563, %v3557
  %v3648 = vpack.c.bf16 %v3564, %v3558
  %v3649 = vpack.c.bf16 %v3565, %v3559
  %v3650 = vpack.c.bf16 %v3566, %v3560
  %v3651 = vpack.c.bf16 %v3567, %v3561
  %v3652 = vpack.c.bf16 %v3574, %v3568
  %v3653 = vpack.c.bf16 %v3575, %v3569
  %v3654 = vpack.c.bf16 %v3576, %v3570
  %v3655 = vpack.c.bf16 %v3577, %v3571
  %v3656 = vpack.c.bf16 %v3578, %v3572
  %v3657 = vpack.c.bf16 %v3579, %v3573
  %v3658 = vpack.c.bf16 %v3586, %v3580
  %v3659 = vpack.c.bf16 %v3587, %v3581
  %v3660 = vpack.c.bf16 %v3588, %v3582
  %v3661 = vpack.c.bf16 %v3589, %v3583
  %v3662 = vpack.c.bf16 %v3590, %v3584
  %v3663 = vpack.c.bf16 %v3591, %v3585
  %v3664 = vpack.c.bf16 %v3598, %v3592
  %v3665 = vpack.c.bf16 %v3599, %v3593
  %v3666 = vpack.c.bf16 %v3600, %v3594
  %v3667 = vpack.c.bf16 %v3601, %v3595
  %v3668 = vpack.c.bf16 %v3602, %v3596
  %v3669 = vpack.c.bf16 %v3603, %v3597
  %v3670 = vpack.c.bf16 %v3610, %v3604
  %v3671 = vpack.c.bf16 %v3611, %v3605
  %v3672 = vpack.c.bf16 %v3612, %v3606
  %v3673 = vpack.c.bf16 %v3613, %v3607
  %v3674 = vpack.c.bf16 %v3614, %v3608
  %v3675 = vpack.c.bf16 %v3615, %v3609
  %v3676 = vpack.c.bf16 %v3622, %v3616
  %v3677 = vpack.c.bf16 %v3623, %v3617
  %v3678 = vpack.c.bf16 %v3624, %v3618
  %v3679 = vpack.c.bf16 %v3625, %v3619
  %v3680 = vpack.c.bf16 %v3626, %v3620
  %v3681 = vpack.c.bf16 %v3627, %v3621
  %v3682 = vpack.c.bf16 %v3634, %v3628
  %v3683 = vpack.c.bf16 %v3635, %v3629
  %v3684 = vpack.c.bf16 %v3636, %v3630
  %v3685 = vpack.c.bf16 %v3637, %v3631
  %v3686 = vpack.c.bf16 %v3638, %v3632
  %v3687 = vpack.c.bf16 %v3639, %v3633
  %v3688 = vld [vmem:[%s5] sm:$0xf]
  %v3689 = vld [vmem:[%s5 + $0x4] sm:$0xf]
  %v3690 = vld [vmem:[%s5 + $0x8] sm:$0xf]
  %v3691 = vld [vmem:[%s5 + $0xc] sm:$0xf]
  %v3692 = vld [vmem:[%s5 + $0x10] sm:$0xf]
  %v3693 = vld [vmem:[%s5 + $0x14] sm:$0xf]
  %v3694 = vld [vmem:[%s5 + $0x18] sm:$0xf]
  %v3695 = vld [vmem:[%s5 + $0x1c] sm:$0xf]
  %v3696 = vld [vmem:[%s5 + $0x20] sm:$0xf]
  %v3697 = vld [vmem:[%s5 + $0x24] sm:$0xf]
  %v3698 = vld [vmem:[%s5 + $0x28] sm:$0xf]
  %v3699 = vld [vmem:[%s5 + $0x2c] sm:$0xf]
  %v3700 = vld [vmem:[%s5 + $0x30] sm:$0xf]
  %v3701 = vld [vmem:[%s5 + $0x34] sm:$0xf]
  %v3702 = vld [vmem:[%s5 + $0x38] sm:$0xf]
  %v3703 = vld [vmem:[%s5 + $0x3c] sm:$0xf]
  %v3704 = vld [vmem:[%s5 + $0x40] sm:$0xf]
  %v3705 = vld [vmem:[%s5 + $0x44] sm:$0xf]
  %v3706 = vld [vmem:[%s5 + $0x48] sm:$0xf]
  %v3707 = vld [vmem:[%s5 + $0x4c] sm:$0xf]
  %v3708 = vld [vmem:[%s5 + $0x50] sm:$0xf]
  %v3709 = vld [vmem:[%s5 + $0x54] sm:$0xf]
  %v3710 = vld [vmem:[%s5 + $0x58] sm:$0xf]
  %v3711 = vld [vmem:[%s5 + $0x5c] sm:$0xf]
  %v3712 = vld [vmem:[%s5 + $0x60] sm:$0xf]
  %v3713 = vld [vmem:[%s5 + $0x64] sm:$0xf]
  %v3714 = vld [vmem:[%s5 + $0x68] sm:$0xf]
  %v3715 = vld [vmem:[%s5 + $0x6c] sm:$0xf]
  %v3716 = vld [vmem:[%s5 + $0x70] sm:$0xf]
  %v3717 = vld [vmem:[%s5 + $0x74] sm:$0xf]
  %v3718 = vld [vmem:[%s5 + $0x78] sm:$0xf]
  %v3719 = vld [vmem:[%s5 + $0x7c] sm:$0xf]
  %v3720 = vld [vmem:[%s5 + $0x80] sm:$0xf]
  %v3721 = vld [vmem:[%s5 + $0x84] sm:$0xf]
  %v3722 = vld [vmem:[%s5 + $0x88] sm:$0xf]
  %v3723 = vld [vmem:[%s5 + $0x8c] sm:$0xf]
  %v3724 = vld [vmem:[%s5 + $0x90] sm:$0xf]
  %v3725 = vld [vmem:[%s5 + $0x94] sm:$0xf]
  %v3726 = vld [vmem:[%s5 + $0x98] sm:$0xf]
  %v3727 = vld [vmem:[%s5 + $0x9c] sm:$0xf]
  %v3728 = vld [vmem:[%s5 + $0xa0] sm:$0xf]
  %v3729 = vld [vmem:[%s5 + $0xa4] sm:$0xf]
  %v3730 = vld [vmem:[%s5 + $0xa8] sm:$0xf]
  %v3731 = vld [vmem:[%s5 + $0xac] sm:$0xf]
  %v3732 = vld [vmem:[%s5 + $0xb0] sm:$0xf]
  %v3733 = vld [vmem:[%s5 + $0xb4] sm:$0xf]
  %v3734 = vld [vmem:[%s5 + $0xb8] sm:$0xf]
  %v3735 = vld [vmem:[%s5 + $0xbc] sm:$0xf]
  %v3736 = vld [vmem:[%s5 + $0xc0] sm:$0xf]
  %v3737 = vld [vmem:[%s5 + $0xc4] sm:$0xf]
  %v3738 = vld [vmem:[%s5 + $0xc8] sm:$0xf]
  %v3739 = vld [vmem:[%s5 + $0xcc] sm:$0xf]
  %v3740 = vld [vmem:[%s5 + $0xd0] sm:$0xf]
  %v3741 = vld [vmem:[%s5 + $0xd4] sm:$0xf]
  %v3742 = vld [vmem:[%s5 + $0xd8] sm:$0xf]
  %v3743 = vld [vmem:[%s5 + $0xdc] sm:$0xf]
  %v3744 = vld [vmem:[%s5 + $0xe0] sm:$0xf]
  %v3745 = vld [vmem:[%s5 + $0xe4] sm:$0xf]
  %v3746 = vld [vmem:[%s5 + $0xe8] sm:$0xf]
  %v3747 = vld [vmem:[%s5 + $0xec] sm:$0xf]
  %v3748 = vld [vmem:[%s5 + $0xf0] sm:$0xf]
  %v3749 = vld [vmem:[%s5 + $0xf4] sm:$0xf]
  %v3750 = vld [vmem:[%s5 + $0xf8] sm:$0xf]
  %v3751 = vld [vmem:[%s5 + $0xfc] sm:$0xf]
  %v3752 = vld [vmem:[%s5 + $0x100] sm:$0xf]
  %v3753 = vld [vmem:[%s5 + $0x104] sm:$0xf]
  %v3754 = vld [vmem:[%s5 + $0x108] sm:$0xf]
  %v3755 = vld [vmem:[%s5 + $0x10c] sm:$0xf]
  %v3756 = vld [vmem:[%s5 + $0x110] sm:$0xf]
  %v3757 = vld [vmem:[%s5 + $0x114] sm:$0xf]
  %v3758 = vld [vmem:[%s5 + $0x118] sm:$0xf]
  %v3759 = vld [vmem:[%s5 + $0x11c] sm:$0xf]
  %v3760 = vld [vmem:[%s5 + $0x120] sm:$0xf]
  %v3761 = vld [vmem:[%s5 + $0x124] sm:$0xf]
  %v3762 = vld [vmem:[%s5 + $0x128] sm:$0xf]
  %v3763 = vld [vmem:[%s5 + $0x12c] sm:$0xf]
  %v3764 = vld [vmem:[%s5 + $0x130] sm:$0xf]
  %v3765 = vld [vmem:[%s5 + $0x134] sm:$0xf]
  %v3766 = vld [vmem:[%s5 + $0x138] sm:$0xf]
  %v3767 = vld [vmem:[%s5 + $0x13c] sm:$0xf]
  %v3768 = vld [vmem:[%s5 + $0x140] sm:$0xf]
  %v3769 = vld [vmem:[%s5 + $0x144] sm:$0xf]
  %v3770 = vld [vmem:[%s5 + $0x148] sm:$0xf]
  %v3771 = vld [vmem:[%s5 + $0x14c] sm:$0xf]
  %v3772 = vld [vmem:[%s5 + $0x150] sm:$0xf]
  %v3773 = vld [vmem:[%s5 + $0x154] sm:$0xf]
  %v3774 = vld [vmem:[%s5 + $0x158] sm:$0xf]
  %v3775 = vld [vmem:[%s5 + $0x15c] sm:$0xf]
  %v3776 = vld [vmem:[%s5 + $0x160] sm:$0xf]
  %v3777 = vld [vmem:[%s5 + $0x164] sm:$0xf]
  %v3778 = vld [vmem:[%s5 + $0x168] sm:$0xf]
  %v3779 = vld [vmem:[%s5 + $0x16c] sm:$0xf]
  %v3780 = vld [vmem:[%s5 + $0x170] sm:$0xf]
  %v3781 = vld [vmem:[%s5 + $0x174] sm:$0xf]
  %v3782 = vld [vmem:[%s5 + $0x178] sm:$0xf]
  %v3783 = vld [vmem:[%s5 + $0x17c] sm:$0xf]
  %v3784 = vld [vmem:[%s6] sm:$0x1]
  %v3786 = vlaneseq
  %v3787 = vshrl.u32 %v3786, 7
  %v3788 = vsub.s32 0, %v3787
  %v3789 = vrot.slane %v3784, %v3788
  %v3887 = vunpack.c.l.b16 %v3688
  %v3888 = vunpack.c.l.b16 %v3689
  %v3889 = vunpack.c.l.b16 %v3690
  %v3890 = vunpack.c.l.b16 %v3691
  %v3891 = vunpack.c.l.b16 %v3692
  %v3892 = vunpack.c.l.b16 %v3693
  %v3893 = vunpack.c.l.b16 %v3694
  %v3894 = vunpack.c.l.b16 %v3695
  %v3895 = vunpack.c.l.b16 %v3696
  %v3896 = vunpack.c.l.b16 %v3697
  %v3897 = vunpack.c.l.b16 %v3698
  %v3898 = vunpack.c.l.b16 %v3699
  %v3899 = vunpack.c.l.b16 %v3700
  %v3900 = vunpack.c.l.b16 %v3701
  %v3901 = vunpack.c.l.b16 %v3702
  %v3902 = vunpack.c.l.b16 %v3703
  %v3903 = vunpack.c.l.b16 %v3704
  %v3904 = vunpack.c.l.b16 %v3705
  %v3905 = vunpack.c.l.b16 %v3706
  %v3906 = vunpack.c.l.b16 %v3707
  %v3907 = vunpack.c.l.b16 %v3708
  %v3908 = vunpack.c.l.b16 %v3709
  %v3909 = vunpack.c.l.b16 %v3710
  %v3910 = vunpack.c.l.b16 %v3711
  %v3911 = vunpack.c.l.b16 %v3712
  %v3912 = vunpack.c.l.b16 %v3713
  %v3913 = vunpack.c.l.b16 %v3714
  %v3914 = vunpack.c.l.b16 %v3715
  %v3915 = vunpack.c.l.b16 %v3716
  %v3916 = vunpack.c.l.b16 %v3717
  %v3917 = vunpack.c.l.b16 %v3718
  %v3918 = vunpack.c.l.b16 %v3719
  %v3919 = vunpack.c.l.b16 %v3720
  %v3920 = vunpack.c.l.b16 %v3721
  %v3921 = vunpack.c.l.b16 %v3722
  %v3922 = vunpack.c.l.b16 %v3723
  %v3923 = vunpack.c.l.b16 %v3724
  %v3924 = vunpack.c.l.b16 %v3725
  %v3925 = vunpack.c.l.b16 %v3726
  %v3926 = vunpack.c.l.b16 %v3727
  %v3927 = vunpack.c.l.b16 %v3728
  %v3928 = vunpack.c.l.b16 %v3729
  %v3929 = vunpack.c.l.b16 %v3730
  %v3930 = vunpack.c.l.b16 %v3731
  %v3931 = vunpack.c.l.b16 %v3732
  %v3932 = vunpack.c.l.b16 %v3733
  %v3933 = vunpack.c.l.b16 %v3734
  %v3934 = vunpack.c.l.b16 %v3735
  %v3935 = vunpack.c.l.b16 %v3736
  %v3936 = vunpack.c.l.b16 %v3737
  %v3937 = vunpack.c.l.b16 %v3738
  %v3938 = vunpack.c.l.b16 %v3739
  %v3939 = vunpack.c.l.b16 %v3740
  %v3940 = vunpack.c.l.b16 %v3741
  %v3941 = vunpack.c.l.b16 %v3742
  %v3942 = vunpack.c.l.b16 %v3743
  %v3943 = vunpack.c.l.b16 %v3744
  %v3944 = vunpack.c.l.b16 %v3745
  %v3945 = vunpack.c.l.b16 %v3746
  %v3946 = vunpack.c.l.b16 %v3747
  %v3947 = vunpack.c.l.b16 %v3748
  %v3948 = vunpack.c.l.b16 %v3749
  %v3949 = vunpack.c.l.b16 %v3750
  %v3950 = vunpack.c.l.b16 %v3751
  %v3951 = vunpack.c.l.b16 %v3752
  %v3952 = vunpack.c.l.b16 %v3753
  %v3953 = vunpack.c.l.b16 %v3754
  %v3954 = vunpack.c.l.b16 %v3755
  %v3955 = vunpack.c.l.b16 %v3756
  %v3956 = vunpack.c.l.b16 %v3757
  %v3957 = vunpack.c.l.b16 %v3758
  %v3958 = vunpack.c.l.b16 %v3759
  %v3959 = vunpack.c.l.b16 %v3760
  %v3960 = vunpack.c.l.b16 %v3761
  %v3961 = vunpack.c.l.b16 %v3762
  %v3962 = vunpack.c.l.b16 %v3763
  %v3963 = vunpack.c.l.b16 %v3764
  %v3964 = vunpack.c.l.b16 %v3765
  %v3965 = vunpack.c.l.b16 %v3766
  %v3966 = vunpack.c.l.b16 %v3767
  %v3967 = vunpack.c.l.b16 %v3768
  %v3968 = vunpack.c.l.b16 %v3769
  %v3969 = vunpack.c.l.b16 %v3770
  %v3970 = vunpack.c.l.b16 %v3771
  %v3971 = vunpack.c.l.b16 %v3772
  %v3972 = vunpack.c.l.b16 %v3773
  %v3973 = vunpack.c.l.b16 %v3774
  %v3974 = vunpack.c.l.b16 %v3775
  %v3975 = vunpack.c.l.b16 %v3776
  %v3976 = vunpack.c.l.b16 %v3777
  %v3977 = vunpack.c.l.b16 %v3778
  %v3978 = vunpack.c.l.b16 %v3779
  %v3979 = vunpack.c.l.b16 %v3780
  %v3980 = vunpack.c.l.b16 %v3781
  %v3981 = vunpack.c.l.b16 %v3782
  %v3982 = vunpack.c.l.b16 %v3783
  %v3983 = vpack.c.b16 %v3888, %v3887
  %v3984 = vpack.c.b16 %v3890, %v3889
  %v3985 = vpack.c.b16 %v3892, %v3891
  %v3986 = vpack.c.b16 %v3894, %v3893
  %v3987 = vpack.c.b16 %v3896, %v3895
  %v3988 = vpack.c.b16 %v3898, %v3897
  %v3989 = vpack.c.b16 %v3900, %v3899
  %v3990 = vpack.c.b16 %v3902, %v3901
  %v3991 = vpack.c.b16 %v3904, %v3903
  %v3992 = vpack.c.b16 %v3906, %v3905
  %v3993 = vpack.c.b16 %v3908, %v3907
  %v3994 = vpack.c.b16 %v3910, %v3909
  %v3995 = vpack.c.b16 %v3912, %v3911
  %v3996 = vpack.c.b16 %v3914, %v3913
  %v3997 = vpack.c.b16 %v3916, %v3915
  %v3998 = vpack.c.b16 %v3918, %v3917
  %v3999 = vpack.c.b16 %v3920, %v3919
  %v4000 = vpack.c.b16 %v3922, %v3921
  %v4001 = vpack.c.b16 %v3924, %v3923
  %v4002 = vpack.c.b16 %v3926, %v3925
  %v4003 = vpack.c.b16 %v3928, %v3927
  %v4004 = vpack.c.b16 %v3930, %v3929
  %v4005 = vpack.c.b16 %v3932, %v3931
  %v4006 = vpack.c.b16 %v3934, %v3933
  %v4007 = vpack.c.b16 %v3936, %v3935
  %v4008 = vpack.c.b16 %v3938, %v3937
  %v4009 = vpack.c.b16 %v3940, %v3939
  %v4010 = vpack.c.b16 %v3942, %v3941
  %v4011 = vpack.c.b16 %v3944, %v3943
  %v4012 = vpack.c.b16 %v3946, %v3945
  %v4013 = vpack.c.b16 %v3948, %v3947
  %v4014 = vpack.c.b16 %v3950, %v3949
  %v4015 = vpack.c.b16 %v3952, %v3951
  %v4016 = vpack.c.b16 %v3954, %v3953
  %v4017 = vpack.c.b16 %v3956, %v3955
  %v4018 = vpack.c.b16 %v3958, %v3957
  %v4019 = vpack.c.b16 %v3960, %v3959
  %v4020 = vpack.c.b16 %v3962, %v3961
  %v4021 = vpack.c.b16 %v3964, %v3963
  %v4022 = vpack.c.b16 %v3966, %v3965
  %v4023 = vpack.c.b16 %v3968, %v3967
  %v4024 = vpack.c.b16 %v3970, %v3969
  %v4025 = vpack.c.b16 %v3972, %v3971
  %v4026 = vpack.c.b16 %v3974, %v3973
  %v4027 = vpack.c.b16 %v3976, %v3975
  %v4028 = vpack.c.b16 %v3978, %v3977
  %v4029 = vpack.c.b16 %v3980, %v3979
  %v4030 = vpack.c.b16 %v3982, %v3981
  %4079 = vmatprep.subr.bf16.mxu0 0
  %4080 = vmatpush1.bf16.msra.mxu0 %v3983
  %4081 = vmatprep.subr.bf16.mxu0 0
  %4082 = vmatpush1.bf16.msra.mxu0 %v3984
  %4083 = vmatprep.subr.bf16.mxu0 0
  %4084 = vmatpush1.bf16.msra.mxu0 %v3985
  %4085 = vmatprep.subr.bf16.mxu0 0
  %4086 = vmatpush1.bf16.msra.mxu0 %v3986
  %4087 = vmatprep.subr.bf16.mxu0 0
  %4088 = vmatpush1.bf16.msra.mxu0 %v3987
  %4089 = vmatprep.subr.bf16.mxu0 0
  %4090 = vmatpush1.bf16.msra.mxu0 %v3988
  %4091 = vmatprep.subr.bf16.mxu0 0
  %4092 = vmatpush1.bf16.msra.mxu0 %v3989
  %4093 = vmatprep.subr.bf16.mxu0 0
  %4094 = vmatpush1.bf16.msra.mxu0 %v3990
  %4095 = vmatprep.subr.bf16.mxu0 0
  %4096 = vmatpush1.bf16.msra.mxu0 %v3991
  %4097 = vmatprep.subr.bf16.mxu0 0
  %4098 = vmatpush1.bf16.msra.mxu0 %v3992
  %4099 = vmatprep.subr.bf16.mxu0 0
  %4100 = vmatpush1.bf16.msra.mxu0 %v3993
  %4101 = vmatprep.subr.bf16.mxu0 0
  %4102 = vmatpush1.bf16.msra.mxu0 %v3994
  %4103 = vmatprep.subr.bf16.mxu0 0
  %4104 = vmatpush1.bf16.msra.mxu0 %v3995
  %4105 = vmatprep.subr.bf16.mxu0 0
  %4106 = vmatpush1.bf16.msra.mxu0 %v3996
  %4107 = vmatprep.subr.bf16.mxu0 0
  %4108 = vmatpush1.bf16.msra.mxu0 %v3997
  %4109 = vmatprep.subr.bf16.mxu0 0
  %4110 = vmatpush1.bf16.msra.mxu0 %v3998
  %4111 = vmatprep.mubr.bf16.mxu0 %v3641
  %4112 = vmatmul.mubr.bf16.gmra.mrb[0].mxu0 %v3640
  %v4113 = vpop.f32.mrb[0].mxu0
  %v4114 = vadd.f32 %v3789, %v4113
  %v4115 = vpop.f32.mrb[0].mxu0
  %v4116 = vpop.f32.mrb[0].mxu0
  %v4117 = vadd.f32 %v3789, %v4116
  %v4118 = vpop.f32.mrb[0].mxu0
  %4119 = vmatprep.mubr.bf16.mxu0 %v3647
  %4120 = vmatmul.mubr.bf16.gmra.mrb[0].mxu0 %v3646
  %v4121 = vpop.f32.mrb[0].mxu0
  %v4122 = vadd.f32 %v3789, %v4121
  %v4123 = vpop.f32.mrb[0].mxu0
  %v4124 = vpop.f32.mrb[0].mxu0
  %v4125 = vadd.f32 %v3789, %v4124
  %v4126 = vpop.f32.mrb[0].mxu0
  %4127 = vmatprep.mubr.bf16.mxu0 %v3653
  %4128 = vmatmul.mubr.bf16.gmra.mrb[0].mxu0 %v3652
  %v4129 = vpop.f32.mrb[0].mxu0
  %v4130 = vadd.f32 %v3789, %v4129
  %v4131 = vpop.f32.mrb[0].mxu0
  %v4132 = vpop.f32.mrb[0].mxu0
  %v4133 = vadd.f32 %v3789, %v4132
  %v4134 = vpop.f32.mrb[0].mxu0
  %4135 = vmatprep.mubr.bf16.mxu0 %v3659
  %4136 = vmatmul.mubr.bf16.gmra.mrb[0].mxu0 %v3658
  %v4137 = vpop.f32.mrb[0].mxu0
  %v4138 = vadd.f32 %v3789, %v4137
  %v4139 = vpop.f32.mrb[0].mxu0
  %v4140 = vpop.f32.mrb[0].mxu0
  %v4141 = vadd.f32 %v3789, %v4140
  %v4142 = vpop.f32.mrb[0].mxu0
  %4143 = vmatprep.mubr.bf16.mxu0 %v3665
  %4144 = vmatmul.mubr.bf16.gmra.mrb[0].mxu0 %v3664
  %v4145 = vpop.f32.mrb[0].mxu0
  %v4146 = vadd.f32 %v3789, %v4145
  %v4147 = vpop.f32.mrb[0].mxu0
  %v4148 = vpop.f32.mrb[0].mxu0
  %v4149 = vadd.f32 %v3789, %v4148
  %v4150 = vpop.f32.mrb[0].mxu0
  %4151 = vmatprep.mubr.bf16.mxu0 %v3671
  %4152 = vmatmul.mubr.bf16.gmra.mrb[0].mxu0 %v3670
  %v4153 = vpop.f32.mrb[0].mxu0
  %v4154 = vadd.f32 %v3789, %v4153
  %v4155 = vpop.f32.mrb[0].mxu0
  %v4156 = vpop.f32.mrb[0].mxu0
  %v4157 = vadd.f32 %v3789, %v4156
  %v4158 = vpop.f32.mrb[0].mxu0
  %4159 = vmatprep.mubr.bf16.mxu0 %v3677
  %4160 = vmatmul.mubr.bf16.gmra.mrb[0].mxu0 %v3676
  %v4161 = vpop.f32.mrb[0].mxu0
  %v4162 = vadd.f32 %v3789, %v4161
  %v4163 = vpop.f32.mrb[0].mxu0
  %v4164 = vpop.f32.mrb[0].mxu0
  %v4165 = vadd.f32 %v3789, %v4164
  %v4166 = vpop.f32.mrb[0].mxu0
  %4167 = vmatprep.mubr.bf16.mxu0 %v3683
  %4168 = vmatmul.mubr.bf16.gmra.mrb[0].mxu0 %v3682
  %v4169 = vpop.f32.mrb[0].mxu0
  %v4170 = vadd.f32 %v3789, %v4169
  %v4171 = vpop.f32.mrb[0].mxu0
  %v4172 = vpop.f32.mrb[0].mxu0
  %v4173 = vadd.f32 %v3789, %v4172
  %v4174 = vpop.f32.mrb[0].mxu0
  %4175 = vdwg.mxu0
  %4176 = vmatprep.subr.bf16.mxu0 0
  %4177 = vmatpush1.bf16.msra.mxu0 %v3999
  %4178 = vmatprep.subr.bf16.mxu0 0
  %4179 = vmatpush1.bf16.msra.mxu0 %v4000
  %4180 = vmatprep.subr.bf16.mxu0 0
  %4181 = vmatpush1.bf16.msra.mxu0 %v4001
  %4182 = vmatprep.subr.bf16.mxu0 0
  %4183 = vmatpush1.bf16.msra.mxu0 %v4002
  %4184 = vmatprep.subr.bf16.mxu0 0
  %4185 = vmatpush1.bf16.msra.mxu0 %v4003
  %4186 = vmatprep.subr.bf16.mxu0 0
  %4187 = vmatpush1.bf16.msra.mxu0 %v4004
  %4188 = vmatprep.subr.bf16.mxu0 0
  %4189 = vmatpush1.bf16.msra.mxu0 %v4005
  %4190 = vmatprep.subr.bf16.mxu0 0
  %4191 = vmatpush1.bf16.msra.mxu0 %v4006
  %4192 = vmatprep.subr.bf16.mxu0 0
  %4193 = vmatpush1.bf16.msra.mxu0 %v4007
  %4194 = vmatprep.subr.bf16.mxu0 0
  %4195 = vmatpush1.bf16.msra.mxu0 %v4008
  %4196 = vmatprep.subr.bf16.mxu0 0
  %4197 = vmatpush1.bf16.msra.mxu0 %v4009
  %4198 = vmatprep.subr.bf16.mxu0 0
  %4199 = vmatpush1.bf16.msra.mxu0 %v4010
  %4200 = vmatprep.subr.bf16.mxu0 0
  %4201 = vmatpush1.bf16.msra.mxu0 %v4011
  %4202 = vmatprep.subr.bf16.mxu0 0
  %4203 = vmatpush1.bf16.msra.mxu0 %v4012
  %4204 = vmatprep.subr.bf16.mxu0 0
  %4205 = vmatpush1.bf16.msra.mxu0 %v4013
  %4206 = vmatprep.subr.bf16.mxu0 0
  %4207 = vmatpush1.bf16.msra.mxu0 %v4014
  %4208 = vmatprep.mubr.bf16.mxu0 %v3643
  %4209 = vmatmul.mubr.bf16.gmra.mrb[0].mxu0 %v3642
  %v4210 = vpop.f32.mrb[0].mxu0
  %v4211 = vadd.f32 %v4114, %v4210
  %v4212 = vpop.f32.mrb[0].mxu0
  %v4213 = vpop.f32.mrb[0].mxu0
  %v4214 = vadd.f32 %v4117, %v4213
  %v4215 = vpop.f32.mrb[0].mxu0
  %4216 = vmatprep.mubr.bf16.mxu0 %v3649
  %4217 = vmatmul.mubr.bf16.gmra.mrb[0].mxu0 %v3648
  %v4218 = vpop.f32.mrb[0].mxu0
  %v4219 = vadd.f32 %v4122, %v4218
  %v4220 = vpop.f32.mrb[0].mxu0
  %v4221 = vpop.f32.mrb[0].mxu0
  %v4222 = vadd.f32 %v4125, %v4221
  %v4223 = vpop.f32.mrb[0].mxu0
  %4224 = vmatprep.mubr.bf16.mxu0 %v3655
  %4225 = vmatmul.mubr.bf16.gmra.mrb[0].mxu0 %v3654
  %v4226 = vpop.f32.mrb[0].mxu0
  %v4227 = vadd.f32 %v4130, %v4226
  %v4228 = vpop.f32.mrb[0].mxu0
  %v4229 = vpop.f32.mrb[0].mxu0
  %v4230 = vadd.f32 %v4133, %v4229
  %v4231 = vpop.f32.mrb[0].mxu0
  %4232 = vmatprep.mubr.bf16.mxu0 %v3661
  %4233 = vmatmul.mubr.bf16.gmra.mrb[0].mxu0 %v3660
  %v4234 = vpop.f32.mrb[0].mxu0
  %v4235 = vadd.f32 %v4138, %v4234
  %v4236 = vpop.f32.mrb[0].mxu0
  %v4237 = vpop.f32.mrb[0].mxu0
  %v4238 = vadd.f32 %v4141, %v4237
  %v4239 = vpop.f32.mrb[0].mxu0
  %4240 = vmatprep.mubr.bf16.mxu0 %v3667
  %4241 = vmatmul.mubr.bf16.gmra.mrb[0].mxu0 %v3666
  %v4242 = vpop.f32.mrb[0].mxu0
  %v4243 = vadd.f32 %v4146, %v4242
  %v4244 = vpop.f32.mrb[0].mxu0
  %v4245 = vpop.f32.mrb[0].mxu0
  %v4246 = vadd.f32 %v4149, %v4245
  %v4247 = vpop.f32.mrb[0].mxu0
  %4248 = vmatprep.mubr.bf16.mxu0 %v3673
  %4249 = vmatmul.mubr.bf16.gmra.mrb[0].mxu0 %v3672
  %v4250 = vpop.f32.mrb[0].mxu0
  %v4251 = vadd.f32 %v4154, %v4250
  %v4252 = vpop.f32.mrb[0].mxu0
  %v4253 = vpop.f32.mrb[0].mxu0
  %v4254 = vadd.f32 %v4157, %v4253
  %v4255 = vpop.f32.mrb[0].mxu0
  %4256 = vmatprep.mubr.bf16.mxu0 %v3679
  %4257 = vmatmul.mubr.bf16.gmra.mrb[0].mxu0 %v3678
  %v4258 = vpop.f32.mrb[0].mxu0
  %v4259 = vadd.f32 %v4162, %v4258
  %v4260 = vpop.f32.mrb[0].mxu0
  %v4261 = vpop.f32.mrb[0].mxu0
  %v4262 = vadd.f32 %v4165, %v4261
  %v4263 = vpop.f32.mrb[0].mxu0
  %4264 = vmatprep.mubr.bf16.mxu0 %v3685
  %4265 = vmatmul.mubr.bf16.gmra.mrb[0].mxu0 %v3684
  %v4266 = vpop.f32.mrb[0].mxu0
  %v4267 = vadd.f32 %v4170, %v4266
  %v4268 = vpop.f32.mrb[0].mxu0
  %v4269 = vpop.f32.mrb[0].mxu0
  %v4270 = vadd.f32 %v4173, %v4269
  %v4271 = vpop.f32.mrb[0].mxu0
  %4272 = vdwg.mxu0
  %4273 = vmatprep.subr.bf16.mxu0 0
  %4274 = vmatpush1.bf16.msra.mxu0 %v4015
  %4275 = vmatprep.subr.bf16.mxu0 0
  %4276 = vmatpush1.bf16.msra.mxu0 %v4016
  %4277 = vmatprep.subr.bf16.mxu0 0
  %4278 = vmatpush1.bf16.msra.mxu0 %v4017
  %4279 = vmatprep.subr.bf16.mxu0 0
  %4280 = vmatpush1.bf16.msra.mxu0 %v4018
  %4281 = vmatprep.subr.bf16.mxu0 0
  %4282 = vmatpush1.bf16.msra.mxu0 %v4019
  %4283 = vmatprep.subr.bf16.mxu0 0
  %4284 = vmatpush1.bf16.msra.mxu0 %v4020
  %4285 = vmatprep.subr.bf16.mxu0 0
  %4286 = vmatpush1.bf16.msra.mxu0 %v4021
  %4287 = vmatprep.subr.bf16.mxu0 0
  %4288 = vmatpush1.bf16.msra.mxu0 %v4022
  %4289 = vmatprep.subr.bf16.mxu0 0
  %4290 = vmatpush1.bf16.msra.mxu0 %v4023
  %4291 = vmatprep.subr.bf16.mxu0 0
  %4292 = vmatpush1.bf16.msra.mxu0 %v4024
  %4293 = vmatprep.subr.bf16.mxu0 0
  %4294 = vmatpush1.bf16.msra.mxu0 %v4025
  %4295 = vmatprep.subr.bf16.mxu0 0
  %4296 = vmatpush1.bf16.msra.mxu0 %v4026
  %4297 = vmatprep.subr.bf16.mxu0 0
  %4298 = vmatpush1.bf16.msra.mxu0 %v4027
  %4299 = vmatprep.subr.bf16.mxu0 0
  %4300 = vmatpush1.bf16.msra.mxu0 %v4028
  %4301 = vmatprep.subr.bf16.mxu0 0
  %4302 = vmatpush1.bf16.msra.mxu0 %v4029
  %4303 = vmatprep.subr.bf16.mxu0 0
  %4304 = vmatpush1.bf16.msra.mxu0 %v4030
  %4305 = vmatprep.mubr.bf16.mxu0 %v3645
  %4306 = vmatmul.mubr.bf16.gmra.mrb[0].mxu0 %v3644
  %v4307 = vpop.f32.mrb[0].mxu0
  %v4308 = vadd.f32 %v4211, %v4307
  %v4309 = vpop.f32.mrb[0].mxu0
  %v4310 = vpop.f32.mrb[0].mxu0
  %v4311 = vadd.f32 %v4214, %v4310
  %v4312 = vpop.f32.mrb[0].mxu0
  %4313 = vmatprep.mubr.bf16.mxu0 %v3651
  %4314 = vmatmul.mubr.bf16.gmra.mrb[0].mxu0 %v3650
  %v4315 = vpop.f32.mrb[0].mxu0
  %v4316 = vadd.f32 %v4219, %v4315
  %v4317 = vpop.f32.mrb[0].mxu0
  %v4318 = vpop.f32.mrb[0].mxu0
  %v4319 = vadd.f32 %v4222, %v4318
  %v4320 = vpop.f32.mrb[0].mxu0
  %4321 = vmatprep.mubr.bf16.mxu0 %v3657
  %4322 = vmatmul.mubr.bf16.gmra.mrb[0].mxu0 %v3656
  %v4323 = vpop.f32.mrb[0].mxu0
  %v4324 = vadd.f32 %v4227, %v4323
  %v4325 = vpop.f32.mrb[0].mxu0
  %v4326 = vpop.f32.mrb[0].mxu0
  %v4327 = vadd.f32 %v4230, %v4326
  %v4328 = vpop.f32.mrb[0].mxu0
  %4329 = vmatprep.mubr.bf16.mxu0 %v3663
  %4330 = vmatmul.mubr.bf16.gmra.mrb[0].mxu0 %v3662
  %v4331 = vpop.f32.mrb[0].mxu0
  %v4332 = vadd.f32 %v4235, %v4331
  %v4333 = vpop.f32.mrb[0].mxu0
  %v4334 = vpop.f32.mrb[0].mxu0
  %v4335 = vadd.f32 %v4238, %v4334
  %v4336 = vpop.f32.mrb[0].mxu0
  %4337 = vmatprep.mubr.bf16.mxu0 %v3669
  %4338 = vmatmul.mubr.bf16.gmra.mrb[0].mxu0 %v3668
  %v4339 = vpop.f32.mrb[0].mxu0
  %v4340 = vadd.f32 %v4243, %v4339
  %v4341 = vpop.f32.mrb[0].mxu0
  %v4342 = vpop.f32.mrb[0].mxu0
  %v4343 = vadd.f32 %v4246, %v4342
  %v4344 = vpop.f32.mrb[0].mxu0
  %4345 = vmatprep.mubr.bf16.mxu0 %v3675
  %4346 = vmatmul.mubr.bf16.gmra.mrb[0].mxu0 %v3674
  %v4347 = vpop.f32.mrb[0].mxu0
  %v4348 = vadd.f32 %v4251, %v4347
  %v4349 = vpop.f32.mrb[0].mxu0
  %v4350 = vpop.f32.mrb[0].mxu0
  %v4351 = vadd.f32 %v4254, %v4350
  %v4352 = vpop.f32.mrb[0].mxu0
  %4353 = vmatprep.mubr.bf16.mxu0 %v3681
  %4354 = vmatmul.mubr.bf16.gmra.mrb[0].mxu0 %v3680
  %v4355 = vpop.f32.mrb[0].mxu0
  %v4356 = vadd.f32 %v4259, %v4355
  %v4357 = vpop.f32.mrb[0].mxu0
  %v4358 = vpop.f32.mrb[0].mxu0
  %v4359 = vadd.f32 %v4262, %v4358
  %v4360 = vpop.f32.mrb[0].mxu0
  %4361 = vmatprep.mubr.bf16.mxu0 %v3687
  %4362 = vmatmul.mubr.bf16.gmra.mrb[0].mxu0 %v3686
  %v4363 = vpop.f32.mrb[0].mxu0
  %v4364 = vadd.f32 %v4267, %v4363
  %v4365 = vpop.f32.mrb[0].mxu0
  %v4366 = vpop.f32.mrb[0].mxu0
  %v4367 = vadd.f32 %v4270, %v4366
  %v4368 = vpop.f32.mrb[0].mxu0
  %4369 = vdwg.mxu0
  %4370 = vst [vmem:[%s7] sm:$0xff] %v4308
  %4371 = vst [vmem:[%s7 + $0x8] sm:$0xff] %v4311
  %4372 = vst [vmem:[%s7 + $0x10] sm:$0xff] %v4316
  %4373 = vst [vmem:[%s7 + $0x18] sm:$0xff] %v4319
  %4374 = vst [vmem:[%s7 + $0x20] sm:$0xff] %v4324
  %4375 = vst [vmem:[%s7 + $0x28] sm:$0xff] %v4327
  %4376 = vst [vmem:[%s7 + $0x30] sm:$0xff] %v4332
  %4377 = vst [vmem:[%s7 + $0x38] sm:$0xff] %v4335
  %4378 = vst [vmem:[%s7 + $0x40] sm:$0xff] %v4340
  %4379 = vst [vmem:[%s7 + $0x48] sm:$0xff] %v4343
  %4380 = vst [vmem:[%s7 + $0x50] sm:$0xff] %v4348
  %4381 = vst [vmem:[%s7 + $0x58] sm:$0xff] %v4351
  %4382 = vst [vmem:[%s7 + $0x60] sm:$0xff] %v4356
  %4383 = vst [vmem:[%s7 + $0x68] sm:$0xff] %v4359
  %4384 = vst [vmem:[%s7 + $0x70] sm:$0xff] %v4364
  %4385 = vst [vmem:[%s7 + $0x78] sm:$0xff] %v4367
  // Predicated region
  $region30: #{hrnet_forward.6} parent=0 // pred_check
    _
  $region31: #{hrnet_forward.6} parent=0 // pred_check_branch
    %4387 = sbr.rel (0) target = $region33
  $region32: #{hrnet_forward.6} parent=0 // pred_region
    _
  $region33: #{hrnet_forward.6} parent=0 // pred_fallthru
    _
  // Predicated region
  $region34: #{hrnet_forward.6} parent=0 // pred_check
    _
  $region35: #{hrnet_forward.6} parent=0 // pred_check_branch
    %4389 = sbr.rel (0) target = $region37
  $region36: #{hrnet_forward.6} parent=0 // pred_region
    _
  $region37: #{hrnet_forward.6} parent=0 // pred_fallthru
    _

</llo_original>
